<compile_context>
chip_gen: v7x
topology: tpu7x:2x2x1
jax: 0.10.0
libtpu: 0.0.40
codegen_flags: <defaults>
</compile_context>

<pallas_src>
import functools

import numpy as np
import jax
import jax.numpy as jnp
from jax import lax
from jax.experimental import pallas as pl
from jax.experimental.pallas import tpu as pltpu


# ---------------------------------------------------------------------------
# Host-side constants.
# ---------------------------------------------------------------------------

def _log2(v):
    l = int(np.log2(v))
    assert (1 << l) == v
    return l


def _make_downsample(hout, wout, hin, win):
    """Exact 0/1 row-selection matrix: stride-2 subsample of a stride-1 conv output."""
    ds = np.zeros((hout * wout, hin * win), np.float32)
    for ho in range(hout):
        for wo in range(wout):
            ds[ho * wout + wo, (2 * ho) * win + (2 * wo)] = 1.0
    return ds


def _make_group_indicator(n_head, n_loc, num_anchors, num_classes):
    """GG[i, j] = 1 iff columns i and j belong to the same anchor's class block."""
    gg = np.zeros((n_head, n_head), np.float32)
    for a in range(num_anchors):
        lo = n_loc + a * num_classes
        gg[lo:lo + num_classes, lo:lo + num_classes] = 1.0
    return gg


# ---------------------------------------------------------------------------
# In-kernel helpers (pure jnp, traced inside the Pallas body).
# ---------------------------------------------------------------------------

def _taps_fused(x, h_img, w_img):
    """(rows, c) -> (rows, 9*c): the 9 zero-padded 3x3 taps, concatenated on lanes.

    `rows` may hold several images stacked along axis 0 (rows = B*h_img*w_img); border
    masks are computed per image position, so shifts never leak across image boundaries.
    Shifts are sublane rotations + VPU selects: no MXU FLOPs spent on gathering.
    """
    rows = x.shape[0]
    r = lax.broadcasted_iota(jnp.int32, (rows, 1), 0)
    w = r & (w_img - 1)                              # w coordinate (w_img is a power of 2)
    h = (r >> _log2(w_img)) & (h_img - 1)            # h coordinate (h_img is a power of 2)
    taps = []
    for dh in (-1, 0, 1):
        for dw in (-1, 0, 1):
            d = dh * w_img + dw
            t = x if d == 0 else jnp.roll(x, -d, axis=0)
            conds = []
            if dh == -1:
                conds.append(h >= 1)
            if dh == +1:
                conds.append(h <= h_img - 2)
            if dw == -1:
                conds.append(w >= 1)
            if dw == +1:
                conds.append(w <= w_img - 2)
            if conds:
                valid = functools.reduce(jnp.logical_and, conds)
                t = jnp.where(valid, t, 0.0)
            taps.append(t)
    return jnp.concatenate(taps, axis=-1)            # (rows, 9*c) f32


def _downsample(ds, y, rin_img, b):
    """Apply the per-image (rout, rin) row-selection to a batch folded along rows."""
    parts = [jnp.dot(ds, y[i * rin_img:(i + 1) * rin_img, :],
                     preferred_element_type=jnp.float32) for i in range(b)]
    return parts[0] if b == 1 else jnp.concatenate(parts, axis=0)


# ---------------------------------------------------------------------------
# Fused Pallas kernel: whole Retina forward for B images per grid step.
# ---------------------------------------------------------------------------

def _retina_kernel(*refs, B, H1, H2, H3, n_loc, n_head, phase):
    (x_ref, w1_ref, b1_ref, w2_ref, b2_ref, ds2_ref,
     w3_ref, b3_ref, ds3_ref) = refs[:9]
    rest = refs[9:]

    r1i, r2i = H1 * H1, H2 * H2

    # --- base: conv1 (3x3, s1) + conv2 (3x3, s2) -> source 1 ------------------
    x = x_ref[...]                                                        # (B*r1, cin) f32
    x9 = _taps_fused(x, H1, H1).astype(jnp.bfloat16)                      # (B*r1, 9*cin)
    a1 = jnp.maximum(
        jnp.dot(x9, w1_ref[...], preferred_element_type=jnp.float32) + b1_ref[...], 0.0)
    a9 = _taps_fused(a1, H1, H1).astype(jnp.bfloat16)                     # (B*r1, 288)
    y2 = jnp.dot(a9, w2_ref[...], preferred_element_type=jnp.float32)     # full-res conv2
    f1 = jnp.maximum(_downsample(ds2_ref[...], y2, r1i, B) + b2_ref[...], 0.0)  # (B*r2, C)

    # --- extra: conv3 (3x3, s2) -> source 2 (reuses the source-1 taps) --------
    f1_taps = _taps_fused(f1, H2, H2).astype(jnp.bfloat16)                # (B*r2, 288)
    y3 = jnp.dot(f1_taps, w3_ref[...], preferred_element_type=jnp.float32)
    f2 = jnp.maximum(_downsample(ds3_ref[...], y3, r2i, B) + b3_ref[...], 0.0)  # (B*r3, C)

    if phase == 'feature':
        f1_ref, f2_ref = rest
        f1_ref[...] = f1
        f2_ref[...] = f2
        return

    if phase == 'eval':
        wh_ref, bh_ref, gg_ref, out_ref = rest
    else:
        wh_ref, bh_ref, out_ref = rest

    # --- shared multibox head: loc+conf fused along Cout, per source ----------
    f2_taps = _taps_fused(f2, H3, H3).astype(jnp.bfloat16)
    head1 = jnp.dot(f1_taps, wh_ref[...], preferred_element_type=jnp.float32) + bh_ref[...]
    head2 = jnp.dot(f2_taps, wh_ref[...], preferred_element_type=jnp.float32) + bh_ref[...]
    head = jnp.concatenate([head1, head2], axis=0)                        # (B*rh, 150)

    if phase == 'eval':
        # Per-anchor softmax over the class columns, without unaligned 21-wide slices:
        # one masked exp pass + one 0/1 group-indicator matmul for the denominators.
        col = lax.broadcasted_iota(jnp.int32, (1, n_head), 1)
        cmask = col >= n_loc                                              # conf columns
        row_max = jnp.max(jnp.where(cmask, head, -jnp.inf), axis=-1, keepdims=True)
        e = jnp.exp(jnp.where(cmask, head - row_max, 0.0))
        e = jnp.where(cmask, e, 0.0)
        denom = jnp.dot(e, gg_ref[...], preferred_element_type=jnp.float32)
        denom = denom + jnp.where(cmask, 0.0, 1.0)                        # loc cols: denom 1
        denom = jnp.maximum(denom, 1e-30)
        head = jnp.where(cmask, e / denom, head)

    out_ref[...] = head


# ---------------------------------------------------------------------------
# Retina module (synthetic deterministic parameters).
# ---------------------------------------------------------------------------

class RetinaPallas:
    def __init__(self, in_channels=4, base_channels=32, num_anchors=6,
                 num_classes=21, image_size=16, seed=0):
        assert image_size % 4 == 0
        self.in_channels = in_channels
        self.base_channels = base_channels
        self.num_anchors = num_anchors
        self.num_classes = num_classes
        self.image_size = image_size
        self.n_loc = num_anchors * 4
        self.n_conf = num_anchors * num_classes
        self.n_head = self.n_loc + self.n_conf

        key = jax.random.PRNGKey(seed)
        ks = jax.random.split(key, 10)

        def winit(k, shape, scale=0.05):
            return (scale * jax.random.normal(k, shape)).astype(jnp.float32)

        C = base_channels
        # f32 parameters in HWIO layout (also used by the pure-JAX reference).
        self.w1 = winit(ks[0], (3, 3, in_channels, C)); self.b1 = winit(ks[5], (C,))
        self.w2 = winit(ks[1], (3, 3, C, C));            self.b2 = winit(ks[6], (C,))
        self.we = winit(ks[2], (3, 3, C, C));            self.be = winit(ks[7], (C,))
        self.wl = winit(ks[3], (3, 3, C, self.n_loc));   self.bl = winit(ks[8], (self.n_loc,))
        self.wc = winit(ks[4], (3, 3, C, self.n_conf));  self.bc = winit(ks[9], (self.n_conf,))
        # TODO(synk): the original module's `norm` argument (L2Norm / BN on the first
        # source) is not reproduced since the reference __init__/forward are stubs.

        # geometry: H -> conv1 (s1) -> H -> conv2 (s2) -> H/2 (source 1)
        #           -> extra (s2) -> H/4 (source 2); shared head on both sources.
        h1 = image_size; h2 = h1 // 2; h3 = h2 // 2
        self.h2, self.h3 = h2, h3
        self.r1, self.r2, self.r3 = h1 * h1, h2 * h2, h3 * h3
        self.rh = self.r2 + self.r3

        # fused kernel-format weights: (9*Cin, Cout) bf16, row index = tap*Cin + cin.
        self.W1f = self.w1.reshape(9 * in_channels, C).astype(jnp.bfloat16)
        self.W2f = self.w2.reshape(9 * C, C).astype(jnp.bfloat16)
        self.W3f = self.we.reshape(9 * C, C).astype(jnp.bfloat16)
        wh = jnp.concatenate([self.wl, self.wc], axis=-1)                  # (3,3,C,150)
        self.WHf = wh.reshape(9 * C, self.n_head).astype(jnp.bfloat16)
        self.b1k = self.b1.reshape(1, C)
        self.b2k = self.b2.reshape(1, C)
        self.b3k = self.be.reshape(1, C)
        self.bhk = jnp.concatenate([self.bl, self.bc]).reshape(1, self.n_head)

        # exact f32 constants: stride-2 row subsample matrices + softmax group indicator.
        self.DS2 = jnp.asarray(_make_downsample(h2, h2, h1, h1), jnp.float32)
        self.DS3 = jnp.asarray(_make_downsample(h3, h3, h2, h2), jnp.float32)
        self.GG = jnp.asarray(_make_group_indicator(self.n_head, self.n_loc,
                                                    num_anchors, num_classes), jnp.float32)

        self._fwd_cache = {}

    # ------------------------------------------------------------------ helpers

    @staticmethod
    def _pick_block_batch(N):
        # Fold several images into one grid step (amortizes the ~0.35us/step overhead on
        # single-TC v5e/v6e) while keeping the grid length >= 2 so both v7x TensorCores
        # stay busy under dimension_semantics=("parallel",).
        best = 1
        for b in range(1, min(4, N // 2) + 1):
            if N % b == 0:
                best = b
        return best

    # ------------------------------------------------------------------ forward

    def _build_forward(self, N, phase):
        C = self.base_channels
        B = self._pick_block_batch(N)
        G = N // B
        rows1, rows2, rows3 = B * self.r1, B * self.r2, B * self.r3
        rowsh = rows2 + rows3

        kernel = functools.partial(
            _retina_kernel, B=B, H1=self.image_size, H2=self.h2, H3=self.h3,
            n_loc=self.n_loc, n_head=self.n_head, phase=phase)

        consts = [self.W1f, self.b1k, self.W2f, self.b2k, self.DS2,
                  self.W3f, self.b3k, self.DS3]
        if phase != 'feature':
            consts += [self.WHf, self.bhk]
            if phase == 'eval':
                consts += [self.GG]
        consts = tuple(consts)

        def const_spec(a):
            return pl.BlockSpec(a.shape, lambda i: (0, 0))

        in_specs = [pl.BlockSpec((rows1, self.in_channels), lambda i: (i, 0))]
        in_specs += [const_spec(a) for a in consts]

        if phase == 'feature':
            out_shape = (jax.ShapeDtypeStruct((G * rows2, C), jnp.float32),
                         jax.ShapeDtypeStruct((G * rows3, C), jnp.float32))
            out_specs = (pl.BlockSpec((rows2, C), lambda i: (i, 0)),
                         pl.BlockSpec((rows3, C), lambda i: (i, 0)))
        else:
            # single lane-dense head slab; loc/conf split happens in the wrapper
            out_shape = jax.ShapeDtypeStruct((G * rowsh, self.n_head), jnp.float32)
            out_specs = pl.BlockSpec((rowsh, self.n_head), lambda i: (i, 0))

        # advisory cost hint for XLA scheduling around the single fused custom call
        macs = (rows1 * 9 * self.in_channels * C
                + rows1 * 9 * C * C + rows2 * self.r1 * C
                + rows2 * 9 * C * C + rows3 * self.r2 * C)
        if phase != 'feature':
            macs += rowsh * 9 * C * self.n_head
        if phase == 'eval':
            macs += rowsh * self.n_head * self.n_head
        const_bytes = int(sum(int(a.size) * a.dtype.itemsize for a in consts))
        if phase == 'feature':
            out_bytes = 4 * N * (self.r2 + self.r3) * C
        else:
            out_bytes = 4 * N * self.rh * self.n_head
        cost = pl.CostEstimate(
            flops=int(2 * G * macs),
            transcendentals=int(N * self.rh * self.n_head) if phase == 'eval' else 0,
            bytes_accessed=int(const_bytes + 4 * N * self.r1 * self.in_channels + out_bytes))

        pc = pl.pallas_call(
            kernel,
            out_shape=out_shape,
            grid=(G,),
            in_specs=in_specs,
            out_specs=out_specs,
            compiler_params=pltpu.CompilerParams(
                dimension_semantics=("parallel",)),   # batch shards across TCs on v7x
            cost_estimate=cost,
        )

        hw, cin = self.image_size, self.in_channels
        r2, r3, rh, nh = self.r2, self.r3, self.rh, self.n_head
        nl, nc = self.n_loc, self.num_classes

        def fwd(x_nchw):
            # boundary transpose: NCHW (PyTorch) -> NHWC -> (N*H*W, Cin)
            # TODO(synk): at realistic resolutions, pad Cin / present the image lane-dense.
            x = jnp.transpose(x_nchw, (0, 2, 3, 1)).astype(jnp.float32)
            x2d = x.reshape(N * hw * hw, cin)
            if phase == 'feature':
                f1s, f2s = pc(x2d, *consts)
                return [f1s.reshape(N, self.h2, self.h2, C),
                        f2s.reshape(N, self.h3, self.h3, C)]
            slab = pc(x2d, *consts)                                # (G*B*rh, 150)
            slab = slab.reshape(G, B * rh, nh)
            s1 = slab[:, :B * r2, :].reshape(N, r2, nh)
            s2 = slab[:, B * r2:, :].reshape(N, r3, nh)
            per_img = jnp.concatenate([s1, s2], axis=1)            # (N, rh, 150)
            loc = per_img[..., :nl].reshape(N, -1, 4)
            conf = per_img[..., nl:]
            conf = conf.reshape(-1, nc) if phase == 'eval' else conf.reshape(N, -1, nc)
            return loc, conf

        return jax.jit(fwd)

    def __call__(self, x_nchw, phase='eval'):
        N, Cin, H, W = x_nchw.shape
        assert Cin == self.in_channels and H == W == self.image_size
        key = (int(N), phase)
        if key not in self._fwd_cache:
            self._fwd_cache[key] = self._build_forward(int(N), phase)
        return self._fwd_cache[key](x_nchw)

    # ------------------------------------------------------------------ reference

    def reference_forward(self, x_nchw, phase='eval'):
        """Pure-JAX f32 reference (lax.conv) used to validate the fused kernel."""
        def conv(x, w, b, stride, relu):
            y = lax.conv_general_dilated(
                x, w, window_strides=(stride, stride), padding=((1, 1), (1, 1)),
                dimension_numbers=('NHWC', 'HWIO', 'NHWC'))
            y = y + b
            return jnp.maximum(y, 0.0) if relu else y

        x = jnp.transpose(x_nchw, (0, 2, 3, 1)).astype(jnp.float32)
        a1 = conv(x, self.w1, self.b1, 1, True)
        s1 = conv(a1, self.w2, self.b2, 2, True)
        s2 = conv(s1, self.we, self.be, 2, True)
        if phase == 'feature':
            return [s1, s2]
        loc, conf = [], []
        for s in (s1, s2):
            l = conv(s, self.wl, self.bl, 1, False)
            c = conv(s, self.wc, self.bc, 1, False)
            loc.append(l.reshape(l.shape[0], -1))
            conf.append(c.reshape(c.shape[0], -1))
        loc = jnp.concatenate(loc, axis=1)
        conf = jnp.concatenate(conf, axis=1)
        N = loc.shape[0]
        loc = loc.reshape(N, -1, 4)
        if phase == 'eval':
            conf = jax.nn.softmax(conf.reshape(-1, self.num_classes), axis=-1)
        else:
            conf = conf.reshape(N, -1, self.num_classes)
        return loc, conf


# ---------------------------------------------------------------------------

if __name__ == "__main__":
    model = RetinaPallas(in_channels=4, base_channels=32, num_anchors=6,
                         num_classes=21, image_size=16, seed=0)

    key = jax.random.PRNGKey(0)
    x = jax.random.normal(key, (2, 4, 16, 16), dtype=jnp.float32)  # NCHW

    loc, conf = model(x, phase='eval')
    loc, conf = jax.block_until_ready((loc, conf))

    # sources: 8x8 and 4x4, 6 anchors each -> (64 + 16) * 6 = 480 priors / image
    assert loc.shape == (2, 480, 4), loc.shape
    assert conf.shape == (2 * 480, 21), conf.shape
    assert bool(jnp.all(jnp.isfinite(loc))) and bool(jnp.all(jnp.isfinite(conf)))
    # softmax rows sum to 1
    assert bool(jnp.allclose(jnp.sum(conf, axis=-1), 1.0, atol=1e-4))

    # numerics vs. a pure-JAX f32 reference (kernel uses bf16 MXU operands -> loose tol)
    loc_ref, conf_ref = model.reference_forward(x, phase='eval')
    assert bool(jnp.max(jnp.abs(loc - loc_ref)) < 5e-2), float(jnp.max(jnp.abs(loc - loc_ref)))
    assert bool(jnp.max(jnp.abs(conf - conf_ref)) < 1e-2), float(jnp.max(jnp.abs(conf - conf_ref)))

    print("KERNEL_OK")
</pallas_src>

<mosaic_0001>
module attributes {stable_mosaic.version = 11 : i64} {
  func.func @_retina_kernel(%arg0: i32, %arg1: memref<256x4xf32, #tpu.memory_space<vmem>>, %arg2: memref<36x32xbf16, #tpu.memory_space<vmem>>, %arg3: memref<1x32xf32, #tpu.memory_space<vmem>>, %arg4: memref<288x32xbf16, #tpu.memory_space<vmem>>, %arg5: memref<1x32xf32, #tpu.memory_space<vmem>>, %arg6: memref<64x256xf32, #tpu.memory_space<vmem>>, %arg7: memref<288x32xbf16, #tpu.memory_space<vmem>>, %arg8: memref<1x32xf32, #tpu.memory_space<vmem>>, %arg9: memref<16x64xf32, #tpu.memory_space<vmem>>, %arg10: memref<288x150xbf16, #tpu.memory_space<vmem>>, %arg11: memref<1x150xf32, #tpu.memory_space<vmem>>, %arg12: memref<150x150xf32, #tpu.memory_space<vmem>>, %arg13: memref<80x150xf32, #tpu.memory_space<vmem>>) attributes {dimension_semantics = [#tpu.dimension_semantics<parallel>], iteration_bounds = array<i64: 2>, scalar_prefetch = 0 : i64, scratch_operands = 0 : i64, tpu.core_type = #tpu.core_type<tc>, window_params = [{transform_indices = @transform_0, window_bounds = array<i64: 256, 4>}, {pipeline_mode = #tpu.pipeline_mode<synchronous>, transform_indices = @transform_1, window_bounds = array<i64: 36, 32>}, {pipeline_mode = #tpu.pipeline_mode<synchronous>, transform_indices = @transform_2, window_bounds = array<i64: 1, 32>}, {pipeline_mode = #tpu.pipeline_mode<synchronous>, transform_indices = @transform_3, window_bounds = array<i64: 288, 32>}, {pipeline_mode = #tpu.pipeline_mode<synchronous>, transform_indices = @transform_4, window_bounds = array<i64: 1, 32>}, {pipeline_mode = #tpu.pipeline_mode<synchronous>, transform_indices = @transform_5, window_bounds = array<i64: 64, 256>}, {pipeline_mode = #tpu.pipeline_mode<synchronous>, transform_indices = @transform_6, window_bounds = array<i64: 288, 32>}, {pipeline_mode = #tpu.pipeline_mode<synchronous>, transform_indices = @transform_7, window_bounds = array<i64: 1, 32>}, {pipeline_mode = #tpu.pipeline_mode<synchronous>, transform_indices = @transform_8, window_bounds = array<i64: 16, 64>}, {pipeline_mode = #tpu.pipeline_mode<synchronous>, transform_indices = @transform_9, window_bounds = array<i64: 288, 150>}, {pipeline_mode = #tpu.pipeline_mode<synchronous>, transform_indices = @transform_10, window_bounds = array<i64: 1, 150>}, {pipeline_mode = #tpu.pipeline_mode<synchronous>, transform_indices = @transform_11, window_bounds = array<i64: 150, 150>}, {transform_indices = @transform_12, window_bounds = array<i64: 80, 150>}]} {
    %c0 = arith.constant 0 : index
    %c0_0 = arith.constant 0 : index
    %0 = vector.load %arg1[%c0, %c0_0] : memref<256x4xf32, #tpu.memory_space<vmem>>, vector<256x4xf32>
    %1 = tpu.iota {dimensions = array<i32: 0>} : vector<256x1xi32>
    %c15_i32 = arith.constant 15 : i32
    %2 = vector.broadcast %c15_i32 : i32 to vector<256x1xi32>
    %3 = arith.andi %1, %2 : vector<256x1xi32>
    %c4_i32 = arith.constant 4 : i32
    %4 = vector.broadcast %c4_i32 : i32 to vector<256x1xi32>
    %5 = arith.shrsi %1, %4 : vector<256x1xi32>
    %c15_i32_1 = arith.constant 15 : i32
    %6 = vector.broadcast %c15_i32_1 : i32 to vector<256x1xi32>
    %7 = arith.andi %5, %6 : vector<256x1xi32>
    %8 = vector.extract_strided_slice %0 {offsets = [239, 0], sizes = [17, 4], strides = [1, 1]} : vector<256x4xf32> to vector<17x4xf32>
    %9 = vector.extract_strided_slice %0 {offsets = [0, 0], sizes = [239, 4], strides = [1, 1]} : vector<256x4xf32> to vector<239x4xf32>
    %10 = tpu.concatenate %8, %9 in 0 : vector<17x4xf32>, vector<239x4xf32> -> vector<256x4xf32>
    %c1_i32 = arith.constant 1 : i32
    %11 = vector.broadcast %c1_i32 : i32 to vector<256x1xi32>
    %12 = arith.cmpi sge, %7, %11 : vector<256x1xi32>
    %c1_i32_2 = arith.constant 1 : i32
    %13 = vector.broadcast %c1_i32_2 : i32 to vector<256x1xi32>
    %14 = arith.cmpi sge, %3, %13 : vector<256x1xi32>
    %15 = arith.andi %12, %14 : vector<256x1xi1>
    %cst = arith.constant 0.000000e+00 : f32
    %16 = vector.shape_cast %15 : vector<256x1xi1> to vector<256x1xi1>
    %17 = vector.broadcast %16 : vector<256x1xi1> to vector<256x4xi1>
    %18 = vector.broadcast %cst : f32 to vector<256x4xf32>
    %19 = arith.select %17, %10, %18 : vector<256x4xi1>, vector<256x4xf32>
    %20 = vector.extract_strided_slice %0 {offsets = [240, 0], sizes = [16, 4], strides = [1, 1]} : vector<256x4xf32> to vector<16x4xf32>
    %21 = vector.extract_strided_slice %0 {offsets = [0, 0], sizes = [240, 4], strides = [1, 1]} : vector<256x4xf32> to vector<240x4xf32>
    %22 = tpu.concatenate %20, %21 in 0 : vector<16x4xf32>, vector<240x4xf32> -> vector<256x4xf32>
    %c1_i32_3 = arith.constant 1 : i32
    %23 = vector.broadcast %c1_i32_3 : i32 to vector<256x1xi32>
    %24 = arith.cmpi sge, %7, %23 : vector<256x1xi32>
    %cst_4 = arith.constant 0.000000e+00 : f32
    %25 = vector.shape_cast %24 : vector<256x1xi1> to vector<256x1xi1>
    %26 = vector.broadcast %25 : vector<256x1xi1> to vector<256x4xi1>
    %27 = vector.broadcast %cst_4 : f32 to vector<256x4xf32>
    %28 = arith.select %26, %22, %27 : vector<256x4xi1>, vector<256x4xf32>
    %29 = vector.extract_strided_slice %0 {offsets = [241, 0], sizes = [15, 4], strides = [1, 1]} : vector<256x4xf32> to vector<15x4xf32>
    %30 = vector.extract_strided_slice %0 {offsets = [0, 0], sizes = [241, 4], strides = [1, 1]} : vector<256x4xf32> to vector<241x4xf32>
    %31 = tpu.concatenate %29, %30 in 0 : vector<15x4xf32>, vector<241x4xf32> -> vector<256x4xf32>
    %c1_i32_5 = arith.constant 1 : i32
    %32 = vector.broadcast %c1_i32_5 : i32 to vector<256x1xi32>
    %33 = arith.cmpi sge, %7, %32 : vector<256x1xi32>
    %c14_i32 = arith.constant 14 : i32
    %34 = vector.broadcast %c14_i32 : i32 to vector<256x1xi32>
    %35 = arith.cmpi sle, %3, %34 : vector<256x1xi32>
    %36 = arith.andi %33, %35 : vector<256x1xi1>
    %cst_6 = arith.constant 0.000000e+00 : f32
    %37 = vector.shape_cast %36 : vector<256x1xi1> to vector<256x1xi1>
    %38 = vector.broadcast %37 : vector<256x1xi1> to vector<256x4xi1>
    %39 = vector.broadcast %cst_6 : f32 to vector<256x4xf32>
    %40 = arith.select %38, %31, %39 : vector<256x4xi1>, vector<256x4xf32>
    %41 = vector.extract_strided_slice %0 {offsets = [255, 0], sizes = [1, 4], strides = [1, 1]} : vector<256x4xf32> to vector<1x4xf32>
    %42 = vector.extract_strided_slice %0 {offsets = [0, 0], sizes = [255, 4], strides = [1, 1]} : vector<256x4xf32> to vector<255x4xf32>
    %43 = tpu.concatenate %41, %42 in 0 : vector<1x4xf32>, vector<255x4xf32> -> vector<256x4xf32>
    %c1_i32_7 = arith.constant 1 : i32
    %44 = vector.broadcast %c1_i32_7 : i32 to vector<256x1xi32>
    %45 = arith.cmpi sge, %3, %44 : vector<256x1xi32>
    %cst_8 = arith.constant 0.000000e+00 : f32
    %46 = vector.shape_cast %45 : vector<256x1xi1> to vector<256x1xi1>
    %47 = vector.broadcast %46 : vector<256x1xi1> to vector<256x4xi1>
    %48 = vector.broadcast %cst_8 : f32 to vector<256x4xf32>
    %49 = arith.select %47, %43, %48 : vector<256x4xi1>, vector<256x4xf32>
    %50 = vector.extract_strided_slice %0 {offsets = [1, 0], sizes = [255, 4], strides = [1, 1]} : vector<256x4xf32> to vector<255x4xf32>
    %51 = vector.extract_strided_slice %0 {offsets = [0, 0], sizes = [1, 4], strides = [1, 1]} : vector<256x4xf32> to vector<1x4xf32>
    %52 = tpu.concatenate %50, %51 in 0 : vector<255x4xf32>, vector<1x4xf32> -> vector<256x4xf32>
    %c14_i32_9 = arith.constant 14 : i32
    %53 = vector.broadcast %c14_i32_9 : i32 to vector<256x1xi32>
    %54 = arith.cmpi sle, %3, %53 : vector<256x1xi32>
    %cst_10 = arith.constant 0.000000e+00 : f32
    %55 = vector.shape_cast %54 : vector<256x1xi1> to vector<256x1xi1>
    %56 = vector.broadcast %55 : vector<256x1xi1> to vector<256x4xi1>
    %57 = vector.broadcast %cst_10 : f32 to vector<256x4xf32>
    %58 = arith.select %56, %52, %57 : vector<256x4xi1>, vector<256x4xf32>
    %59 = vector.extract_strided_slice %0 {offsets = [15, 0], sizes = [241, 4], strides = [1, 1]} : vector<256x4xf32> to vector<241x4xf32>
    %60 = vector.extract_strided_slice %0 {offsets = [0, 0], sizes = [15, 4], strides = [1, 1]} : vector<256x4xf32> to vector<15x4xf32>
    %61 = tpu.concatenate %59, %60 in 0 : vector<241x4xf32>, vector<15x4xf32> -> vector<256x4xf32>
    %c14_i32_11 = arith.constant 14 : i32
    %62 = vector.broadcast %c14_i32_11 : i32 to vector<256x1xi32>
    %63 = arith.cmpi sle, %7, %62 : vector<256x1xi32>
    %c1_i32_12 = arith.constant 1 : i32
    %64 = vector.broadcast %c1_i32_12 : i32 to vector<256x1xi32>
    %65 = arith.cmpi sge, %3, %64 : vector<256x1xi32>
    %66 = arith.andi %63, %65 : vector<256x1xi1>
    %cst_13 = arith.constant 0.000000e+00 : f32
    %67 = vector.shape_cast %66 : vector<256x1xi1> to vector<256x1xi1>
    %68 = vector.broadcast %67 : vector<256x1xi1> to vector<256x4xi1>
    %69 = vector.broadcast %cst_13 : f32 to vector<256x4xf32>
    %70 = arith.select %68, %61, %69 : vector<256x4xi1>, vector<256x4xf32>
    %71 = vector.extract_strided_slice %0 {offsets = [16, 0], sizes = [240, 4], strides = [1, 1]} : vector<256x4xf32> to vector<240x4xf32>
    %72 = vector.extract_strided_slice %0 {offsets = [0, 0], sizes = [16, 4], strides = [1, 1]} : vector<256x4xf32> to vector<16x4xf32>
    %73 = tpu.concatenate %71, %72 in 0 : vector<240x4xf32>, vector<16x4xf32> -> vector<256x4xf32>
    %c14_i32_14 = arith.constant 14 : i32
    %74 = vector.broadcast %c14_i32_14 : i32 to vector<256x1xi32>
    %75 = arith.cmpi sle, %7, %74 : vector<256x1xi32>
    %cst_15 = arith.constant 0.000000e+00 : f32
    %76 = vector.shape_cast %75 : vector<256x1xi1> to vector<256x1xi1>
    %77 = vector.broadcast %76 : vector<256x1xi1> to vector<256x4xi1>
    %78 = vector.broadcast %cst_15 : f32 to vector<256x4xf32>
    %79 = arith.select %77, %73, %78 : vector<256x4xi1>, vector<256x4xf32>
    %80 = vector.extract_strided_slice %0 {offsets = [17, 0], sizes = [239, 4], strides = [1, 1]} : vector<256x4xf32> to vector<239x4xf32>
    %81 = vector.extract_strided_slice %0 {offsets = [0, 0], sizes = [17, 4], strides = [1, 1]} : vector<256x4xf32> to vector<17x4xf32>
    %82 = tpu.concatenate %80, %81 in 0 : vector<239x4xf32>, vector<17x4xf32> -> vector<256x4xf32>
    %c14_i32_16 = arith.constant 14 : i32
    %83 = vector.broadcast %c14_i32_16 : i32 to vector<256x1xi32>
    %84 = arith.cmpi sle, %7, %83 : vector<256x1xi32>
    %c14_i32_17 = arith.constant 14 : i32
    %85 = vector.broadcast %c14_i32_17 : i32 to vector<256x1xi32>
    %86 = arith.cmpi sle, %3, %85 : vector<256x1xi32>
    %87 = arith.andi %84, %86 : vector<256x1xi1>
    %cst_18 = arith.constant 0.000000e+00 : f32
    %88 = vector.shape_cast %87 : vector<256x1xi1> to vector<256x1xi1>
    %89 = vector.broadcast %88 : vector<256x1xi1> to vector<256x4xi1>
    %90 = vector.broadcast %cst_18 : f32 to vector<256x4xf32>
    %91 = arith.select %89, %82, %90 : vector<256x4xi1>, vector<256x4xf32>
    %92 = tpu.concatenate %19, %28, %40, %49, %0, %58, %70, %79, %91 in 1 : vector<256x4xf32>, vector<256x4xf32>, vector<256x4xf32>, vector<256x4xf32>, vector<256x4xf32>, vector<256x4xf32>, vector<256x4xf32>, vector<256x4xf32>, vector<256x4xf32> -> vector<256x36xf32>
    %93 = arith.truncf %92 : vector<256x36xf32> to vector<256x36xbf16>
    %c0_19 = arith.constant 0 : index
    %c0_20 = arith.constant 0 : index
    %94 = vector.load %arg2[%c0_19, %c0_20] : memref<36x32xbf16, #tpu.memory_space<vmem>>, vector<36x32xbf16>
    %cst_21 = arith.constant dense<0.000000e+00> : vector<256x32xf32>
    %95 = tpu.matmul %93, %94, %cst_21 {dimension_numbers = #tpu.dot_dimension_numbers<[1], [0], [0], [1], [0, 0, 1, 1], [], []>} : vector<256x36xbf16>, vector<36x32xbf16>, vector<256x32xf32> -> vector<256x32xf32>
    %c0_22 = arith.constant 0 : index
    %c0_23 = arith.constant 0 : index
    %96 = vector.load %arg3[%c0_22, %c0_23] : memref<1x32xf32, #tpu.memory_space<vmem>>, vector<1x32xf32>
    %97 = vector.broadcast %96 : vector<1x32xf32> to vector<256x32xf32>
    %98 = arith.addf %95, %97 : vector<256x32xf32>
    %cst_24 = arith.constant 0.000000e+00 : f32
    %99 = vector.broadcast %cst_24 : f32 to vector<256x32xf32>
    %100 = arith.maximumf %98, %99 : vector<256x32xf32>
    %101 = tpu.iota {dimensions = array<i32: 0>} : vector<256x1xi32>
    %c15_i32_25 = arith.constant 15 : i32
    %102 = vector.broadcast %c15_i32_25 : i32 to vector<256x1xi32>
    %103 = arith.andi %101, %102 : vector<256x1xi32>
    %c4_i32_26 = arith.constant 4 : i32
    %104 = vector.broadcast %c4_i32_26 : i32 to vector<256x1xi32>
    %105 = arith.shrsi %101, %104 : vector<256x1xi32>
    %c15_i32_27 = arith.constant 15 : i32
    %106 = vector.broadcast %c15_i32_27 : i32 to vector<256x1xi32>
    %107 = arith.andi %105, %106 : vector<256x1xi32>
    %108 = vector.extract_strided_slice %100 {offsets = [239, 0], sizes = [17, 32], strides = [1, 1]} : vector<256x32xf32> to vector<17x32xf32>
    %109 = vector.extract_strided_slice %100 {offsets = [0, 0], sizes = [239, 32], strides = [1, 1]} : vector<256x32xf32> to vector<239x32xf32>
    %110 = tpu.concatenate %108, %109 in 0 : vector<17x32xf32>, vector<239x32xf32> -> vector<256x32xf32>
    %c1_i32_28 = arith.constant 1 : i32
    %111 = vector.broadcast %c1_i32_28 : i32 to vector<256x1xi32>
    %112 = arith.cmpi sge, %107, %111 : vector<256x1xi32>
    %c1_i32_29 = arith.constant 1 : i32
    %113 = vector.broadcast %c1_i32_29 : i32 to vector<256x1xi32>
    %114 = arith.cmpi sge, %103, %113 : vector<256x1xi32>
    %115 = arith.andi %112, %114 : vector<256x1xi1>
    %cst_30 = arith.constant 0.000000e+00 : f32
    %116 = vector.shape_cast %115 : vector<256x1xi1> to vector<256x1xi1>
    %117 = vector.broadcast %116 : vector<256x1xi1> to vector<256x32xi1>
    %118 = vector.broadcast %cst_30 : f32 to vector<256x32xf32>
    %119 = arith.select %117, %110, %118 : vector<256x32xi1>, vector<256x32xf32>
    %120 = vector.extract_strided_slice %100 {offsets = [240, 0], sizes = [16, 32], strides = [1, 1]} : vector<256x32xf32> to vector<16x32xf32>
    %121 = vector.extract_strided_slice %100 {offsets = [0, 0], sizes = [240, 32], strides = [1, 1]} : vector<256x32xf32> to vector<240x32xf32>
    %122 = tpu.concatenate %120, %121 in 0 : vector<16x32xf32>, vector<240x32xf32> -> vector<256x32xf32>
    %c1_i32_31 = arith.constant 1 : i32
    %123 = vector.broadcast %c1_i32_31 : i32 to vector<256x1xi32>
    %124 = arith.cmpi sge, %107, %123 : vector<256x1xi32>
    %cst_32 = arith.constant 0.000000e+00 : f32
    %125 = vector.shape_cast %124 : vector<256x1xi1> to vector<256x1xi1>
    %126 = vector.broadcast %125 : vector<256x1xi1> to vector<256x32xi1>
    %127 = vector.broadcast %cst_32 : f32 to vector<256x32xf32>
    %128 = arith.select %126, %122, %127 : vector<256x32xi1>, vector<256x32xf32>
    %129 = vector.extract_strided_slice %100 {offsets = [241, 0], sizes = [15, 32], strides = [1, 1]} : vector<256x32xf32> to vector<15x32xf32>
    %130 = vector.extract_strided_slice %100 {offsets = [0, 0], sizes = [241, 32], strides = [1, 1]} : vector<256x32xf32> to vector<241x32xf32>
    %131 = tpu.concatenate %129, %130 in 0 : vector<15x32xf32>, vector<241x32xf32> -> vector<256x32xf32>
    %c1_i32_33 = arith.constant 1 : i32
    %132 = vector.broadcast %c1_i32_33 : i32 to vector<256x1xi32>
    %133 = arith.cmpi sge, %107, %132 : vector<256x1xi32>
    %c14_i32_34 = arith.constant 14 : i32
    %134 = vector.broadcast %c14_i32_34 : i32 to vector<256x1xi32>
    %135 = arith.cmpi sle, %103, %134 : vector<256x1xi32>
    %136 = arith.andi %133, %135 : vector<256x1xi1>
    %cst_35 = arith.constant 0.000000e+00 : f32
    %137 = vector.shape_cast %136 : vector<256x1xi1> to vector<256x1xi1>
    %138 = vector.broadcast %137 : vector<256x1xi1> to vector<256x32xi1>
    %139 = vector.broadcast %cst_35 : f32 to vector<256x32xf32>
    %140 = arith.select %138, %131, %139 : vector<256x32xi1>, vector<256x32xf32>
    %141 = vector.extract_strided_slice %100 {offsets = [255, 0], sizes = [1, 32], strides = [1, 1]} : vector<256x32xf32> to vector<1x32xf32>
    %142 = vector.extract_strided_slice %100 {offsets = [0, 0], sizes = [255, 32], strides = [1, 1]} : vector<256x32xf32> to vector<255x32xf32>
    %143 = tpu.concatenate %141, %142 in 0 : vector<1x32xf32>, vector<255x32xf32> -> vector<256x32xf32>
    %c1_i32_36 = arith.constant 1 : i32
    %144 = vector.broadcast %c1_i32_36 : i32 to vector<256x1xi32>
    %145 = arith.cmpi sge, %103, %144 : vector<256x1xi32>
    %cst_37 = arith.constant 0.000000e+00 : f32
    %146 = vector.shape_cast %145 : vector<256x1xi1> to vector<256x1xi1>
    %147 = vector.broadcast %146 : vector<256x1xi1> to vector<256x32xi1>
    %148 = vector.broadcast %cst_37 : f32 to vector<256x32xf32>
    %149 = arith.select %147, %143, %148 : vector<256x32xi1>, vector<256x32xf32>
    %150 = vector.extract_strided_slice %100 {offsets = [1, 0], sizes = [255, 32], strides = [1, 1]} : vector<256x32xf32> to vector<255x32xf32>
    %151 = vector.extract_strided_slice %100 {offsets = [0, 0], sizes = [1, 32], strides = [1, 1]} : vector<256x32xf32> to vector<1x32xf32>
    %152 = tpu.concatenate %150, %151 in 0 : vector<255x32xf32>, vector<1x32xf32> -> vector<256x32xf32>
    %c14_i32_38 = arith.constant 14 : i32
    %153 = vector.broadcast %c14_i32_38 : i32 to vector<256x1xi32>
    %154 = arith.cmpi sle, %103, %153 : vector<256x1xi32>
    %cst_39 = arith.constant 0.000000e+00 : f32
    %155 = vector.shape_cast %154 : vector<256x1xi1> to vector<256x1xi1>
    %156 = vector.broadcast %155 : vector<256x1xi1> to vector<256x32xi1>
    %157 = vector.broadcast %cst_39 : f32 to vector<256x32xf32>
    %158 = arith.select %156, %152, %157 : vector<256x32xi1>, vector<256x32xf32>
    %159 = vector.extract_strided_slice %100 {offsets = [15, 0], sizes = [241, 32], strides = [1, 1]} : vector<256x32xf32> to vector<241x32xf32>
    %160 = vector.extract_strided_slice %100 {offsets = [0, 0], sizes = [15, 32], strides = [1, 1]} : vector<256x32xf32> to vector<15x32xf32>
    %161 = tpu.concatenate %159, %160 in 0 : vector<241x32xf32>, vector<15x32xf32> -> vector<256x32xf32>
    %c14_i32_40 = arith.constant 14 : i32
    %162 = vector.broadcast %c14_i32_40 : i32 to vector<256x1xi32>
    %163 = arith.cmpi sle, %107, %162 : vector<256x1xi32>
    %c1_i32_41 = arith.constant 1 : i32
    %164 = vector.broadcast %c1_i32_41 : i32 to vector<256x1xi32>
    %165 = arith.cmpi sge, %103, %164 : vector<256x1xi32>
    %166 = arith.andi %163, %165 : vector<256x1xi1>
    %cst_42 = arith.constant 0.000000e+00 : f32
    %167 = vector.shape_cast %166 : vector<256x1xi1> to vector<256x1xi1>
    %168 = vector.broadcast %167 : vector<256x1xi1> to vector<256x32xi1>
    %169 = vector.broadcast %cst_42 : f32 to vector<256x32xf32>
    %170 = arith.select %168, %161, %169 : vector<256x32xi1>, vector<256x32xf32>
    %171 = vector.extract_strided_slice %100 {offsets = [16, 0], sizes = [240, 32], strides = [1, 1]} : vector<256x32xf32> to vector<240x32xf32>
    %172 = vector.extract_strided_slice %100 {offsets = [0, 0], sizes = [16, 32], strides = [1, 1]} : vector<256x32xf32> to vector<16x32xf32>
    %173 = tpu.concatenate %171, %172 in 0 : vector<240x32xf32>, vector<16x32xf32> -> vector<256x32xf32>
    %c14_i32_43 = arith.constant 14 : i32
    %174 = vector.broadcast %c14_i32_43 : i32 to vector<256x1xi32>
    %175 = arith.cmpi sle, %107, %174 : vector<256x1xi32>
    %cst_44 = arith.constant 0.000000e+00 : f32
    %176 = vector.shape_cast %175 : vector<256x1xi1> to vector<256x1xi1>
    %177 = vector.broadcast %176 : vector<256x1xi1> to vector<256x32xi1>
    %178 = vector.broadcast %cst_44 : f32 to vector<256x32xf32>
    %179 = arith.select %177, %173, %178 : vector<256x32xi1>, vector<256x32xf32>
    %180 = vector.extract_strided_slice %100 {offsets = [17, 0], sizes = [239, 32], strides = [1, 1]} : vector<256x32xf32> to vector<239x32xf32>
    %181 = vector.extract_strided_slice %100 {offsets = [0, 0], sizes = [17, 32], strides = [1, 1]} : vector<256x32xf32> to vector<17x32xf32>
    %182 = tpu.concatenate %180, %181 in 0 : vector<239x32xf32>, vector<17x32xf32> -> vector<256x32xf32>
    %c14_i32_45 = arith.constant 14 : i32
    %183 = vector.broadcast %c14_i32_45 : i32 to vector<256x1xi32>
    %184 = arith.cmpi sle, %107, %183 : vector<256x1xi32>
    %c14_i32_46 = arith.constant 14 : i32
    %185 = vector.broadcast %c14_i32_46 : i32 to vector<256x1xi32>
    %186 = arith.cmpi sle, %103, %185 : vector<256x1xi32>
    %187 = arith.andi %184, %186 : vector<256x1xi1>
    %cst_47 = arith.constant 0.000000e+00 : f32
    %188 = vector.shape_cast %187 : vector<256x1xi1> to vector<256x1xi1>
    %189 = vector.broadcast %188 : vector<256x1xi1> to vector<256x32xi1>
    %190 = vector.broadcast %cst_47 : f32 to vector<256x32xf32>
    %191 = arith.select %189, %182, %190 : vector<256x32xi1>, vector<256x32xf32>
    %192 = tpu.concatenate %119, %128, %140, %149, %100, %158, %170, %179, %191 in 1 : vector<256x32xf32>, vector<256x32xf32>, vector<256x32xf32>, vector<256x32xf32>, vector<256x32xf32>, vector<256x32xf32>, vector<256x32xf32>, vector<256x32xf32>, vector<256x32xf32> -> vector<256x288xf32>
    %193 = arith.truncf %192 : vector<256x288xf32> to vector<256x288xbf16>
    %c0_48 = arith.constant 0 : index
    %c0_49 = arith.constant 0 : index
    %194 = vector.load %arg4[%c0_48, %c0_49] : memref<288x32xbf16, #tpu.memory_space<vmem>>, vector<288x32xbf16>
    %cst_50 = arith.constant dense<0.000000e+00> : vector<256x32xf32>
    %195 = tpu.matmul %193, %194, %cst_50 {dimension_numbers = #tpu.dot_dimension_numbers<[1], [0], [0], [1], [0, 0, 1, 1], [], []>} : vector<256x288xbf16>, vector<288x32xbf16>, vector<256x32xf32> -> vector<256x32xf32>
    %c0_51 = arith.constant 0 : index
    %c0_52 = arith.constant 0 : index
    %196 = vector.load %arg6[%c0_51, %c0_52] : memref<64x256xf32, #tpu.memory_space<vmem>>, vector<64x256xf32>
    %cst_53 = arith.constant dense<0.000000e+00> : vector<64x32xf32>
    %197 = tpu.matmul %196, %195, %cst_53 {dimension_numbers = #tpu.dot_dimension_numbers<[1], [0], [0], [1], [0, 0, 1, 1], [], []>} : vector<64x256xf32>, vector<256x32xf32>, vector<64x32xf32> -> vector<64x32xf32>
    %c0_54 = arith.constant 0 : index
    %c0_55 = arith.constant 0 : index
    %198 = vector.load %arg5[%c0_54, %c0_55] : memref<1x32xf32, #tpu.memory_space<vmem>>, vector<1x32xf32>
    %199 = vector.broadcast %198 : vector<1x32xf32> to vector<64x32xf32>
    %200 = arith.addf %197, %199 : vector<64x32xf32>
    %cst_56 = arith.constant 0.000000e+00 : f32
    %201 = vector.broadcast %cst_56 : f32 to vector<64x32xf32>
    %202 = arith.maximumf %200, %201 : vector<64x32xf32>
    %203 = tpu.iota {dimensions = array<i32: 0>} : vector<64x1xi32>
    %c7_i32 = arith.constant 7 : i32
    %204 = vector.broadcast %c7_i32 : i32 to vector<64x1xi32>
    %205 = arith.andi %203, %204 : vector<64x1xi32>
    %c3_i32 = arith.constant 3 : i32
    %206 = vector.broadcast %c3_i32 : i32 to vector<64x1xi32>
    %207 = arith.shrsi %203, %206 : vector<64x1xi32>
    %c7_i32_57 = arith.constant 7 : i32
    %208 = vector.broadcast %c7_i32_57 : i32 to vector<64x1xi32>
    %209 = arith.andi %207, %208 : vector<64x1xi32>
    %210 = vector.extract_strided_slice %202 {offsets = [55, 0], sizes = [9, 32], strides = [1, 1]} : vector<64x32xf32> to vector<9x32xf32>
    %211 = vector.extract_strided_slice %202 {offsets = [0, 0], sizes = [55, 32], strides = [1, 1]} : vector<64x32xf32> to vector<55x32xf32>
    %212 = tpu.concatenate %210, %211 in 0 : vector<9x32xf32>, vector<55x32xf32> -> vector<64x32xf32>
    %c1_i32_58 = arith.constant 1 : i32
    %213 = vector.broadcast %c1_i32_58 : i32 to vector<64x1xi32>
    %214 = arith.cmpi sge, %209, %213 : vector<64x1xi32>
    %c1_i32_59 = arith.constant 1 : i32
    %215 = vector.broadcast %c1_i32_59 : i32 to vector<64x1xi32>
    %216 = arith.cmpi sge, %205, %215 : vector<64x1xi32>
    %217 = arith.andi %214, %216 : vector<64x1xi1>
    %cst_60 = arith.constant 0.000000e+00 : f32
    %218 = vector.shape_cast %217 : vector<64x1xi1> to vector<64x1xi1>
    %219 = vector.broadcast %218 : vector<64x1xi1> to vector<64x32xi1>
    %220 = vector.broadcast %cst_60 : f32 to vector<64x32xf32>
    %221 = arith.select %219, %212, %220 : vector<64x32xi1>, vector<64x32xf32>
    %222 = vector.extract_strided_slice %202 {offsets = [56, 0], sizes = [8, 32], strides = [1, 1]} : vector<64x32xf32> to vector<8x32xf32>
    %223 = vector.extract_strided_slice %202 {offsets = [0, 0], sizes = [56, 32], strides = [1, 1]} : vector<64x32xf32> to vector<56x32xf32>
    %224 = tpu.concatenate %222, %223 in 0 : vector<8x32xf32>, vector<56x32xf32> -> vector<64x32xf32>
    %c1_i32_61 = arith.constant 1 : i32
    %225 = vector.broadcast %c1_i32_61 : i32 to vector<64x1xi32>
    %226 = arith.cmpi sge, %209, %225 : vector<64x1xi32>
    %cst_62 = arith.constant 0.000000e+00 : f32
    %227 = vector.shape_cast %226 : vector<64x1xi1> to vector<64x1xi1>
    %228 = vector.broadcast %227 : vector<64x1xi1> to vector<64x32xi1>
    %229 = vector.broadcast %cst_62 : f32 to vector<64x32xf32>
    %230 = arith.select %228, %224, %229 : vector<64x32xi1>, vector<64x32xf32>
    %231 = vector.extract_strided_slice %202 {offsets = [57, 0], sizes = [7, 32], strides = [1, 1]} : vector<64x32xf32> to vector<7x32xf32>
    %232 = vector.extract_strided_slice %202 {offsets = [0, 0], sizes = [57, 32], strides = [1, 1]} : vector<64x32xf32> to vector<57x32xf32>
    %233 = tpu.concatenate %231, %232 in 0 : vector<7x32xf32>, vector<57x32xf32> -> vector<64x32xf32>
    %c1_i32_63 = arith.constant 1 : i32
    %234 = vector.broadcast %c1_i32_63 : i32 to vector<64x1xi32>
    %235 = arith.cmpi sge, %209, %234 : vector<64x1xi32>
    %c6_i32 = arith.constant 6 : i32
    %236 = vector.broadcast %c6_i32 : i32 to vector<64x1xi32>
    %237 = arith.cmpi sle, %205, %236 : vector<64x1xi32>
    %238 = arith.andi %235, %237 : vector<64x1xi1>
    %cst_64 = arith.constant 0.000000e+00 : f32
    %239 = vector.shape_cast %238 : vector<64x1xi1> to vector<64x1xi1>
    %240 = vector.broadcast %239 : vector<64x1xi1> to vector<64x32xi1>
    %241 = vector.broadcast %cst_64 : f32 to vector<64x32xf32>
    %242 = arith.select %240, %233, %241 : vector<64x32xi1>, vector<64x32xf32>
    %243 = vector.extract_strided_slice %202 {offsets = [63, 0], sizes = [1, 32], strides = [1, 1]} : vector<64x32xf32> to vector<1x32xf32>
    %244 = vector.extract_strided_slice %202 {offsets = [0, 0], sizes = [63, 32], strides = [1, 1]} : vector<64x32xf32> to vector<63x32xf32>
    %245 = tpu.concatenate %243, %244 in 0 : vector<1x32xf32>, vector<63x32xf32> -> vector<64x32xf32>
    %c1_i32_65 = arith.constant 1 : i32
    %246 = vector.broadcast %c1_i32_65 : i32 to vector<64x1xi32>
    %247 = arith.cmpi sge, %205, %246 : vector<64x1xi32>
    %cst_66 = arith.constant 0.000000e+00 : f32
    %248 = vector.shape_cast %247 : vector<64x1xi1> to vector<64x1xi1>
    %249 = vector.broadcast %248 : vector<64x1xi1> to vector<64x32xi1>
    %250 = vector.broadcast %cst_66 : f32 to vector<64x32xf32>
    %251 = arith.select %249, %245, %250 : vector<64x32xi1>, vector<64x32xf32>
    %252 = vector.extract_strided_slice %202 {offsets = [1, 0], sizes = [63, 32], strides = [1, 1]} : vector<64x32xf32> to vector<63x32xf32>
    %253 = vector.extract_strided_slice %202 {offsets = [0, 0], sizes = [1, 32], strides = [1, 1]} : vector<64x32xf32> to vector<1x32xf32>
    %254 = tpu.concatenate %252, %253 in 0 : vector<63x32xf32>, vector<1x32xf32> -> vector<64x32xf32>
    %c6_i32_67 = arith.constant 6 : i32
    %255 = vector.broadcast %c6_i32_67 : i32 to vector<64x1xi32>
    %256 = arith.cmpi sle, %205, %255 : vector<64x1xi32>
    %cst_68 = arith.constant 0.000000e+00 : f32
    %257 = vector.shape_cast %256 : vector<64x1xi1> to vector<64x1xi1>
    %258 = vector.broadcast %257 : vector<64x1xi1> to vector<64x32xi1>
    %259 = vector.broadcast %cst_68 : f32 to vector<64x32xf32>
    %260 = arith.select %258, %254, %259 : vector<64x32xi1>, vector<64x32xf32>
    %261 = vector.extract_strided_slice %202 {offsets = [7, 0], sizes = [57, 32], strides = [1, 1]} : vector<64x32xf32> to vector<57x32xf32>
    %262 = vector.extract_strided_slice %202 {offsets = [0, 0], sizes = [7, 32], strides = [1, 1]} : vector<64x32xf32> to vector<7x32xf32>
    %263 = tpu.concatenate %261, %262 in 0 : vector<57x32xf32>, vector<7x32xf32> -> vector<64x32xf32>
    %c6_i32_69 = arith.constant 6 : i32
    %264 = vector.broadcast %c6_i32_69 : i32 to vector<64x1xi32>
    %265 = arith.cmpi sle, %209, %264 : vector<64x1xi32>
    %c1_i32_70 = arith.constant 1 : i32
    %266 = vector.broadcast %c1_i32_70 : i32 to vector<64x1xi32>
    %267 = arith.cmpi sge, %205, %266 : vector<64x1xi32>
    %268 = arith.andi %265, %267 : vector<64x1xi1>
    %cst_71 = arith.constant 0.000000e+00 : f32
    %269 = vector.shape_cast %268 : vector<64x1xi1> to vector<64x1xi1>
    %270 = vector.broadcast %269 : vector<64x1xi1> to vector<64x32xi1>
    %271 = vector.broadcast %cst_71 : f32 to vector<64x32xf32>
    %272 = arith.select %270, %263, %271 : vector<64x32xi1>, vector<64x32xf32>
    %273 = vector.extract_strided_slice %202 {offsets = [8, 0], sizes = [56, 32], strides = [1, 1]} : vector<64x32xf32> to vector<56x32xf32>
    %274 = vector.extract_strided_slice %202 {offsets = [0, 0], sizes = [8, 32], strides = [1, 1]} : vector<64x32xf32> to vector<8x32xf32>
    %275 = tpu.concatenate %273, %274 in 0 : vector<56x32xf32>, vector<8x32xf32> -> vector<64x32xf32>
    %c6_i32_72 = arith.constant 6 : i32
    %276 = vector.broadcast %c6_i32_72 : i32 to vector<64x1xi32>
    %277 = arith.cmpi sle, %209, %276 : vector<64x1xi32>
    %cst_73 = arith.constant 0.000000e+00 : f32
    %278 = vector.shape_cast %277 : vector<64x1xi1> to vector<64x1xi1>
    %279 = vector.broadcast %278 : vector<64x1xi1> to vector<64x32xi1>
    %280 = vector.broadcast %cst_73 : f32 to vector<64x32xf32>
    %281 = arith.select %279, %275, %280 : vector<64x32xi1>, vector<64x32xf32>
    %282 = vector.extract_strided_slice %202 {offsets = [9, 0], sizes = [55, 32], strides = [1, 1]} : vector<64x32xf32> to vector<55x32xf32>
    %283 = vector.extract_strided_slice %202 {offsets = [0, 0], sizes = [9, 32], strides = [1, 1]} : vector<64x32xf32> to vector<9x32xf32>
    %284 = tpu.concatenate %282, %283 in 0 : vector<55x32xf32>, vector<9x32xf32> -> vector<64x32xf32>
    %c6_i32_74 = arith.constant 6 : i32
    %285 = vector.broadcast %c6_i32_74 : i32 to vector<64x1xi32>
    %286 = arith.cmpi sle, %209, %285 : vector<64x1xi32>
    %c6_i32_75 = arith.constant 6 : i32
    %287 = vector.broadcast %c6_i32_75 : i32 to vector<64x1xi32>
    %288 = arith.cmpi sle, %205, %287 : vector<64x1xi32>
    %289 = arith.andi %286, %288 : vector<64x1xi1>
    %cst_76 = arith.constant 0.000000e+00 : f32
    %290 = vector.shape_cast %289 : vector<64x1xi1> to vector<64x1xi1>
    %291 = vector.broadcast %290 : vector<64x1xi1> to vector<64x32xi1>
    %292 = vector.broadcast %cst_76 : f32 to vector<64x32xf32>
    %293 = arith.select %291, %284, %292 : vector<64x32xi1>, vector<64x32xf32>
    %294 = tpu.concatenate %221, %230, %242, %251, %202, %260, %272, %281, %293 in 1 : vector<64x32xf32>, vector<64x32xf32>, vector<64x32xf32>, vector<64x32xf32>, vector<64x32xf32>, vector<64x32xf32>, vector<64x32xf32>, vector<64x32xf32>, vector<64x32xf32> -> vector<64x288xf32>
    %295 = arith.truncf %294 : vector<64x288xf32> to vector<64x288xbf16>
    %c0_77 = arith.constant 0 : index
    %c0_78 = arith.constant 0 : index
    %296 = vector.load %arg7[%c0_77, %c0_78] : memref<288x32xbf16, #tpu.memory_space<vmem>>, vector<288x32xbf16>
    %cst_79 = arith.constant dense<0.000000e+00> : vector<64x32xf32>
    %297 = tpu.matmul %295, %296, %cst_79 {dimension_numbers = #tpu.dot_dimension_numbers<[1], [0], [0], [1], [0, 0, 1, 1], [], []>} : vector<64x288xbf16>, vector<288x32xbf16>, vector<64x32xf32> -> vector<64x32xf32>
    %c0_80 = arith.constant 0 : index
    %c0_81 = arith.constant 0 : index
    %298 = vector.load %arg9[%c0_80, %c0_81] : memref<16x64xf32, #tpu.memory_space<vmem>>, vector<16x64xf32>
    %cst_82 = arith.constant dense<0.000000e+00> : vector<16x32xf32>
    %299 = tpu.matmul %298, %297, %cst_82 {dimension_numbers = #tpu.dot_dimension_numbers<[1], [0], [0], [1], [0, 0, 1, 1], [], []>} : vector<16x64xf32>, vector<64x32xf32>, vector<16x32xf32> -> vector<16x32xf32>
    %c0_83 = arith.constant 0 : index
    %c0_84 = arith.constant 0 : index
    %300 = vector.load %arg8[%c0_83, %c0_84] : memref<1x32xf32, #tpu.memory_space<vmem>>, vector<1x32xf32>
    %301 = vector.broadcast %300 : vector<1x32xf32> to vector<16x32xf32>
    %302 = arith.addf %299, %301 : vector<16x32xf32>
    %cst_85 = arith.constant 0.000000e+00 : f32
    %303 = vector.broadcast %cst_85 : f32 to vector<16x32xf32>
    %304 = arith.maximumf %302, %303 : vector<16x32xf32>
    %305 = tpu.iota {dimensions = array<i32: 0>} : vector<16x1xi32>
    %c3_i32_86 = arith.constant 3 : i32
    %306 = vector.broadcast %c3_i32_86 : i32 to vector<16x1xi32>
    %307 = arith.andi %305, %306 : vector<16x1xi32>
    %c2_i32 = arith.constant 2 : i32
    %308 = vector.broadcast %c2_i32 : i32 to vector<16x1xi32>
    %309 = arith.shrsi %305, %308 : vector<16x1xi32>
    %c3_i32_87 = arith.constant 3 : i32
    %310 = vector.broadcast %c3_i32_87 : i32 to vector<16x1xi32>
    %311 = arith.andi %309, %310 : vector<16x1xi32>
    %312 = vector.extract_strided_slice %304 {offsets = [11, 0], sizes = [5, 32], strides = [1, 1]} : vector<16x32xf32> to vector<5x32xf32>
    %313 = vector.extract_strided_slice %304 {offsets = [0, 0], sizes = [11, 32], strides = [1, 1]} : vector<16x32xf32> to vector<11x32xf32>
    %314 = tpu.concatenate %312, %313 in 0 : vector<5x32xf32>, vector<11x32xf32> -> vector<16x32xf32>
    %c1_i32_88 = arith.constant 1 : i32
    %315 = vector.broadcast %c1_i32_88 : i32 to vector<16x1xi32>
    %316 = arith.cmpi sge, %311, %315 : vector<16x1xi32>
    %c1_i32_89 = arith.constant 1 : i32
    %317 = vector.broadcast %c1_i32_89 : i32 to vector<16x1xi32>
    %318 = arith.cmpi sge, %307, %317 : vector<16x1xi32>
    %319 = arith.andi %316, %318 : vector<16x1xi1>
    %cst_90 = arith.constant 0.000000e+00 : f32
    %320 = vector.shape_cast %319 : vector<16x1xi1> to vector<16x1xi1>
    %321 = vector.broadcast %320 : vector<16x1xi1> to vector<16x32xi1>
    %322 = vector.broadcast %cst_90 : f32 to vector<16x32xf32>
    %323 = arith.select %321, %314, %322 : vector<16x32xi1>, vector<16x32xf32>
    %324 = vector.extract_strided_slice %304 {offsets = [12, 0], sizes = [4, 32], strides = [1, 1]} : vector<16x32xf32> to vector<4x32xf32>
    %325 = vector.extract_strided_slice %304 {offsets = [0, 0], sizes = [12, 32], strides = [1, 1]} : vector<16x32xf32> to vector<12x32xf32>
    %326 = tpu.concatenate %324, %325 in 0 : vector<4x32xf32>, vector<12x32xf32> -> vector<16x32xf32>
    %c1_i32_91 = arith.constant 1 : i32
    %327 = vector.broadcast %c1_i32_91 : i32 to vector<16x1xi32>
    %328 = arith.cmpi sge, %311, %327 : vector<16x1xi32>
    %cst_92 = arith.constant 0.000000e+00 : f32
    %329 = vector.shape_cast %328 : vector<16x1xi1> to vector<16x1xi1>
    %330 = vector.broadcast %329 : vector<16x1xi1> to vector<16x32xi1>
    %331 = vector.broadcast %cst_92 : f32 to vector<16x32xf32>
    %332 = arith.select %330, %326, %331 : vector<16x32xi1>, vector<16x32xf32>
    %333 = vector.extract_strided_slice %304 {offsets = [13, 0], sizes = [3, 32], strides = [1, 1]} : vector<16x32xf32> to vector<3x32xf32>
    %334 = vector.extract_strided_slice %304 {offsets = [0, 0], sizes = [13, 32], strides = [1, 1]} : vector<16x32xf32> to vector<13x32xf32>
    %335 = tpu.concatenate %333, %334 in 0 : vector<3x32xf32>, vector<13x32xf32> -> vector<16x32xf32>
    %c1_i32_93 = arith.constant 1 : i32
    %336 = vector.broadcast %c1_i32_93 : i32 to vector<16x1xi32>
    %337 = arith.cmpi sge, %311, %336 : vector<16x1xi32>
    %c2_i32_94 = arith.constant 2 : i32
    %338 = vector.broadcast %c2_i32_94 : i32 to vector<16x1xi32>
    %339 = arith.cmpi sle, %307, %338 : vector<16x1xi32>
    %340 = arith.andi %337, %339 : vector<16x1xi1>
    %cst_95 = arith.constant 0.000000e+00 : f32
    %341 = vector.shape_cast %340 : vector<16x1xi1> to vector<16x1xi1>
    %342 = vector.broadcast %341 : vector<16x1xi1> to vector<16x32xi1>
    %343 = vector.broadcast %cst_95 : f32 to vector<16x32xf32>
    %344 = arith.select %342, %335, %343 : vector<16x32xi1>, vector<16x32xf32>
    %345 = vector.extract_strided_slice %304 {offsets = [15, 0], sizes = [1, 32], strides = [1, 1]} : vector<16x32xf32> to vector<1x32xf32>
    %346 = vector.extract_strided_slice %304 {offsets = [0, 0], sizes = [15, 32], strides = [1, 1]} : vector<16x32xf32> to vector<15x32xf32>
    %347 = tpu.concatenate %345, %346 in 0 : vector<1x32xf32>, vector<15x32xf32> -> vector<16x32xf32>
    %c1_i32_96 = arith.constant 1 : i32
    %348 = vector.broadcast %c1_i32_96 : i32 to vector<16x1xi32>
    %349 = arith.cmpi sge, %307, %348 : vector<16x1xi32>
    %cst_97 = arith.constant 0.000000e+00 : f32
    %350 = vector.shape_cast %349 : vector<16x1xi1> to vector<16x1xi1>
    %351 = vector.broadcast %350 : vector<16x1xi1> to vector<16x32xi1>
    %352 = vector.broadcast %cst_97 : f32 to vector<16x32xf32>
    %353 = arith.select %351, %347, %352 : vector<16x32xi1>, vector<16x32xf32>
    %354 = vector.extract_strided_slice %304 {offsets = [1, 0], sizes = [15, 32], strides = [1, 1]} : vector<16x32xf32> to vector<15x32xf32>
    %355 = vector.extract_strided_slice %304 {offsets = [0, 0], sizes = [1, 32], strides = [1, 1]} : vector<16x32xf32> to vector<1x32xf32>
    %356 = tpu.concatenate %354, %355 in 0 : vector<15x32xf32>, vector<1x32xf32> -> vector<16x32xf32>
    %c2_i32_98 = arith.constant 2 : i32
    %357 = vector.broadcast %c2_i32_98 : i32 to vector<16x1xi32>
    %358 = arith.cmpi sle, %307, %357 : vector<16x1xi32>
    %cst_99 = arith.constant 0.000000e+00 : f32
    %359 = vector.shape_cast %358 : vector<16x1xi1> to vector<16x1xi1>
    %360 = vector.broadcast %359 : vector<16x1xi1> to vector<16x32xi1>
    %361 = vector.broadcast %cst_99 : f32 to vector<16x32xf32>
    %362 = arith.select %360, %356, %361 : vector<16x32xi1>, vector<16x32xf32>
    %363 = vector.extract_strided_slice %304 {offsets = [3, 0], sizes = [13, 32], strides = [1, 1]} : vector<16x32xf32> to vector<13x32xf32>
    %364 = vector.extract_strided_slice %304 {offsets = [0, 0], sizes = [3, 32], strides = [1, 1]} : vector<16x32xf32> to vector<3x32xf32>
    %365 = tpu.concatenate %363, %364 in 0 : vector<13x32xf32>, vector<3x32xf32> -> vector<16x32xf32>
    %c2_i32_100 = arith.constant 2 : i32
    %366 = vector.broadcast %c2_i32_100 : i32 to vector<16x1xi32>
    %367 = arith.cmpi sle, %311, %366 : vector<16x1xi32>
    %c1_i32_101 = arith.constant 1 : i32
    %368 = vector.broadcast %c1_i32_101 : i32 to vector<16x1xi32>
    %369 = arith.cmpi sge, %307, %368 : vector<16x1xi32>
    %370 = arith.andi %367, %369 : vector<16x1xi1>
    %cst_102 = arith.constant 0.000000e+00 : f32
    %371 = vector.shape_cast %370 : vector<16x1xi1> to vector<16x1xi1>
    %372 = vector.broadcast %371 : vector<16x1xi1> to vector<16x32xi1>
    %373 = vector.broadcast %cst_102 : f32 to vector<16x32xf32>
    %374 = arith.select %372, %365, %373 : vector<16x32xi1>, vector<16x32xf32>
    %375 = vector.extract_strided_slice %304 {offsets = [4, 0], sizes = [12, 32], strides = [1, 1]} : vector<16x32xf32> to vector<12x32xf32>
    %376 = vector.extract_strided_slice %304 {offsets = [0, 0], sizes = [4, 32], strides = [1, 1]} : vector<16x32xf32> to vector<4x32xf32>
    %377 = tpu.concatenate %375, %376 in 0 : vector<12x32xf32>, vector<4x32xf32> -> vector<16x32xf32>
    %c2_i32_103 = arith.constant 2 : i32
    %378 = vector.broadcast %c2_i32_103 : i32 to vector<16x1xi32>
    %379 = arith.cmpi sle, %311, %378 : vector<16x1xi32>
    %cst_104 = arith.constant 0.000000e+00 : f32
    %380 = vector.shape_cast %379 : vector<16x1xi1> to vector<16x1xi1>
    %381 = vector.broadcast %380 : vector<16x1xi1> to vector<16x32xi1>
    %382 = vector.broadcast %cst_104 : f32 to vector<16x32xf32>
    %383 = arith.select %381, %377, %382 : vector<16x32xi1>, vector<16x32xf32>
    %384 = vector.extract_strided_slice %304 {offsets = [5, 0], sizes = [11, 32], strides = [1, 1]} : vector<16x32xf32> to vector<11x32xf32>
    %385 = vector.extract_strided_slice %304 {offsets = [0, 0], sizes = [5, 32], strides = [1, 1]} : vector<16x32xf32> to vector<5x32xf32>
    %386 = tpu.concatenate %384, %385 in 0 : vector<11x32xf32>, vector<5x32xf32> -> vector<16x32xf32>
    %c2_i32_105 = arith.constant 2 : i32
    %387 = vector.broadcast %c2_i32_105 : i32 to vector<16x1xi32>
    %388 = arith.cmpi sle, %311, %387 : vector<16x1xi32>
    %c2_i32_106 = arith.constant 2 : i32
    %389 = vector.broadcast %c2_i32_106 : i32 to vector<16x1xi32>
    %390 = arith.cmpi sle, %307, %389 : vector<16x1xi32>
    %391 = arith.andi %388, %390 : vector<16x1xi1>
    %cst_107 = arith.constant 0.000000e+00 : f32
    %392 = vector.shape_cast %391 : vector<16x1xi1> to vector<16x1xi1>
    %393 = vector.broadcast %392 : vector<16x1xi1> to vector<16x32xi1>
    %394 = vector.broadcast %cst_107 : f32 to vector<16x32xf32>
    %395 = arith.select %393, %386, %394 : vector<16x32xi1>, vector<16x32xf32>
    %396 = tpu.concatenate %323, %332, %344, %353, %304, %362, %374, %383, %395 in 1 : vector<16x32xf32>, vector<16x32xf32>, vector<16x32xf32>, vector<16x32xf32>, vector<16x32xf32>, vector<16x32xf32>, vector<16x32xf32>, vector<16x32xf32>, vector<16x32xf32> -> vector<16x288xf32>
    %397 = arith.truncf %396 : vector<16x288xf32> to vector<16x288xbf16>
    %c0_108 = arith.constant 0 : index
    %c0_109 = arith.constant 0 : index
    %398 = vector.load %arg10[%c0_108, %c0_109] : memref<288x150xbf16, #tpu.memory_space<vmem>>, vector<288x150xbf16>
    %cst_110 = arith.constant dense<0.000000e+00> : vector<64x150xf32>
    %399 = tpu.matmul %295, %398, %cst_110 {dimension_numbers = #tpu.dot_dimension_numbers<[1], [0], [0], [1], [0, 0, 1, 1], [], []>} : vector<64x288xbf16>, vector<288x150xbf16>, vector<64x150xf32> -> vector<64x150xf32>
    %c0_111 = arith.constant 0 : index
    %c0_112 = arith.constant 0 : index
    %400 = vector.load %arg11[%c0_111, %c0_112] : memref<1x150xf32, #tpu.memory_space<vmem>>, vector<1x150xf32>
    %401 = vector.broadcast %400 : vector<1x150xf32> to vector<64x150xf32>
    %402 = arith.addf %399, %401 : vector<64x150xf32>
    %c0_113 = arith.constant 0 : index
    %c0_114 = arith.constant 0 : index
    %403 = vector.load %arg10[%c0_113, %c0_114] : memref<288x150xbf16, #tpu.memory_space<vmem>>, vector<288x150xbf16>
    %cst_115 = arith.constant dense<0.000000e+00> : vector<16x150xf32>
    %404 = tpu.matmul %397, %403, %cst_115 {dimension_numbers = #tpu.dot_dimension_numbers<[1], [0], [0], [1], [0, 0, 1, 1], [], []>} : vector<16x288xbf16>, vector<288x150xbf16>, vector<16x150xf32> -> vector<16x150xf32>
    %c0_116 = arith.constant 0 : index
    %c0_117 = arith.constant 0 : index
    %405 = vector.load %arg11[%c0_116, %c0_117] : memref<1x150xf32, #tpu.memory_space<vmem>>, vector<1x150xf32>
    %406 = vector.broadcast %405 : vector<1x150xf32> to vector<16x150xf32>
    %407 = arith.addf %404, %406 : vector<16x150xf32>
    %408 = tpu.concatenate %402, %407 in 0 : vector<64x150xf32>, vector<16x150xf32> -> vector<80x150xf32>
    %409 = tpu.iota {dimensions = array<i32: 1>} : vector<1x150xi32>
    %c24_i32 = arith.constant 24 : i32
    %410 = vector.broadcast %c24_i32 : i32 to vector<1x150xi32>
    %411 = arith.cmpi sge, %409, %410 : vector<1x150xi32>
    %cst_118 = arith.constant 0xFF800000 : f32
    %412 = vector.shape_cast %411 : vector<1x150xi1> to vector<1x150xi1>
    %413 = vector.broadcast %412 : vector<1x150xi1> to vector<80x150xi1>
    %414 = vector.broadcast %cst_118 : f32 to vector<80x150xf32>
    %415 = arith.select %413, %408, %414 : vector<80x150xi1>, vector<80x150xf32>
    %cst_119 = arith.constant dense<0xFF800000> : vector<80xf32>
    %416 = vector.multi_reduction <maximumf>, %415, %cst_119 [1] : vector<80x150xf32> to vector<80xf32>
    %417 = vector.shape_cast %416 : vector<80xf32> to vector<80x1xf32>
    %418 = vector.broadcast %417 : vector<80x1xf32> to vector<80x150xf32>
    %419 = arith.subf %408, %418 : vector<80x150xf32>
    %cst_120 = arith.constant 0.000000e+00 : f32
    %420 = vector.shape_cast %411 : vector<1x150xi1> to vector<1x150xi1>
    %421 = vector.broadcast %420 : vector<1x150xi1> to vector<80x150xi1>
    %422 = vector.broadcast %cst_120 : f32 to vector<80x150xf32>
    %423 = arith.select %421, %419, %422 : vector<80x150xi1>, vector<80x150xf32>
    %424 = math.exp %423 : vector<80x150xf32>
    %cst_121 = arith.constant 0.000000e+00 : f32
    %425 = vector.shape_cast %411 : vector<1x150xi1> to vector<1x150xi1>
    %426 = vector.broadcast %425 : vector<1x150xi1> to vector<80x150xi1>
    %427 = vector.broadcast %cst_121 : f32 to vector<80x150xf32>
    %428 = arith.select %426, %424, %427 : vector<80x150xi1>, vector<80x150xf32>
    %c0_122 = arith.constant 0 : index
    %c0_123 = arith.constant 0 : index
    %429 = vector.load %arg12[%c0_122, %c0_123] : memref<150x150xf32, #tpu.memory_space<vmem>>, vector<150x150xf32>
    %cst_124 = arith.constant dense<0.000000e+00> : vector<80x150xf32>
    %430 = tpu.matmul %428, %429, %cst_124 {dimension_numbers = #tpu.dot_dimension_numbers<[1], [0], [0], [1], [0, 0, 1, 1], [], []>} : vector<80x150xf32>, vector<150x150xf32>, vector<80x150xf32> -> vector<80x150xf32>
    %cst_125 = arith.constant 0.000000e+00 : f32
    %cst_126 = arith.constant 1.000000e+00 : f32
    %431 = vector.broadcast %cst_125 : f32 to vector<1x150xf32>
    %432 = vector.broadcast %cst_126 : f32 to vector<1x150xf32>
    %433 = arith.select %411, %431, %432 : vector<1x150xi1>, vector<1x150xf32>
    %434 = vector.broadcast %433 : vector<1x150xf32> to vector<80x150xf32>
    %435 = arith.addf %430, %434 : vector<80x150xf32>
    %cst_127 = arith.constant 1.000000e-30 : f32
    %436 = vector.broadcast %cst_127 : f32 to vector<80x150xf32>
    %437 = arith.maximumf %435, %436 : vector<80x150xf32>
    %438 = arith.divf %428, %437 : vector<80x150xf32>
    %439 = vector.shape_cast %411 : vector<1x150xi1> to vector<1x150xi1>
    %440 = vector.broadcast %439 : vector<1x150xi1> to vector<80x150xi1>
    %441 = arith.select %440, %438, %408 : vector<80x150xi1>, vector<80x150xf32>
    %c0_128 = arith.constant 0 : index
    %c0_129 = arith.constant 0 : index
    %442 = vector.load %arg13[%c0_128, %c0_129] : memref<80x150xf32, #tpu.memory_space<vmem>>, vector<80x150xf32>
    tpu.vector_store %arg13[%c0_128, %c0_129], %441 {strides = array<i32>} : memref<80x150xf32, #tpu.memory_space<vmem>>, vector<80x150xf32>,
    return
  }
  func.func @transform_0(%arg0: i32) -> (i32, i32) {
    %c0_i32 = arith.constant 0 : i32
    %c0_i32_0 = arith.constant 0 : i32
    return %arg0, %c0_i32 : i32, i32
  }
  func.func @transform_1(%arg0: i32) -> (i32, i32) {
    %c0_i32 = arith.constant 0 : i32
    %c0_i32_0 = arith.constant 0 : i32
    %c0_i32_1 = arith.constant 0 : i32
    return %c0_i32, %c0_i32_0 : i32, i32
  }
  func.func @transform_2(%arg0: i32) -> (i32, i32) {
    %c0_i32 = arith.constant 0 : i32
    %c0_i32_0 = arith.constant 0 : i32
    %c0_i32_1 = arith.constant 0 : i32
    return %c0_i32, %c0_i32_0 : i32, i32
  }
  func.func @transform_3(%arg0: i32) -> (i32, i32) {
    %c0_i32 = arith.constant 0 : i32
    %c0_i32_0 = arith.constant 0 : i32
    %c0_i32_1 = arith.constant 0 : i32
    return %c0_i32, %c0_i32_0 : i32, i32
  }
  func.func @transform_4(%arg0: i32) -> (i32, i32) {
    %c0_i32 = arith.constant 0 : i32
    %c0_i32_0 = arith.constant 0 : i32
    %c0_i32_1 = arith.constant 0 : i32
    return %c0_i32, %c0_i32_0 : i32, i32
  }
  func.func @transform_5(%arg0: i32) -> (i32, i32) {
    %c0_i32 = arith.constant 0 : i32
    %c0_i32_0 = arith.constant 0 : i32
    %c0_i32_1 = arith.constant 0 : i32
    return %c0_i32, %c0_i32_0 : i32, i32
  }
  func.func @transform_6(%arg0: i32) -> (i32, i32) {
    %c0_i32 = arith.constant 0 : i32
    %c0_i32_0 = arith.constant 0 : i32
    %c0_i32_1 = arith.constant 0 : i32
    return %c0_i32, %c0_i32_0 : i32, i32
  }
  func.func @transform_7(%arg0: i32) -> (i32, i32) {
    %c0_i32 = arith.constant 0 : i32
    %c0_i32_0 = arith.constant 0 : i32
    %c0_i32_1 = arith.constant 0 : i32
    return %c0_i32, %c0_i32_0 : i32, i32
  }
  func.func @transform_8(%arg0: i32) -> (i32, i32) {
    %c0_i32 = arith.constant 0 : i32
    %c0_i32_0 = arith.constant 0 : i32
    %c0_i32_1 = arith.constant 0 : i32
    return %c0_i32, %c0_i32_0 : i32, i32
  }
  func.func @transform_9(%arg0: i32) -> (i32, i32) {
    %c0_i32 = arith.constant 0 : i32
    %c0_i32_0 = arith.constant 0 : i32
    %c0_i32_1 = arith.constant 0 : i32
    return %c0_i32, %c0_i32_0 : i32, i32
  }
  func.func @transform_10(%arg0: i32) -> (i32, i32) {
    %c0_i32 = arith.constant 0 : i32
    %c0_i32_0 = arith.constant 0 : i32
    %c0_i32_1 = arith.constant 0 : i32
    return %c0_i32, %c0_i32_0 : i32, i32
  }
  func.func @transform_11(%arg0: i32) -> (i32, i32) {
    %c0_i32 = arith.constant 0 : i32
    %c0_i32_0 = arith.constant 0 : i32
    %c0_i32_1 = arith.constant 0 : i32
    return %c0_i32, %c0_i32_0 : i32, i32
  }
  func.func @transform_12(%arg0: i32) -> (i32, i32) {
    %c0_i32 = arith.constant 0 : i32
    %c0_i32_0 = arith.constant 0 : i32
    return %arg0, %c0_i32 : i32, i32
  }
}

</mosaic_0001>

<llo_original>
// kernel: fwd.1
$region0: #{fwd.1}
  #allocation0 [shape = 'u32[]', space=smem, size = 0x4, offset = 0x4, fixed_abs, tag = 'smem constant byte address 0x4 - core index']
  #allocation1 [shape = 'u32[144,128]{1,0:T(1,128)}', space=vmem, size = 0x12000, scoped, tag = 'internal scratch']
  %s0 = inlined_call_operand.vmem [shape: f32[512,4], index: 0, kind: input, shape index: {}]
  %s1 = inlined_call_operand.vmem [shape: bf16[36,32], index: 1, kind: input, shape index: {}]
  %s2 = inlined_call_operand.vmem [shape: f32[1,32], index: 2, kind: input, shape index: {}]
  %s3 = inlined_call_operand.vmem [shape: bf16[288,32], index: 3, kind: input, shape index: {}]
  %s4 = inlined_call_operand.vmem [shape: f32[1,32], index: 4, kind: input, shape index: {}]
  %s5 = inlined_call_operand.vmem [shape: f32[64,256], index: 5, kind: input, shape index: {}]
  %s6 = inlined_call_operand.vmem [shape: bf16[288,32], index: 6, kind: input, shape index: {}]
  %s7 = inlined_call_operand.vmem [shape: f32[1,32], index: 7, kind: input, shape index: {}]
  %s8 = inlined_call_operand.vmem [shape: f32[16,64], index: 8, kind: input, shape index: {}]
  %s9 = inlined_call_operand.vmem [shape: bf16[288,150], index: 9, kind: input, shape index: {}]
  %s10 = inlined_call_operand.vmem [shape: f32[1,150], index: 10, kind: input, shape index: {}]
  %s11 = inlined_call_operand.vmem [shape: f32[150,150], index: 11, kind: input, shape index: {}]
  %s12 = inlined_call_operand.vmem [shape: f32[160,150], index: 12, kind: output, shape index: {}]
  %s13 = sld [smem:[#allocation0]]
  $region81: #{fwd.1} parent=0
    _
  %s15 = ssub.s32 1, %s13
  %s16 = scalar_select 0, %s15, %s13
  loop: start=0, step=1, limit=4
  $region2: #{fwd.1} parent=0 // loop_pre_header
    _
  $region3: #{fwd.1} parent=0 // loop_header
    %s18 = sphi 0, %s22
    %p19 = scmp.ge.s32.totalorder %s18, 4
    %s28 = sphi 0, %s30
    %s31 = sphi 0, %s28
    %s32 = sphi 0, %s31
    %s48 = sphi 0, %s32
    %s52 = sphi 0, %s52
    %s54 = sphi 0, %s52
    %s55 = sphi 0, %s54
    %s69 = sphi 0, %s55
    %s73 = sphi 0, %s73
    %s75 = sphi 0, %s73
    %s76 = sphi 0, %s75
    %s90 = sphi 0, %s76
    %s94 = sphi 0, %s94
    %s96 = sphi 0, %s94
    %s97 = sphi 0, %s96
    %s111 = sphi 0, %s97
    %s115 = sphi 0, %s115
    %s117 = sphi 0, %s115
    %s118 = sphi 0, %s117
    %s132 = sphi 0, %s118
    %s136 = sphi 0, %s136
    %s138 = sphi 0, %s136
    %s139 = sphi 0, %s138
    %s153 = sphi 0, %s139
    %s157 = sphi 0, %s157
    %s159 = sphi 0, %s157
    %s160 = sphi 0, %s159
    %s174 = sphi 0, %s160
    %s178 = sphi 0, %s178
    %s180 = sphi 0, %s178
    %s181 = sphi 0, %s180
    %s195 = sphi 0, %s181
    %s199 = sphi 0, %s199
    %s201 = sphi 0, %s199
    %s202 = sphi 0, %s201
    %s216 = sphi 0, %s202
    %s220 = sphi 0, %s220
    %s222 = sphi 0, %s220
    %s223 = sphi 0, %s222
    %s237 = sphi 0, %s223
    %s241 = sphi 0, %s241
    %s243 = sphi 0, %s241
    %s244 = sphi 0, %s243
    %s258 = sphi 0, %s244
    %s262 = sphi 0, %s262
    %s264 = sphi 0, %s262
    %s265 = sphi 0, %s264
    %s279 = sphi 0, %s265
    %s285 = sphi 0, %s287
    %s288 = sphi 0, %s285
    %s289 = sphi 0, %s288
    %s305 = sphi 0, %s289
  $region4: #{fwd.1} parent=0 // loop_header_branch
    %21 = sbr.rel (%p19) target = $region8
  $region5: #{fwd.1} parent=0 // loop_body
    %s23 = ssub.s32 %s18, 1
    %s24 = ssub.s32 %s18, 2
    %s25 = sadd.s32 %s18, 1
    %s26 = ssub.s32 %s18, %s25
    %p27 = scmp.eq.s32.totalorder %s26, 0
    %s29 = sadd.s32 %s28, 1
    %s30 = scalar_select %p27, %s28, %s29
    %p33 = pneg %p27
    %p34 = scmp.eq.s32.totalorder %s18, 1
    %p35 = por %p33, %p34
    %p36 = scmp.ne.s32.totalorder %s28, %s31
    %p37 = scmp.eq.s32.totalorder %s18, 0
    %p38 = por %p36, %p37
    %p39 = scmp.ne.s32.totalorder %s28, %s31
    %p40 = scmp.eq.s32.totalorder %s23, 1
    %p41 = por %p39, %p40
    %p42 = scmp.ne.s32.totalorder %s31, %s32
    %p43 = scmp.eq.s32.totalorder %s23, 0
    %p44 = por %p42, %p43
    %p45 = scmp.ne.s32.totalorder %s31, %s32
    %p46 = scmp.eq.s32.totalorder %s24, 1
    %p47 = por %p45, %p46
    %p49 = scmp.ne.s32.totalorder %s32, %s48
    %p50 = scmp.eq.s32.totalorder %s24, 0
    %p51 = por %p49, %p50
    %s53 = sadd.s32 %s52, 1
    %p56 = scmp.eq.s32.totalorder %s18, 1
    %p57 = scmp.ne.s32.totalorder %s52, %s54
    %p58 = scmp.eq.s32.totalorder %s18, 0
    %p59 = por %p57, %p58
    %p60 = scmp.ne.s32.totalorder %s52, %s54
    %p61 = scmp.eq.s32.totalorder %s23, 1
    %p62 = por %p60, %p61
    %p63 = scmp.ne.s32.totalorder %s54, %s55
    %p64 = scmp.eq.s32.totalorder %s23, 0
    %p65 = por %p63, %p64
    %p66 = scmp.ne.s32.totalorder %s54, %s55
    %p67 = scmp.eq.s32.totalorder %s24, 1
    %p68 = por %p66, %p67
    %p70 = scmp.ne.s32.totalorder %s55, %s69
    %p71 = scmp.eq.s32.totalorder %s24, 0
    %p72 = por %p70, %p71
    %s74 = sadd.s32 %s73, 1
    %p77 = scmp.eq.s32.totalorder %s18, 1
    %p78 = scmp.ne.s32.totalorder %s73, %s75
    %p79 = scmp.eq.s32.totalorder %s18, 0
    %p80 = por %p78, %p79
    %p81 = scmp.ne.s32.totalorder %s73, %s75
    %p82 = scmp.eq.s32.totalorder %s23, 1
    %p83 = por %p81, %p82
    %p84 = scmp.ne.s32.totalorder %s75, %s76
    %p85 = scmp.eq.s32.totalorder %s23, 0
    %p86 = por %p84, %p85
    %p87 = scmp.ne.s32.totalorder %s75, %s76
    %p88 = scmp.eq.s32.totalorder %s24, 1
    %p89 = por %p87, %p88
    %p91 = scmp.ne.s32.totalorder %s76, %s90
    %p92 = scmp.eq.s32.totalorder %s24, 0
    %p93 = por %p91, %p92
    %s95 = sadd.s32 %s94, 1
    %p98 = scmp.eq.s32.totalorder %s18, 1
    %p99 = scmp.ne.s32.totalorder %s94, %s96
    %p100 = scmp.eq.s32.totalorder %s18, 0
    %p101 = por %p99, %p100
    %p102 = scmp.ne.s32.totalorder %s94, %s96
    %p103 = scmp.eq.s32.totalorder %s23, 1
    %p104 = por %p102, %p103
    %p105 = scmp.ne.s32.totalorder %s96, %s97
    %p106 = scmp.eq.s32.totalorder %s23, 0
    %p107 = por %p105, %p106
    %p108 = scmp.ne.s32.totalorder %s96, %s97
    %p109 = scmp.eq.s32.totalorder %s24, 1
    %p110 = por %p108, %p109
    %p112 = scmp.ne.s32.totalorder %s97, %s111
    %p113 = scmp.eq.s32.totalorder %s24, 0
    %p114 = por %p112, %p113
    %s116 = sadd.s32 %s115, 1
    %p119 = scmp.eq.s32.totalorder %s18, 1
    %p120 = scmp.ne.s32.totalorder %s115, %s117
    %p121 = scmp.eq.s32.totalorder %s18, 0
    %p122 = por %p120, %p121
    %p123 = scmp.ne.s32.totalorder %s115, %s117
    %p124 = scmp.eq.s32.totalorder %s23, 1
    %p125 = por %p123, %p124
    %p126 = scmp.ne.s32.totalorder %s117, %s118
    %p127 = scmp.eq.s32.totalorder %s23, 0
    %p128 = por %p126, %p127
    %p129 = scmp.ne.s32.totalorder %s117, %s118
    %p130 = scmp.eq.s32.totalorder %s24, 1
    %p131 = por %p129, %p130
    %p133 = scmp.ne.s32.totalorder %s118, %s132
    %p134 = scmp.eq.s32.totalorder %s24, 0
    %p135 = por %p133, %p134
    %s137 = sadd.s32 %s136, 1
    %p140 = scmp.eq.s32.totalorder %s18, 1
    %p141 = scmp.ne.s32.totalorder %s136, %s138
    %p142 = scmp.eq.s32.totalorder %s18, 0
    %p143 = por %p141, %p142
    %p144 = scmp.ne.s32.totalorder %s136, %s138
    %p145 = scmp.eq.s32.totalorder %s23, 1
    %p146 = por %p144, %p145
    %p147 = scmp.ne.s32.totalorder %s138, %s139
    %p148 = scmp.eq.s32.totalorder %s23, 0
    %p149 = por %p147, %p148
    %p150 = scmp.ne.s32.totalorder %s138, %s139
    %p151 = scmp.eq.s32.totalorder %s24, 1
    %p152 = por %p150, %p151
    %p154 = scmp.ne.s32.totalorder %s139, %s153
    %p155 = scmp.eq.s32.totalorder %s24, 0
    %p156 = por %p154, %p155
    %s158 = sadd.s32 %s157, 1
    %p161 = scmp.eq.s32.totalorder %s18, 1
    %p162 = scmp.ne.s32.totalorder %s157, %s159
    %p163 = scmp.eq.s32.totalorder %s18, 0
    %p164 = por %p162, %p163
    %p165 = scmp.ne.s32.totalorder %s157, %s159
    %p166 = scmp.eq.s32.totalorder %s23, 1
    %p167 = por %p165, %p166
    %p168 = scmp.ne.s32.totalorder %s159, %s160
    %p169 = scmp.eq.s32.totalorder %s23, 0
    %p170 = por %p168, %p169
    %p171 = scmp.ne.s32.totalorder %s159, %s160
    %p172 = scmp.eq.s32.totalorder %s24, 1
    %p173 = por %p171, %p172
    %p175 = scmp.ne.s32.totalorder %s160, %s174
    %p176 = scmp.eq.s32.totalorder %s24, 0
    %p177 = por %p175, %p176
    %s179 = sadd.s32 %s178, 1
    %p182 = scmp.eq.s32.totalorder %s18, 1
    %p183 = scmp.ne.s32.totalorder %s178, %s180
    %p184 = scmp.eq.s32.totalorder %s18, 0
    %p185 = por %p183, %p184
    %p186 = scmp.ne.s32.totalorder %s178, %s180
    %p187 = scmp.eq.s32.totalorder %s23, 1
    %p188 = por %p186, %p187
    %p189 = scmp.ne.s32.totalorder %s180, %s181
    %p190 = scmp.eq.s32.totalorder %s23, 0
    %p191 = por %p189, %p190
    %p192 = scmp.ne.s32.totalorder %s180, %s181
    %p193 = scmp.eq.s32.totalorder %s24, 1
    %p194 = por %p192, %p193
    %p196 = scmp.ne.s32.totalorder %s181, %s195
    %p197 = scmp.eq.s32.totalorder %s24, 0
    %p198 = por %p196, %p197
    %s200 = sadd.s32 %s199, 1
    %p203 = scmp.eq.s32.totalorder %s18, 1
    %p204 = scmp.ne.s32.totalorder %s199, %s201
    %p205 = scmp.eq.s32.totalorder %s18, 0
    %p206 = por %p204, %p205
    %p207 = scmp.ne.s32.totalorder %s199, %s201
    %p208 = scmp.eq.s32.totalorder %s23, 1
    %p209 = por %p207, %p208
    %p210 = scmp.ne.s32.totalorder %s201, %s202
    %p211 = scmp.eq.s32.totalorder %s23, 0
    %p212 = por %p210, %p211
    %p213 = scmp.ne.s32.totalorder %s201, %s202
    %p214 = scmp.eq.s32.totalorder %s24, 1
    %p215 = por %p213, %p214
    %p217 = scmp.ne.s32.totalorder %s202, %s216
    %p218 = scmp.eq.s32.totalorder %s24, 0
    %p219 = por %p217, %p218
    %s221 = sadd.s32 %s220, 1
    %p224 = scmp.eq.s32.totalorder %s18, 1
    %p225 = scmp.ne.s32.totalorder %s220, %s222
    %p226 = scmp.eq.s32.totalorder %s18, 0
    %p227 = por %p225, %p226
    %p228 = scmp.ne.s32.totalorder %s220, %s222
    %p229 = scmp.eq.s32.totalorder %s23, 1
    %p230 = por %p228, %p229
    %p231 = scmp.ne.s32.totalorder %s222, %s223
    %p232 = scmp.eq.s32.totalorder %s23, 0
    %p233 = por %p231, %p232
    %p234 = scmp.ne.s32.totalorder %s222, %s223
    %p235 = scmp.eq.s32.totalorder %s24, 1
    %p236 = por %p234, %p235
    %p238 = scmp.ne.s32.totalorder %s223, %s237
    %p239 = scmp.eq.s32.totalorder %s24, 0
    %p240 = por %p238, %p239
    %s242 = sadd.s32 %s241, 1
    %p245 = scmp.eq.s32.totalorder %s18, 1
    %p246 = scmp.ne.s32.totalorder %s241, %s243
    %p247 = scmp.eq.s32.totalorder %s18, 0
    %p248 = por %p246, %p247
    %p249 = scmp.ne.s32.totalorder %s241, %s243
    %p250 = scmp.eq.s32.totalorder %s23, 1
    %p251 = por %p249, %p250
    %p252 = scmp.ne.s32.totalorder %s243, %s244
    %p253 = scmp.eq.s32.totalorder %s23, 0
    %p254 = por %p252, %p253
    %p255 = scmp.ne.s32.totalorder %s243, %s244
    %p256 = scmp.eq.s32.totalorder %s24, 1
    %p257 = por %p255, %p256
    %p259 = scmp.ne.s32.totalorder %s244, %s258
    %p260 = scmp.eq.s32.totalorder %s24, 0
    %p261 = por %p259, %p260
    %s263 = sadd.s32 %s262, 1
    %p266 = scmp.eq.s32.totalorder %s18, 1
    %p267 = scmp.ne.s32.totalorder %s262, %s264
    %p268 = scmp.eq.s32.totalorder %s18, 0
    %p269 = por %p267, %p268
    %p270 = scmp.ne.s32.totalorder %s262, %s264
    %p271 = scmp.eq.s32.totalorder %s23, 1
    %p272 = por %p270, %p271
    %p273 = scmp.ne.s32.totalorder %s264, %s265
    %p274 = scmp.eq.s32.totalorder %s23, 0
    %p275 = por %p273, %p274
    %p276 = scmp.ne.s32.totalorder %s264, %s265
    %p277 = scmp.eq.s32.totalorder %s24, 1
    %p278 = por %p276, %p277
    %p280 = scmp.ne.s32.totalorder %s265, %s279
    %p281 = scmp.eq.s32.totalorder %s24, 0
    %p282 = por %p280, %p281
    %s283 = ssub.s32 %s18, %s25
    %p284 = scmp.eq.s32.totalorder %s283, 0
    %s286 = sadd.s32 %s285, 1
    %s287 = scalar_select %p284, %s285, %s286
    %p290 = pneg %p284
    %p291 = scmp.eq.s32.totalorder %s18, 1
    %p292 = por %p290, %p291
    %p293 = scmp.ne.s32.totalorder %s285, %s288
    %p294 = scmp.eq.s32.totalorder %s18, 0
    %p295 = por %p293, %p294
    %p296 = scmp.ne.s32.totalorder %s285, %s288
    %p297 = scmp.eq.s32.totalorder %s23, 1
    %p298 = por %p296, %p297
    %p299 = scmp.ne.s32.totalorder %s288, %s289
    %p300 = scmp.eq.s32.totalorder %s23, 0
    %p301 = por %p299, %p300
    %p302 = scmp.ne.s32.totalorder %s288, %s289
    %p303 = scmp.eq.s32.totalorder %s24, 1
    %p304 = por %p302, %p303
    %p306 = scmp.ne.s32.totalorder %s289, %s305
    %p307 = scmp.eq.s32.totalorder %s24, 0
    %p308 = por %p306, %p307
    %p309 = scmp.le.s32.totalorder 1, %s18
    %p310 = scmp.lt.s32.totalorder %s18, 3
    %p311 = pnand %p309, %p310
    %p312 = pneg %p311
    // Predicated region
    $region9: #{fwd.1} parent=5 // pred_check
      _
    $region10: #{fwd.1} parent=5 // pred_check_branch
      %314 = sbr.rel (%p311) target = $region12
    $region11: #{fwd.1} parent=5 // pred_region
      %s315 = ssub.s32 %s18, 1
      // Predicated region
      $region13: #{fwd.1} parent=11 // pred_check
        %p316 = pneg %p65
      $region14: #{fwd.1} parent=11 // pred_check_branch
        %318 = sbr.rel (%p316) target = $region16
      $region15: #{fwd.1} parent=11 // pred_region
        _
      $region16: #{fwd.1} parent=11 // pred_fallthru
        _
      // Predicated region
      $region17: #{fwd.1} parent=11 // pred_check
        %p319 = pneg %p86
      $region18: #{fwd.1} parent=11 // pred_check_branch
        %321 = sbr.rel (%p319) target = $region20
      $region19: #{fwd.1} parent=11 // pred_region
        _
      $region20: #{fwd.1} parent=11 // pred_fallthru
        _
      // Predicated region
      $region21: #{fwd.1} parent=11 // pred_check
        %p322 = pneg %p107
      $region22: #{fwd.1} parent=11 // pred_check_branch
        %324 = sbr.rel (%p322) target = $region24
      $region23: #{fwd.1} parent=11 // pred_region
        _
      $region24: #{fwd.1} parent=11 // pred_fallthru
        _
      // Predicated region
      $region25: #{fwd.1} parent=11 // pred_check
        %p325 = pneg %p128
      $region26: #{fwd.1} parent=11 // pred_check_branch
        %327 = sbr.rel (%p325) target = $region28
      $region27: #{fwd.1} parent=11 // pred_region
        _
      $region28: #{fwd.1} parent=11 // pred_fallthru
        _
      // Predicated region
      $region29: #{fwd.1} parent=11 // pred_check
        %p328 = pneg %p149
      $region30: #{fwd.1} parent=11 // pred_check_branch
        %330 = sbr.rel (%p328) target = $region32
      $region31: #{fwd.1} parent=11 // pred_region
        _
      $region32: #{fwd.1} parent=11 // pred_fallthru
        _
      // Predicated region
      $region33: #{fwd.1} parent=11 // pred_check
        %p331 = pneg %p170
      $region34: #{fwd.1} parent=11 // pred_check_branch
        %333 = sbr.rel (%p331) target = $region36
      $region35: #{fwd.1} parent=11 // pred_region
        _
      $region36: #{fwd.1} parent=11 // pred_fallthru
        _
      // Predicated region
      $region37: #{fwd.1} parent=11 // pred_check
        %p334 = pneg %p191
      $region38: #{fwd.1} parent=11 // pred_check_branch
        %336 = sbr.rel (%p334) target = $region40
      $region39: #{fwd.1} parent=11 // pred_region
        _
      $region40: #{fwd.1} parent=11 // pred_fallthru
        _
      // Predicated region
      $region41: #{fwd.1} parent=11 // pred_check
        %p337 = pneg %p212
      $region42: #{fwd.1} parent=11 // pred_check_branch
        %339 = sbr.rel (%p337) target = $region44
      $region43: #{fwd.1} parent=11 // pred_region
        _
      $region44: #{fwd.1} parent=11 // pred_fallthru
        _
      // Predicated region
      $region45: #{fwd.1} parent=11 // pred_check
        %p340 = pneg %p233
      $region46: #{fwd.1} parent=11 // pred_check_branch
        %342 = sbr.rel (%p340) target = $region48
      $region47: #{fwd.1} parent=11 // pred_region
        _
      $region48: #{fwd.1} parent=11 // pred_fallthru
        _
      // Predicated region
      $region49: #{fwd.1} parent=11 // pred_check
        %p343 = pneg %p254
      $region50: #{fwd.1} parent=11 // pred_check_branch
        %345 = sbr.rel (%p343) target = $region52
      $region51: #{fwd.1} parent=11 // pred_region
        _
      $region52: #{fwd.1} parent=11 // pred_fallthru
        _
      // Predicated region
      $region53: #{fwd.1} parent=11 // pred_check
        %p346 = pneg %p275
      $region54: #{fwd.1} parent=11 // pred_check_branch
        %348 = sbr.rel (%p346) target = $region56
      $region55: #{fwd.1} parent=11 // pred_region
        _
      $region56: #{fwd.1} parent=11 // pred_fallthru
        _
    $region12: #{fwd.1} parent=5 // pred_fallthru
      _
    %p349 = scmp.lt.s32.totalorder %s18, 2
    // Predicated region
    $region57: #{fwd.1} parent=5 // pred_check
      %p350 = pneg %p349
    $region58: #{fwd.1} parent=5 // pred_check_branch
      %352 = sbr.rel (%p350) target = $region60
    $region59: #{fwd.1} parent=5 // pred_region
      // Predicated region
      $region61: #{fwd.1} parent=59 // pred_check
        %p353 = pneg %p38
      $region62: #{fwd.1} parent=59 // pred_check_branch
        %355 = sbr.rel (%p353) target = $region64
      $region63: #{fwd.1} parent=59 // pred_region
        %s356 = smul.u32 32, %s18
        %p357 = scmp.lt.s32.totalorder %s356, 63
        %s358 = scalar_select %p357, %s356, 63
        %s359 = smul.addr %s358, 8
        %s360 = scalar_lea.vmem %s0, %s359
        %s361 = smul.u32 32, %s18
      $region64: #{fwd.1} parent=59 // pred_fallthru
        _
    $region60: #{fwd.1} parent=5 // pred_fallthru
      _
    %p362 = scmp.le.s32.totalorder 1, %s18
    %p363 = scmp.lt.s32.totalorder %s18, 3
    %p364 = pnand %p362, %p363
    %p365 = pneg %p364
    // Predicated region
    $region65: #{fwd.1} parent=5 // pred_check
      _
    $region66: #{fwd.1} parent=5 // pred_check_branch
      %367 = sbr.rel (%p364) target = $region68
    $region67: #{fwd.1} parent=5 // pred_region
      %s368 = ssub.s32 %s18, 1
      %s369 = smul.u32 32, %s23
      %p370 = scmp.lt.s32.totalorder %s369, 63
      %s371 = scalar_select %p370, %s369, 63
      %s372 = smul.addr %s371, 8
      %s373 = scalar_lea.vmem %s0, %s372
      %p374 = pneg %p44
      %p375 = pneg %p41
      %p376 = pneg %p65
      %p377 = pneg %p62
      %p378 = pneg %p86
      %p379 = pneg %p83
      %p380 = pneg %p107
      %p381 = pneg %p104
      %p382 = pneg %p128
      %p383 = pneg %p125
      %p384 = pneg %p149
      %p385 = pneg %p146
      %p386 = pneg %p170
      %p387 = pneg %p167
      %p388 = pneg %p191
      %p389 = pneg %p188
      %p390 = pneg %p212
      %p391 = pneg %p209
      %p392 = pneg %p233
      %p393 = pneg %p230
      %p394 = pneg %p254
      %p395 = pneg %p251
      %p396 = pneg %p275
      %p397 = pneg %p272
      %p398 = pneg %p301
      %p399 = pneg %p298
      %s400 = smul.u32 10, %s23
      %p401 = scmp.lt.s32.totalorder %s400, 19
      %s402 = scalar_select %p401, %s400, 19
      %s403 = smul.addr %s402, 2
      %s404 = smul.addr %s403, 8
      %s405 = scalar_lea.vmem %s12, %s404
      %s406 = smul.u32 32, %s23
      %p407 = scmp.lt.s32.totalorder %s406, 63
      %s408 = scalar_select %p407, %s406, 63
      %s409 = smul.addr %s408, 8
      %s410 = scalar_lea.vmem %s0, %s409
      %s411 = smul.u32 32, %s23
      %s412 = smul.u32 10, %s23
      %p413 = scmp.lt.s32.totalorder %s412, 19
      %s414 = scalar_select %p413, %s412, 19
      %s415 = smul.addr %s414, 2
      %s416 = smul.addr %s415, 8
      %s417 = scalar_lea.vmem %s12, %s416
      %s418 = smul.u32 10, %s23
      %v420 = vld [vmem:[%s410] sm:$0xff]
      %v421 = vld [vmem:[%s410 + $0x8] sm:$0xff]
      %v422 = vld [vmem:[%s410 + $0x10] sm:$0xff]
      %v423 = vld [vmem:[%s410 + $0x18] sm:$0xff]
      %v424 = vld [vmem:[%s410 + $0x20] sm:$0xff]
      %v425 = vld [vmem:[%s410 + $0x28] sm:$0xff]
      %v426 = vld [vmem:[%s410 + $0x30] sm:$0xff]
      %v427 = vld [vmem:[%s410 + $0x38] sm:$0xff]
      %v428 = vld [vmem:[%s410 + $0x40] sm:$0xff]
      %v429 = vld [vmem:[%s410 + $0x48] sm:$0xff]
      %v430 = vld [vmem:[%s410 + $0x50] sm:$0xff]
      %v431 = vld [vmem:[%s410 + $0x58] sm:$0xff]
      %v432 = vld [vmem:[%s410 + $0x60] sm:$0xff]
      %v433 = vld [vmem:[%s410 + $0x68] sm:$0xff]
      %v434 = vld [vmem:[%s410 + $0x70] sm:$0xff]
      %v435 = vld [vmem:[%s410 + $0x78] sm:$0xff]
      %v436 = vld [vmem:[%s410 + $0x80] sm:$0xff]
      %v437 = vld [vmem:[%s410 + $0x88] sm:$0xff]
      %v438 = vld [vmem:[%s410 + $0x90] sm:$0xff]
      %v439 = vld [vmem:[%s410 + $0x98] sm:$0xff]
      %v440 = vld [vmem:[%s410 + $0xa0] sm:$0xff]
      %v441 = vld [vmem:[%s410 + $0xa8] sm:$0xff]
      %v442 = vld [vmem:[%s410 + $0xb0] sm:$0xff]
      %v443 = vld [vmem:[%s410 + $0xb8] sm:$0xff]
      %v444 = vld [vmem:[%s410 + $0xc0] sm:$0xff]
      %v445 = vld [vmem:[%s410 + $0xc8] sm:$0xff]
      %v446 = vld [vmem:[%s410 + $0xd0] sm:$0xff]
      %v447 = vld [vmem:[%s410 + $0xd8] sm:$0xff]
      %v448 = vld [vmem:[%s410 + $0xe0] sm:$0xff]
      %v449 = vld [vmem:[%s410 + $0xe8] sm:$0xff]
      %v450 = vld [vmem:[%s410 + $0xf0] sm:$0xff]
      %v451 = vld [vmem:[%s410 + $0xf8] sm:$0xff]
      %v452 = vlaneseq
      %v453 = vshrl.u32 %v452, 7
      %v454 = vadd.s32 %v453, 8
      %v455 = vadd.s32 %v453, 16
      %v456 = vadd.s32 %v453, 24
      %v457 = vadd.s32 %v453, 32
      %v458 = vadd.s32 %v453, 40
      %v459 = vadd.s32 %v453, 48
      %v460 = vadd.s32 %v453, 56
      %v461 = vadd.s32 %v453, 64
      %v462 = vadd.s32 %v453, 72
      %v463 = vadd.s32 %v453, 80
      %v464 = vadd.s32 %v453, 88
      %v465 = vadd.s32 %v453, 96
      %v466 = vadd.s32 %v453, 104
      %v467 = vadd.s32 %v453, 112
      %v468 = vadd.s32 %v453, 120
      %v469 = vadd.s32 %v453, 128
      %v470 = vadd.s32 %v453, 136
      %v471 = vadd.s32 %v453, 144
      %v472 = vadd.s32 %v453, 152
      %v473 = vadd.s32 %v453, 160
      %v474 = vadd.s32 %v453, 168
      %v475 = vadd.s32 %v453, 176
      %v476 = vadd.s32 %v453, 184
      %v477 = vadd.s32 %v453, 192
      %v478 = vadd.s32 %v453, 200
      %v479 = vadd.s32 %v453, 208
      %v480 = vadd.s32 %v453, 216
      %v481 = vadd.s32 %v453, 224
      %v482 = vadd.s32 %v453, 232
      %v483 = vadd.s32 %v453, 240
      %v484 = vadd.s32 %v453, 248
      %v485 = vand.u32 %v453, 15
      %v486 = vand.u32 %v454, 15
      %v487 = vand.u32 %v455, 15
      %v488 = vand.u32 %v456, 15
      %v489 = vand.u32 %v457, 15
      %v490 = vand.u32 %v458, 15
      %v491 = vand.u32 %v459, 15
      %v492 = vand.u32 %v460, 15
      %v493 = vand.u32 %v461, 15
      %v494 = vand.u32 %v462, 15
      %v495 = vand.u32 %v463, 15
      %v496 = vand.u32 %v464, 15
      %v497 = vand.u32 %v465, 15
      %v498 = vand.u32 %v466, 15
      %v499 = vand.u32 %v467, 15
      %v500 = vand.u32 %v468, 15
      %v501 = vand.u32 %v469, 15
      %v502 = vand.u32 %v470, 15
      %v503 = vand.u32 %v471, 15
      %v504 = vand.u32 %v472, 15
      %v505 = vand.u32 %v473, 15
      %v506 = vand.u32 %v474, 15
      %v507 = vand.u32 %v475, 15
      %v508 = vand.u32 %v476, 15
      %v509 = vand.u32 %v477, 15
      %v510 = vand.u32 %v478, 15
      %v511 = vand.u32 %v479, 15
      %v512 = vand.u32 %v480, 15
      %v513 = vand.u32 %v481, 15
      %v514 = vand.u32 %v482, 15
      %v515 = vand.u32 %v483, 15
      %v516 = vand.u32 %v484, 15
      %v517 = vshra.s32 %v453, 4
      %v518 = vshra.s32 %v454, 4
      %v519 = vshra.s32 %v455, 4
      %v520 = vshra.s32 %v456, 4
      %v521 = vshra.s32 %v457, 4
      %v522 = vshra.s32 %v458, 4
      %v523 = vshra.s32 %v459, 4
      %v524 = vshra.s32 %v460, 4
      %v525 = vshra.s32 %v461, 4
      %v526 = vshra.s32 %v462, 4
      %v527 = vshra.s32 %v463, 4
      %v528 = vshra.s32 %v464, 4
      %v529 = vshra.s32 %v465, 4
      %v530 = vshra.s32 %v466, 4
      %v531 = vshra.s32 %v467, 4
      %v532 = vshra.s32 %v468, 4
      %v533 = vshra.s32 %v469, 4
      %v534 = vshra.s32 %v470, 4
      %v535 = vshra.s32 %v471, 4
      %v536 = vshra.s32 %v472, 4
      %v537 = vshra.s32 %v473, 4
      %v538 = vshra.s32 %v474, 4
      %v539 = vshra.s32 %v475, 4
      %v540 = vshra.s32 %v476, 4
      %v541 = vshra.s32 %v477, 4
      %v542 = vshra.s32 %v478, 4
      %v543 = vshra.s32 %v479, 4
      %v544 = vshra.s32 %v480, 4
      %v545 = vshra.s32 %v481, 4
      %v546 = vshra.s32 %v482, 4
      %v547 = vshra.s32 %v483, 4
      %v548 = vshra.s32 %v484, 4
      %v549 = vand.u32 %v517, 15
      %v550 = vand.u32 %v518, 15
      %v551 = vand.u32 %v519, 15
      %v552 = vand.u32 %v520, 15
      %v553 = vand.u32 %v521, 15
      %v554 = vand.u32 %v522, 15
      %v555 = vand.u32 %v523, 15
      %v556 = vand.u32 %v524, 15
      %v557 = vand.u32 %v525, 15
      %v558 = vand.u32 %v526, 15
      %v559 = vand.u32 %v527, 15
      %v560 = vand.u32 %v528, 15
      %v561 = vand.u32 %v529, 15
      %v562 = vand.u32 %v530, 15
      %v563 = vand.u32 %v531, 15
      %v564 = vand.u32 %v532, 15
      %v565 = vand.u32 %v533, 15
      %v566 = vand.u32 %v534, 15
      %v567 = vand.u32 %v535, 15
      %v568 = vand.u32 %v536, 15
      %v569 = vand.u32 %v537, 15
      %v570 = vand.u32 %v538, 15
      %v571 = vand.u32 %v539, 15
      %v572 = vand.u32 %v540, 15
      %v573 = vand.u32 %v541, 15
      %v574 = vand.u32 %v542, 15
      %v575 = vand.u32 %v543, 15
      %v576 = vand.u32 %v544, 15
      %v577 = vand.u32 %v545, 15
      %v578 = vand.u32 %v546, 15
      %v579 = vand.u32 %v547, 15
      %v580 = vand.u32 %v548, 15
      %vm584 = vcmask 1040384
      %v585 = vrot.slane %v449, 7
      %v586 = vrot.slane %v450, 7
      %v587 = vsel %vm584, %v585, %v586
      %v588 = vrot.slane %v451, 7
      %v589 = vsel %vm584, %v586, %v588
      %v622 = vrot.slane %v420, 7
      %v623 = vrot.slane %v421, 7
      %v624 = vsel %vm584, %v622, %v623
      %v625 = vrot.slane %v422, 7
      %v626 = vsel %vm584, %v623, %v625
      %v627 = vrot.slane %v423, 7
      %v628 = vsel %vm584, %v625, %v627
      %v629 = vrot.slane %v424, 7
      %v630 = vsel %vm584, %v627, %v629
      %v631 = vrot.slane %v425, 7
      %v632 = vsel %vm584, %v629, %v631
      %v633 = vrot.slane %v426, 7
      %v634 = vsel %vm584, %v631, %v633
      %v635 = vrot.slane %v427, 7
      %v636 = vsel %vm584, %v633, %v635
      %v637 = vrot.slane %v428, 7
      %v638 = vsel %vm584, %v635, %v637
      %v639 = vrot.slane %v429, 7
      %v640 = vsel %vm584, %v637, %v639
      %v641 = vrot.slane %v430, 7
      %v642 = vsel %vm584, %v639, %v641
      %v643 = vrot.slane %v431, 7
      %v644 = vsel %vm584, %v641, %v643
      %v645 = vrot.slane %v432, 7
      %v646 = vsel %vm584, %v643, %v645
      %v647 = vrot.slane %v433, 7
      %v648 = vsel %vm584, %v645, %v647
      %v649 = vrot.slane %v434, 7
      %v650 = vsel %vm584, %v647, %v649
      %v651 = vrot.slane %v435, 7
      %v652 = vsel %vm584, %v649, %v651
      %v653 = vrot.slane %v436, 7
      %v654 = vsel %vm584, %v651, %v653
      %v655 = vrot.slane %v437, 7
      %v656 = vsel %vm584, %v653, %v655
      %v657 = vrot.slane %v438, 7
      %v658 = vsel %vm584, %v655, %v657
      %v659 = vrot.slane %v439, 7
      %v660 = vsel %vm584, %v657, %v659
      %v661 = vrot.slane %v440, 7
      %v662 = vsel %vm584, %v659, %v661
      %v663 = vrot.slane %v441, 7
      %v664 = vsel %vm584, %v661, %v663
      %v665 = vrot.slane %v442, 7
      %v666 = vsel %vm584, %v663, %v665
      %v667 = vrot.slane %v443, 7
      %v668 = vsel %vm584, %v665, %v667
      %v669 = vrot.slane %v444, 7
      %v670 = vsel %vm584, %v667, %v669
      %v671 = vrot.slane %v445, 7
      %v672 = vsel %vm584, %v669, %v671
      %v673 = vrot.slane %v446, 7
      %v674 = vsel %vm584, %v671, %v673
      %v675 = vrot.slane %v447, 7
      %v676 = vsel %vm584, %v673, %v675
      %v677 = vrot.slane %v448, 7
      %v678 = vsel %vm584, %v675, %v677
      %v679 = vsel %vm584, %v677, %v585
      %v710 = vsel %vm584, %v588, %v622
      %vm711 = vcmp.ge.s32.totalorder %v549, 1
      %vm712 = vcmp.ge.s32.totalorder %v550, 1
      %vm713 = vcmp.ge.s32.totalorder %v551, 1
      %vm714 = vcmp.ge.s32.totalorder %v552, 1
      %vm715 = vcmp.ge.s32.totalorder %v553, 1
      %vm716 = vcmp.ge.s32.totalorder %v554, 1
      %vm717 = vcmp.ge.s32.totalorder %v555, 1
      %vm718 = vcmp.ge.s32.totalorder %v556, 1
      %vm719 = vcmp.ge.s32.totalorder %v557, 1
      %vm720 = vcmp.ge.s32.totalorder %v558, 1
      %vm721 = vcmp.ge.s32.totalorder %v559, 1
      %vm722 = vcmp.ge.s32.totalorder %v560, 1
      %vm723 = vcmp.ge.s32.totalorder %v561, 1
      %vm724 = vcmp.ge.s32.totalorder %v562, 1
      %vm725 = vcmp.ge.s32.totalorder %v563, 1
      %vm726 = vcmp.ge.s32.totalorder %v564, 1
      %vm727 = vcmp.ge.s32.totalorder %v565, 1
      %vm728 = vcmp.ge.s32.totalorder %v566, 1
      %vm729 = vcmp.ge.s32.totalorder %v567, 1
      %vm730 = vcmp.ge.s32.totalorder %v568, 1
      %vm731 = vcmp.ge.s32.totalorder %v569, 1
      %vm732 = vcmp.ge.s32.totalorder %v570, 1
      %vm733 = vcmp.ge.s32.totalorder %v571, 1
      %vm734 = vcmp.ge.s32.totalorder %v572, 1
      %vm735 = vcmp.ge.s32.totalorder %v573, 1
      %vm736 = vcmp.ge.s32.totalorder %v574, 1
      %vm737 = vcmp.ge.s32.totalorder %v575, 1
      %vm738 = vcmp.ge.s32.totalorder %v576, 1
      %vm739 = vcmp.ge.s32.totalorder %v577, 1
      %vm740 = vcmp.ge.s32.totalorder %v578, 1
      %vm741 = vcmp.ge.s32.totalorder %v579, 1
      %vm742 = vcmp.ge.s32.totalorder %v580, 1
      %vm743 = vcmp.ge.s32.totalorder %v485, 1
      %vm744 = vcmp.ge.s32.totalorder %v486, 1
      %vm745 = vcmp.ge.s32.totalorder %v487, 1
      %vm746 = vcmp.ge.s32.totalorder %v488, 1
      %vm747 = vcmp.ge.s32.totalorder %v489, 1
      %vm748 = vcmp.ge.s32.totalorder %v490, 1
      %vm749 = vcmp.ge.s32.totalorder %v491, 1
      %vm750 = vcmp.ge.s32.totalorder %v492, 1
      %vm751 = vcmp.ge.s32.totalorder %v493, 1
      %vm752 = vcmp.ge.s32.totalorder %v494, 1
      %vm753 = vcmp.ge.s32.totalorder %v495, 1
      %vm754 = vcmp.ge.s32.totalorder %v496, 1
      %vm755 = vcmp.ge.s32.totalorder %v497, 1
      %vm756 = vcmp.ge.s32.totalorder %v498, 1
      %vm757 = vcmp.ge.s32.totalorder %v499, 1
      %vm758 = vcmp.ge.s32.totalorder %v500, 1
      %vm759 = vcmp.ge.s32.totalorder %v501, 1
      %vm760 = vcmp.ge.s32.totalorder %v502, 1
      %vm761 = vcmp.ge.s32.totalorder %v503, 1
      %vm762 = vcmp.ge.s32.totalorder %v504, 1
      %vm763 = vcmp.ge.s32.totalorder %v505, 1
      %vm764 = vcmp.ge.s32.totalorder %v506, 1
      %vm765 = vcmp.ge.s32.totalorder %v507, 1
      %vm766 = vcmp.ge.s32.totalorder %v508, 1
      %vm767 = vcmp.ge.s32.totalorder %v509, 1
      %vm768 = vcmp.ge.s32.totalorder %v510, 1
      %vm769 = vcmp.ge.s32.totalorder %v511, 1
      %vm770 = vcmp.ge.s32.totalorder %v512, 1
      %vm771 = vcmp.ge.s32.totalorder %v513, 1
      %vm772 = vcmp.ge.s32.totalorder %v514, 1
      %vm773 = vcmp.ge.s32.totalorder %v515, 1
      %vm774 = vcmp.ge.s32.totalorder %v516, 1
      %vm775 = vmand %vm711, %vm743
      %vm776 = vmand %vm712, %vm744
      %vm777 = vmand %vm713, %vm745
      %vm778 = vmand %vm714, %vm746
      %vm779 = vmand %vm715, %vm747
      %vm780 = vmand %vm716, %vm748
      %vm781 = vmand %vm717, %vm749
      %vm782 = vmand %vm718, %vm750
      %vm783 = vmand %vm719, %vm751
      %vm784 = vmand %vm720, %vm752
      %vm785 = vmand %vm721, %vm753
      %vm786 = vmand %vm722, %vm754
      %vm787 = vmand %vm723, %vm755
      %vm788 = vmand %vm724, %vm756
      %vm789 = vmand %vm725, %vm757
      %vm790 = vmand %vm726, %vm758
      %vm791 = vmand %vm727, %vm759
      %vm792 = vmand %vm728, %vm760
      %vm793 = vmand %vm729, %vm761
      %vm794 = vmand %vm730, %vm762
      %vm795 = vmand %vm731, %vm763
      %vm796 = vmand %vm732, %vm764
      %vm797 = vmand %vm733, %vm765
      %vm798 = vmand %vm734, %vm766
      %vm799 = vmand %vm735, %vm767
      %vm800 = vmand %vm736, %vm768
      %vm801 = vmand %vm737, %vm769
      %vm802 = vmand %vm738, %vm770
      %vm803 = vmand %vm739, %vm771
      %vm804 = vmand %vm740, %vm772
      %vm805 = vmand %vm741, %vm773
      %vm806 = vmand %vm742, %vm774
      %v807 = vsel %vm775, 1, 0
      %v808 = vsel %vm776, 1, 0
      %v809 = vsel %vm777, 1, 0
      %v810 = vsel %vm778, 1, 0
      %v811 = vsel %vm779, 1, 0
      %v812 = vsel %vm780, 1, 0
      %v813 = vsel %vm781, 1, 0
      %v814 = vsel %vm782, 1, 0
      %v815 = vsel %vm783, 1, 0
      %v816 = vsel %vm784, 1, 0
      %v817 = vsel %vm785, 1, 0
      %v818 = vsel %vm786, 1, 0
      %v819 = vsel %vm787, 1, 0
      %v820 = vsel %vm788, 1, 0
      %v821 = vsel %vm789, 1, 0
      %v822 = vsel %vm790, 1, 0
      %v823 = vsel %vm791, 1, 0
      %v824 = vsel %vm792, 1, 0
      %v825 = vsel %vm793, 1, 0
      %v826 = vsel %vm794, 1, 0
      %v827 = vsel %vm795, 1, 0
      %v828 = vsel %vm796, 1, 0
      %v829 = vsel %vm797, 1, 0
      %v830 = vsel %vm798, 1, 0
      %v831 = vsel %vm799, 1, 0
      %v832 = vsel %vm800, 1, 0
      %v833 = vsel %vm801, 1, 0
      %v834 = vsel %vm802, 1, 0
      %v835 = vsel %vm803, 1, 0
      %v836 = vsel %vm804, 1, 0
      %v837 = vsel %vm805, 1, 0
      %v838 = vsel %vm806, 1, 0
      %vm839 = vcmp.eq.s32.totalorder %v807, 1
      %vm840 = vcmp.eq.s32.totalorder %v808, 1
      %vm841 = vcmp.eq.s32.totalorder %v809, 1
      %vm842 = vcmp.eq.s32.totalorder %v810, 1
      %vm843 = vcmp.eq.s32.totalorder %v811, 1
      %vm844 = vcmp.eq.s32.totalorder %v812, 1
      %vm845 = vcmp.eq.s32.totalorder %v813, 1
      %vm846 = vcmp.eq.s32.totalorder %v814, 1
      %vm847 = vcmp.eq.s32.totalorder %v815, 1
      %vm848 = vcmp.eq.s32.totalorder %v816, 1
      %vm849 = vcmp.eq.s32.totalorder %v817, 1
      %vm850 = vcmp.eq.s32.totalorder %v818, 1
      %vm851 = vcmp.eq.s32.totalorder %v819, 1
      %vm852 = vcmp.eq.s32.totalorder %v820, 1
      %vm853 = vcmp.eq.s32.totalorder %v821, 1
      %vm854 = vcmp.eq.s32.totalorder %v822, 1
      %vm855 = vcmp.eq.s32.totalorder %v823, 1
      %vm856 = vcmp.eq.s32.totalorder %v824, 1
      %vm857 = vcmp.eq.s32.totalorder %v825, 1
      %vm858 = vcmp.eq.s32.totalorder %v826, 1
      %vm859 = vcmp.eq.s32.totalorder %v827, 1
      %vm860 = vcmp.eq.s32.totalorder %v828, 1
      %vm861 = vcmp.eq.s32.totalorder %v829, 1
      %vm862 = vcmp.eq.s32.totalorder %v830, 1
      %vm863 = vcmp.eq.s32.totalorder %v831, 1
      %vm864 = vcmp.eq.s32.totalorder %v832, 1
      %vm865 = vcmp.eq.s32.totalorder %v833, 1
      %vm866 = vcmp.eq.s32.totalorder %v834, 1
      %vm867 = vcmp.eq.s32.totalorder %v835, 1
      %vm868 = vcmp.eq.s32.totalorder %v836, 1
      %vm869 = vcmp.eq.s32.totalorder %v837, 1
      %vm870 = vcmp.eq.s32.totalorder %v838, 1
      %v871 = vsel %vm839, %v587, 0.0
      %v872 = vsel %vm840, %v589, 0.0
      %v873 = vsel %vm841, %v710, 0.0
      %v874 = vsel %vm842, %v624, 0.0
      %v875 = vsel %vm843, %v626, 0.0
      %v876 = vsel %vm844, %v628, 0.0
      %v877 = vsel %vm845, %v630, 0.0
      %v878 = vsel %vm846, %v632, 0.0
      %v879 = vsel %vm847, %v634, 0.0
      %v880 = vsel %vm848, %v636, 0.0
      %v881 = vsel %vm849, %v638, 0.0
      %v882 = vsel %vm850, %v640, 0.0
      %v883 = vsel %vm851, %v642, 0.0
      %v884 = vsel %vm852, %v644, 0.0
      %v885 = vsel %vm853, %v646, 0.0
      %v886 = vsel %vm854, %v648, 0.0
      %v887 = vsel %vm855, %v650, 0.0
      %v888 = vsel %vm856, %v652, 0.0
      %v889 = vsel %vm857, %v654, 0.0
      %v890 = vsel %vm858, %v656, 0.0
      %v891 = vsel %vm859, %v658, 0.0
      %v892 = vsel %vm860, %v660, 0.0
      %v893 = vsel %vm861, %v662, 0.0
      %v894 = vsel %vm862, %v664, 0.0
      %v895 = vsel %vm863, %v666, 0.0
      %v896 = vsel %vm864, %v668, 0.0
      %v897 = vsel %vm865, %v670, 0.0
      %v898 = vsel %vm866, %v672, 0.0
      %v899 = vsel %vm867, %v674, 0.0
      %v900 = vsel %vm868, %v676, 0.0
      %v901 = vsel %vm869, %v678, 0.0
      %v902 = vsel %vm870, %v679, 0.0
      %v903 = vsel %vm711, 1, 0
      %v904 = vsel %vm712, 1, 0
      %v905 = vsel %vm713, 1, 0
      %v906 = vsel %vm714, 1, 0
      %v907 = vsel %vm715, 1, 0
      %v908 = vsel %vm716, 1, 0
      %v909 = vsel %vm717, 1, 0
      %v910 = vsel %vm718, 1, 0
      %v911 = vsel %vm719, 1, 0
      %v912 = vsel %vm720, 1, 0
      %v913 = vsel %vm721, 1, 0
      %v914 = vsel %vm722, 1, 0
      %v915 = vsel %vm723, 1, 0
      %v916 = vsel %vm724, 1, 0
      %v917 = vsel %vm725, 1, 0
      %v918 = vsel %vm726, 1, 0
      %v919 = vsel %vm727, 1, 0
      %v920 = vsel %vm728, 1, 0
      %v921 = vsel %vm729, 1, 0
      %v922 = vsel %vm730, 1, 0
      %v923 = vsel %vm731, 1, 0
      %v924 = vsel %vm732, 1, 0
      %v925 = vsel %vm733, 1, 0
      %v926 = vsel %vm734, 1, 0
      %v927 = vsel %vm735, 1, 0
      %v928 = vsel %vm736, 1, 0
      %v929 = vsel %vm737, 1, 0
      %v930 = vsel %vm738, 1, 0
      %v931 = vsel %vm739, 1, 0
      %v932 = vsel %vm740, 1, 0
      %v933 = vsel %vm741, 1, 0
      %v934 = vsel %vm742, 1, 0
      %vm935 = vcmp.eq.s32.totalorder %v903, 1
      %vm936 = vcmp.eq.s32.totalorder %v904, 1
      %vm937 = vcmp.eq.s32.totalorder %v905, 1
      %vm938 = vcmp.eq.s32.totalorder %v906, 1
      %vm939 = vcmp.eq.s32.totalorder %v907, 1
      %vm940 = vcmp.eq.s32.totalorder %v908, 1
      %vm941 = vcmp.eq.s32.totalorder %v909, 1
      %vm942 = vcmp.eq.s32.totalorder %v910, 1
      %vm943 = vcmp.eq.s32.totalorder %v911, 1
      %vm944 = vcmp.eq.s32.totalorder %v912, 1
      %vm945 = vcmp.eq.s32.totalorder %v913, 1
      %vm946 = vcmp.eq.s32.totalorder %v914, 1
      %vm947 = vcmp.eq.s32.totalorder %v915, 1
      %vm948 = vcmp.eq.s32.totalorder %v916, 1
      %vm949 = vcmp.eq.s32.totalorder %v917, 1
      %vm950 = vcmp.eq.s32.totalorder %v918, 1
      %vm951 = vcmp.eq.s32.totalorder %v919, 1
      %vm952 = vcmp.eq.s32.totalorder %v920, 1
      %vm953 = vcmp.eq.s32.totalorder %v921, 1
      %vm954 = vcmp.eq.s32.totalorder %v922, 1
      %vm955 = vcmp.eq.s32.totalorder %v923, 1
      %vm956 = vcmp.eq.s32.totalorder %v924, 1
      %vm957 = vcmp.eq.s32.totalorder %v925, 1
      %vm958 = vcmp.eq.s32.totalorder %v926, 1
      %vm959 = vcmp.eq.s32.totalorder %v927, 1
      %vm960 = vcmp.eq.s32.totalorder %v928, 1
      %vm961 = vcmp.eq.s32.totalorder %v929, 1
      %vm962 = vcmp.eq.s32.totalorder %v930, 1
      %vm963 = vcmp.eq.s32.totalorder %v931, 1
      %vm964 = vcmp.eq.s32.totalorder %v932, 1
      %vm965 = vcmp.eq.s32.totalorder %v933, 1
      %vm966 = vcmp.eq.s32.totalorder %v934, 1
      %v967 = vsel %vm935, %v450, 0.0
      %v968 = vsel %vm936, %v451, 0.0
      %v969 = vsel %vm937, %v420, 0.0
      %v970 = vsel %vm938, %v421, 0.0
      %v971 = vsel %vm939, %v422, 0.0
      %v972 = vsel %vm940, %v423, 0.0
      %v973 = vsel %vm941, %v424, 0.0
      %v974 = vsel %vm942, %v425, 0.0
      %v975 = vsel %vm943, %v426, 0.0
      %v976 = vsel %vm944, %v427, 0.0
      %v977 = vsel %vm945, %v428, 0.0
      %v978 = vsel %vm946, %v429, 0.0
      %v979 = vsel %vm947, %v430, 0.0
      %v980 = vsel %vm948, %v431, 0.0
      %v981 = vsel %vm949, %v432, 0.0
      %v982 = vsel %vm950, %v433, 0.0
      %v983 = vsel %vm951, %v434, 0.0
      %v984 = vsel %vm952, %v435, 0.0
      %v985 = vsel %vm953, %v436, 0.0
      %v986 = vsel %vm954, %v437, 0.0
      %v987 = vsel %vm955, %v438, 0.0
      %v988 = vsel %vm956, %v439, 0.0
      %v989 = vsel %vm957, %v440, 0.0
      %v990 = vsel %vm958, %v441, 0.0
      %v991 = vsel %vm959, %v442, 0.0
      %v992 = vsel %vm960, %v443, 0.0
      %v993 = vsel %vm961, %v444, 0.0
      %v994 = vsel %vm962, %v445, 0.0
      %v995 = vsel %vm963, %v446, 0.0
      %v996 = vsel %vm964, %v447, 0.0
      %v997 = vsel %vm965, %v448, 0.0
      %v998 = vsel %vm966, %v449, 0.0
      %vm999 = vcmask 1046528
      %v1000 = vrot.slane %v450, 1
      %v1001 = vrot.slane %v451, 1
      %v1002 = vsel %vm999, %v1000, %v1001
      %v1005 = vrot.slane %v420, 1
      %v1006 = vrot.slane %v421, 1
      %v1007 = vsel %vm999, %v1005, %v1006
      %v1008 = vrot.slane %v422, 1
      %v1009 = vsel %vm999, %v1006, %v1008
      %v1010 = vrot.slane %v423, 1
      %v1011 = vsel %vm999, %v1008, %v1010
      %v1012 = vrot.slane %v424, 1
      %v1013 = vsel %vm999, %v1010, %v1012
      %v1014 = vrot.slane %v425, 1
      %v1015 = vsel %vm999, %v1012, %v1014
      %v1016 = vrot.slane %v426, 1
      %v1017 = vsel %vm999, %v1014, %v1016
      %v1018 = vrot.slane %v427, 1
      %v1019 = vsel %vm999, %v1016, %v1018
      %v1020 = vrot.slane %v428, 1
      %v1021 = vsel %vm999, %v1018, %v1020
      %v1022 = vrot.slane %v429, 1
      %v1023 = vsel %vm999, %v1020, %v1022
      %v1024 = vrot.slane %v430, 1
      %v1025 = vsel %vm999, %v1022, %v1024
      %v1026 = vrot.slane %v431, 1
      %v1027 = vsel %vm999, %v1024, %v1026
      %v1028 = vrot.slane %v432, 1
      %v1029 = vsel %vm999, %v1026, %v1028
      %v1030 = vrot.slane %v433, 1
      %v1031 = vsel %vm999, %v1028, %v1030
      %v1032 = vrot.slane %v434, 1
      %v1033 = vsel %vm999, %v1030, %v1032
      %v1034 = vrot.slane %v435, 1
      %v1035 = vsel %vm999, %v1032, %v1034
      %v1036 = vrot.slane %v436, 1
      %v1037 = vsel %vm999, %v1034, %v1036
      %v1038 = vrot.slane %v437, 1
      %v1039 = vsel %vm999, %v1036, %v1038
      %v1040 = vrot.slane %v438, 1
      %v1041 = vsel %vm999, %v1038, %v1040
      %v1042 = vrot.slane %v439, 1
      %v1043 = vsel %vm999, %v1040, %v1042
      %v1044 = vrot.slane %v440, 1
      %v1045 = vsel %vm999, %v1042, %v1044
      %v1046 = vrot.slane %v441, 1
      %v1047 = vsel %vm999, %v1044, %v1046
      %v1048 = vrot.slane %v442, 1
      %v1049 = vsel %vm999, %v1046, %v1048
      %v1050 = vrot.slane %v443, 1
      %v1051 = vsel %vm999, %v1048, %v1050
      %v1052 = vrot.slane %v444, 1
      %v1053 = vsel %vm999, %v1050, %v1052
      %v1054 = vrot.slane %v445, 1
      %v1055 = vsel %vm999, %v1052, %v1054
      %v1056 = vrot.slane %v446, 1
      %v1057 = vsel %vm999, %v1054, %v1056
      %v1058 = vrot.slane %v447, 1
      %v1059 = vsel %vm999, %v1056, %v1058
      %v1060 = vrot.slane %v448, 1
      %v1061 = vsel %vm999, %v1058, %v1060
      %v1062 = vrot.slane %v449, 1
      %v1063 = vsel %vm999, %v1060, %v1062
      %v1064 = vsel %vm999, %v1062, %v1000
      %v1096 = vsel %vm999, %v1001, %v1005
      %vm1097 = vcmp.le.s32.totalorder %v485, 14
      %vm1098 = vcmp.le.s32.totalorder %v486, 14
      %vm1099 = vcmp.le.s32.totalorder %v487, 14
      %vm1100 = vcmp.le.s32.totalorder %v488, 14
      %vm1101 = vcmp.le.s32.totalorder %v489, 14
      %vm1102 = vcmp.le.s32.totalorder %v490, 14
      %vm1103 = vcmp.le.s32.totalorder %v491, 14
      %vm1104 = vcmp.le.s32.totalorder %v492, 14
      %vm1105 = vcmp.le.s32.totalorder %v493, 14
      %vm1106 = vcmp.le.s32.totalorder %v494, 14
      %vm1107 = vcmp.le.s32.totalorder %v495, 14
      %vm1108 = vcmp.le.s32.totalorder %v496, 14
      %vm1109 = vcmp.le.s32.totalorder %v497, 14
      %vm1110 = vcmp.le.s32.totalorder %v498, 14
      %vm1111 = vcmp.le.s32.totalorder %v499, 14
      %vm1112 = vcmp.le.s32.totalorder %v500, 14
      %vm1113 = vcmp.le.s32.totalorder %v501, 14
      %vm1114 = vcmp.le.s32.totalorder %v502, 14
      %vm1115 = vcmp.le.s32.totalorder %v503, 14
      %vm1116 = vcmp.le.s32.totalorder %v504, 14
      %vm1117 = vcmp.le.s32.totalorder %v505, 14
      %vm1118 = vcmp.le.s32.totalorder %v506, 14
      %vm1119 = vcmp.le.s32.totalorder %v507, 14
      %vm1120 = vcmp.le.s32.totalorder %v508, 14
      %vm1121 = vcmp.le.s32.totalorder %v509, 14
      %vm1122 = vcmp.le.s32.totalorder %v510, 14
      %vm1123 = vcmp.le.s32.totalorder %v511, 14
      %vm1124 = vcmp.le.s32.totalorder %v512, 14
      %vm1125 = vcmp.le.s32.totalorder %v513, 14
      %vm1126 = vcmp.le.s32.totalorder %v514, 14
      %vm1127 = vcmp.le.s32.totalorder %v515, 14
      %vm1128 = vcmp.le.s32.totalorder %v516, 14
      %vm1129 = vmand %vm711, %vm1097
      %vm1130 = vmand %vm712, %vm1098
      %vm1131 = vmand %vm713, %vm1099
      %vm1132 = vmand %vm714, %vm1100
      %vm1133 = vmand %vm715, %vm1101
      %vm1134 = vmand %vm716, %vm1102
      %vm1135 = vmand %vm717, %vm1103
      %vm1136 = vmand %vm718, %vm1104
      %vm1137 = vmand %vm719, %vm1105
      %vm1138 = vmand %vm720, %vm1106
      %vm1139 = vmand %vm721, %vm1107
      %vm1140 = vmand %vm722, %vm1108
      %vm1141 = vmand %vm723, %vm1109
      %vm1142 = vmand %vm724, %vm1110
      %vm1143 = vmand %vm725, %vm1111
      %vm1144 = vmand %vm726, %vm1112
      %vm1145 = vmand %vm727, %vm1113
      %vm1146 = vmand %vm728, %vm1114
      %vm1147 = vmand %vm729, %vm1115
      %vm1148 = vmand %vm730, %vm1116
      %vm1149 = vmand %vm731, %vm1117
      %vm1150 = vmand %vm732, %vm1118
      %vm1151 = vmand %vm733, %vm1119
      %vm1152 = vmand %vm734, %vm1120
      %vm1153 = vmand %vm735, %vm1121
      %vm1154 = vmand %vm736, %vm1122
      %vm1155 = vmand %vm737, %vm1123
      %vm1156 = vmand %vm738, %vm1124
      %vm1157 = vmand %vm739, %vm1125
      %vm1158 = vmand %vm740, %vm1126
      %vm1159 = vmand %vm741, %vm1127
      %vm1160 = vmand %vm742, %vm1128
      %v1161 = vsel %vm1129, 1, 0
      %v1162 = vsel %vm1130, 1, 0
      %v1163 = vsel %vm1131, 1, 0
      %v1164 = vsel %vm1132, 1, 0
      %v1165 = vsel %vm1133, 1, 0
      %v1166 = vsel %vm1134, 1, 0
      %v1167 = vsel %vm1135, 1, 0
      %v1168 = vsel %vm1136, 1, 0
      %v1169 = vsel %vm1137, 1, 0
      %v1170 = vsel %vm1138, 1, 0
      %v1171 = vsel %vm1139, 1, 0
      %v1172 = vsel %vm1140, 1, 0
      %v1173 = vsel %vm1141, 1, 0
      %v1174 = vsel %vm1142, 1, 0
      %v1175 = vsel %vm1143, 1, 0
      %v1176 = vsel %vm1144, 1, 0
      %v1177 = vsel %vm1145, 1, 0
      %v1178 = vsel %vm1146, 1, 0
      %v1179 = vsel %vm1147, 1, 0
      %v1180 = vsel %vm1148, 1, 0
      %v1181 = vsel %vm1149, 1, 0
      %v1182 = vsel %vm1150, 1, 0
      %v1183 = vsel %vm1151, 1, 0
      %v1184 = vsel %vm1152, 1, 0
      %v1185 = vsel %vm1153, 1, 0
      %v1186 = vsel %vm1154, 1, 0
      %v1187 = vsel %vm1155, 1, 0
      %v1188 = vsel %vm1156, 1, 0
      %v1189 = vsel %vm1157, 1, 0
      %v1190 = vsel %vm1158, 1, 0
      %v1191 = vsel %vm1159, 1, 0
      %v1192 = vsel %vm1160, 1, 0
      %vm1193 = vcmp.eq.s32.totalorder %v1161, 1
      %vm1194 = vcmp.eq.s32.totalorder %v1162, 1
      %vm1195 = vcmp.eq.s32.totalorder %v1163, 1
      %vm1196 = vcmp.eq.s32.totalorder %v1164, 1
      %vm1197 = vcmp.eq.s32.totalorder %v1165, 1
      %vm1198 = vcmp.eq.s32.totalorder %v1166, 1
      %vm1199 = vcmp.eq.s32.totalorder %v1167, 1
      %vm1200 = vcmp.eq.s32.totalorder %v1168, 1
      %vm1201 = vcmp.eq.s32.totalorder %v1169, 1
      %vm1202 = vcmp.eq.s32.totalorder %v1170, 1
      %vm1203 = vcmp.eq.s32.totalorder %v1171, 1
      %vm1204 = vcmp.eq.s32.totalorder %v1172, 1
      %vm1205 = vcmp.eq.s32.totalorder %v1173, 1
      %vm1206 = vcmp.eq.s32.totalorder %v1174, 1
      %vm1207 = vcmp.eq.s32.totalorder %v1175, 1
      %vm1208 = vcmp.eq.s32.totalorder %v1176, 1
      %vm1209 = vcmp.eq.s32.totalorder %v1177, 1
      %vm1210 = vcmp.eq.s32.totalorder %v1178, 1
      %vm1211 = vcmp.eq.s32.totalorder %v1179, 1
      %vm1212 = vcmp.eq.s32.totalorder %v1180, 1
      %vm1213 = vcmp.eq.s32.totalorder %v1181, 1
      %vm1214 = vcmp.eq.s32.totalorder %v1182, 1
      %vm1215 = vcmp.eq.s32.totalorder %v1183, 1
      %vm1216 = vcmp.eq.s32.totalorder %v1184, 1
      %vm1217 = vcmp.eq.s32.totalorder %v1185, 1
      %vm1218 = vcmp.eq.s32.totalorder %v1186, 1
      %vm1219 = vcmp.eq.s32.totalorder %v1187, 1
      %vm1220 = vcmp.eq.s32.totalorder %v1188, 1
      %vm1221 = vcmp.eq.s32.totalorder %v1189, 1
      %vm1222 = vcmp.eq.s32.totalorder %v1190, 1
      %vm1223 = vcmp.eq.s32.totalorder %v1191, 1
      %vm1224 = vcmp.eq.s32.totalorder %v1192, 1
      %v1225 = vsel %vm1193, %v1002, 0.0
      %v1226 = vsel %vm1194, %v1096, 0.0
      %v1227 = vsel %vm1195, %v1007, 0.0
      %v1228 = vsel %vm1196, %v1009, 0.0
      %v1229 = vsel %vm1197, %v1011, 0.0
      %v1230 = vsel %vm1198, %v1013, 0.0
      %v1231 = vsel %vm1199, %v1015, 0.0
      %v1232 = vsel %vm1200, %v1017, 0.0
      %v1233 = vsel %vm1201, %v1019, 0.0
      %v1234 = vsel %vm1202, %v1021, 0.0
      %v1235 = vsel %vm1203, %v1023, 0.0
      %v1236 = vsel %vm1204, %v1025, 0.0
      %v1237 = vsel %vm1205, %v1027, 0.0
      %v1238 = vsel %vm1206, %v1029, 0.0
      %v1239 = vsel %vm1207, %v1031, 0.0
      %v1240 = vsel %vm1208, %v1033, 0.0
      %v1241 = vsel %vm1209, %v1035, 0.0
      %v1242 = vsel %vm1210, %v1037, 0.0
      %v1243 = vsel %vm1211, %v1039, 0.0
      %v1244 = vsel %vm1212, %v1041, 0.0
      %v1245 = vsel %vm1213, %v1043, 0.0
      %v1246 = vsel %vm1214, %v1045, 0.0
      %v1247 = vsel %vm1215, %v1047, 0.0
      %v1248 = vsel %vm1216, %v1049, 0.0
      %v1249 = vsel %vm1217, %v1051, 0.0
      %v1250 = vsel %vm1218, %v1053, 0.0
      %v1251 = vsel %vm1219, %v1055, 0.0
      %v1252 = vsel %vm1220, %v1057, 0.0
      %v1253 = vsel %vm1221, %v1059, 0.0
      %v1254 = vsel %vm1222, %v1061, 0.0
      %v1255 = vsel %vm1223, %v1063, 0.0
      %v1256 = vsel %vm1224, %v1064, 0.0
      %v1257 = vsel %vm743, 1, 0
      %v1258 = vsel %vm744, 1, 0
      %v1259 = vsel %vm745, 1, 0
      %v1260 = vsel %vm746, 1, 0
      %v1261 = vsel %vm747, 1, 0
      %v1262 = vsel %vm748, 1, 0
      %v1263 = vsel %vm749, 1, 0
      %v1264 = vsel %vm750, 1, 0
      %v1265 = vsel %vm751, 1, 0
      %v1266 = vsel %vm752, 1, 0
      %v1267 = vsel %vm753, 1, 0
      %v1268 = vsel %vm754, 1, 0
      %v1269 = vsel %vm755, 1, 0
      %v1270 = vsel %vm756, 1, 0
      %v1271 = vsel %vm757, 1, 0
      %v1272 = vsel %vm758, 1, 0
      %v1273 = vsel %vm759, 1, 0
      %v1274 = vsel %vm760, 1, 0
      %v1275 = vsel %vm761, 1, 0
      %v1276 = vsel %vm762, 1, 0
      %v1277 = vsel %vm763, 1, 0
      %v1278 = vsel %vm764, 1, 0
      %v1279 = vsel %vm765, 1, 0
      %v1280 = vsel %vm766, 1, 0
      %v1281 = vsel %vm767, 1, 0
      %v1282 = vsel %vm768, 1, 0
      %v1283 = vsel %vm769, 1, 0
      %v1284 = vsel %vm770, 1, 0
      %v1285 = vsel %vm771, 1, 0
      %v1286 = vsel %vm772, 1, 0
      %v1287 = vsel %vm773, 1, 0
      %v1288 = vsel %vm774, 1, 0
      %vm1289 = vcmp.eq.s32.totalorder %v1257, 1
      %vm1290 = vcmp.eq.s32.totalorder %v1258, 1
      %vm1291 = vcmp.eq.s32.totalorder %v1259, 1
      %vm1292 = vcmp.eq.s32.totalorder %v1260, 1
      %vm1293 = vcmp.eq.s32.totalorder %v1261, 1
      %vm1294 = vcmp.eq.s32.totalorder %v1262, 1
      %vm1295 = vcmp.eq.s32.totalorder %v1263, 1
      %vm1296 = vcmp.eq.s32.totalorder %v1264, 1
      %vm1297 = vcmp.eq.s32.totalorder %v1265, 1
      %vm1298 = vcmp.eq.s32.totalorder %v1266, 1
      %vm1299 = vcmp.eq.s32.totalorder %v1267, 1
      %vm1300 = vcmp.eq.s32.totalorder %v1268, 1
      %vm1301 = vcmp.eq.s32.totalorder %v1269, 1
      %vm1302 = vcmp.eq.s32.totalorder %v1270, 1
      %vm1303 = vcmp.eq.s32.totalorder %v1271, 1
      %vm1304 = vcmp.eq.s32.totalorder %v1272, 1
      %vm1305 = vcmp.eq.s32.totalorder %v1273, 1
      %vm1306 = vcmp.eq.s32.totalorder %v1274, 1
      %vm1307 = vcmp.eq.s32.totalorder %v1275, 1
      %vm1308 = vcmp.eq.s32.totalorder %v1276, 1
      %vm1309 = vcmp.eq.s32.totalorder %v1277, 1
      %vm1310 = vcmp.eq.s32.totalorder %v1278, 1
      %vm1311 = vcmp.eq.s32.totalorder %v1279, 1
      %vm1312 = vcmp.eq.s32.totalorder %v1280, 1
      %vm1313 = vcmp.eq.s32.totalorder %v1281, 1
      %vm1314 = vcmp.eq.s32.totalorder %v1282, 1
      %vm1315 = vcmp.eq.s32.totalorder %v1283, 1
      %vm1316 = vcmp.eq.s32.totalorder %v1284, 1
      %vm1317 = vcmp.eq.s32.totalorder %v1285, 1
      %vm1318 = vcmp.eq.s32.totalorder %v1286, 1
      %vm1319 = vcmp.eq.s32.totalorder %v1287, 1
      %vm1320 = vcmp.eq.s32.totalorder %v1288, 1
      %v1321 = vsel %vm1289, %v710, 0.0
      %v1322 = vsel %vm1290, %v624, 0.0
      %v1323 = vsel %vm1291, %v626, 0.0
      %v1324 = vsel %vm1292, %v628, 0.0
      %v1325 = vsel %vm1293, %v630, 0.0
      %v1326 = vsel %vm1294, %v632, 0.0
      %v1327 = vsel %vm1295, %v634, 0.0
      %v1328 = vsel %vm1296, %v636, 0.0
      %v1329 = vsel %vm1297, %v638, 0.0
      %v1330 = vsel %vm1298, %v640, 0.0
      %v1331 = vsel %vm1299, %v642, 0.0
      %v1332 = vsel %vm1300, %v644, 0.0
      %v1333 = vsel %vm1301, %v646, 0.0
      %v1334 = vsel %vm1302, %v648, 0.0
      %v1335 = vsel %vm1303, %v650, 0.0
      %v1336 = vsel %vm1304, %v652, 0.0
      %v1337 = vsel %vm1305, %v654, 0.0
      %v1338 = vsel %vm1306, %v656, 0.0
      %v1339 = vsel %vm1307, %v658, 0.0
      %v1340 = vsel %vm1308, %v660, 0.0
      %v1341 = vsel %vm1309, %v662, 0.0
      %v1342 = vsel %vm1310, %v664, 0.0
      %v1343 = vsel %vm1311, %v666, 0.0
      %v1344 = vsel %vm1312, %v668, 0.0
      %v1345 = vsel %vm1313, %v670, 0.0
      %v1346 = vsel %vm1314, %v672, 0.0
      %v1347 = vsel %vm1315, %v674, 0.0
      %v1348 = vsel %vm1316, %v676, 0.0
      %v1349 = vsel %vm1317, %v678, 0.0
      %v1350 = vsel %vm1318, %v679, 0.0
      %v1351 = vsel %vm1319, %v587, 0.0
      %v1352 = vsel %vm1320, %v589, 0.0
      %v1353 = vsel %vm1097, 1, 0
      %v1354 = vsel %vm1098, 1, 0
      %v1355 = vsel %vm1099, 1, 0
      %v1356 = vsel %vm1100, 1, 0
      %v1357 = vsel %vm1101, 1, 0
      %v1358 = vsel %vm1102, 1, 0
      %v1359 = vsel %vm1103, 1, 0
      %v1360 = vsel %vm1104, 1, 0
      %v1361 = vsel %vm1105, 1, 0
      %v1362 = vsel %vm1106, 1, 0
      %v1363 = vsel %vm1107, 1, 0
      %v1364 = vsel %vm1108, 1, 0
      %v1365 = vsel %vm1109, 1, 0
      %v1366 = vsel %vm1110, 1, 0
      %v1367 = vsel %vm1111, 1, 0
      %v1368 = vsel %vm1112, 1, 0
      %v1369 = vsel %vm1113, 1, 0
      %v1370 = vsel %vm1114, 1, 0
      %v1371 = vsel %vm1115, 1, 0
      %v1372 = vsel %vm1116, 1, 0
      %v1373 = vsel %vm1117, 1, 0
      %v1374 = vsel %vm1118, 1, 0
      %v1375 = vsel %vm1119, 1, 0
      %v1376 = vsel %vm1120, 1, 0
      %v1377 = vsel %vm1121, 1, 0
      %v1378 = vsel %vm1122, 1, 0
      %v1379 = vsel %vm1123, 1, 0
      %v1380 = vsel %vm1124, 1, 0
      %v1381 = vsel %vm1125, 1, 0
      %v1382 = vsel %vm1126, 1, 0
      %v1383 = vsel %vm1127, 1, 0
      %v1384 = vsel %vm1128, 1, 0
      %vm1385 = vcmp.eq.s32.totalorder %v1353, 1
      %vm1386 = vcmp.eq.s32.totalorder %v1354, 1
      %vm1387 = vcmp.eq.s32.totalorder %v1355, 1
      %vm1388 = vcmp.eq.s32.totalorder %v1356, 1
      %vm1389 = vcmp.eq.s32.totalorder %v1357, 1
      %vm1390 = vcmp.eq.s32.totalorder %v1358, 1
      %vm1391 = vcmp.eq.s32.totalorder %v1359, 1
      %vm1392 = vcmp.eq.s32.totalorder %v1360, 1
      %vm1393 = vcmp.eq.s32.totalorder %v1361, 1
      %vm1394 = vcmp.eq.s32.totalorder %v1362, 1
      %vm1395 = vcmp.eq.s32.totalorder %v1363, 1
      %vm1396 = vcmp.eq.s32.totalorder %v1364, 1
      %vm1397 = vcmp.eq.s32.totalorder %v1365, 1
      %vm1398 = vcmp.eq.s32.totalorder %v1366, 1
      %vm1399 = vcmp.eq.s32.totalorder %v1367, 1
      %vm1400 = vcmp.eq.s32.totalorder %v1368, 1
      %vm1401 = vcmp.eq.s32.totalorder %v1369, 1
      %vm1402 = vcmp.eq.s32.totalorder %v1370, 1
      %vm1403 = vcmp.eq.s32.totalorder %v1371, 1
      %vm1404 = vcmp.eq.s32.totalorder %v1372, 1
      %vm1405 = vcmp.eq.s32.totalorder %v1373, 1
      %vm1406 = vcmp.eq.s32.totalorder %v1374, 1
      %vm1407 = vcmp.eq.s32.totalorder %v1375, 1
      %vm1408 = vcmp.eq.s32.totalorder %v1376, 1
      %vm1409 = vcmp.eq.s32.totalorder %v1377, 1
      %vm1410 = vcmp.eq.s32.totalorder %v1378, 1
      %vm1411 = vcmp.eq.s32.totalorder %v1379, 1
      %vm1412 = vcmp.eq.s32.totalorder %v1380, 1
      %vm1413 = vcmp.eq.s32.totalorder %v1381, 1
      %vm1414 = vcmp.eq.s32.totalorder %v1382, 1
      %vm1415 = vcmp.eq.s32.totalorder %v1383, 1
      %vm1416 = vcmp.eq.s32.totalorder %v1384, 1
      %v1417 = vsel %vm1385, %v1007, 0.0
      %v1418 = vsel %vm1386, %v1009, 0.0
      %v1419 = vsel %vm1387, %v1011, 0.0
      %v1420 = vsel %vm1388, %v1013, 0.0
      %v1421 = vsel %vm1389, %v1015, 0.0
      %v1422 = vsel %vm1390, %v1017, 0.0
      %v1423 = vsel %vm1391, %v1019, 0.0
      %v1424 = vsel %vm1392, %v1021, 0.0
      %v1425 = vsel %vm1393, %v1023, 0.0
      %v1426 = vsel %vm1394, %v1025, 0.0
      %v1427 = vsel %vm1395, %v1027, 0.0
      %v1428 = vsel %vm1396, %v1029, 0.0
      %v1429 = vsel %vm1397, %v1031, 0.0
      %v1430 = vsel %vm1398, %v1033, 0.0
      %v1431 = vsel %vm1399, %v1035, 0.0
      %v1432 = vsel %vm1400, %v1037, 0.0
      %v1433 = vsel %vm1401, %v1039, 0.0
      %v1434 = vsel %vm1402, %v1041, 0.0
      %v1435 = vsel %vm1403, %v1043, 0.0
      %v1436 = vsel %vm1404, %v1045, 0.0
      %v1437 = vsel %vm1405, %v1047, 0.0
      %v1438 = vsel %vm1406, %v1049, 0.0
      %v1439 = vsel %vm1407, %v1051, 0.0
      %v1440 = vsel %vm1408, %v1053, 0.0
      %v1441 = vsel %vm1409, %v1055, 0.0
      %v1442 = vsel %vm1410, %v1057, 0.0
      %v1443 = vsel %vm1411, %v1059, 0.0
      %v1444 = vsel %vm1412, %v1061, 0.0
      %v1445 = vsel %vm1413, %v1063, 0.0
      %v1446 = vsel %vm1414, %v1064, 0.0
      %v1447 = vsel %vm1415, %v1002, 0.0
      %v1448 = vsel %vm1416, %v1096, 0.0
      %vm1449 = vcmp.le.s32.totalorder %v549, 14
      %vm1450 = vcmp.le.s32.totalorder %v550, 14
      %vm1451 = vcmp.le.s32.totalorder %v551, 14
      %vm1452 = vcmp.le.s32.totalorder %v552, 14
      %vm1453 = vcmp.le.s32.totalorder %v553, 14
      %vm1454 = vcmp.le.s32.totalorder %v554, 14
      %vm1455 = vcmp.le.s32.totalorder %v555, 14
      %vm1456 = vcmp.le.s32.totalorder %v556, 14
      %vm1457 = vcmp.le.s32.totalorder %v557, 14
      %vm1458 = vcmp.le.s32.totalorder %v558, 14
      %vm1459 = vcmp.le.s32.totalorder %v559, 14
      %vm1460 = vcmp.le.s32.totalorder %v560, 14
      %vm1461 = vcmp.le.s32.totalorder %v561, 14
      %vm1462 = vcmp.le.s32.totalorder %v562, 14
      %vm1463 = vcmp.le.s32.totalorder %v563, 14
      %vm1464 = vcmp.le.s32.totalorder %v564, 14
      %vm1465 = vcmp.le.s32.totalorder %v565, 14
      %vm1466 = vcmp.le.s32.totalorder %v566, 14
      %vm1467 = vcmp.le.s32.totalorder %v567, 14
      %vm1468 = vcmp.le.s32.totalorder %v568, 14
      %vm1469 = vcmp.le.s32.totalorder %v569, 14
      %vm1470 = vcmp.le.s32.totalorder %v570, 14
      %vm1471 = vcmp.le.s32.totalorder %v571, 14
      %vm1472 = vcmp.le.s32.totalorder %v572, 14
      %vm1473 = vcmp.le.s32.totalorder %v573, 14
      %vm1474 = vcmp.le.s32.totalorder %v574, 14
      %vm1475 = vcmp.le.s32.totalorder %v575, 14
      %vm1476 = vcmp.le.s32.totalorder %v576, 14
      %vm1477 = vcmp.le.s32.totalorder %v577, 14
      %vm1478 = vcmp.le.s32.totalorder %v578, 14
      %vm1479 = vcmp.le.s32.totalorder %v579, 14
      %vm1480 = vcmp.le.s32.totalorder %v580, 14
      %vm1481 = vmand %vm1449, %vm743
      %vm1482 = vmand %vm1450, %vm744
      %vm1483 = vmand %vm1451, %vm745
      %vm1484 = vmand %vm1452, %vm746
      %vm1485 = vmand %vm1453, %vm747
      %vm1486 = vmand %vm1454, %vm748
      %vm1487 = vmand %vm1455, %vm749
      %vm1488 = vmand %vm1456, %vm750
      %vm1489 = vmand %vm1457, %vm751
      %vm1490 = vmand %vm1458, %vm752
      %vm1491 = vmand %vm1459, %vm753
      %vm1492 = vmand %vm1460, %vm754
      %vm1493 = vmand %vm1461, %vm755
      %vm1494 = vmand %vm1462, %vm756
      %vm1495 = vmand %vm1463, %vm757
      %vm1496 = vmand %vm1464, %vm758
      %vm1497 = vmand %vm1465, %vm759
      %vm1498 = vmand %vm1466, %vm760
      %vm1499 = vmand %vm1467, %vm761
      %vm1500 = vmand %vm1468, %vm762
      %vm1501 = vmand %vm1469, %vm763
      %vm1502 = vmand %vm1470, %vm764
      %vm1503 = vmand %vm1471, %vm765
      %vm1504 = vmand %vm1472, %vm766
      %vm1505 = vmand %vm1473, %vm767
      %vm1506 = vmand %vm1474, %vm768
      %vm1507 = vmand %vm1475, %vm769
      %vm1508 = vmand %vm1476, %vm770
      %vm1509 = vmand %vm1477, %vm771
      %vm1510 = vmand %vm1478, %vm772
      %vm1511 = vmand %vm1479, %vm773
      %vm1512 = vmand %vm1480, %vm774
      %v1513 = vsel %vm1481, 1, 0
      %v1514 = vsel %vm1482, 1, 0
      %v1515 = vsel %vm1483, 1, 0
      %v1516 = vsel %vm1484, 1, 0
      %v1517 = vsel %vm1485, 1, 0
      %v1518 = vsel %vm1486, 1, 0
      %v1519 = vsel %vm1487, 1, 0
      %v1520 = vsel %vm1488, 1, 0
      %v1521 = vsel %vm1489, 1, 0
      %v1522 = vsel %vm1490, 1, 0
      %v1523 = vsel %vm1491, 1, 0
      %v1524 = vsel %vm1492, 1, 0
      %v1525 = vsel %vm1493, 1, 0
      %v1526 = vsel %vm1494, 1, 0
      %v1527 = vsel %vm1495, 1, 0
      %v1528 = vsel %vm1496, 1, 0
      %v1529 = vsel %vm1497, 1, 0
      %v1530 = vsel %vm1498, 1, 0
      %v1531 = vsel %vm1499, 1, 0
      %v1532 = vsel %vm1500, 1, 0
      %v1533 = vsel %vm1501, 1, 0
      %v1534 = vsel %vm1502, 1, 0
      %v1535 = vsel %vm1503, 1, 0
      %v1536 = vsel %vm1504, 1, 0
      %v1537 = vsel %vm1505, 1, 0
      %v1538 = vsel %vm1506, 1, 0
      %v1539 = vsel %vm1507, 1, 0
      %v1540 = vsel %vm1508, 1, 0
      %v1541 = vsel %vm1509, 1, 0
      %v1542 = vsel %vm1510, 1, 0
      %v1543 = vsel %vm1511, 1, 0
      %v1544 = vsel %vm1512, 1, 0
      %vm1545 = vcmp.eq.s32.totalorder %v1513, 1
      %vm1546 = vcmp.eq.s32.totalorder %v1514, 1
      %vm1547 = vcmp.eq.s32.totalorder %v1515, 1
      %vm1548 = vcmp.eq.s32.totalorder %v1516, 1
      %vm1549 = vcmp.eq.s32.totalorder %v1517, 1
      %vm1550 = vcmp.eq.s32.totalorder %v1518, 1
      %vm1551 = vcmp.eq.s32.totalorder %v1519, 1
      %vm1552 = vcmp.eq.s32.totalorder %v1520, 1
      %vm1553 = vcmp.eq.s32.totalorder %v1521, 1
      %vm1554 = vcmp.eq.s32.totalorder %v1522, 1
      %vm1555 = vcmp.eq.s32.totalorder %v1523, 1
      %vm1556 = vcmp.eq.s32.totalorder %v1524, 1
      %vm1557 = vcmp.eq.s32.totalorder %v1525, 1
      %vm1558 = vcmp.eq.s32.totalorder %v1526, 1
      %vm1559 = vcmp.eq.s32.totalorder %v1527, 1
      %vm1560 = vcmp.eq.s32.totalorder %v1528, 1
      %vm1561 = vcmp.eq.s32.totalorder %v1529, 1
      %vm1562 = vcmp.eq.s32.totalorder %v1530, 1
      %vm1563 = vcmp.eq.s32.totalorder %v1531, 1
      %vm1564 = vcmp.eq.s32.totalorder %v1532, 1
      %vm1565 = vcmp.eq.s32.totalorder %v1533, 1
      %vm1566 = vcmp.eq.s32.totalorder %v1534, 1
      %vm1567 = vcmp.eq.s32.totalorder %v1535, 1
      %vm1568 = vcmp.eq.s32.totalorder %v1536, 1
      %vm1569 = vcmp.eq.s32.totalorder %v1537, 1
      %vm1570 = vcmp.eq.s32.totalorder %v1538, 1
      %vm1571 = vcmp.eq.s32.totalorder %v1539, 1
      %vm1572 = vcmp.eq.s32.totalorder %v1540, 1
      %vm1573 = vcmp.eq.s32.totalorder %v1541, 1
      %vm1574 = vcmp.eq.s32.totalorder %v1542, 1
      %vm1575 = vcmp.eq.s32.totalorder %v1543, 1
      %vm1576 = vcmp.eq.s32.totalorder %v1544, 1
      %v1577 = vsel %vm1545, %v626, 0.0
      %v1578 = vsel %vm1546, %v628, 0.0
      %v1579 = vsel %vm1547, %v630, 0.0
      %v1580 = vsel %vm1548, %v632, 0.0
      %v1581 = vsel %vm1549, %v634, 0.0
      %v1582 = vsel %vm1550, %v636, 0.0
      %v1583 = vsel %vm1551, %v638, 0.0
      %v1584 = vsel %vm1552, %v640, 0.0
      %v1585 = vsel %vm1553, %v642, 0.0
      %v1586 = vsel %vm1554, %v644, 0.0
      %v1587 = vsel %vm1555, %v646, 0.0
      %v1588 = vsel %vm1556, %v648, 0.0
      %v1589 = vsel %vm1557, %v650, 0.0
      %v1590 = vsel %vm1558, %v652, 0.0
      %v1591 = vsel %vm1559, %v654, 0.0
      %v1592 = vsel %vm1560, %v656, 0.0
      %v1593 = vsel %vm1561, %v658, 0.0
      %v1594 = vsel %vm1562, %v660, 0.0
      %v1595 = vsel %vm1563, %v662, 0.0
      %v1596 = vsel %vm1564, %v664, 0.0
      %v1597 = vsel %vm1565, %v666, 0.0
      %v1598 = vsel %vm1566, %v668, 0.0
      %v1599 = vsel %vm1567, %v670, 0.0
      %v1600 = vsel %vm1568, %v672, 0.0
      %v1601 = vsel %vm1569, %v674, 0.0
      %v1602 = vsel %vm1570, %v676, 0.0
      %v1603 = vsel %vm1571, %v678, 0.0
      %v1604 = vsel %vm1572, %v679, 0.0
      %v1605 = vsel %vm1573, %v587, 0.0
      %v1606 = vsel %vm1574, %v589, 0.0
      %v1607 = vsel %vm1575, %v710, 0.0
      %v1608 = vsel %vm1576, %v624, 0.0
      %v1609 = vsel %vm1449, 1, 0
      %v1610 = vsel %vm1450, 1, 0
      %v1611 = vsel %vm1451, 1, 0
      %v1612 = vsel %vm1452, 1, 0
      %v1613 = vsel %vm1453, 1, 0
      %v1614 = vsel %vm1454, 1, 0
      %v1615 = vsel %vm1455, 1, 0
      %v1616 = vsel %vm1456, 1, 0
      %v1617 = vsel %vm1457, 1, 0
      %v1618 = vsel %vm1458, 1, 0
      %v1619 = vsel %vm1459, 1, 0
      %v1620 = vsel %vm1460, 1, 0
      %v1621 = vsel %vm1461, 1, 0
      %v1622 = vsel %vm1462, 1, 0
      %v1623 = vsel %vm1463, 1, 0
      %v1624 = vsel %vm1464, 1, 0
      %v1625 = vsel %vm1465, 1, 0
      %v1626 = vsel %vm1466, 1, 0
      %v1627 = vsel %vm1467, 1, 0
      %v1628 = vsel %vm1468, 1, 0
      %v1629 = vsel %vm1469, 1, 0
      %v1630 = vsel %vm1470, 1, 0
      %v1631 = vsel %vm1471, 1, 0
      %v1632 = vsel %vm1472, 1, 0
      %v1633 = vsel %vm1473, 1, 0
      %v1634 = vsel %vm1474, 1, 0
      %v1635 = vsel %vm1475, 1, 0
      %v1636 = vsel %vm1476, 1, 0
      %v1637 = vsel %vm1477, 1, 0
      %v1638 = vsel %vm1478, 1, 0
      %v1639 = vsel %vm1479, 1, 0
      %v1640 = vsel %vm1480, 1, 0
      %vm1641 = vcmp.eq.s32.totalorder %v1609, 1
      %vm1642 = vcmp.eq.s32.totalorder %v1610, 1
      %vm1643 = vcmp.eq.s32.totalorder %v1611, 1
      %vm1644 = vcmp.eq.s32.totalorder %v1612, 1
      %vm1645 = vcmp.eq.s32.totalorder %v1613, 1
      %vm1646 = vcmp.eq.s32.totalorder %v1614, 1
      %vm1647 = vcmp.eq.s32.totalorder %v1615, 1
      %vm1648 = vcmp.eq.s32.totalorder %v1616, 1
      %vm1649 = vcmp.eq.s32.totalorder %v1617, 1
      %vm1650 = vcmp.eq.s32.totalorder %v1618, 1
      %vm1651 = vcmp.eq.s32.totalorder %v1619, 1
      %vm1652 = vcmp.eq.s32.totalorder %v1620, 1
      %vm1653 = vcmp.eq.s32.totalorder %v1621, 1
      %vm1654 = vcmp.eq.s32.totalorder %v1622, 1
      %vm1655 = vcmp.eq.s32.totalorder %v1623, 1
      %vm1656 = vcmp.eq.s32.totalorder %v1624, 1
      %vm1657 = vcmp.eq.s32.totalorder %v1625, 1
      %vm1658 = vcmp.eq.s32.totalorder %v1626, 1
      %vm1659 = vcmp.eq.s32.totalorder %v1627, 1
      %vm1660 = vcmp.eq.s32.totalorder %v1628, 1
      %vm1661 = vcmp.eq.s32.totalorder %v1629, 1
      %vm1662 = vcmp.eq.s32.totalorder %v1630, 1
      %vm1663 = vcmp.eq.s32.totalorder %v1631, 1
      %vm1664 = vcmp.eq.s32.totalorder %v1632, 1
      %vm1665 = vcmp.eq.s32.totalorder %v1633, 1
      %vm1666 = vcmp.eq.s32.totalorder %v1634, 1
      %vm1667 = vcmp.eq.s32.totalorder %v1635, 1
      %vm1668 = vcmp.eq.s32.totalorder %v1636, 1
      %vm1669 = vcmp.eq.s32.totalorder %v1637, 1
      %vm1670 = vcmp.eq.s32.totalorder %v1638, 1
      %vm1671 = vcmp.eq.s32.totalorder %v1639, 1
      %vm1672 = vcmp.eq.s32.totalorder %v1640, 1
      %v1673 = vsel %vm1641, %v422, 0.0
      %v1674 = vsel %vm1642, %v423, 0.0
      %v1675 = vsel %vm1643, %v424, 0.0
      %v1676 = vsel %vm1644, %v425, 0.0
      %v1677 = vsel %vm1645, %v426, 0.0
      %v1678 = vsel %vm1646, %v427, 0.0
      %v1679 = vsel %vm1647, %v428, 0.0
      %v1680 = vsel %vm1648, %v429, 0.0
      %v1681 = vsel %vm1649, %v430, 0.0
      %v1682 = vsel %vm1650, %v431, 0.0
      %v1683 = vsel %vm1651, %v432, 0.0
      %v1684 = vsel %vm1652, %v433, 0.0
      %v1685 = vsel %vm1653, %v434, 0.0
      %v1686 = vsel %vm1654, %v435, 0.0
      %v1687 = vsel %vm1655, %v436, 0.0
      %v1688 = vsel %vm1656, %v437, 0.0
      %v1689 = vsel %vm1657, %v438, 0.0
      %v1690 = vsel %vm1658, %v439, 0.0
      %v1691 = vsel %vm1659, %v440, 0.0
      %v1692 = vsel %vm1660, %v441, 0.0
      %v1693 = vsel %vm1661, %v442, 0.0
      %v1694 = vsel %vm1662, %v443, 0.0
      %v1695 = vsel %vm1663, %v444, 0.0
      %v1696 = vsel %vm1664, %v445, 0.0
      %v1697 = vsel %vm1665, %v446, 0.0
      %v1698 = vsel %vm1666, %v447, 0.0
      %v1699 = vsel %vm1667, %v448, 0.0
      %v1700 = vsel %vm1668, %v449, 0.0
      %v1701 = vsel %vm1669, %v450, 0.0
      %v1702 = vsel %vm1670, %v451, 0.0
      %v1703 = vsel %vm1671, %v420, 0.0
      %v1704 = vsel %vm1672, %v421, 0.0
      %vm1705 = vmand %vm1449, %vm1097
      %vm1706 = vmand %vm1450, %vm1098
      %vm1707 = vmand %vm1451, %vm1099
      %vm1708 = vmand %vm1452, %vm1100
      %vm1709 = vmand %vm1453, %vm1101
      %vm1710 = vmand %vm1454, %vm1102
      %vm1711 = vmand %vm1455, %vm1103
      %vm1712 = vmand %vm1456, %vm1104
      %vm1713 = vmand %vm1457, %vm1105
      %vm1714 = vmand %vm1458, %vm1106
      %vm1715 = vmand %vm1459, %vm1107
      %vm1716 = vmand %vm1460, %vm1108
      %vm1717 = vmand %vm1461, %vm1109
      %vm1718 = vmand %vm1462, %vm1110
      %vm1719 = vmand %vm1463, %vm1111
      %vm1720 = vmand %vm1464, %vm1112
      %vm1721 = vmand %vm1465, %vm1113
      %vm1722 = vmand %vm1466, %vm1114
      %vm1723 = vmand %vm1467, %vm1115
      %vm1724 = vmand %vm1468, %vm1116
      %vm1725 = vmand %vm1469, %vm1117
      %vm1726 = vmand %vm1470, %vm1118
      %vm1727 = vmand %vm1471, %vm1119
      %vm1728 = vmand %vm1472, %vm1120
      %vm1729 = vmand %vm1473, %vm1121
      %vm1730 = vmand %vm1474, %vm1122
      %vm1731 = vmand %vm1475, %vm1123
      %vm1732 = vmand %vm1476, %vm1124
      %vm1733 = vmand %vm1477, %vm1125
      %vm1734 = vmand %vm1478, %vm1126
      %vm1735 = vmand %vm1479, %vm1127
      %vm1736 = vmand %vm1480, %vm1128
      %v1737 = vsel %vm1705, 1, 0
      %v1738 = vsel %vm1706, 1, 0
      %v1739 = vsel %vm1707, 1, 0
      %v1740 = vsel %vm1708, 1, 0
      %v1741 = vsel %vm1709, 1, 0
      %v1742 = vsel %vm1710, 1, 0
      %v1743 = vsel %vm1711, 1, 0
      %v1744 = vsel %vm1712, 1, 0
      %v1745 = vsel %vm1713, 1, 0
      %v1746 = vsel %vm1714, 1, 0
      %v1747 = vsel %vm1715, 1, 0
      %v1748 = vsel %vm1716, 1, 0
      %v1749 = vsel %vm1717, 1, 0
      %v1750 = vsel %vm1718, 1, 0
      %v1751 = vsel %vm1719, 1, 0
      %v1752 = vsel %vm1720, 1, 0
      %v1753 = vsel %vm1721, 1, 0
      %v1754 = vsel %vm1722, 1, 0
      %v1755 = vsel %vm1723, 1, 0
      %v1756 = vsel %vm1724, 1, 0
      %v1757 = vsel %vm1725, 1, 0
      %v1758 = vsel %vm1726, 1, 0
      %v1759 = vsel %vm1727, 1, 0
      %v1760 = vsel %vm1728, 1, 0
      %v1761 = vsel %vm1729, 1, 0
      %v1762 = vsel %vm1730, 1, 0
      %v1763 = vsel %vm1731, 1, 0
      %v1764 = vsel %vm1732, 1, 0
      %v1765 = vsel %vm1733, 1, 0
      %v1766 = vsel %vm1734, 1, 0
      %v1767 = vsel %vm1735, 1, 0
      %v1768 = vsel %vm1736, 1, 0
      %vm1769 = vcmp.eq.s32.totalorder %v1737, 1
      %vm1770 = vcmp.eq.s32.totalorder %v1738, 1
      %vm1771 = vcmp.eq.s32.totalorder %v1739, 1
      %vm1772 = vcmp.eq.s32.totalorder %v1740, 1
      %vm1773 = vcmp.eq.s32.totalorder %v1741, 1
      %vm1774 = vcmp.eq.s32.totalorder %v1742, 1
      %vm1775 = vcmp.eq.s32.totalorder %v1743, 1
      %vm1776 = vcmp.eq.s32.totalorder %v1744, 1
      %vm1777 = vcmp.eq.s32.totalorder %v1745, 1
      %vm1778 = vcmp.eq.s32.totalorder %v1746, 1
      %vm1779 = vcmp.eq.s32.totalorder %v1747, 1
      %vm1780 = vcmp.eq.s32.totalorder %v1748, 1
      %vm1781 = vcmp.eq.s32.totalorder %v1749, 1
      %vm1782 = vcmp.eq.s32.totalorder %v1750, 1
      %vm1783 = vcmp.eq.s32.totalorder %v1751, 1
      %vm1784 = vcmp.eq.s32.totalorder %v1752, 1
      %vm1785 = vcmp.eq.s32.totalorder %v1753, 1
      %vm1786 = vcmp.eq.s32.totalorder %v1754, 1
      %vm1787 = vcmp.eq.s32.totalorder %v1755, 1
      %vm1788 = vcmp.eq.s32.totalorder %v1756, 1
      %vm1789 = vcmp.eq.s32.totalorder %v1757, 1
      %vm1790 = vcmp.eq.s32.totalorder %v1758, 1
      %vm1791 = vcmp.eq.s32.totalorder %v1759, 1
      %vm1792 = vcmp.eq.s32.totalorder %v1760, 1
      %vm1793 = vcmp.eq.s32.totalorder %v1761, 1
      %vm1794 = vcmp.eq.s32.totalorder %v1762, 1
      %vm1795 = vcmp.eq.s32.totalorder %v1763, 1
      %vm1796 = vcmp.eq.s32.totalorder %v1764, 1
      %vm1797 = vcmp.eq.s32.totalorder %v1765, 1
      %vm1798 = vcmp.eq.s32.totalorder %v1766, 1
      %vm1799 = vcmp.eq.s32.totalorder %v1767, 1
      %vm1800 = vcmp.eq.s32.totalorder %v1768, 1
      %v1801 = vsel %vm1769, %v1011, 0.0
      %v1802 = vsel %vm1770, %v1013, 0.0
      %v1803 = vsel %vm1771, %v1015, 0.0
      %v1804 = vsel %vm1772, %v1017, 0.0
      %v1805 = vsel %vm1773, %v1019, 0.0
      %v1806 = vsel %vm1774, %v1021, 0.0
      %v1807 = vsel %vm1775, %v1023, 0.0
      %v1808 = vsel %vm1776, %v1025, 0.0
      %v1809 = vsel %vm1777, %v1027, 0.0
      %v1810 = vsel %vm1778, %v1029, 0.0
      %v1811 = vsel %vm1779, %v1031, 0.0
      %v1812 = vsel %vm1780, %v1033, 0.0
      %v1813 = vsel %vm1781, %v1035, 0.0
      %v1814 = vsel %vm1782, %v1037, 0.0
      %v1815 = vsel %vm1783, %v1039, 0.0
      %v1816 = vsel %vm1784, %v1041, 0.0
      %v1817 = vsel %vm1785, %v1043, 0.0
      %v1818 = vsel %vm1786, %v1045, 0.0
      %v1819 = vsel %vm1787, %v1047, 0.0
      %v1820 = vsel %vm1788, %v1049, 0.0
      %v1821 = vsel %vm1789, %v1051, 0.0
      %v1822 = vsel %vm1790, %v1053, 0.0
      %v1823 = vsel %vm1791, %v1055, 0.0
      %v1824 = vsel %vm1792, %v1057, 0.0
      %v1825 = vsel %vm1793, %v1059, 0.0
      %v1826 = vsel %vm1794, %v1061, 0.0
      %v1827 = vsel %vm1795, %v1063, 0.0
      %v1828 = vsel %vm1796, %v1064, 0.0
      %v1829 = vsel %vm1797, %v1002, 0.0
      %v1830 = vsel %vm1798, %v1096, 0.0
      %v1831 = vsel %vm1799, %v1007, 0.0
      %v1832 = vsel %vm1800, %v1009, 0.0
      %1865 = vrot.lane.b32.xlu0 %v967, 4
      %v1866 = vpop.permute.xlu0 %1865
      %1867 = vrot.lane.b32.xlu0 %v968, 4
      %v1868 = vpop.permute.xlu0 %1867
      %1869 = vrot.lane.b32.xlu0 %v969, 4
      %v1870 = vpop.permute.xlu0 %1869
      %1871 = vrot.lane.b32.xlu0 %v970, 4
      %v1872 = vpop.permute.xlu0 %1871
      %1873 = vrot.lane.b32.xlu0 %v971, 4
      %v1874 = vpop.permute.xlu0 %1873
      %1875 = vrot.lane.b32.xlu0 %v972, 4
      %v1876 = vpop.permute.xlu0 %1875
      %1877 = vrot.lane.b32.xlu0 %v973, 4
      %v1878 = vpop.permute.xlu0 %1877
      %1879 = vrot.lane.b32.xlu0 %v974, 4
      %v1880 = vpop.permute.xlu0 %1879
      %1881 = vrot.lane.b32.xlu0 %v975, 4
      %v1882 = vpop.permute.xlu0 %1881
      %1883 = vrot.lane.b32.xlu0 %v976, 4
      %v1884 = vpop.permute.xlu0 %1883
      %1885 = vrot.lane.b32.xlu0 %v977, 4
      %v1886 = vpop.permute.xlu0 %1885
      %1887 = vrot.lane.b32.xlu0 %v978, 4
      %v1888 = vpop.permute.xlu0 %1887
      %1889 = vrot.lane.b32.xlu0 %v979, 4
      %v1890 = vpop.permute.xlu0 %1889
      %1891 = vrot.lane.b32.xlu0 %v980, 4
      %v1892 = vpop.permute.xlu0 %1891
      %1893 = vrot.lane.b32.xlu0 %v981, 4
      %v1894 = vpop.permute.xlu0 %1893
      %1895 = vrot.lane.b32.xlu0 %v982, 4
      %v1896 = vpop.permute.xlu0 %1895
      %1897 = vrot.lane.b32.xlu0 %v983, 4
      %v1898 = vpop.permute.xlu0 %1897
      %1899 = vrot.lane.b32.xlu0 %v984, 4
      %v1900 = vpop.permute.xlu0 %1899
      %1901 = vrot.lane.b32.xlu0 %v985, 4
      %v1902 = vpop.permute.xlu0 %1901
      %1903 = vrot.lane.b32.xlu0 %v986, 4
      %v1904 = vpop.permute.xlu0 %1903
      %1905 = vrot.lane.b32.xlu0 %v987, 4
      %v1906 = vpop.permute.xlu0 %1905
      %1907 = vrot.lane.b32.xlu0 %v988, 4
      %v1908 = vpop.permute.xlu0 %1907
      %1909 = vrot.lane.b32.xlu0 %v989, 4
      %v1910 = vpop.permute.xlu0 %1909
      %1911 = vrot.lane.b32.xlu0 %v990, 4
      %v1912 = vpop.permute.xlu0 %1911
      %1913 = vrot.lane.b32.xlu0 %v991, 4
      %v1914 = vpop.permute.xlu0 %1913
      %1915 = vrot.lane.b32.xlu0 %v992, 4
      %v1916 = vpop.permute.xlu0 %1915
      %1917 = vrot.lane.b32.xlu0 %v993, 4
      %v1918 = vpop.permute.xlu0 %1917
      %1919 = vrot.lane.b32.xlu0 %v994, 4
      %v1920 = vpop.permute.xlu0 %1919
      %1921 = vrot.lane.b32.xlu0 %v995, 4
      %v1922 = vpop.permute.xlu0 %1921
      %1923 = vrot.lane.b32.xlu0 %v996, 4
      %v1924 = vpop.permute.xlu0 %1923
      %1925 = vrot.lane.b32.xlu0 %v997, 4
      %v1926 = vpop.permute.xlu0 %1925
      %1927 = vrot.lane.b32.xlu0 %v998, 4
      %v1928 = vpop.permute.xlu0 %1927
      %1993 = vrot.lane.b32.xlu0 %v1225, 8
      %v1994 = vpop.permute.xlu0 %1993
      %1995 = vrot.lane.b32.xlu0 %v1226, 8
      %v1996 = vpop.permute.xlu0 %1995
      %1997 = vrot.lane.b32.xlu0 %v1227, 8
      %v1998 = vpop.permute.xlu0 %1997
      %1999 = vrot.lane.b32.xlu0 %v1228, 8
      %v2000 = vpop.permute.xlu0 %1999
      %2001 = vrot.lane.b32.xlu0 %v1229, 8
      %v2002 = vpop.permute.xlu0 %2001
      %2003 = vrot.lane.b32.xlu0 %v1230, 8
      %v2004 = vpop.permute.xlu0 %2003
      %2005 = vrot.lane.b32.xlu0 %v1231, 8
      %v2006 = vpop.permute.xlu0 %2005
      %2007 = vrot.lane.b32.xlu0 %v1232, 8
      %v2008 = vpop.permute.xlu0 %2007
      %2009 = vrot.lane.b32.xlu0 %v1233, 8
      %v2010 = vpop.permute.xlu0 %2009
      %2011 = vrot.lane.b32.xlu0 %v1234, 8
      %v2012 = vpop.permute.xlu0 %2011
      %2013 = vrot.lane.b32.xlu0 %v1235, 8
      %v2014 = vpop.permute.xlu0 %2013
      %2015 = vrot.lane.b32.xlu0 %v1236, 8
      %v2016 = vpop.permute.xlu0 %2015
      %2017 = vrot.lane.b32.xlu0 %v1237, 8
      %v2018 = vpop.permute.xlu0 %2017
      %2019 = vrot.lane.b32.xlu0 %v1238, 8
      %v2020 = vpop.permute.xlu0 %2019
      %2021 = vrot.lane.b32.xlu0 %v1239, 8
      %v2022 = vpop.permute.xlu0 %2021
      %2023 = vrot.lane.b32.xlu0 %v1240, 8
      %v2024 = vpop.permute.xlu0 %2023
      %2025 = vrot.lane.b32.xlu0 %v1241, 8
      %v2026 = vpop.permute.xlu0 %2025
      %2027 = vrot.lane.b32.xlu0 %v1242, 8
      %v2028 = vpop.permute.xlu0 %2027
      %2029 = vrot.lane.b32.xlu0 %v1243, 8
      %v2030 = vpop.permute.xlu0 %2029
      %2031 = vrot.lane.b32.xlu0 %v1244, 8
      %v2032 = vpop.permute.xlu0 %2031
      %2033 = vrot.lane.b32.xlu0 %v1245, 8
      %v2034 = vpop.permute.xlu0 %2033
      %2035 = vrot.lane.b32.xlu0 %v1246, 8
      %v2036 = vpop.permute.xlu0 %2035
      %2037 = vrot.lane.b32.xlu0 %v1247, 8
      %v2038 = vpop.permute.xlu0 %2037
      %2039 = vrot.lane.b32.xlu0 %v1248, 8
      %v2040 = vpop.permute.xlu0 %2039
      %2041 = vrot.lane.b32.xlu0 %v1249, 8
      %v2042 = vpop.permute.xlu0 %2041
      %2043 = vrot.lane.b32.xlu0 %v1250, 8
      %v2044 = vpop.permute.xlu0 %2043
      %2045 = vrot.lane.b32.xlu0 %v1251, 8
      %v2046 = vpop.permute.xlu0 %2045
      %2047 = vrot.lane.b32.xlu0 %v1252, 8
      %v2048 = vpop.permute.xlu0 %2047
      %2049 = vrot.lane.b32.xlu0 %v1253, 8
      %v2050 = vpop.permute.xlu0 %2049
      %2051 = vrot.lane.b32.xlu0 %v1254, 8
      %v2052 = vpop.permute.xlu0 %2051
      %2053 = vrot.lane.b32.xlu0 %v1255, 8
      %v2054 = vpop.permute.xlu0 %2053
      %2055 = vrot.lane.b32.xlu0 %v1256, 8
      %v2056 = vpop.permute.xlu0 %2055
      %2121 = vrot.lane.b32.xlu0 %v1321, 12
      %v2122 = vpop.permute.xlu0 %2121
      %2123 = vrot.lane.b32.xlu0 %v1322, 12
      %v2124 = vpop.permute.xlu0 %2123
      %2125 = vrot.lane.b32.xlu0 %v1323, 12
      %v2126 = vpop.permute.xlu0 %2125
      %2127 = vrot.lane.b32.xlu0 %v1324, 12
      %v2128 = vpop.permute.xlu0 %2127
      %2129 = vrot.lane.b32.xlu0 %v1325, 12
      %v2130 = vpop.permute.xlu0 %2129
      %2131 = vrot.lane.b32.xlu0 %v1326, 12
      %v2132 = vpop.permute.xlu0 %2131
      %2133 = vrot.lane.b32.xlu0 %v1327, 12
      %v2134 = vpop.permute.xlu0 %2133
      %2135 = vrot.lane.b32.xlu0 %v1328, 12
      %v2136 = vpop.permute.xlu0 %2135
      %2137 = vrot.lane.b32.xlu0 %v1329, 12
      %v2138 = vpop.permute.xlu0 %2137
      %2139 = vrot.lane.b32.xlu0 %v1330, 12
      %v2140 = vpop.permute.xlu0 %2139
      %2141 = vrot.lane.b32.xlu0 %v1331, 12
      %v2142 = vpop.permute.xlu0 %2141
      %2143 = vrot.lane.b32.xlu0 %v1332, 12
      %v2144 = vpop.permute.xlu0 %2143
      %2145 = vrot.lane.b32.xlu0 %v1333, 12
      %v2146 = vpop.permute.xlu0 %2145
      %2147 = vrot.lane.b32.xlu0 %v1334, 12
      %v2148 = vpop.permute.xlu0 %2147
      %2149 = vrot.lane.b32.xlu0 %v1335, 12
      %v2150 = vpop.permute.xlu0 %2149
      %2151 = vrot.lane.b32.xlu0 %v1336, 12
      %v2152 = vpop.permute.xlu0 %2151
      %2153 = vrot.lane.b32.xlu0 %v1337, 12
      %v2154 = vpop.permute.xlu0 %2153
      %2155 = vrot.lane.b32.xlu0 %v1338, 12
      %v2156 = vpop.permute.xlu0 %2155
      %2157 = vrot.lane.b32.xlu0 %v1339, 12
      %v2158 = vpop.permute.xlu0 %2157
      %2159 = vrot.lane.b32.xlu0 %v1340, 12
      %v2160 = vpop.permute.xlu0 %2159
      %2161 = vrot.lane.b32.xlu0 %v1341, 12
      %v2162 = vpop.permute.xlu0 %2161
      %2163 = vrot.lane.b32.xlu0 %v1342, 12
      %v2164 = vpop.permute.xlu0 %2163
      %2165 = vrot.lane.b32.xlu0 %v1343, 12
      %v2166 = vpop.permute.xlu0 %2165
      %2167 = vrot.lane.b32.xlu0 %v1344, 12
      %v2168 = vpop.permute.xlu0 %2167
      %2169 = vrot.lane.b32.xlu0 %v1345, 12
      %v2170 = vpop.permute.xlu0 %2169
      %2171 = vrot.lane.b32.xlu0 %v1346, 12
      %v2172 = vpop.permute.xlu0 %2171
      %2173 = vrot.lane.b32.xlu0 %v1347, 12
      %v2174 = vpop.permute.xlu0 %2173
      %2175 = vrot.lane.b32.xlu0 %v1348, 12
      %v2176 = vpop.permute.xlu0 %2175
      %2177 = vrot.lane.b32.xlu0 %v1349, 12
      %v2178 = vpop.permute.xlu0 %2177
      %2179 = vrot.lane.b32.xlu0 %v1350, 12
      %v2180 = vpop.permute.xlu0 %2179
      %2181 = vrot.lane.b32.xlu0 %v1351, 12
      %v2182 = vpop.permute.xlu0 %2181
      %2183 = vrot.lane.b32.xlu0 %v1352, 12
      %v2184 = vpop.permute.xlu0 %2183
      %2217 = vrot.lane.b32.xlu0 %v420, 16
      %v2218 = vpop.permute.xlu0 %2217
      %2219 = vrot.lane.b32.xlu0 %v421, 16
      %v2220 = vpop.permute.xlu0 %2219
      %2221 = vrot.lane.b32.xlu0 %v422, 16
      %v2222 = vpop.permute.xlu0 %2221
      %2223 = vrot.lane.b32.xlu0 %v423, 16
      %v2224 = vpop.permute.xlu0 %2223
      %2225 = vrot.lane.b32.xlu0 %v424, 16
      %v2226 = vpop.permute.xlu0 %2225
      %2227 = vrot.lane.b32.xlu0 %v425, 16
      %v2228 = vpop.permute.xlu0 %2227
      %2229 = vrot.lane.b32.xlu0 %v426, 16
      %v2230 = vpop.permute.xlu0 %2229
      %2231 = vrot.lane.b32.xlu0 %v427, 16
      %v2232 = vpop.permute.xlu0 %2231
      %2233 = vrot.lane.b32.xlu0 %v428, 16
      %v2234 = vpop.permute.xlu0 %2233
      %2235 = vrot.lane.b32.xlu0 %v429, 16
      %v2236 = vpop.permute.xlu0 %2235
      %2237 = vrot.lane.b32.xlu0 %v430, 16
      %v2238 = vpop.permute.xlu0 %2237
      %2239 = vrot.lane.b32.xlu0 %v431, 16
      %v2240 = vpop.permute.xlu0 %2239
      %2241 = vrot.lane.b32.xlu0 %v432, 16
      %v2242 = vpop.permute.xlu0 %2241
      %2243 = vrot.lane.b32.xlu0 %v433, 16
      %v2244 = vpop.permute.xlu0 %2243
      %2245 = vrot.lane.b32.xlu0 %v434, 16
      %v2246 = vpop.permute.xlu0 %2245
      %2247 = vrot.lane.b32.xlu0 %v435, 16
      %v2248 = vpop.permute.xlu0 %2247
      %2249 = vrot.lane.b32.xlu0 %v436, 16
      %v2250 = vpop.permute.xlu0 %2249
      %2251 = vrot.lane.b32.xlu0 %v437, 16
      %v2252 = vpop.permute.xlu0 %2251
      %2253 = vrot.lane.b32.xlu0 %v438, 16
      %v2254 = vpop.permute.xlu0 %2253
      %2255 = vrot.lane.b32.xlu0 %v439, 16
      %v2256 = vpop.permute.xlu0 %2255
      %2257 = vrot.lane.b32.xlu0 %v440, 16
      %v2258 = vpop.permute.xlu0 %2257
      %2259 = vrot.lane.b32.xlu0 %v441, 16
      %v2260 = vpop.permute.xlu0 %2259
      %2261 = vrot.lane.b32.xlu0 %v442, 16
      %v2262 = vpop.permute.xlu0 %2261
      %2263 = vrot.lane.b32.xlu0 %v443, 16
      %v2264 = vpop.permute.xlu0 %2263
      %2265 = vrot.lane.b32.xlu0 %v444, 16
      %v2266 = vpop.permute.xlu0 %2265
      %2267 = vrot.lane.b32.xlu0 %v445, 16
      %v2268 = vpop.permute.xlu0 %2267
      %2269 = vrot.lane.b32.xlu0 %v446, 16
      %v2270 = vpop.permute.xlu0 %2269
      %2271 = vrot.lane.b32.xlu0 %v447, 16
      %v2272 = vpop.permute.xlu0 %2271
      %2273 = vrot.lane.b32.xlu0 %v448, 16
      %v2274 = vpop.permute.xlu0 %2273
      %2275 = vrot.lane.b32.xlu0 %v449, 16
      %v2276 = vpop.permute.xlu0 %2275
      %2277 = vrot.lane.b32.xlu0 %v450, 16
      %v2278 = vpop.permute.xlu0 %2277
      %2279 = vrot.lane.b32.xlu0 %v451, 16
      %v2280 = vpop.permute.xlu0 %2279
      %2345 = vrot.lane.b32.xlu0 %v1417, 20
      %v2346 = vpop.permute.xlu0 %2345
      %2347 = vrot.lane.b32.xlu0 %v1418, 20
      %v2348 = vpop.permute.xlu0 %2347
      %2349 = vrot.lane.b32.xlu0 %v1419, 20
      %v2350 = vpop.permute.xlu0 %2349
      %2351 = vrot.lane.b32.xlu0 %v1420, 20
      %v2352 = vpop.permute.xlu0 %2351
      %2353 = vrot.lane.b32.xlu0 %v1421, 20
      %v2354 = vpop.permute.xlu0 %2353
      %2355 = vrot.lane.b32.xlu0 %v1422, 20
      %v2356 = vpop.permute.xlu0 %2355
      %2357 = vrot.lane.b32.xlu0 %v1423, 20
      %v2358 = vpop.permute.xlu0 %2357
      %2359 = vrot.lane.b32.xlu0 %v1424, 20
      %v2360 = vpop.permute.xlu0 %2359
      %2361 = vrot.lane.b32.xlu0 %v1425, 20
      %v2362 = vpop.permute.xlu0 %2361
      %2363 = vrot.lane.b32.xlu0 %v1426, 20
      %v2364 = vpop.permute.xlu0 %2363
      %2365 = vrot.lane.b32.xlu0 %v1427, 20
      %v2366 = vpop.permute.xlu0 %2365
      %2367 = vrot.lane.b32.xlu0 %v1428, 20
      %v2368 = vpop.permute.xlu0 %2367
      %2369 = vrot.lane.b32.xlu0 %v1429, 20
      %v2370 = vpop.permute.xlu0 %2369
      %2371 = vrot.lane.b32.xlu0 %v1430, 20
      %v2372 = vpop.permute.xlu0 %2371
      %2373 = vrot.lane.b32.xlu0 %v1431, 20
      %v2374 = vpop.permute.xlu0 %2373
      %2375 = vrot.lane.b32.xlu0 %v1432, 20
      %v2376 = vpop.permute.xlu0 %2375
      %2377 = vrot.lane.b32.xlu0 %v1433, 20
      %v2378 = vpop.permute.xlu0 %2377
      %2379 = vrot.lane.b32.xlu0 %v1434, 20
      %v2380 = vpop.permute.xlu0 %2379
      %2381 = vrot.lane.b32.xlu0 %v1435, 20
      %v2382 = vpop.permute.xlu0 %2381
      %2383 = vrot.lane.b32.xlu0 %v1436, 20
      %v2384 = vpop.permute.xlu0 %2383
      %2385 = vrot.lane.b32.xlu0 %v1437, 20
      %v2386 = vpop.permute.xlu0 %2385
      %2387 = vrot.lane.b32.xlu0 %v1438, 20
      %v2388 = vpop.permute.xlu0 %2387
      %2389 = vrot.lane.b32.xlu0 %v1439, 20
      %v2390 = vpop.permute.xlu0 %2389
      %2391 = vrot.lane.b32.xlu0 %v1440, 20
      %v2392 = vpop.permute.xlu0 %2391
      %2393 = vrot.lane.b32.xlu0 %v1441, 20
      %v2394 = vpop.permute.xlu0 %2393
      %2395 = vrot.lane.b32.xlu0 %v1442, 20
      %v2396 = vpop.permute.xlu0 %2395
      %2397 = vrot.lane.b32.xlu0 %v1443, 20
      %v2398 = vpop.permute.xlu0 %2397
      %2399 = vrot.lane.b32.xlu0 %v1444, 20
      %v2400 = vpop.permute.xlu0 %2399
      %2401 = vrot.lane.b32.xlu0 %v1445, 20
      %v2402 = vpop.permute.xlu0 %2401
      %2403 = vrot.lane.b32.xlu0 %v1446, 20
      %v2404 = vpop.permute.xlu0 %2403
      %2405 = vrot.lane.b32.xlu0 %v1447, 20
      %v2406 = vpop.permute.xlu0 %2405
      %2407 = vrot.lane.b32.xlu0 %v1448, 20
      %v2408 = vpop.permute.xlu0 %2407
      %2473 = vrot.lane.b32.xlu0 %v1577, 24
      %v2474 = vpop.permute.xlu0 %2473
      %2475 = vrot.lane.b32.xlu0 %v1578, 24
      %v2476 = vpop.permute.xlu0 %2475
      %2477 = vrot.lane.b32.xlu0 %v1579, 24
      %v2478 = vpop.permute.xlu0 %2477
      %2479 = vrot.lane.b32.xlu0 %v1580, 24
      %v2480 = vpop.permute.xlu0 %2479
      %2481 = vrot.lane.b32.xlu0 %v1581, 24
      %v2482 = vpop.permute.xlu0 %2481
      %2483 = vrot.lane.b32.xlu0 %v1582, 24
      %v2484 = vpop.permute.xlu0 %2483
      %2485 = vrot.lane.b32.xlu0 %v1583, 24
      %v2486 = vpop.permute.xlu0 %2485
      %2487 = vrot.lane.b32.xlu0 %v1584, 24
      %v2488 = vpop.permute.xlu0 %2487
      %2489 = vrot.lane.b32.xlu0 %v1585, 24
      %v2490 = vpop.permute.xlu0 %2489
      %2491 = vrot.lane.b32.xlu0 %v1586, 24
      %v2492 = vpop.permute.xlu0 %2491
      %2493 = vrot.lane.b32.xlu0 %v1587, 24
      %v2494 = vpop.permute.xlu0 %2493
      %2495 = vrot.lane.b32.xlu0 %v1588, 24
      %v2496 = vpop.permute.xlu0 %2495
      %2497 = vrot.lane.b32.xlu0 %v1589, 24
      %v2498 = vpop.permute.xlu0 %2497
      %2499 = vrot.lane.b32.xlu0 %v1590, 24
      %v2500 = vpop.permute.xlu0 %2499
      %2501 = vrot.lane.b32.xlu0 %v1591, 24
      %v2502 = vpop.permute.xlu0 %2501
      %2503 = vrot.lane.b32.xlu0 %v1592, 24
      %v2504 = vpop.permute.xlu0 %2503
      %2505 = vrot.lane.b32.xlu0 %v1593, 24
      %v2506 = vpop.permute.xlu0 %2505
      %2507 = vrot.lane.b32.xlu0 %v1594, 24
      %v2508 = vpop.permute.xlu0 %2507
      %2509 = vrot.lane.b32.xlu0 %v1595, 24
      %v2510 = vpop.permute.xlu0 %2509
      %2511 = vrot.lane.b32.xlu0 %v1596, 24
      %v2512 = vpop.permute.xlu0 %2511
      %2513 = vrot.lane.b32.xlu0 %v1597, 24
      %v2514 = vpop.permute.xlu0 %2513
      %2515 = vrot.lane.b32.xlu0 %v1598, 24
      %v2516 = vpop.permute.xlu0 %2515
      %2517 = vrot.lane.b32.xlu0 %v1599, 24
      %v2518 = vpop.permute.xlu0 %2517
      %2519 = vrot.lane.b32.xlu0 %v1600, 24
      %v2520 = vpop.permute.xlu0 %2519
      %2521 = vrot.lane.b32.xlu0 %v1601, 24
      %v2522 = vpop.permute.xlu0 %2521
      %2523 = vrot.lane.b32.xlu0 %v1602, 24
      %v2524 = vpop.permute.xlu0 %2523
      %2525 = vrot.lane.b32.xlu0 %v1603, 24
      %v2526 = vpop.permute.xlu0 %2525
      %2527 = vrot.lane.b32.xlu0 %v1604, 24
      %v2528 = vpop.permute.xlu0 %2527
      %2529 = vrot.lane.b32.xlu0 %v1605, 24
      %v2530 = vpop.permute.xlu0 %2529
      %2531 = vrot.lane.b32.xlu0 %v1606, 24
      %v2532 = vpop.permute.xlu0 %2531
      %2533 = vrot.lane.b32.xlu0 %v1607, 24
      %v2534 = vpop.permute.xlu0 %2533
      %2535 = vrot.lane.b32.xlu0 %v1608, 24
      %v2536 = vpop.permute.xlu0 %2535
      %2601 = vrot.lane.b32.xlu0 %v1673, 28
      %v2602 = vpop.permute.xlu0 %2601
      %2603 = vrot.lane.b32.xlu0 %v1674, 28
      %v2604 = vpop.permute.xlu0 %2603
      %2605 = vrot.lane.b32.xlu0 %v1675, 28
      %v2606 = vpop.permute.xlu0 %2605
      %2607 = vrot.lane.b32.xlu0 %v1676, 28
      %v2608 = vpop.permute.xlu0 %2607
      %2609 = vrot.lane.b32.xlu0 %v1677, 28
      %v2610 = vpop.permute.xlu0 %2609
      %2611 = vrot.lane.b32.xlu0 %v1678, 28
      %v2612 = vpop.permute.xlu0 %2611
      %2613 = vrot.lane.b32.xlu0 %v1679, 28
      %v2614 = vpop.permute.xlu0 %2613
      %2615 = vrot.lane.b32.xlu0 %v1680, 28
      %v2616 = vpop.permute.xlu0 %2615
      %2617 = vrot.lane.b32.xlu0 %v1681, 28
      %v2618 = vpop.permute.xlu0 %2617
      %2619 = vrot.lane.b32.xlu0 %v1682, 28
      %v2620 = vpop.permute.xlu0 %2619
      %2621 = vrot.lane.b32.xlu0 %v1683, 28
      %v2622 = vpop.permute.xlu0 %2621
      %2623 = vrot.lane.b32.xlu0 %v1684, 28
      %v2624 = vpop.permute.xlu0 %2623
      %2625 = vrot.lane.b32.xlu0 %v1685, 28
      %v2626 = vpop.permute.xlu0 %2625
      %2627 = vrot.lane.b32.xlu0 %v1686, 28
      %v2628 = vpop.permute.xlu0 %2627
      %2629 = vrot.lane.b32.xlu0 %v1687, 28
      %v2630 = vpop.permute.xlu0 %2629
      %2631 = vrot.lane.b32.xlu0 %v1688, 28
      %v2632 = vpop.permute.xlu0 %2631
      %2633 = vrot.lane.b32.xlu0 %v1689, 28
      %v2634 = vpop.permute.xlu0 %2633
      %2635 = vrot.lane.b32.xlu0 %v1690, 28
      %v2636 = vpop.permute.xlu0 %2635
      %2637 = vrot.lane.b32.xlu0 %v1691, 28
      %v2638 = vpop.permute.xlu0 %2637
      %2639 = vrot.lane.b32.xlu0 %v1692, 28
      %v2640 = vpop.permute.xlu0 %2639
      %2641 = vrot.lane.b32.xlu0 %v1693, 28
      %v2642 = vpop.permute.xlu0 %2641
      %2643 = vrot.lane.b32.xlu0 %v1694, 28
      %v2644 = vpop.permute.xlu0 %2643
      %2645 = vrot.lane.b32.xlu0 %v1695, 28
      %v2646 = vpop.permute.xlu0 %2645
      %2647 = vrot.lane.b32.xlu0 %v1696, 28
      %v2648 = vpop.permute.xlu0 %2647
      %2649 = vrot.lane.b32.xlu0 %v1697, 28
      %v2650 = vpop.permute.xlu0 %2649
      %2651 = vrot.lane.b32.xlu0 %v1698, 28
      %v2652 = vpop.permute.xlu0 %2651
      %2653 = vrot.lane.b32.xlu0 %v1699, 28
      %v2654 = vpop.permute.xlu0 %2653
      %2655 = vrot.lane.b32.xlu0 %v1700, 28
      %v2656 = vpop.permute.xlu0 %2655
      %2657 = vrot.lane.b32.xlu0 %v1701, 28
      %v2658 = vpop.permute.xlu0 %2657
      %2659 = vrot.lane.b32.xlu0 %v1702, 28
      %v2660 = vpop.permute.xlu0 %2659
      %2661 = vrot.lane.b32.xlu0 %v1703, 28
      %v2662 = vpop.permute.xlu0 %2661
      %2663 = vrot.lane.b32.xlu0 %v1704, 28
      %v2664 = vpop.permute.xlu0 %2663
      %2729 = vrot.lane.b32.xlu0 %v1801, 32
      %v2730 = vpop.permute.xlu0 %2729
      %2731 = vrot.lane.b32.xlu0 %v1802, 32
      %v2732 = vpop.permute.xlu0 %2731
      %2733 = vrot.lane.b32.xlu0 %v1803, 32
      %v2734 = vpop.permute.xlu0 %2733
      %2735 = vrot.lane.b32.xlu0 %v1804, 32
      %v2736 = vpop.permute.xlu0 %2735
      %2737 = vrot.lane.b32.xlu0 %v1805, 32
      %v2738 = vpop.permute.xlu0 %2737
      %2739 = vrot.lane.b32.xlu0 %v1806, 32
      %v2740 = vpop.permute.xlu0 %2739
      %2741 = vrot.lane.b32.xlu0 %v1807, 32
      %v2742 = vpop.permute.xlu0 %2741
      %2743 = vrot.lane.b32.xlu0 %v1808, 32
      %v2744 = vpop.permute.xlu0 %2743
      %2745 = vrot.lane.b32.xlu0 %v1809, 32
      %v2746 = vpop.permute.xlu0 %2745
      %2747 = vrot.lane.b32.xlu0 %v1810, 32
      %v2748 = vpop.permute.xlu0 %2747
      %2749 = vrot.lane.b32.xlu0 %v1811, 32
      %v2750 = vpop.permute.xlu0 %2749
      %2751 = vrot.lane.b32.xlu0 %v1812, 32
      %v2752 = vpop.permute.xlu0 %2751
      %2753 = vrot.lane.b32.xlu0 %v1813, 32
      %v2754 = vpop.permute.xlu0 %2753
      %2755 = vrot.lane.b32.xlu0 %v1814, 32
      %v2756 = vpop.permute.xlu0 %2755
      %2757 = vrot.lane.b32.xlu0 %v1815, 32
      %v2758 = vpop.permute.xlu0 %2757
      %2759 = vrot.lane.b32.xlu0 %v1816, 32
      %v2760 = vpop.permute.xlu0 %2759
      %2761 = vrot.lane.b32.xlu0 %v1817, 32
      %v2762 = vpop.permute.xlu0 %2761
      %2763 = vrot.lane.b32.xlu0 %v1818, 32
      %v2764 = vpop.permute.xlu0 %2763
      %2765 = vrot.lane.b32.xlu0 %v1819, 32
      %v2766 = vpop.permute.xlu0 %2765
      %2767 = vrot.lane.b32.xlu0 %v1820, 32
      %v2768 = vpop.permute.xlu0 %2767
      %2769 = vrot.lane.b32.xlu0 %v1821, 32
      %v2770 = vpop.permute.xlu0 %2769
      %2771 = vrot.lane.b32.xlu0 %v1822, 32
      %v2772 = vpop.permute.xlu0 %2771
      %2773 = vrot.lane.b32.xlu0 %v1823, 32
      %v2774 = vpop.permute.xlu0 %2773
      %2775 = vrot.lane.b32.xlu0 %v1824, 32
      %v2776 = vpop.permute.xlu0 %2775
      %2777 = vrot.lane.b32.xlu0 %v1825, 32
      %v2778 = vpop.permute.xlu0 %2777
      %2779 = vrot.lane.b32.xlu0 %v1826, 32
      %v2780 = vpop.permute.xlu0 %2779
      %2781 = vrot.lane.b32.xlu0 %v1827, 32
      %v2782 = vpop.permute.xlu0 %2781
      %2783 = vrot.lane.b32.xlu0 %v1828, 32
      %v2784 = vpop.permute.xlu0 %2783
      %2785 = vrot.lane.b32.xlu0 %v1829, 32
      %v2786 = vpop.permute.xlu0 %2785
      %2787 = vrot.lane.b32.xlu0 %v1830, 32
      %v2788 = vpop.permute.xlu0 %2787
      %2789 = vrot.lane.b32.xlu0 %v1831, 32
      %v2790 = vpop.permute.xlu0 %2789
      %2791 = vrot.lane.b32.xlu0 %v1832, 32
      %v2792 = vpop.permute.xlu0 %2791
      %vm2825 = vcmask 31744
      %v2826 = vsel %vm2825, %v871, %v1866
      %v2827 = vsel %vm2825, %v872, %v1868
      %v2828 = vsel %vm2825, %v873, %v1870
      %v2829 = vsel %vm2825, %v874, %v1872
      %v2830 = vsel %vm2825, %v875, %v1874
      %v2831 = vsel %vm2825, %v876, %v1876
      %v2832 = vsel %vm2825, %v877, %v1878
      %v2833 = vsel %vm2825, %v878, %v1880
      %v2834 = vsel %vm2825, %v879, %v1882
      %v2835 = vsel %vm2825, %v880, %v1884
      %v2836 = vsel %vm2825, %v881, %v1886
      %v2837 = vsel %vm2825, %v882, %v1888
      %v2838 = vsel %vm2825, %v883, %v1890
      %v2839 = vsel %vm2825, %v884, %v1892
      %v2840 = vsel %vm2825, %v885, %v1894
      %v2841 = vsel %vm2825, %v886, %v1896
      %v2842 = vsel %vm2825, %v887, %v1898
      %v2843 = vsel %vm2825, %v888, %v1900
      %v2844 = vsel %vm2825, %v889, %v1902
      %v2845 = vsel %vm2825, %v890, %v1904
      %v2846 = vsel %vm2825, %v891, %v1906
      %v2847 = vsel %vm2825, %v892, %v1908
      %v2848 = vsel %vm2825, %v893, %v1910
      %v2849 = vsel %vm2825, %v894, %v1912
      %v2850 = vsel %vm2825, %v895, %v1914
      %v2851 = vsel %vm2825, %v896, %v1916
      %v2852 = vsel %vm2825, %v897, %v1918
      %v2853 = vsel %vm2825, %v898, %v1920
      %v2854 = vsel %vm2825, %v899, %v1922
      %v2855 = vsel %vm2825, %v900, %v1924
      %v2856 = vsel %vm2825, %v901, %v1926
      %v2857 = vsel %vm2825, %v902, %v1928
      %vm2858 = vcmask 64512
      %v2859 = vsel %vm2858, %v2826, %v1994
      %v2860 = vsel %vm2858, %v2827, %v1996
      %v2861 = vsel %vm2858, %v2828, %v1998
      %v2862 = vsel %vm2858, %v2829, %v2000
      %v2863 = vsel %vm2858, %v2830, %v2002
      %v2864 = vsel %vm2858, %v2831, %v2004
      %v2865 = vsel %vm2858, %v2832, %v2006
      %v2866 = vsel %vm2858, %v2833, %v2008
      %v2867 = vsel %vm2858, %v2834, %v2010
      %v2868 = vsel %vm2858, %v2835, %v2012
      %v2869 = vsel %vm2858, %v2836, %v2014
      %v2870 = vsel %vm2858, %v2837, %v2016
      %v2871 = vsel %vm2858, %v2838, %v2018
      %v2872 = vsel %vm2858, %v2839, %v2020
      %v2873 = vsel %vm2858, %v2840, %v2022
      %v2874 = vsel %vm2858, %v2841, %v2024
      %v2875 = vsel %vm2858, %v2842, %v2026
      %v2876 = vsel %vm2858, %v2843, %v2028
      %v2877 = vsel %vm2858, %v2844, %v2030
      %v2878 = vsel %vm2858, %v2845, %v2032
      %v2879 = vsel %vm2858, %v2846, %v2034
      %v2880 = vsel %vm2858, %v2847, %v2036
      %v2881 = vsel %vm2858, %v2848, %v2038
      %v2882 = vsel %vm2858, %v2849, %v2040
      %v2883 = vsel %vm2858, %v2850, %v2042
      %v2884 = vsel %vm2858, %v2851, %v2044
      %v2885 = vsel %vm2858, %v2852, %v2046
      %v2886 = vsel %vm2858, %v2853, %v2048
      %v2887 = vsel %vm2858, %v2854, %v2050
      %v2888 = vsel %vm2858, %v2855, %v2052
      %v2889 = vsel %vm2858, %v2856, %v2054
      %v2890 = vsel %vm2858, %v2857, %v2056
      %vm2891 = vcmask 97280
      %v2892 = vsel %vm2891, %v2859, %v2122
      %v2893 = vsel %vm2891, %v2860, %v2124
      %v2894 = vsel %vm2891, %v2861, %v2126
      %v2895 = vsel %vm2891, %v2862, %v2128
      %v2896 = vsel %vm2891, %v2863, %v2130
      %v2897 = vsel %vm2891, %v2864, %v2132
      %v2898 = vsel %vm2891, %v2865, %v2134
      %v2899 = vsel %vm2891, %v2866, %v2136
      %v2900 = vsel %vm2891, %v2867, %v2138
      %v2901 = vsel %vm2891, %v2868, %v2140
      %v2902 = vsel %vm2891, %v2869, %v2142
      %v2903 = vsel %vm2891, %v2870, %v2144
      %v2904 = vsel %vm2891, %v2871, %v2146
      %v2905 = vsel %vm2891, %v2872, %v2148
      %v2906 = vsel %vm2891, %v2873, %v2150
      %v2907 = vsel %vm2891, %v2874, %v2152
      %v2908 = vsel %vm2891, %v2875, %v2154
      %v2909 = vsel %vm2891, %v2876, %v2156
      %v2910 = vsel %vm2891, %v2877, %v2158
      %v2911 = vsel %vm2891, %v2878, %v2160
      %v2912 = vsel %vm2891, %v2879, %v2162
      %v2913 = vsel %vm2891, %v2880, %v2164
      %v2914 = vsel %vm2891, %v2881, %v2166
      %v2915 = vsel %vm2891, %v2882, %v2168
      %v2916 = vsel %vm2891, %v2883, %v2170
      %v2917 = vsel %vm2891, %v2884, %v2172
      %v2918 = vsel %vm2891, %v2885, %v2174
      %v2919 = vsel %vm2891, %v2886, %v2176
      %v2920 = vsel %vm2891, %v2887, %v2178
      %v2921 = vsel %vm2891, %v2888, %v2180
      %v2922 = vsel %vm2891, %v2889, %v2182
      %v2923 = vsel %vm2891, %v2890, %v2184
      %vm2924 = vcmask 130048
      %v2925 = vsel %vm2924, %v2892, %v2218
      %v2926 = vsel %vm2924, %v2893, %v2220
      %v2927 = vsel %vm2924, %v2894, %v2222
      %v2928 = vsel %vm2924, %v2895, %v2224
      %v2929 = vsel %vm2924, %v2896, %v2226
      %v2930 = vsel %vm2924, %v2897, %v2228
      %v2931 = vsel %vm2924, %v2898, %v2230
      %v2932 = vsel %vm2924, %v2899, %v2232
      %v2933 = vsel %vm2924, %v2900, %v2234
      %v2934 = vsel %vm2924, %v2901, %v2236
      %v2935 = vsel %vm2924, %v2902, %v2238
      %v2936 = vsel %vm2924, %v2903, %v2240
      %v2937 = vsel %vm2924, %v2904, %v2242
      %v2938 = vsel %vm2924, %v2905, %v2244
      %v2939 = vsel %vm2924, %v2906, %v2246
      %v2940 = vsel %vm2924, %v2907, %v2248
      %v2941 = vsel %vm2924, %v2908, %v2250
      %v2942 = vsel %vm2924, %v2909, %v2252
      %v2943 = vsel %vm2924, %v2910, %v2254
      %v2944 = vsel %vm2924, %v2911, %v2256
      %v2945 = vsel %vm2924, %v2912, %v2258
      %v2946 = vsel %vm2924, %v2913, %v2260
      %v2947 = vsel %vm2924, %v2914, %v2262
      %v2948 = vsel %vm2924, %v2915, %v2264
      %v2949 = vsel %vm2924, %v2916, %v2266
      %v2950 = vsel %vm2924, %v2917, %v2268
      %v2951 = vsel %vm2924, %v2918, %v2270
      %v2952 = vsel %vm2924, %v2919, %v2272
      %v2953 = vsel %vm2924, %v2920, %v2274
      %v2954 = vsel %vm2924, %v2921, %v2276
      %v2955 = vsel %vm2924, %v2922, %v2278
      %v2956 = vsel %vm2924, %v2923, %v2280
      %vm2957 = vcmask 162816
      %v2958 = vsel %vm2957, %v2925, %v2346
      %v2959 = vsel %vm2957, %v2926, %v2348
      %v2960 = vsel %vm2957, %v2927, %v2350
      %v2961 = vsel %vm2957, %v2928, %v2352
      %v2962 = vsel %vm2957, %v2929, %v2354
      %v2963 = vsel %vm2957, %v2930, %v2356
      %v2964 = vsel %vm2957, %v2931, %v2358
      %v2965 = vsel %vm2957, %v2932, %v2360
      %v2966 = vsel %vm2957, %v2933, %v2362
      %v2967 = vsel %vm2957, %v2934, %v2364
      %v2968 = vsel %vm2957, %v2935, %v2366
      %v2969 = vsel %vm2957, %v2936, %v2368
      %v2970 = vsel %vm2957, %v2937, %v2370
      %v2971 = vsel %vm2957, %v2938, %v2372
      %v2972 = vsel %vm2957, %v2939, %v2374
      %v2973 = vsel %vm2957, %v2940, %v2376
      %v2974 = vsel %vm2957, %v2941, %v2378
      %v2975 = vsel %vm2957, %v2942, %v2380
      %v2976 = vsel %vm2957, %v2943, %v2382
      %v2977 = vsel %vm2957, %v2944, %v2384
      %v2978 = vsel %vm2957, %v2945, %v2386
      %v2979 = vsel %vm2957, %v2946, %v2388
      %v2980 = vsel %vm2957, %v2947, %v2390
      %v2981 = vsel %vm2957, %v2948, %v2392
      %v2982 = vsel %vm2957, %v2949, %v2394
      %v2983 = vsel %vm2957, %v2950, %v2396
      %v2984 = vsel %vm2957, %v2951, %v2398
      %v2985 = vsel %vm2957, %v2952, %v2400
      %v2986 = vsel %vm2957, %v2953, %v2402
      %v2987 = vsel %vm2957, %v2954, %v2404
      %v2988 = vsel %vm2957, %v2955, %v2406
      %v2989 = vsel %vm2957, %v2956, %v2408
      %vm2990 = vcmask 195584
      %v2991 = vsel %vm2990, %v2958, %v2474
      %v2992 = vsel %vm2990, %v2959, %v2476
      %v2993 = vsel %vm2990, %v2960, %v2478
      %v2994 = vsel %vm2990, %v2961, %v2480
      %v2995 = vsel %vm2990, %v2962, %v2482
      %v2996 = vsel %vm2990, %v2963, %v2484
      %v2997 = vsel %vm2990, %v2964, %v2486
      %v2998 = vsel %vm2990, %v2965, %v2488
      %v2999 = vsel %vm2990, %v2966, %v2490
      %v3000 = vsel %vm2990, %v2967, %v2492
      %v3001 = vsel %vm2990, %v2968, %v2494
      %v3002 = vsel %vm2990, %v2969, %v2496
      %v3003 = vsel %vm2990, %v2970, %v2498
      %v3004 = vsel %vm2990, %v2971, %v2500
      %v3005 = vsel %vm2990, %v2972, %v2502
      %v3006 = vsel %vm2990, %v2973, %v2504
      %v3007 = vsel %vm2990, %v2974, %v2506
      %v3008 = vsel %vm2990, %v2975, %v2508
      %v3009 = vsel %vm2990, %v2976, %v2510
      %v3010 = vsel %vm2990, %v2977, %v2512
      %v3011 = vsel %vm2990, %v2978, %v2514
      %v3012 = vsel %vm2990, %v2979, %v2516
      %v3013 = vsel %vm2990, %v2980, %v2518
      %v3014 = vsel %vm2990, %v2981, %v2520
      %v3015 = vsel %vm2990, %v2982, %v2522
      %v3016 = vsel %vm2990, %v2983, %v2524
      %v3017 = vsel %vm2990, %v2984, %v2526
      %v3018 = vsel %vm2990, %v2985, %v2528
      %v3019 = vsel %vm2990, %v2986, %v2530
      %v3020 = vsel %vm2990, %v2987, %v2532
      %v3021 = vsel %vm2990, %v2988, %v2534
      %v3022 = vsel %vm2990, %v2989, %v2536
      %vm3023 = vcmask 228352
      %v3024 = vsel %vm3023, %v2991, %v2602
      %v3025 = vsel %vm3023, %v2992, %v2604
      %v3026 = vsel %vm3023, %v2993, %v2606
      %v3027 = vsel %vm3023, %v2994, %v2608
      %v3028 = vsel %vm3023, %v2995, %v2610
      %v3029 = vsel %vm3023, %v2996, %v2612
      %v3030 = vsel %vm3023, %v2997, %v2614
      %v3031 = vsel %vm3023, %v2998, %v2616
      %v3032 = vsel %vm3023, %v2999, %v2618
      %v3033 = vsel %vm3023, %v3000, %v2620
      %v3034 = vsel %vm3023, %v3001, %v2622
      %v3035 = vsel %vm3023, %v3002, %v2624
      %v3036 = vsel %vm3023, %v3003, %v2626
      %v3037 = vsel %vm3023, %v3004, %v2628
      %v3038 = vsel %vm3023, %v3005, %v2630
      %v3039 = vsel %vm3023, %v3006, %v2632
      %v3040 = vsel %vm3023, %v3007, %v2634
      %v3041 = vsel %vm3023, %v3008, %v2636
      %v3042 = vsel %vm3023, %v3009, %v2638
      %v3043 = vsel %vm3023, %v3010, %v2640
      %v3044 = vsel %vm3023, %v3011, %v2642
      %v3045 = vsel %vm3023, %v3012, %v2644
      %v3046 = vsel %vm3023, %v3013, %v2646
      %v3047 = vsel %vm3023, %v3014, %v2648
      %v3048 = vsel %vm3023, %v3015, %v2650
      %v3049 = vsel %vm3023, %v3016, %v2652
      %v3050 = vsel %vm3023, %v3017, %v2654
      %v3051 = vsel %vm3023, %v3018, %v2656
      %v3052 = vsel %vm3023, %v3019, %v2658
      %v3053 = vsel %vm3023, %v3020, %v2660
      %v3054 = vsel %vm3023, %v3021, %v2662
      %v3055 = vsel %vm3023, %v3022, %v2664
      %vm3056 = vcmask 261120
      %v3057 = vsel %vm3056, %v3024, %v2730
      %v3058 = vsel %vm3056, %v3025, %v2732
      %v3059 = vsel %vm3056, %v3026, %v2734
      %v3060 = vsel %vm3056, %v3027, %v2736
      %v3061 = vsel %vm3056, %v3028, %v2738
      %v3062 = vsel %vm3056, %v3029, %v2740
      %v3063 = vsel %vm3056, %v3030, %v2742
      %v3064 = vsel %vm3056, %v3031, %v2744
      %v3065 = vsel %vm3056, %v3032, %v2746
      %v3066 = vsel %vm3056, %v3033, %v2748
      %v3067 = vsel %vm3056, %v3034, %v2750
      %v3068 = vsel %vm3056, %v3035, %v2752
      %v3069 = vsel %vm3056, %v3036, %v2754
      %v3070 = vsel %vm3056, %v3037, %v2756
      %v3071 = vsel %vm3056, %v3038, %v2758
      %v3072 = vsel %vm3056, %v3039, %v2760
      %v3073 = vsel %vm3056, %v3040, %v2762
      %v3074 = vsel %vm3056, %v3041, %v2764
      %v3075 = vsel %vm3056, %v3042, %v2766
      %v3076 = vsel %vm3056, %v3043, %v2768
      %v3077 = vsel %vm3056, %v3044, %v2770
      %v3078 = vsel %vm3056, %v3045, %v2772
      %v3079 = vsel %vm3056, %v3046, %v2774
      %v3080 = vsel %vm3056, %v3047, %v2776
      %v3081 = vsel %vm3056, %v3048, %v2778
      %v3082 = vsel %vm3056, %v3049, %v2780
      %v3083 = vsel %vm3056, %v3050, %v2782
      %v3084 = vsel %vm3056, %v3051, %v2784
      %v3085 = vsel %vm3056, %v3052, %v2786
      %v3086 = vsel %vm3056, %v3053, %v2788
      %v3087 = vsel %vm3056, %v3054, %v2790
      %v3088 = vsel %vm3056, %v3055, %v2792
      %v3089 = vpack.c.bf16 %v3058, %v3057
      %v3090 = vpack.c.bf16 %v3060, %v3059
      %v3091 = vpack.c.bf16 %v3062, %v3061
      %v3092 = vpack.c.bf16 %v3064, %v3063
      %v3093 = vpack.c.bf16 %v3066, %v3065
      %v3094 = vpack.c.bf16 %v3068, %v3067
      %v3095 = vpack.c.bf16 %v3070, %v3069
      %v3096 = vpack.c.bf16 %v3072, %v3071
      %v3097 = vpack.c.bf16 %v3074, %v3073
      %v3098 = vpack.c.bf16 %v3076, %v3075
      %v3099 = vpack.c.bf16 %v3078, %v3077
      %v3100 = vpack.c.bf16 %v3080, %v3079
      %v3101 = vpack.c.bf16 %v3082, %v3081
      %v3102 = vpack.c.bf16 %v3084, %v3083
      %v3103 = vpack.c.bf16 %v3086, %v3085
      %v3104 = vpack.c.bf16 %v3088, %v3087
      %v3105 = vld [vmem:[%s1] sm:$0xf]
      %v3106 = vld [vmem:[%s1 + $0x4] sm:$0xf]
      %v3107 = vld [vmem:[%s1 + $0x8] sm:$0xf]
      %v3108 = vld [vmem:[%s1 + $0xc] sm:$0xf]
      %v3109 = vld [vmem:[%s1 + $0x10] sm:$0x3]
      %v3110 = vld [vmem:[%s2] sm:$0x1]
      %v3112 = vlaneseq
      %v3113 = vshrl.u32 %v3112, 7
      %v3114 = vsub.s32 0, %v3113
      %v3115 = vrot.slane %v3110, %v3114
      %v3122 = vunpack.c.l.b16 %v3105
      %v3123 = vunpack.c.l.b16 %v3106
      %v3124 = vunpack.c.l.b16 %v3107
      %v3125 = vunpack.c.l.b16 %v3108
      %v3126 = vunpack.c.l.b16 %v3109
      %v3127 = vpack.c.b16 %v3123, %v3122
      %v3128 = vpack.c.b16 %v3125, %v3124
      %v3129 = vpack.c.b16 %v3126, %v3126
      %vm3132 = vcmask 293888
      %v3134 = vsel %vm3132, %v3089, 0
      %v3137 = vsel %vm3132, %v3090, 0
      %v3140 = vsel %vm3132, %v3091, 0
      %v3143 = vsel %vm3132, %v3092, 0
      %v3146 = vsel %vm3132, %v3093, 0
      %v3149 = vsel %vm3132, %v3094, 0
      %v3152 = vsel %vm3132, %v3095, 0
      %v3155 = vsel %vm3132, %v3096, 0
      %v3158 = vsel %vm3132, %v3097, 0
      %v3161 = vsel %vm3132, %v3098, 0
      %v3164 = vsel %vm3132, %v3099, 0
      %v3167 = vsel %vm3132, %v3100, 0
      %v3170 = vsel %vm3132, %v3101, 0
      %v3173 = vsel %vm3132, %v3102, 0
      %v3176 = vsel %vm3132, %v3103, 0
      %v3179 = vsel %vm3132, %v3104, 0
      %vm3181 = vcmask 1041408
      %v3183 = vsel %vm3181, %v3129, 0
      %3185 = vmatprep.subr.bf16.mxu0 0
      %3186 = vmatpush1.bf16.msra.mxu0 %v3127
      %3187 = vmatprep.subr.bf16.mxu0 0
      %3188 = vmatpush1.bf16.msra.mxu0 %v3128
      %3189 = vmatprep.subr.bf16.mxu0 0
      %3190 = vmatpush1.bf16.msra.mxu0 %v3183
      %3191 = vmatprep.subr.bf16.mxu0 0
      %3192 = vmatpush1.bf16.msra.mxu0 0
      %3193 = vmatprep.subr.bf16.mxu0 0
      %3194 = vmatpush1.bf16.msra.mxu0 0
      %3195 = vmatprep.subr.bf16.mxu0 0
      %3196 = vmatpush1.bf16.msra.mxu0 0
      %3197 = vmatprep.subr.bf16.mxu0 0
      %3198 = vmatpush1.bf16.msra.mxu0 0
      %3199 = vmatprep.subr.bf16.mxu0 0
      %3200 = vmatpush1.bf16.msra.mxu0 0
      %3201 = vmatprep.subr.bf16.mxu0 0
      %3202 = vmatpush1.bf16.msra.mxu0 0
      %3203 = vmatprep.subr.bf16.mxu0 0
      %3204 = vmatpush1.bf16.msra.mxu0 0
      %3205 = vmatprep.subr.bf16.mxu0 0
      %3206 = vmatpush1.bf16.msra.mxu0 0
      %3207 = vmatprep.subr.bf16.mxu0 0
      %3208 = vmatpush1.bf16.msra.mxu0 0
      %3209 = vmatprep.subr.bf16.mxu0 0
      %3210 = vmatpush1.bf16.msra.mxu0 0
      %3211 = vmatprep.subr.bf16.mxu0 0
      %3212 = vmatpush1.bf16.msra.mxu0 0
      %3213 = vmatprep.subr.bf16.mxu0 0
      %3214 = vmatpush1.bf16.msra.mxu0 0
      %3215 = vmatprep.subr.bf16.mxu0 0
      %3216 = vmatpush1.bf16.msra.mxu0 0
      %3217 = vmatprep.mubr.bf16.mxu0 0
      %3218 = vmatmul.mubr.bf16.gmra.mrb[0].mxu0 %v3134
      %v3219 = vpop.f32.mrb[0].mxu0
      %v3220 = vadd.f32 %v3115, %v3219
      %v3221 = vpop.f32.mrb[0].mxu0
      %v3222 = vpop.f32.mrb[0].mxu0
      %v3223 = vadd.f32 %v3115, %v3222
      %v3224 = vpop.f32.mrb[0].mxu0
      %3225 = vmatprep.mubr.bf16.mxu0 0
      %3226 = vmatmul.mubr.bf16.gmra.mrb[0].mxu0 %v3137
      %v3227 = vpop.f32.mrb[0].mxu0
      %v3228 = vadd.f32 %v3115, %v3227
      %v3229 = vpop.f32.mrb[0].mxu0
      %v3230 = vpop.f32.mrb[0].mxu0
      %v3231 = vadd.f32 %v3115, %v3230
      %v3232 = vpop.f32.mrb[0].mxu0
      %3233 = vmatprep.mubr.bf16.mxu0 0
      %3234 = vmatmul.mubr.bf16.gmra.mrb[0].mxu0 %v3140
      %v3235 = vpop.f32.mrb[0].mxu0
      %v3236 = vadd.f32 %v3115, %v3235
      %v3237 = vpop.f32.mrb[0].mxu0
      %v3238 = vpop.f32.mrb[0].mxu0
      %v3239 = vadd.f32 %v3115, %v3238
      %v3240 = vpop.f32.mrb[0].mxu0
      %3241 = vmatprep.mubr.bf16.mxu0 0
      %3242 = vmatmul.mubr.bf16.gmra.mrb[0].mxu0 %v3143
      %v3243 = vpop.f32.mrb[0].mxu0
      %v3244 = vadd.f32 %v3115, %v3243
      %v3245 = vpop.f32.mrb[0].mxu0
      %v3246 = vpop.f32.mrb[0].mxu0
      %v3247 = vadd.f32 %v3115, %v3246
      %v3248 = vpop.f32.mrb[0].mxu0
      %3249 = vmatprep.mubr.bf16.mxu0 0
      %3250 = vmatmul.mubr.bf16.gmra.mrb[0].mxu0 %v3146
      %v3251 = vpop.f32.mrb[0].mxu0
      %v3252 = vadd.f32 %v3115, %v3251
      %v3253 = vpop.f32.mrb[0].mxu0
      %v3254 = vpop.f32.mrb[0].mxu0
      %v3255 = vadd.f32 %v3115, %v3254
      %v3256 = vpop.f32.mrb[0].mxu0
      %3257 = vmatprep.mubr.bf16.mxu0 0
      %3258 = vmatmul.mubr.bf16.gmra.mrb[0].mxu0 %v3149
      %v3259 = vpop.f32.mrb[0].mxu0
      %v3260 = vadd.f32 %v3115, %v3259
      %v3261 = vpop.f32.mrb[0].mxu0
      %v3262 = vpop.f32.mrb[0].mxu0
      %v3263 = vadd.f32 %v3115, %v3262
      %v3264 = vpop.f32.mrb[0].mxu0
      %3265 = vmatprep.mubr.bf16.mxu0 0
      %3266 = vmatmul.mubr.bf16.gmra.mrb[0].mxu0 %v3152
      %v3267 = vpop.f32.mrb[0].mxu0
      %v3268 = vadd.f32 %v3115, %v3267
      %v3269 = vpop.f32.mrb[0].mxu0
      %v3270 = vpop.f32.mrb[0].mxu0
      %v3271 = vadd.f32 %v3115, %v3270
      %v3272 = vpop.f32.mrb[0].mxu0
      %3273 = vmatprep.mubr.bf16.mxu0 0
      %3274 = vmatmul.mubr.bf16.gmra.mrb[0].mxu0 %v3155
      %v3275 = vpop.f32.mrb[0].mxu0
      %v3276 = vadd.f32 %v3115, %v3275
      %v3277 = vpop.f32.mrb[0].mxu0
      %v3278 = vpop.f32.mrb[0].mxu0
      %v3279 = vadd.f32 %v3115, %v3278
      %v3280 = vpop.f32.mrb[0].mxu0
      %3281 = vmatprep.mubr.bf16.mxu0 0
      %3282 = vmatmul.mubr.bf16.gmra.mrb[0].mxu0 %v3158
      %v3283 = vpop.f32.mrb[0].mxu0
      %v3284 = vadd.f32 %v3115, %v3283
      %v3285 = vpop.f32.mrb[0].mxu0
      %v3286 = vpop.f32.mrb[0].mxu0
      %v3287 = vadd.f32 %v3115, %v3286
      %v3288 = vpop.f32.mrb[0].mxu0
      %3289 = vmatprep.mubr.bf16.mxu0 0
      %3290 = vmatmul.mubr.bf16.gmra.mrb[0].mxu0 %v3161
      %v3291 = vpop.f32.mrb[0].mxu0
      %v3292 = vadd.f32 %v3115, %v3291
      %v3293 = vpop.f32.mrb[0].mxu0
      %v3294 = vpop.f32.mrb[0].mxu0
      %v3295 = vadd.f32 %v3115, %v3294
      %v3296 = vpop.f32.mrb[0].mxu0
      %3297 = vmatprep.mubr.bf16.mxu0 0
      %3298 = vmatmul.mubr.bf16.gmra.mrb[0].mxu0 %v3164
      %v3299 = vpop.f32.mrb[0].mxu0
      %v3300 = vadd.f32 %v3115, %v3299
      %v3301 = vpop.f32.mrb[0].mxu0
      %v3302 = vpop.f32.mrb[0].mxu0
      %v3303 = vadd.f32 %v3115, %v3302
      %v3304 = vpop.f32.mrb[0].mxu0
      %3305 = vmatprep.mubr.bf16.mxu0 0
      %3306 = vmatmul.mubr.bf16.gmra.mrb[0].mxu0 %v3167
      %v3307 = vpop.f32.mrb[0].mxu0
      %v3308 = vadd.f32 %v3115, %v3307
      %v3309 = vpop.f32.mrb[0].mxu0
      %v3310 = vpop.f32.mrb[0].mxu0
      %v3311 = vadd.f32 %v3115, %v3310
      %v3312 = vpop.f32.mrb[0].mxu0
      %3313 = vmatprep.mubr.bf16.mxu0 0
      %3314 = vmatmul.mubr.bf16.gmra.mrb[0].mxu0 %v3170
      %v3315 = vpop.f32.mrb[0].mxu0
      %v3316 = vadd.f32 %v3115, %v3315
      %v3317 = vpop.f32.mrb[0].mxu0
      %v3318 = vpop.f32.mrb[0].mxu0
      %v3319 = vadd.f32 %v3115, %v3318
      %v3320 = vpop.f32.mrb[0].mxu0
      %3321 = vmatprep.mubr.bf16.mxu0 0
      %3322 = vmatmul.mubr.bf16.gmra.mrb[0].mxu0 %v3173
      %v3323 = vpop.f32.mrb[0].mxu0
      %v3324 = vadd.f32 %v3115, %v3323
      %v3325 = vpop.f32.mrb[0].mxu0
      %v3326 = vpop.f32.mrb[0].mxu0
      %v3327 = vadd.f32 %v3115, %v3326
      %v3328 = vpop.f32.mrb[0].mxu0
      %3329 = vmatprep.mubr.bf16.mxu0 0
      %3330 = vmatmul.mubr.bf16.gmra.mrb[0].mxu0 %v3176
      %v3331 = vpop.f32.mrb[0].mxu0
      %v3332 = vadd.f32 %v3115, %v3331
      %v3333 = vpop.f32.mrb[0].mxu0
      %v3334 = vpop.f32.mrb[0].mxu0
      %v3335 = vadd.f32 %v3115, %v3334
      %v3336 = vpop.f32.mrb[0].mxu0
      %3337 = vmatprep.mubr.bf16.mxu0 0
      %3338 = vmatmul.mubr.bf16.gmra.mrb[0].mxu0 %v3179
      %v3339 = vpop.f32.mrb[0].mxu0
      %v3340 = vadd.f32 %v3115, %v3339
      %v3341 = vpop.f32.mrb[0].mxu0
      %v3342 = vpop.f32.mrb[0].mxu0
      %v3343 = vadd.f32 %v3115, %v3342
      %v3344 = vpop.f32.mrb[0].mxu0
      %3345 = vdwg.mxu0
      %v3346 = vmax.f32 %v3220, 0.0
      %v3347 = vmax.f32 %v3223, 0.0
      %v3348 = vmax.f32 %v3228, 0.0
      %v3349 = vmax.f32 %v3231, 0.0
      %v3350 = vmax.f32 %v3236, 0.0
      %v3351 = vmax.f32 %v3239, 0.0
      %v3352 = vmax.f32 %v3244, 0.0
      %v3353 = vmax.f32 %v3247, 0.0
      %v3354 = vmax.f32 %v3252, 0.0
      %v3355 = vmax.f32 %v3255, 0.0
      %v3356 = vmax.f32 %v3260, 0.0
      %v3357 = vmax.f32 %v3263, 0.0
      %v3358 = vmax.f32 %v3268, 0.0
      %v3359 = vmax.f32 %v3271, 0.0
      %v3360 = vmax.f32 %v3276, 0.0
      %v3361 = vmax.f32 %v3279, 0.0
      %v3362 = vmax.f32 %v3284, 0.0
      %v3363 = vmax.f32 %v3287, 0.0
      %v3364 = vmax.f32 %v3292, 0.0
      %v3365 = vmax.f32 %v3295, 0.0
      %v3366 = vmax.f32 %v3300, 0.0
      %v3367 = vmax.f32 %v3303, 0.0
      %v3368 = vmax.f32 %v3308, 0.0
      %v3369 = vmax.f32 %v3311, 0.0
      %v3370 = vmax.f32 %v3316, 0.0
      %v3371 = vmax.f32 %v3319, 0.0
      %v3372 = vmax.f32 %v3324, 0.0
      %v3373 = vmax.f32 %v3327, 0.0
      %v3374 = vmax.f32 %v3332, 0.0
      %v3375 = vmax.f32 %v3335, 0.0
      %v3376 = vmax.f32 %v3340, 0.0
      %v3377 = vmax.f32 %v3343, 0.0
      %v3381 = vrot.slane %v3375, 7
      %v3382 = vrot.slane %v3376, 7
      %v3383 = vsel %vm584, %v3381, %v3382
      %v3384 = vrot.slane %v3377, 7
      %v3385 = vsel %vm584, %v3382, %v3384
      %v3418 = vrot.slane %v3346, 7
      %v3419 = vrot.slane %v3347, 7
      %v3420 = vsel %vm584, %v3418, %v3419
      %v3421 = vrot.slane %v3348, 7
      %v3422 = vsel %vm584, %v3419, %v3421
      %v3423 = vrot.slane %v3349, 7
      %v3424 = vsel %vm584, %v3421, %v3423
      %v3425 = vrot.slane %v3350, 7
      %v3426 = vsel %vm584, %v3423, %v3425
      %v3427 = vrot.slane %v3351, 7
      %v3428 = vsel %vm584, %v3425, %v3427
      %v3429 = vrot.slane %v3352, 7
      %v3430 = vsel %vm584, %v3427, %v3429
      %v3431 = vrot.slane %v3353, 7
      %v3432 = vsel %vm584, %v3429, %v3431
      %v3433 = vrot.slane %v3354, 7
      %v3434 = vsel %vm584, %v3431, %v3433
      %v3435 = vrot.slane %v3355, 7
      %v3436 = vsel %vm584, %v3433, %v3435
      %v3437 = vrot.slane %v3356, 7
      %v3438 = vsel %vm584, %v3435, %v3437
      %v3439 = vrot.slane %v3357, 7
      %v3440 = vsel %vm584, %v3437, %v3439
      %v3441 = vrot.slane %v3358, 7
      %v3442 = vsel %vm584, %v3439, %v3441
      %v3443 = vrot.slane %v3359, 7
      %v3444 = vsel %vm584, %v3441, %v3443
      %v3445 = vrot.slane %v3360, 7
      %v3446 = vsel %vm584, %v3443, %v3445
      %v3447 = vrot.slane %v3361, 7
      %v3448 = vsel %vm584, %v3445, %v3447
      %v3449 = vrot.slane %v3362, 7
      %v3450 = vsel %vm584, %v3447, %v3449
      %v3451 = vrot.slane %v3363, 7
      %v3452 = vsel %vm584, %v3449, %v3451
      %v3453 = vrot.slane %v3364, 7
      %v3454 = vsel %vm584, %v3451, %v3453
      %v3455 = vrot.slane %v3365, 7
      %v3456 = vsel %vm584, %v3453, %v3455
      %v3457 = vrot.slane %v3366, 7
      %v3458 = vsel %vm584, %v3455, %v3457
      %v3459 = vrot.slane %v3367, 7
      %v3460 = vsel %vm584, %v3457, %v3459
      %v3461 = vrot.slane %v3368, 7
      %v3462 = vsel %vm584, %v3459, %v3461
      %v3463 = vrot.slane %v3369, 7
      %v3464 = vsel %vm584, %v3461, %v3463
      %v3465 = vrot.slane %v3370, 7
      %v3466 = vsel %vm584, %v3463, %v3465
      %v3467 = vrot.slane %v3371, 7
      %v3468 = vsel %vm584, %v3465, %v3467
      %v3469 = vrot.slane %v3372, 7
      %v3470 = vsel %vm584, %v3467, %v3469
      %v3471 = vrot.slane %v3373, 7
      %v3472 = vsel %vm584, %v3469, %v3471
      %v3473 = vrot.slane %v3374, 7
      %v3474 = vsel %vm584, %v3471, %v3473
      %v3475 = vsel %vm584, %v3473, %v3381
      %v3506 = vsel %vm584, %v3384, %v3418
      %v3507 = vsel %vm839, %v3383, 0.0
      %v3508 = vsel %vm840, %v3385, 0.0
      %v3509 = vsel %vm841, %v3506, 0.0
      %v3510 = vsel %vm842, %v3420, 0.0
      %v3511 = vsel %vm843, %v3422, 0.0
      %v3512 = vsel %vm844, %v3424, 0.0
      %v3513 = vsel %vm845, %v3426, 0.0
      %v3514 = vsel %vm846, %v3428, 0.0
      %v3515 = vsel %vm847, %v3430, 0.0
      %v3516 = vsel %vm848, %v3432, 0.0
      %v3517 = vsel %vm849, %v3434, 0.0
      %v3518 = vsel %vm850, %v3436, 0.0
      %v3519 = vsel %vm851, %v3438, 0.0
      %v3520 = vsel %vm852, %v3440, 0.0
      %v3521 = vsel %vm853, %v3442, 0.0
      %v3522 = vsel %vm854, %v3444, 0.0
      %v3523 = vsel %vm855, %v3446, 0.0
      %v3524 = vsel %vm856, %v3448, 0.0
      %v3525 = vsel %vm857, %v3450, 0.0
      %v3526 = vsel %vm858, %v3452, 0.0
      %v3527 = vsel %vm859, %v3454, 0.0
      %v3528 = vsel %vm860, %v3456, 0.0
      %v3529 = vsel %vm861, %v3458, 0.0
      %v3530 = vsel %vm862, %v3460, 0.0
      %v3531 = vsel %vm863, %v3462, 0.0
      %v3532 = vsel %vm864, %v3464, 0.0
      %v3533 = vsel %vm865, %v3466, 0.0
      %v3534 = vsel %vm866, %v3468, 0.0
      %v3535 = vsel %vm867, %v3470, 0.0
      %v3536 = vsel %vm868, %v3472, 0.0
      %v3537 = vsel %vm869, %v3474, 0.0
      %v3538 = vsel %vm870, %v3475, 0.0
      %v3539 = vsel %vm935, %v3376, 0.0
      %v3540 = vsel %vm936, %v3377, 0.0
      %v3541 = vsel %vm937, %v3346, 0.0
      %v3542 = vsel %vm938, %v3347, 0.0
      %v3543 = vsel %vm939, %v3348, 0.0
      %v3544 = vsel %vm940, %v3349, 0.0
      %v3545 = vsel %vm941, %v3350, 0.0
      %v3546 = vsel %vm942, %v3351, 0.0
      %v3547 = vsel %vm943, %v3352, 0.0
      %v3548 = vsel %vm944, %v3353, 0.0
      %v3549 = vsel %vm945, %v3354, 0.0
      %v3550 = vsel %vm946, %v3355, 0.0
      %v3551 = vsel %vm947, %v3356, 0.0
      %v3552 = vsel %vm948, %v3357, 0.0
      %v3553 = vsel %vm949, %v3358, 0.0
      %v3554 = vsel %vm950, %v3359, 0.0
      %v3555 = vsel %vm951, %v3360, 0.0
      %v3556 = vsel %vm952, %v3361, 0.0
      %v3557 = vsel %vm953, %v3362, 0.0
      %v3558 = vsel %vm954, %v3363, 0.0
      %v3559 = vsel %vm955, %v3364, 0.0
      %v3560 = vsel %vm956, %v3365, 0.0
      %v3561 = vsel %vm957, %v3366, 0.0
      %v3562 = vsel %vm958, %v3367, 0.0
      %v3563 = vsel %vm959, %v3368, 0.0
      %v3564 = vsel %vm960, %v3369, 0.0
      %v3565 = vsel %vm961, %v3370, 0.0
      %v3566 = vsel %vm962, %v3371, 0.0
      %v3567 = vsel %vm963, %v3372, 0.0
      %v3568 = vsel %vm964, %v3373, 0.0
      %v3569 = vsel %vm965, %v3374, 0.0
      %v3570 = vsel %vm966, %v3375, 0.0
      %v3571 = vrot.slane %v3376, 1
      %v3572 = vrot.slane %v3377, 1
      %v3573 = vsel %vm999, %v3571, %v3572
      %v3576 = vrot.slane %v3346, 1
      %v3577 = vrot.slane %v3347, 1
      %v3578 = vsel %vm999, %v3576, %v3577
      %v3579 = vrot.slane %v3348, 1
      %v3580 = vsel %vm999, %v3577, %v3579
      %v3581 = vrot.slane %v3349, 1
      %v3582 = vsel %vm999, %v3579, %v3581
      %v3583 = vrot.slane %v3350, 1
      %v3584 = vsel %vm999, %v3581, %v3583
      %v3585 = vrot.slane %v3351, 1
      %v3586 = vsel %vm999, %v3583, %v3585
      %v3587 = vrot.slane %v3352, 1
      %v3588 = vsel %vm999, %v3585, %v3587
      %v3589 = vrot.slane %v3353, 1
      %v3590 = vsel %vm999, %v3587, %v3589
      %v3591 = vrot.slane %v3354, 1
      %v3592 = vsel %vm999, %v3589, %v3591
      %v3593 = vrot.slane %v3355, 1
      %v3594 = vsel %vm999, %v3591, %v3593
      %v3595 = vrot.slane %v3356, 1
      %v3596 = vsel %vm999, %v3593, %v3595
      %v3597 = vrot.slane %v3357, 1
      %v3598 = vsel %vm999, %v3595, %v3597
      %v3599 = vrot.slane %v3358, 1
      %v3600 = vsel %vm999, %v3597, %v3599
      %v3601 = vrot.slane %v3359, 1
      %v3602 = vsel %vm999, %v3599, %v3601
      %v3603 = vrot.slane %v3360, 1
      %v3604 = vsel %vm999, %v3601, %v3603
      %v3605 = vrot.slane %v3361, 1
      %v3606 = vsel %vm999, %v3603, %v3605
      %v3607 = vrot.slane %v3362, 1
      %v3608 = vsel %vm999, %v3605, %v3607
      %v3609 = vrot.slane %v3363, 1
      %v3610 = vsel %vm999, %v3607, %v3609
      %v3611 = vrot.slane %v3364, 1
      %v3612 = vsel %vm999, %v3609, %v3611
      %v3613 = vrot.slane %v3365, 1
      %v3614 = vsel %vm999, %v3611, %v3613
      %v3615 = vrot.slane %v3366, 1
      %v3616 = vsel %vm999, %v3613, %v3615
      %v3617 = vrot.slane %v3367, 1
      %v3618 = vsel %vm999, %v3615, %v3617
      %v3619 = vrot.slane %v3368, 1
      %v3620 = vsel %vm999, %v3617, %v3619
      %v3621 = vrot.slane %v3369, 1
      %v3622 = vsel %vm999, %v3619, %v3621
      %v3623 = vrot.slane %v3370, 1
      %v3624 = vsel %vm999, %v3621, %v3623
      %v3625 = vrot.slane %v3371, 1
      %v3626 = vsel %vm999, %v3623, %v3625
      %v3627 = vrot.slane %v3372, 1
      %v3628 = vsel %vm999, %v3625, %v3627
      %v3629 = vrot.slane %v3373, 1
      %v3630 = vsel %vm999, %v3627, %v3629
      %v3631 = vrot.slane %v3374, 1
      %v3632 = vsel %vm999, %v3629, %v3631
      %v3633 = vrot.slane %v3375, 1
      %v3634 = vsel %vm999, %v3631, %v3633
      %v3635 = vsel %vm999, %v3633, %v3571
      %v3667 = vsel %vm999, %v3572, %v3576
      %v3668 = vsel %vm1193, %v3573, 0.0
      %v3669 = vsel %vm1194, %v3667, 0.0
      %v3670 = vsel %vm1195, %v3578, 0.0
      %v3671 = vsel %vm1196, %v3580, 0.0
      %v3672 = vsel %vm1197, %v3582, 0.0
      %v3673 = vsel %vm1198, %v3584, 0.0
      %v3674 = vsel %vm1199, %v3586, 0.0
      %v3675 = vsel %vm1200, %v3588, 0.0
      %v3676 = vsel %vm1201, %v3590, 0.0
      %v3677 = vsel %vm1202, %v3592, 0.0
      %v3678 = vsel %vm1203, %v3594, 0.0
      %v3679 = vsel %vm1204, %v3596, 0.0
      %v3680 = vsel %vm1205, %v3598, 0.0
      %v3681 = vsel %vm1206, %v3600, 0.0
      %v3682 = vsel %vm1207, %v3602, 0.0
      %v3683 = vsel %vm1208, %v3604, 0.0
      %v3684 = vsel %vm1209, %v3606, 0.0
      %v3685 = vsel %vm1210, %v3608, 0.0
      %v3686 = vsel %vm1211, %v3610, 0.0
      %v3687 = vsel %vm1212, %v3612, 0.0
      %v3688 = vsel %vm1213, %v3614, 0.0
      %v3689 = vsel %vm1214, %v3616, 0.0
      %v3690 = vsel %vm1215, %v3618, 0.0
      %v3691 = vsel %vm1216, %v3620, 0.0
      %v3692 = vsel %vm1217, %v3622, 0.0
      %v3693 = vsel %vm1218, %v3624, 0.0
      %v3694 = vsel %vm1219, %v3626, 0.0
      %v3695 = vsel %vm1220, %v3628, 0.0
      %v3696 = vsel %vm1221, %v3630, 0.0
      %v3697 = vsel %vm1222, %v3632, 0.0
      %v3698 = vsel %vm1223, %v3634, 0.0
      %v3699 = vsel %vm1224, %v3635, 0.0
      %v3700 = vsel %vm1289, %v3506, 0.0
      %v3701 = vsel %vm1290, %v3420, 0.0
      %v3702 = vsel %vm1291, %v3422, 0.0
      %v3703 = vsel %vm1292, %v3424, 0.0
      %v3704 = vsel %vm1293, %v3426, 0.0
      %v3705 = vsel %vm1294, %v3428, 0.0
      %v3706 = vsel %vm1295, %v3430, 0.0
      %v3707 = vsel %vm1296, %v3432, 0.0
      %v3708 = vsel %vm1297, %v3434, 0.0
      %v3709 = vsel %vm1298, %v3436, 0.0
      %v3710 = vsel %vm1299, %v3438, 0.0
      %v3711 = vsel %vm1300, %v3440, 0.0
      %v3712 = vsel %vm1301, %v3442, 0.0
      %v3713 = vsel %vm1302, %v3444, 0.0
      %v3714 = vsel %vm1303, %v3446, 0.0
      %v3715 = vsel %vm1304, %v3448, 0.0
      %v3716 = vsel %vm1305, %v3450, 0.0
      %v3717 = vsel %vm1306, %v3452, 0.0
      %v3718 = vsel %vm1307, %v3454, 0.0
      %v3719 = vsel %vm1308, %v3456, 0.0
      %v3720 = vsel %vm1309, %v3458, 0.0
      %v3721 = vsel %vm1310, %v3460, 0.0
      %v3722 = vsel %vm1311, %v3462, 0.0
      %v3723 = vsel %vm1312, %v3464, 0.0
      %v3724 = vsel %vm1313, %v3466, 0.0
      %v3725 = vsel %vm1314, %v3468, 0.0
      %v3726 = vsel %vm1315, %v3470, 0.0
      %v3727 = vsel %vm1316, %v3472, 0.0
      %v3728 = vsel %vm1317, %v3474, 0.0
      %v3729 = vsel %vm1318, %v3475, 0.0
      %v3730 = vsel %vm1319, %v3383, 0.0
      %v3731 = vsel %vm1320, %v3385, 0.0
      %v3732 = vsel %vm1385, %v3578, 0.0
      %v3733 = vsel %vm1386, %v3580, 0.0
      %v3734 = vsel %vm1387, %v3582, 0.0
      %v3735 = vsel %vm1388, %v3584, 0.0
      %v3736 = vsel %vm1389, %v3586, 0.0
      %v3737 = vsel %vm1390, %v3588, 0.0
      %v3738 = vsel %vm1391, %v3590, 0.0
      %v3739 = vsel %vm1392, %v3592, 0.0
      %v3740 = vsel %vm1393, %v3594, 0.0
      %v3741 = vsel %vm1394, %v3596, 0.0
      %v3742 = vsel %vm1395, %v3598, 0.0
      %v3743 = vsel %vm1396, %v3600, 0.0
      %v3744 = vsel %vm1397, %v3602, 0.0
      %v3745 = vsel %vm1398, %v3604, 0.0
      %v3746 = vsel %vm1399, %v3606, 0.0
      %v3747 = vsel %vm1400, %v3608, 0.0
      %v3748 = vsel %vm1401, %v3610, 0.0
      %v3749 = vsel %vm1402, %v3612, 0.0
      %v3750 = vsel %vm1403, %v3614, 0.0
      %v3751 = vsel %vm1404, %v3616, 0.0
      %v3752 = vsel %vm1405, %v3618, 0.0
      %v3753 = vsel %vm1406, %v3620, 0.0
      %v3754 = vsel %vm1407, %v3622, 0.0
      %v3755 = vsel %vm1408, %v3624, 0.0
      %v3756 = vsel %vm1409, %v3626, 0.0
      %v3757 = vsel %vm1410, %v3628, 0.0
      %v3758 = vsel %vm1411, %v3630, 0.0
      %v3759 = vsel %vm1412, %v3632, 0.0
      %v3760 = vsel %vm1413, %v3634, 0.0
      %v3761 = vsel %vm1414, %v3635, 0.0
      %v3762 = vsel %vm1415, %v3573, 0.0
      %v3763 = vsel %vm1416, %v3667, 0.0
      %v3764 = vsel %vm1545, %v3422, 0.0
      %v3765 = vsel %vm1546, %v3424, 0.0
      %v3766 = vsel %vm1547, %v3426, 0.0
      %v3767 = vsel %vm1548, %v3428, 0.0
      %v3768 = vsel %vm1549, %v3430, 0.0
      %v3769 = vsel %vm1550, %v3432, 0.0
      %v3770 = vsel %vm1551, %v3434, 0.0
      %v3771 = vsel %vm1552, %v3436, 0.0
      %v3772 = vsel %vm1553, %v3438, 0.0
      %v3773 = vsel %vm1554, %v3440, 0.0
      %v3774 = vsel %vm1555, %v3442, 0.0
      %v3775 = vsel %vm1556, %v3444, 0.0
      %v3776 = vsel %vm1557, %v3446, 0.0
      %v3777 = vsel %vm1558, %v3448, 0.0
      %v3778 = vsel %vm1559, %v3450, 0.0
      %v3779 = vsel %vm1560, %v3452, 0.0
      %v3780 = vsel %vm1561, %v3454, 0.0
      %v3781 = vsel %vm1562, %v3456, 0.0
      %v3782 = vsel %vm1563, %v3458, 0.0
      %v3783 = vsel %vm1564, %v3460, 0.0
      %v3784 = vsel %vm1565, %v3462, 0.0
      %v3785 = vsel %vm1566, %v3464, 0.0
      %v3786 = vsel %vm1567, %v3466, 0.0
      %v3787 = vsel %vm1568, %v3468, 0.0
      %v3788 = vsel %vm1569, %v3470, 0.0
      %v3789 = vsel %vm1570, %v3472, 0.0
      %v3790 = vsel %vm1571, %v3474, 0.0
      %v3791 = vsel %vm1572, %v3475, 0.0
      %v3792 = vsel %vm1573, %v3383, 0.0
      %v3793 = vsel %vm1574, %v3385, 0.0
      %v3794 = vsel %vm1575, %v3506, 0.0
      %v3795 = vsel %vm1576, %v3420, 0.0
      %v3796 = vsel %vm1641, %v3348, 0.0
      %v3797 = vsel %vm1642, %v3349, 0.0
      %v3798 = vsel %vm1643, %v3350, 0.0
      %v3799 = vsel %vm1644, %v3351, 0.0
      %v3800 = vsel %vm1645, %v3352, 0.0
      %v3801 = vsel %vm1646, %v3353, 0.0
      %v3802 = vsel %vm1647, %v3354, 0.0
      %v3803 = vsel %vm1648, %v3355, 0.0
      %v3804 = vsel %vm1649, %v3356, 0.0
      %v3805 = vsel %vm1650, %v3357, 0.0
      %v3806 = vsel %vm1651, %v3358, 0.0
      %v3807 = vsel %vm1652, %v3359, 0.0
      %v3808 = vsel %vm1653, %v3360, 0.0
      %v3809 = vsel %vm1654, %v3361, 0.0
      %v3810 = vsel %vm1655, %v3362, 0.0
      %v3811 = vsel %vm1656, %v3363, 0.0
      %v3812 = vsel %vm1657, %v3364, 0.0
      %v3813 = vsel %vm1658, %v3365, 0.0
      %v3814 = vsel %vm1659, %v3366, 0.0
      %v3815 = vsel %vm1660, %v3367, 0.0
      %v3816 = vsel %vm1661, %v3368, 0.0
      %v3817 = vsel %vm1662, %v3369, 0.0
      %v3818 = vsel %vm1663, %v3370, 0.0
      %v3819 = vsel %vm1664, %v3371, 0.0
      %v3820 = vsel %vm1665, %v3372, 0.0
      %v3821 = vsel %vm1666, %v3373, 0.0
      %v3822 = vsel %vm1667, %v3374, 0.0
      %v3823 = vsel %vm1668, %v3375, 0.0
      %v3824 = vsel %vm1669, %v3376, 0.0
      %v3825 = vsel %vm1670, %v3377, 0.0
      %v3826 = vsel %vm1671, %v3346, 0.0
      %v3827 = vsel %vm1672, %v3347, 0.0
      %v3828 = vsel %vm1769, %v3582, 0.0
      %v3829 = vsel %vm1770, %v3584, 0.0
      %v3830 = vsel %vm1771, %v3586, 0.0
      %v3831 = vsel %vm1772, %v3588, 0.0
      %v3832 = vsel %vm1773, %v3590, 0.0
      %v3833 = vsel %vm1774, %v3592, 0.0
      %v3834 = vsel %vm1775, %v3594, 0.0
      %v3835 = vsel %vm1776, %v3596, 0.0
      %v3836 = vsel %vm1777, %v3598, 0.0
      %v3837 = vsel %vm1778, %v3600, 0.0
      %v3838 = vsel %vm1779, %v3602, 0.0
      %v3839 = vsel %vm1780, %v3604, 0.0
      %v3840 = vsel %vm1781, %v3606, 0.0
      %v3841 = vsel %vm1782, %v3608, 0.0
      %v3842 = vsel %vm1783, %v3610, 0.0
      %v3843 = vsel %vm1784, %v3612, 0.0
      %v3844 = vsel %vm1785, %v3614, 0.0
      %v3845 = vsel %vm1786, %v3616, 0.0
      %v3846 = vsel %vm1787, %v3618, 0.0
      %v3847 = vsel %vm1788, %v3620, 0.0
      %v3848 = vsel %vm1789, %v3622, 0.0
      %v3849 = vsel %vm1790, %v3624, 0.0
      %v3850 = vsel %vm1791, %v3626, 0.0
      %v3851 = vsel %vm1792, %v3628, 0.0
      %v3852 = vsel %vm1793, %v3630, 0.0
      %v3853 = vsel %vm1794, %v3632, 0.0
      %v3854 = vsel %vm1795, %v3634, 0.0
      %v3855 = vsel %vm1796, %v3635, 0.0
      %v3856 = vsel %vm1797, %v3573, 0.0
      %v3857 = vsel %vm1798, %v3667, 0.0
      %v3858 = vsel %vm1799, %v3578, 0.0
      %v3859 = vsel %vm1800, %v3580, 0.0
      %3892 = vrot.lane.b32.xlu0 %v3539, 32
      %v3893 = vpop.permute.xlu0 %3892
      %3894 = vrot.lane.b32.xlu0 %v3540, 32
      %v3895 = vpop.permute.xlu0 %3894
      %3896 = vrot.lane.b32.xlu0 %v3541, 32
      %v3897 = vpop.permute.xlu0 %3896
      %3898 = vrot.lane.b32.xlu0 %v3542, 32
      %v3899 = vpop.permute.xlu0 %3898
      %3900 = vrot.lane.b32.xlu0 %v3543, 32
      %v3901 = vpop.permute.xlu0 %3900
      %3902 = vrot.lane.b32.xlu0 %v3544, 32
      %v3903 = vpop.permute.xlu0 %3902
      %3904 = vrot.lane.b32.xlu0 %v3545, 32
      %v3905 = vpop.permute.xlu0 %3904
      %3906 = vrot.lane.b32.xlu0 %v3546, 32
      %v3907 = vpop.permute.xlu0 %3906
      %3908 = vrot.lane.b32.xlu0 %v3547, 32
      %v3909 = vpop.permute.xlu0 %3908
      %3910 = vrot.lane.b32.xlu0 %v3548, 32
      %v3911 = vpop.permute.xlu0 %3910
      %3912 = vrot.lane.b32.xlu0 %v3549, 32
      %v3913 = vpop.permute.xlu0 %3912
      %3914 = vrot.lane.b32.xlu0 %v3550, 32
      %v3915 = vpop.permute.xlu0 %3914
      %3916 = vrot.lane.b32.xlu0 %v3551, 32
      %v3917 = vpop.permute.xlu0 %3916
      %3918 = vrot.lane.b32.xlu0 %v3552, 32
      %v3919 = vpop.permute.xlu0 %3918
      %3920 = vrot.lane.b32.xlu0 %v3553, 32
      %v3921 = vpop.permute.xlu0 %3920
      %3922 = vrot.lane.b32.xlu0 %v3554, 32
      %v3923 = vpop.permute.xlu0 %3922
      %3924 = vrot.lane.b32.xlu0 %v3555, 32
      %v3925 = vpop.permute.xlu0 %3924
      %3926 = vrot.lane.b32.xlu0 %v3556, 32
      %v3927 = vpop.permute.xlu0 %3926
      %3928 = vrot.lane.b32.xlu0 %v3557, 32
      %v3929 = vpop.permute.xlu0 %3928
      %3930 = vrot.lane.b32.xlu0 %v3558, 32
      %v3931 = vpop.permute.xlu0 %3930
      %3932 = vrot.lane.b32.xlu0 %v3559, 32
      %v3933 = vpop.permute.xlu0 %3932
      %3934 = vrot.lane.b32.xlu0 %v3560, 32
      %v3935 = vpop.permute.xlu0 %3934
      %3936 = vrot.lane.b32.xlu0 %v3561, 32
      %v3937 = vpop.permute.xlu0 %3936
      %3938 = vrot.lane.b32.xlu0 %v3562, 32
      %v3939 = vpop.permute.xlu0 %3938
      %3940 = vrot.lane.b32.xlu0 %v3563, 32
      %v3941 = vpop.permute.xlu0 %3940
      %3942 = vrot.lane.b32.xlu0 %v3564, 32
      %v3943 = vpop.permute.xlu0 %3942
      %3944 = vrot.lane.b32.xlu0 %v3565, 32
      %v3945 = vpop.permute.xlu0 %3944
      %3946 = vrot.lane.b32.xlu0 %v3566, 32
      %v3947 = vpop.permute.xlu0 %3946
      %3948 = vrot.lane.b32.xlu0 %v3567, 32
      %v3949 = vpop.permute.xlu0 %3948
      %3950 = vrot.lane.b32.xlu0 %v3568, 32
      %v3951 = vpop.permute.xlu0 %3950
      %3952 = vrot.lane.b32.xlu0 %v3569, 32
      %v3953 = vpop.permute.xlu0 %3952
      %3954 = vrot.lane.b32.xlu0 %v3570, 32
      %v3955 = vpop.permute.xlu0 %3954
      %4020 = vrot.lane.b32.xlu0 %v3668, 64
      %v4021 = vpop.permute.xlu0 %4020
      %4022 = vrot.lane.b32.xlu0 %v3669, 64
      %v4023 = vpop.permute.xlu0 %4022
      %4024 = vrot.lane.b32.xlu0 %v3670, 64
      %v4025 = vpop.permute.xlu0 %4024
      %4026 = vrot.lane.b32.xlu0 %v3671, 64
      %v4027 = vpop.permute.xlu0 %4026
      %4028 = vrot.lane.b32.xlu0 %v3672, 64
      %v4029 = vpop.permute.xlu0 %4028
      %4030 = vrot.lane.b32.xlu0 %v3673, 64
      %v4031 = vpop.permute.xlu0 %4030
      %4032 = vrot.lane.b32.xlu0 %v3674, 64
      %v4033 = vpop.permute.xlu0 %4032
      %4034 = vrot.lane.b32.xlu0 %v3675, 64
      %v4035 = vpop.permute.xlu0 %4034
      %4036 = vrot.lane.b32.xlu0 %v3676, 64
      %v4037 = vpop.permute.xlu0 %4036
      %4038 = vrot.lane.b32.xlu0 %v3677, 64
      %v4039 = vpop.permute.xlu0 %4038
      %4040 = vrot.lane.b32.xlu0 %v3678, 64
      %v4041 = vpop.permute.xlu0 %4040
      %4042 = vrot.lane.b32.xlu0 %v3679, 64
      %v4043 = vpop.permute.xlu0 %4042
      %4044 = vrot.lane.b32.xlu0 %v3680, 64
      %v4045 = vpop.permute.xlu0 %4044
      %4046 = vrot.lane.b32.xlu0 %v3681, 64
      %v4047 = vpop.permute.xlu0 %4046
      %4048 = vrot.lane.b32.xlu0 %v3682, 64
      %v4049 = vpop.permute.xlu0 %4048
      %4050 = vrot.lane.b32.xlu0 %v3683, 64
      %v4051 = vpop.permute.xlu0 %4050
      %4052 = vrot.lane.b32.xlu0 %v3684, 64
      %v4053 = vpop.permute.xlu0 %4052
      %4054 = vrot.lane.b32.xlu0 %v3685, 64
      %v4055 = vpop.permute.xlu0 %4054
      %4056 = vrot.lane.b32.xlu0 %v3686, 64
      %v4057 = vpop.permute.xlu0 %4056
      %4058 = vrot.lane.b32.xlu0 %v3687, 64
      %v4059 = vpop.permute.xlu0 %4058
      %4060 = vrot.lane.b32.xlu0 %v3688, 64
      %v4061 = vpop.permute.xlu0 %4060
      %4062 = vrot.lane.b32.xlu0 %v3689, 64
      %v4063 = vpop.permute.xlu0 %4062
      %4064 = vrot.lane.b32.xlu0 %v3690, 64
      %v4065 = vpop.permute.xlu0 %4064
      %4066 = vrot.lane.b32.xlu0 %v3691, 64
      %v4067 = vpop.permute.xlu0 %4066
      %4068 = vrot.lane.b32.xlu0 %v3692, 64
      %v4069 = vpop.permute.xlu0 %4068
      %4070 = vrot.lane.b32.xlu0 %v3693, 64
      %v4071 = vpop.permute.xlu0 %4070
      %4072 = vrot.lane.b32.xlu0 %v3694, 64
      %v4073 = vpop.permute.xlu0 %4072
      %4074 = vrot.lane.b32.xlu0 %v3695, 64
      %v4075 = vpop.permute.xlu0 %4074
      %4076 = vrot.lane.b32.xlu0 %v3696, 64
      %v4077 = vpop.permute.xlu0 %4076
      %4078 = vrot.lane.b32.xlu0 %v3697, 64
      %v4079 = vpop.permute.xlu0 %4078
      %4080 = vrot.lane.b32.xlu0 %v3698, 64
      %v4081 = vpop.permute.xlu0 %4080
      %4082 = vrot.lane.b32.xlu0 %v3699, 64
      %v4083 = vpop.permute.xlu0 %4082
      %4148 = vrot.lane.b32.xlu0 %v3700, 96
      %v4149 = vpop.permute.xlu0 %4148
      %4150 = vrot.lane.b32.xlu0 %v3701, 96
      %v4151 = vpop.permute.xlu0 %4150
      %4152 = vrot.lane.b32.xlu0 %v3702, 96
      %v4153 = vpop.permute.xlu0 %4152
      %4154 = vrot.lane.b32.xlu0 %v3703, 96
      %v4155 = vpop.permute.xlu0 %4154
      %4156 = vrot.lane.b32.xlu0 %v3704, 96
      %v4157 = vpop.permute.xlu0 %4156
      %4158 = vrot.lane.b32.xlu0 %v3705, 96
      %v4159 = vpop.permute.xlu0 %4158
      %4160 = vrot.lane.b32.xlu0 %v3706, 96
      %v4161 = vpop.permute.xlu0 %4160
      %4162 = vrot.lane.b32.xlu0 %v3707, 96
      %v4163 = vpop.permute.xlu0 %4162
      %4164 = vrot.lane.b32.xlu0 %v3708, 96
      %v4165 = vpop.permute.xlu0 %4164
      %4166 = vrot.lane.b32.xlu0 %v3709, 96
      %v4167 = vpop.permute.xlu0 %4166
      %4168 = vrot.lane.b32.xlu0 %v3710, 96
      %v4169 = vpop.permute.xlu0 %4168
      %4170 = vrot.lane.b32.xlu0 %v3711, 96
      %v4171 = vpop.permute.xlu0 %4170
      %4172 = vrot.lane.b32.xlu0 %v3712, 96
      %v4173 = vpop.permute.xlu0 %4172
      %4174 = vrot.lane.b32.xlu0 %v3713, 96
      %v4175 = vpop.permute.xlu0 %4174
      %4176 = vrot.lane.b32.xlu0 %v3714, 96
      %v4177 = vpop.permute.xlu0 %4176
      %4178 = vrot.lane.b32.xlu0 %v3715, 96
      %v4179 = vpop.permute.xlu0 %4178
      %4180 = vrot.lane.b32.xlu0 %v3716, 96
      %v4181 = vpop.permute.xlu0 %4180
      %4182 = vrot.lane.b32.xlu0 %v3717, 96
      %v4183 = vpop.permute.xlu0 %4182
      %4184 = vrot.lane.b32.xlu0 %v3718, 96
      %v4185 = vpop.permute.xlu0 %4184
      %4186 = vrot.lane.b32.xlu0 %v3719, 96
      %v4187 = vpop.permute.xlu0 %4186
      %4188 = vrot.lane.b32.xlu0 %v3720, 96
      %v4189 = vpop.permute.xlu0 %4188
      %4190 = vrot.lane.b32.xlu0 %v3721, 96
      %v4191 = vpop.permute.xlu0 %4190
      %4192 = vrot.lane.b32.xlu0 %v3722, 96
      %v4193 = vpop.permute.xlu0 %4192
      %4194 = vrot.lane.b32.xlu0 %v3723, 96
      %v4195 = vpop.permute.xlu0 %4194
      %4196 = vrot.lane.b32.xlu0 %v3724, 96
      %v4197 = vpop.permute.xlu0 %4196
      %4198 = vrot.lane.b32.xlu0 %v3725, 96
      %v4199 = vpop.permute.xlu0 %4198
      %4200 = vrot.lane.b32.xlu0 %v3726, 96
      %v4201 = vpop.permute.xlu0 %4200
      %4202 = vrot.lane.b32.xlu0 %v3727, 96
      %v4203 = vpop.permute.xlu0 %4202
      %4204 = vrot.lane.b32.xlu0 %v3728, 96
      %v4205 = vpop.permute.xlu0 %4204
      %4206 = vrot.lane.b32.xlu0 %v3729, 96
      %v4207 = vpop.permute.xlu0 %4206
      %4208 = vrot.lane.b32.xlu0 %v3730, 96
      %v4209 = vpop.permute.xlu0 %4208
      %4210 = vrot.lane.b32.xlu0 %v3731, 96
      %v4211 = vpop.permute.xlu0 %4210
      %4276 = vrot.lane.b32.xlu0 %v3732, 32
      %v4277 = vpop.permute.xlu0 %4276
      %4278 = vrot.lane.b32.xlu0 %v3733, 32
      %v4279 = vpop.permute.xlu0 %4278
      %4280 = vrot.lane.b32.xlu0 %v3734, 32
      %v4281 = vpop.permute.xlu0 %4280
      %4282 = vrot.lane.b32.xlu0 %v3735, 32
      %v4283 = vpop.permute.xlu0 %4282
      %4284 = vrot.lane.b32.xlu0 %v3736, 32
      %v4285 = vpop.permute.xlu0 %4284
      %4286 = vrot.lane.b32.xlu0 %v3737, 32
      %v4287 = vpop.permute.xlu0 %4286
      %4288 = vrot.lane.b32.xlu0 %v3738, 32
      %v4289 = vpop.permute.xlu0 %4288
      %4290 = vrot.lane.b32.xlu0 %v3739, 32
      %v4291 = vpop.permute.xlu0 %4290
      %4292 = vrot.lane.b32.xlu0 %v3740, 32
      %v4293 = vpop.permute.xlu0 %4292
      %4294 = vrot.lane.b32.xlu0 %v3741, 32
      %v4295 = vpop.permute.xlu0 %4294
      %4296 = vrot.lane.b32.xlu0 %v3742, 32
      %v4297 = vpop.permute.xlu0 %4296
      %4298 = vrot.lane.b32.xlu0 %v3743, 32
      %v4299 = vpop.permute.xlu0 %4298
      %4300 = vrot.lane.b32.xlu0 %v3744, 32
      %v4301 = vpop.permute.xlu0 %4300
      %4302 = vrot.lane.b32.xlu0 %v3745, 32
      %v4303 = vpop.permute.xlu0 %4302
      %4304 = vrot.lane.b32.xlu0 %v3746, 32
      %v4305 = vpop.permute.xlu0 %4304
      %4306 = vrot.lane.b32.xlu0 %v3747, 32
      %v4307 = vpop.permute.xlu0 %4306
      %4308 = vrot.lane.b32.xlu0 %v3748, 32
      %v4309 = vpop.permute.xlu0 %4308
      %4310 = vrot.lane.b32.xlu0 %v3749, 32
      %v4311 = vpop.permute.xlu0 %4310
      %4312 = vrot.lane.b32.xlu0 %v3750, 32
      %v4313 = vpop.permute.xlu0 %4312
      %4314 = vrot.lane.b32.xlu0 %v3751, 32
      %v4315 = vpop.permute.xlu0 %4314
      %4316 = vrot.lane.b32.xlu0 %v3752, 32
      %v4317 = vpop.permute.xlu0 %4316
      %4318 = vrot.lane.b32.xlu0 %v3753, 32
      %v4319 = vpop.permute.xlu0 %4318
      %4320 = vrot.lane.b32.xlu0 %v3754, 32
      %v4321 = vpop.permute.xlu0 %4320
      %4322 = vrot.lane.b32.xlu0 %v3755, 32
      %v4323 = vpop.permute.xlu0 %4322
      %4324 = vrot.lane.b32.xlu0 %v3756, 32
      %v4325 = vpop.permute.xlu0 %4324
      %4326 = vrot.lane.b32.xlu0 %v3757, 32
      %v4327 = vpop.permute.xlu0 %4326
      %4328 = vrot.lane.b32.xlu0 %v3758, 32
      %v4329 = vpop.permute.xlu0 %4328
      %4330 = vrot.lane.b32.xlu0 %v3759, 32
      %v4331 = vpop.permute.xlu0 %4330
      %4332 = vrot.lane.b32.xlu0 %v3760, 32
      %v4333 = vpop.permute.xlu0 %4332
      %4334 = vrot.lane.b32.xlu0 %v3761, 32
      %v4335 = vpop.permute.xlu0 %4334
      %4336 = vrot.lane.b32.xlu0 %v3762, 32
      %v4337 = vpop.permute.xlu0 %4336
      %4338 = vrot.lane.b32.xlu0 %v3763, 32
      %v4339 = vpop.permute.xlu0 %4338
      %4404 = vrot.lane.b32.xlu0 %v3764, 64
      %v4405 = vpop.permute.xlu0 %4404
      %4406 = vrot.lane.b32.xlu0 %v3765, 64
      %v4407 = vpop.permute.xlu0 %4406
      %4408 = vrot.lane.b32.xlu0 %v3766, 64
      %v4409 = vpop.permute.xlu0 %4408
      %4410 = vrot.lane.b32.xlu0 %v3767, 64
      %v4411 = vpop.permute.xlu0 %4410
      %4412 = vrot.lane.b32.xlu0 %v3768, 64
      %v4413 = vpop.permute.xlu0 %4412
      %4414 = vrot.lane.b32.xlu0 %v3769, 64
      %v4415 = vpop.permute.xlu0 %4414
      %4416 = vrot.lane.b32.xlu0 %v3770, 64
      %v4417 = vpop.permute.xlu0 %4416
      %4418 = vrot.lane.b32.xlu0 %v3771, 64
      %v4419 = vpop.permute.xlu0 %4418
      %4420 = vrot.lane.b32.xlu0 %v3772, 64
      %v4421 = vpop.permute.xlu0 %4420
      %4422 = vrot.lane.b32.xlu0 %v3773, 64
      %v4423 = vpop.permute.xlu0 %4422
      %4424 = vrot.lane.b32.xlu0 %v3774, 64
      %v4425 = vpop.permute.xlu0 %4424
      %4426 = vrot.lane.b32.xlu0 %v3775, 64
      %v4427 = vpop.permute.xlu0 %4426
      %4428 = vrot.lane.b32.xlu0 %v3776, 64
      %v4429 = vpop.permute.xlu0 %4428
      %4430 = vrot.lane.b32.xlu0 %v3777, 64
      %v4431 = vpop.permute.xlu0 %4430
      %4432 = vrot.lane.b32.xlu0 %v3778, 64
      %v4433 = vpop.permute.xlu0 %4432
      %4434 = vrot.lane.b32.xlu0 %v3779, 64
      %v4435 = vpop.permute.xlu0 %4434
      %4436 = vrot.lane.b32.xlu0 %v3780, 64
      %v4437 = vpop.permute.xlu0 %4436
      %4438 = vrot.lane.b32.xlu0 %v3781, 64
      %v4439 = vpop.permute.xlu0 %4438
      %4440 = vrot.lane.b32.xlu0 %v3782, 64
      %v4441 = vpop.permute.xlu0 %4440
      %4442 = vrot.lane.b32.xlu0 %v3783, 64
      %v4443 = vpop.permute.xlu0 %4442
      %4444 = vrot.lane.b32.xlu0 %v3784, 64
      %v4445 = vpop.permute.xlu0 %4444
      %4446 = vrot.lane.b32.xlu0 %v3785, 64
      %v4447 = vpop.permute.xlu0 %4446
      %4448 = vrot.lane.b32.xlu0 %v3786, 64
      %v4449 = vpop.permute.xlu0 %4448
      %4450 = vrot.lane.b32.xlu0 %v3787, 64
      %v4451 = vpop.permute.xlu0 %4450
      %4452 = vrot.lane.b32.xlu0 %v3788, 64
      %v4453 = vpop.permute.xlu0 %4452
      %4454 = vrot.lane.b32.xlu0 %v3789, 64
      %v4455 = vpop.permute.xlu0 %4454
      %4456 = vrot.lane.b32.xlu0 %v3790, 64
      %v4457 = vpop.permute.xlu0 %4456
      %4458 = vrot.lane.b32.xlu0 %v3791, 64
      %v4459 = vpop.permute.xlu0 %4458
      %4460 = vrot.lane.b32.xlu0 %v3792, 64
      %v4461 = vpop.permute.xlu0 %4460
      %4462 = vrot.lane.b32.xlu0 %v3793, 64
      %v4463 = vpop.permute.xlu0 %4462
      %4464 = vrot.lane.b32.xlu0 %v3794, 64
      %v4465 = vpop.permute.xlu0 %4464
      %4466 = vrot.lane.b32.xlu0 %v3795, 64
      %v4467 = vpop.permute.xlu0 %4466
      %4532 = vrot.lane.b32.xlu0 %v3796, 96
      %v4533 = vpop.permute.xlu0 %4532
      %4534 = vrot.lane.b32.xlu0 %v3797, 96
      %v4535 = vpop.permute.xlu0 %4534
      %4536 = vrot.lane.b32.xlu0 %v3798, 96
      %v4537 = vpop.permute.xlu0 %4536
      %4538 = vrot.lane.b32.xlu0 %v3799, 96
      %v4539 = vpop.permute.xlu0 %4538
      %4540 = vrot.lane.b32.xlu0 %v3800, 96
      %v4541 = vpop.permute.xlu0 %4540
      %4542 = vrot.lane.b32.xlu0 %v3801, 96
      %v4543 = vpop.permute.xlu0 %4542
      %4544 = vrot.lane.b32.xlu0 %v3802, 96
      %v4545 = vpop.permute.xlu0 %4544
      %4546 = vrot.lane.b32.xlu0 %v3803, 96
      %v4547 = vpop.permute.xlu0 %4546
      %4548 = vrot.lane.b32.xlu0 %v3804, 96
      %v4549 = vpop.permute.xlu0 %4548
      %4550 = vrot.lane.b32.xlu0 %v3805, 96
      %v4551 = vpop.permute.xlu0 %4550
      %4552 = vrot.lane.b32.xlu0 %v3806, 96
      %v4553 = vpop.permute.xlu0 %4552
      %4554 = vrot.lane.b32.xlu0 %v3807, 96
      %v4555 = vpop.permute.xlu0 %4554
      %4556 = vrot.lane.b32.xlu0 %v3808, 96
      %v4557 = vpop.permute.xlu0 %4556
      %4558 = vrot.lane.b32.xlu0 %v3809, 96
      %v4559 = vpop.permute.xlu0 %4558
      %4560 = vrot.lane.b32.xlu0 %v3810, 96
      %v4561 = vpop.permute.xlu0 %4560
      %4562 = vrot.lane.b32.xlu0 %v3811, 96
      %v4563 = vpop.permute.xlu0 %4562
      %4564 = vrot.lane.b32.xlu0 %v3812, 96
      %v4565 = vpop.permute.xlu0 %4564
      %4566 = vrot.lane.b32.xlu0 %v3813, 96
      %v4567 = vpop.permute.xlu0 %4566
      %4568 = vrot.lane.b32.xlu0 %v3814, 96
      %v4569 = vpop.permute.xlu0 %4568
      %4570 = vrot.lane.b32.xlu0 %v3815, 96
      %v4571 = vpop.permute.xlu0 %4570
      %4572 = vrot.lane.b32.xlu0 %v3816, 96
      %v4573 = vpop.permute.xlu0 %4572
      %4574 = vrot.lane.b32.xlu0 %v3817, 96
      %v4575 = vpop.permute.xlu0 %4574
      %4576 = vrot.lane.b32.xlu0 %v3818, 96
      %v4577 = vpop.permute.xlu0 %4576
      %4578 = vrot.lane.b32.xlu0 %v3819, 96
      %v4579 = vpop.permute.xlu0 %4578
      %4580 = vrot.lane.b32.xlu0 %v3820, 96
      %v4581 = vpop.permute.xlu0 %4580
      %4582 = vrot.lane.b32.xlu0 %v3821, 96
      %v4583 = vpop.permute.xlu0 %4582
      %4584 = vrot.lane.b32.xlu0 %v3822, 96
      %v4585 = vpop.permute.xlu0 %4584
      %4586 = vrot.lane.b32.xlu0 %v3823, 96
      %v4587 = vpop.permute.xlu0 %4586
      %4588 = vrot.lane.b32.xlu0 %v3824, 96
      %v4589 = vpop.permute.xlu0 %4588
      %4590 = vrot.lane.b32.xlu0 %v3825, 96
      %v4591 = vpop.permute.xlu0 %4590
      %4592 = vrot.lane.b32.xlu0 %v3826, 96
      %v4593 = vpop.permute.xlu0 %4592
      %4594 = vrot.lane.b32.xlu0 %v3827, 96
      %v4595 = vpop.permute.xlu0 %4594
      %v4628 = vsel %vm3056, %v3507, %v3893
      %v4629 = vsel %vm3056, %v3508, %v3895
      %v4630 = vsel %vm3056, %v3509, %v3897
      %v4631 = vsel %vm3056, %v3510, %v3899
      %v4632 = vsel %vm3056, %v3511, %v3901
      %v4633 = vsel %vm3056, %v3512, %v3903
      %v4634 = vsel %vm3056, %v3513, %v3905
      %v4635 = vsel %vm3056, %v3514, %v3907
      %v4636 = vsel %vm3056, %v3515, %v3909
      %v4637 = vsel %vm3056, %v3516, %v3911
      %v4638 = vsel %vm3056, %v3517, %v3913
      %v4639 = vsel %vm3056, %v3518, %v3915
      %v4640 = vsel %vm3056, %v3519, %v3917
      %v4641 = vsel %vm3056, %v3520, %v3919
      %v4642 = vsel %vm3056, %v3521, %v3921
      %v4643 = vsel %vm3056, %v3522, %v3923
      %v4644 = vsel %vm3056, %v3523, %v3925
      %v4645 = vsel %vm3056, %v3524, %v3927
      %v4646 = vsel %vm3056, %v3525, %v3929
      %v4647 = vsel %vm3056, %v3526, %v3931
      %v4648 = vsel %vm3056, %v3527, %v3933
      %v4649 = vsel %vm3056, %v3528, %v3935
      %v4650 = vsel %vm3056, %v3529, %v3937
      %v4651 = vsel %vm3056, %v3530, %v3939
      %v4652 = vsel %vm3056, %v3531, %v3941
      %v4653 = vsel %vm3056, %v3532, %v3943
      %v4654 = vsel %vm3056, %v3533, %v3945
      %v4655 = vsel %vm3056, %v3534, %v3947
      %v4656 = vsel %vm3056, %v3535, %v3949
      %v4657 = vsel %vm3056, %v3536, %v3951
      %v4658 = vsel %vm3056, %v3537, %v3953
      %v4659 = vsel %vm3056, %v3538, %v3955
      %vm4660 = vcmask 523264
      %v4661 = vsel %vm4660, %v4628, %v4021
      %v4662 = vsel %vm4660, %v4629, %v4023
      %v4663 = vsel %vm4660, %v4630, %v4025
      %v4664 = vsel %vm4660, %v4631, %v4027
      %v4665 = vsel %vm4660, %v4632, %v4029
      %v4666 = vsel %vm4660, %v4633, %v4031
      %v4667 = vsel %vm4660, %v4634, %v4033
      %v4668 = vsel %vm4660, %v4635, %v4035
      %v4669 = vsel %vm4660, %v4636, %v4037
      %v4670 = vsel %vm4660, %v4637, %v4039
      %v4671 = vsel %vm4660, %v4638, %v4041
      %v4672 = vsel %vm4660, %v4639, %v4043
      %v4673 = vsel %vm4660, %v4640, %v4045
      %v4674 = vsel %vm4660, %v4641, %v4047
      %v4675 = vsel %vm4660, %v4642, %v4049
      %v4676 = vsel %vm4660, %v4643, %v4051
      %v4677 = vsel %vm4660, %v4644, %v4053
      %v4678 = vsel %vm4660, %v4645, %v4055
      %v4679 = vsel %vm4660, %v4646, %v4057
      %v4680 = vsel %vm4660, %v4647, %v4059
      %v4681 = vsel %vm4660, %v4648, %v4061
      %v4682 = vsel %vm4660, %v4649, %v4063
      %v4683 = vsel %vm4660, %v4650, %v4065
      %v4684 = vsel %vm4660, %v4651, %v4067
      %v4685 = vsel %vm4660, %v4652, %v4069
      %v4686 = vsel %vm4660, %v4653, %v4071
      %v4687 = vsel %vm4660, %v4654, %v4073
      %v4688 = vsel %vm4660, %v4655, %v4075
      %v4689 = vsel %vm4660, %v4656, %v4077
      %v4690 = vsel %vm4660, %v4657, %v4079
      %v4691 = vsel %vm4660, %v4658, %v4081
      %v4692 = vsel %vm4660, %v4659, %v4083
      %vm4693 = vcmask 785408
      %v4694 = vsel %vm4693, %v4661, %v4149
      %v4695 = vsel %vm4693, %v4662, %v4151
      %v4696 = vsel %vm4693, %v4663, %v4153
      %v4697 = vsel %vm4693, %v4664, %v4155
      %v4698 = vsel %vm4693, %v4665, %v4157
      %v4699 = vsel %vm4693, %v4666, %v4159
      %v4700 = vsel %vm4693, %v4667, %v4161
      %v4701 = vsel %vm4693, %v4668, %v4163
      %v4702 = vsel %vm4693, %v4669, %v4165
      %v4703 = vsel %vm4693, %v4670, %v4167
      %v4704 = vsel %vm4693, %v4671, %v4169
      %v4705 = vsel %vm4693, %v4672, %v4171
      %v4706 = vsel %vm4693, %v4673, %v4173
      %v4707 = vsel %vm4693, %v4674, %v4175
      %v4708 = vsel %vm4693, %v4675, %v4177
      %v4709 = vsel %vm4693, %v4676, %v4179
      %v4710 = vsel %vm4693, %v4677, %v4181
      %v4711 = vsel %vm4693, %v4678, %v4183
      %v4712 = vsel %vm4693, %v4679, %v4185
      %v4713 = vsel %vm4693, %v4680, %v4187
      %v4714 = vsel %vm4693, %v4681, %v4189
      %v4715 = vsel %vm4693, %v4682, %v4191
      %v4716 = vsel %vm4693, %v4683, %v4193
      %v4717 = vsel %vm4693, %v4684, %v4195
      %v4718 = vsel %vm4693, %v4685, %v4197
      %v4719 = vsel %vm4693, %v4686, %v4199
      %v4720 = vsel %vm4693, %v4687, %v4201
      %v4721 = vsel %vm4693, %v4688, %v4203
      %v4722 = vsel %vm4693, %v4689, %v4205
      %v4723 = vsel %vm4693, %v4690, %v4207
      %v4724 = vsel %vm4693, %v4691, %v4209
      %v4725 = vsel %vm4693, %v4692, %v4211
      %v4726 = vsel %vm3056, %v3346, %v4277
      %v4727 = vsel %vm3056, %v3347, %v4279
      %v4728 = vsel %vm3056, %v3348, %v4281
      %v4729 = vsel %vm3056, %v3349, %v4283
      %v4730 = vsel %vm3056, %v3350, %v4285
      %v4731 = vsel %vm3056, %v3351, %v4287
      %v4732 = vsel %vm3056, %v3352, %v4289
      %v4733 = vsel %vm3056, %v3353, %v4291
      %v4734 = vsel %vm3056, %v3354, %v4293
      %v4735 = vsel %vm3056, %v3355, %v4295
      %v4736 = vsel %vm3056, %v3356, %v4297
      %v4737 = vsel %vm3056, %v3357, %v4299
      %v4738 = vsel %vm3056, %v3358, %v4301
      %v4739 = vsel %vm3056, %v3359, %v4303
      %v4740 = vsel %vm3056, %v3360, %v4305
      %v4741 = vsel %vm3056, %v3361, %v4307
      %v4742 = vsel %vm3056, %v3362, %v4309
      %v4743 = vsel %vm3056, %v3363, %v4311
      %v4744 = vsel %vm3056, %v3364, %v4313
      %v4745 = vsel %vm3056, %v3365, %v4315
      %v4746 = vsel %vm3056, %v3366, %v4317
      %v4747 = vsel %vm3056, %v3367, %v4319
      %v4748 = vsel %vm3056, %v3368, %v4321
      %v4749 = vsel %vm3056, %v3369, %v4323
      %v4750 = vsel %vm3056, %v3370, %v4325
      %v4751 = vsel %vm3056, %v3371, %v4327
      %v4752 = vsel %vm3056, %v3372, %v4329
      %v4753 = vsel %vm3056, %v3373, %v4331
      %v4754 = vsel %vm3056, %v3374, %v4333
      %v4755 = vsel %vm3056, %v3375, %v4335
      %v4756 = vsel %vm3056, %v3376, %v4337
      %v4757 = vsel %vm3056, %v3377, %v4339
      %v4758 = vsel %vm4660, %v4726, %v4405
      %v4759 = vsel %vm4660, %v4727, %v4407
      %v4760 = vsel %vm4660, %v4728, %v4409
      %v4761 = vsel %vm4660, %v4729, %v4411
      %v4762 = vsel %vm4660, %v4730, %v4413
      %v4763 = vsel %vm4660, %v4731, %v4415
      %v4764 = vsel %vm4660, %v4732, %v4417
      %v4765 = vsel %vm4660, %v4733, %v4419
      %v4766 = vsel %vm4660, %v4734, %v4421
      %v4767 = vsel %vm4660, %v4735, %v4423
      %v4768 = vsel %vm4660, %v4736, %v4425
      %v4769 = vsel %vm4660, %v4737, %v4427
      %v4770 = vsel %vm4660, %v4738, %v4429
      %v4771 = vsel %vm4660, %v4739, %v4431
      %v4772 = vsel %vm4660, %v4740, %v4433
      %v4773 = vsel %vm4660, %v4741, %v4435
      %v4774 = vsel %vm4660, %v4742, %v4437
      %v4775 = vsel %vm4660, %v4743, %v4439
      %v4776 = vsel %vm4660, %v4744, %v4441
      %v4777 = vsel %vm4660, %v4745, %v4443
      %v4778 = vsel %vm4660, %v4746, %v4445
      %v4779 = vsel %vm4660, %v4747, %v4447
      %v4780 = vsel %vm4660, %v4748, %v4449
      %v4781 = vsel %vm4660, %v4749, %v4451
      %v4782 = vsel %vm4660, %v4750, %v4453
      %v4783 = vsel %vm4660, %v4751, %v4455
      %v4784 = vsel %vm4660, %v4752, %v4457
      %v4785 = vsel %vm4660, %v4753, %v4459
      %v4786 = vsel %vm4660, %v4754, %v4461
      %v4787 = vsel %vm4660, %v4755, %v4463
      %v4788 = vsel %vm4660, %v4756, %v4465
      %v4789 = vsel %vm4660, %v4757, %v4467
      %v4790 = vsel %vm4693, %v4758, %v4533
      %v4791 = vsel %vm4693, %v4759, %v4535
      %v4792 = vsel %vm4693, %v4760, %v4537
      %v4793 = vsel %vm4693, %v4761, %v4539
      %v4794 = vsel %vm4693, %v4762, %v4541
      %v4795 = vsel %vm4693, %v4763, %v4543
      %v4796 = vsel %vm4693, %v4764, %v4545
      %v4797 = vsel %vm4693, %v4765, %v4547
      %v4798 = vsel %vm4693, %v4766, %v4549
      %v4799 = vsel %vm4693, %v4767, %v4551
      %v4800 = vsel %vm4693, %v4768, %v4553
      %v4801 = vsel %vm4693, %v4769, %v4555
      %v4802 = vsel %vm4693, %v4770, %v4557
      %v4803 = vsel %vm4693, %v4771, %v4559
      %v4804 = vsel %vm4693, %v4772, %v4561
      %v4805 = vsel %vm4693, %v4773, %v4563
      %v4806 = vsel %vm4693, %v4774, %v4565
      %v4807 = vsel %vm4693, %v4775, %v4567
      %v4808 = vsel %vm4693, %v4776, %v4569
      %v4809 = vsel %vm4693, %v4777, %v4571
      %v4810 = vsel %vm4693, %v4778, %v4573
      %v4811 = vsel %vm4693, %v4779, %v4575
      %v4812 = vsel %vm4693, %v4780, %v4577
      %v4813 = vsel %vm4693, %v4781, %v4579
      %v4814 = vsel %vm4693, %v4782, %v4581
      %v4815 = vsel %vm4693, %v4783, %v4583
      %v4816 = vsel %vm4693, %v4784, %v4585
      %v4817 = vsel %vm4693, %v4785, %v4587
      %v4818 = vsel %vm4693, %v4786, %v4589
      %v4819 = vsel %vm4693, %v4787, %v4591
      %v4820 = vsel %vm4693, %v4788, %v4593
      %v4821 = vsel %vm4693, %v4789, %v4595
      %v4822 = vpack.c.bf16 %v4695, %v4694
      %v4823 = vpack.c.bf16 %v4791, %v4790
      %v4824 = vpack.c.bf16 %v3829, %v3828
      %v4825 = vpack.c.bf16 %v4697, %v4696
      %v4826 = vpack.c.bf16 %v4793, %v4792
      %v4827 = vpack.c.bf16 %v3831, %v3830
      %v4828 = vpack.c.bf16 %v4699, %v4698
      %v4829 = vpack.c.bf16 %v4795, %v4794
      %v4830 = vpack.c.bf16 %v3833, %v3832
      %v4831 = vpack.c.bf16 %v4701, %v4700
      %v4832 = vpack.c.bf16 %v4797, %v4796
      %v4833 = vpack.c.bf16 %v3835, %v3834
      %v4834 = vpack.c.bf16 %v4703, %v4702
      %v4835 = vpack.c.bf16 %v4799, %v4798
      %v4836 = vpack.c.bf16 %v3837, %v3836
      %v4837 = vpack.c.bf16 %v4705, %v4704
      %v4838 = vpack.c.bf16 %v4801, %v4800
      %v4839 = vpack.c.bf16 %v3839, %v3838
      %v4840 = vpack.c.bf16 %v4707, %v4706
      %v4841 = vpack.c.bf16 %v4803, %v4802
      %v4842 = vpack.c.bf16 %v3841, %v3840
      %v4843 = vpack.c.bf16 %v4709, %v4708
      %v4844 = vpack.c.bf16 %v4805, %v4804
      %v4845 = vpack.c.bf16 %v3843, %v3842
      %v4846 = vpack.c.bf16 %v4711, %v4710
      %v4847 = vpack.c.bf16 %v4807, %v4806
      %v4848 = vpack.c.bf16 %v3845, %v3844
      %v4849 = vpack.c.bf16 %v4713, %v4712
      %v4850 = vpack.c.bf16 %v4809, %v4808
      %v4851 = vpack.c.bf16 %v3847, %v3846
      %v4852 = vpack.c.bf16 %v4715, %v4714
      %v4853 = vpack.c.bf16 %v4811, %v4810
      %v4854 = vpack.c.bf16 %v3849, %v3848
      %v4855 = vpack.c.bf16 %v4717, %v4716
      %v4856 = vpack.c.bf16 %v4813, %v4812
      %v4857 = vpack.c.bf16 %v3851, %v3850
      %v4858 = vpack.c.bf16 %v4719, %v4718
      %v4859 = vpack.c.bf16 %v4815, %v4814
      %v4860 = vpack.c.bf16 %v3853, %v3852
      %v4861 = vpack.c.bf16 %v4721, %v4720
      %v4862 = vpack.c.bf16 %v4817, %v4816
      %v4863 = vpack.c.bf16 %v3855, %v3854
      %v4864 = vpack.c.bf16 %v4723, %v4722
      %v4865 = vpack.c.bf16 %v4819, %v4818
      %v4866 = vpack.c.bf16 %v3857, %v3856
      %v4867 = vpack.c.bf16 %v4725, %v4724
      %v4868 = vpack.c.bf16 %v4821, %v4820
      %v4869 = vpack.c.bf16 %v3859, %v3858
      %v4870 = vld [vmem:[%s3] sm:$0xf]
      %v4871 = vld [vmem:[%s3 + $0x4] sm:$0xf]
      %v4872 = vld [vmem:[%s3 + $0x8] sm:$0xf]
      %v4873 = vld [vmem:[%s3 + $0xc] sm:$0xf]
      %v4874 = vld [vmem:[%s3 + $0x10] sm:$0xf]
      %v4875 = vld [vmem:[%s3 + $0x14] sm:$0xf]
      %v4876 = vld [vmem:[%s3 + $0x18] sm:$0xf]
      %v4877 = vld [vmem:[%s3 + $0x1c] sm:$0xf]
      %v4878 = vld [vmem:[%s3 + $0x20] sm:$0xf]
      %v4879 = vld [vmem:[%s3 + $0x24] sm:$0xf]
      %v4880 = vld [vmem:[%s3 + $0x28] sm:$0xf]
      %v4881 = vld [vmem:[%s3 + $0x2c] sm:$0xf]
      %v4882 = vld [vmem:[%s3 + $0x30] sm:$0xf]
      %v4883 = vld [vmem:[%s3 + $0x34] sm:$0xf]
      %v4884 = vld [vmem:[%s3 + $0x38] sm:$0xf]
      %v4885 = vld [vmem:[%s3 + $0x3c] sm:$0xf]
      %v4886 = vld [vmem:[%s3 + $0x40] sm:$0xf]
      %v4887 = vld [vmem:[%s3 + $0x44] sm:$0xf]
      %v4888 = vld [vmem:[%s3 + $0x48] sm:$0xf]
      %v4889 = vld [vmem:[%s3 + $0x4c] sm:$0xf]
      %v4890 = vld [vmem:[%s3 + $0x50] sm:$0xf]
      %v4891 = vld [vmem:[%s3 + $0x54] sm:$0xf]
      %v4892 = vld [vmem:[%s3 + $0x58] sm:$0xf]
      %v4893 = vld [vmem:[%s3 + $0x5c] sm:$0xf]
      %v4894 = vld [vmem:[%s3 + $0x60] sm:$0xf]
      %v4895 = vld [vmem:[%s3 + $0x64] sm:$0xf]
      %v4896 = vld [vmem:[%s3 + $0x68] sm:$0xf]
      %v4897 = vld [vmem:[%s3 + $0x6c] sm:$0xf]
      %v4898 = vld [vmem:[%s3 + $0x70] sm:$0xf]
      %v4899 = vld [vmem:[%s3 + $0x74] sm:$0xf]
      %v4900 = vld [vmem:[%s3 + $0x78] sm:$0xf]
      %v4901 = vld [vmem:[%s3 + $0x7c] sm:$0xf]
      %v4902 = vld [vmem:[%s3 + $0x80] sm:$0xf]
      %v4903 = vld [vmem:[%s3 + $0x84] sm:$0xf]
      %v4904 = vld [vmem:[%s3 + $0x88] sm:$0xf]
      %v4905 = vld [vmem:[%s3 + $0x8c] sm:$0xf]
      %v4942 = vunpack.c.l.b16 %v4870
      %v4943 = vunpack.c.l.b16 %v4871
      %v4944 = vunpack.c.l.b16 %v4872
      %v4945 = vunpack.c.l.b16 %v4873
      %v4946 = vunpack.c.l.b16 %v4874
      %v4947 = vunpack.c.l.b16 %v4875
      %v4948 = vunpack.c.l.b16 %v4876
      %v4949 = vunpack.c.l.b16 %v4877
      %v4950 = vunpack.c.l.b16 %v4878
      %v4951 = vunpack.c.l.b16 %v4879
      %v4952 = vunpack.c.l.b16 %v4880
      %v4953 = vunpack.c.l.b16 %v4881
      %v4954 = vunpack.c.l.b16 %v4882
      %v4955 = vunpack.c.l.b16 %v4883
      %v4956 = vunpack.c.l.b16 %v4884
      %v4957 = vunpack.c.l.b16 %v4885
      %v4958 = vunpack.c.l.b16 %v4886
      %v4959 = vunpack.c.l.b16 %v4887
      %v4960 = vunpack.c.l.b16 %v4888
      %v4961 = vunpack.c.l.b16 %v4889
      %v4962 = vunpack.c.l.b16 %v4890
      %v4963 = vunpack.c.l.b16 %v4891
      %v4964 = vunpack.c.l.b16 %v4892
      %v4965 = vunpack.c.l.b16 %v4893
      %v4966 = vunpack.c.l.b16 %v4894
      %v4967 = vunpack.c.l.b16 %v4895
      %v4968 = vunpack.c.l.b16 %v4896
      %v4969 = vunpack.c.l.b16 %v4897
      %v4970 = vunpack.c.l.b16 %v4898
      %v4971 = vunpack.c.l.b16 %v4899
      %v4972 = vunpack.c.l.b16 %v4900
      %v4973 = vunpack.c.l.b16 %v4901
      %v4974 = vunpack.c.l.b16 %v4902
      %v4975 = vunpack.c.l.b16 %v4903
      %v4976 = vunpack.c.l.b16 %v4904
      %v4977 = vunpack.c.l.b16 %v4905
      %v4978 = vpack.c.b16 %v4943, %v4942
      %v4979 = vpack.c.b16 %v4945, %v4944
      %v4980 = vpack.c.b16 %v4947, %v4946
      %v4981 = vpack.c.b16 %v4949, %v4948
      %v4982 = vpack.c.b16 %v4951, %v4950
      %v4983 = vpack.c.b16 %v4953, %v4952
      %v4984 = vpack.c.b16 %v4955, %v4954
      %v4985 = vpack.c.b16 %v4957, %v4956
      %v4986 = vpack.c.b16 %v4959, %v4958
      %v4987 = vpack.c.b16 %v4961, %v4960
      %v4988 = vpack.c.b16 %v4963, %v4962
      %v4989 = vpack.c.b16 %v4965, %v4964
      %v4990 = vpack.c.b16 %v4967, %v4966
      %v4991 = vpack.c.b16 %v4969, %v4968
      %v4992 = vpack.c.b16 %v4971, %v4970
      %v4993 = vpack.c.b16 %v4973, %v4972
      %v4994 = vpack.c.b16 %v4975, %v4974
      %v4995 = vpack.c.b16 %v4977, %v4976
      %v5015 = vsel %vm3056, %v4824, 0
      %v5018 = vsel %vm3056, %v4827, 0
      %v5021 = vsel %vm3056, %v4830, 0
      %v5024 = vsel %vm3056, %v4833, 0
      %v5027 = vsel %vm3056, %v4836, 0
      %v5030 = vsel %vm3056, %v4839, 0
      %v5033 = vsel %vm3056, %v4842, 0
      %v5036 = vsel %vm3056, %v4845, 0
      %v5039 = vsel %vm3056, %v4848, 0
      %v5042 = vsel %vm3056, %v4851, 0
      %v5045 = vsel %vm3056, %v4854, 0
      %v5048 = vsel %vm3056, %v4857, 0
      %v5051 = vsel %vm3056, %v4860, 0
      %v5054 = vsel %vm3056, %v4863, 0
      %v5057 = vsel %vm3056, %v4866, 0
      %v5060 = vsel %vm3056, %v4869, 0
      %5062 = vmatprep.subr.bf16.mxu0 0
      %5063 = vmatpush1.bf16.msra.mxu0 %v4978
      %5064 = vmatprep.subr.bf16.mxu0 0
      %5065 = vmatpush1.bf16.msra.mxu0 %v4979
      %5066 = vmatprep.subr.bf16.mxu0 0
      %5067 = vmatpush1.bf16.msra.mxu0 %v4980
      %5068 = vmatprep.subr.bf16.mxu0 0
      %5069 = vmatpush1.bf16.msra.mxu0 %v4981
      %5070 = vmatprep.subr.bf16.mxu0 0
      %5071 = vmatpush1.bf16.msra.mxu0 %v4982
      %5072 = vmatprep.subr.bf16.mxu0 0
      %5073 = vmatpush1.bf16.msra.mxu0 %v4983
      %5074 = vmatprep.subr.bf16.mxu0 0
      %5075 = vmatpush1.bf16.msra.mxu0 %v4984
      %5076 = vmatprep.subr.bf16.mxu0 0
      %5077 = vmatpush1.bf16.msra.mxu0 %v4985
      %5078 = vmatprep.subr.bf16.mxu0 0
      %5079 = vmatpush1.bf16.msra.mxu0 %v4986
      %5080 = vmatprep.subr.bf16.mxu0 0
      %5081 = vmatpush1.bf16.msra.mxu0 %v4987
      %5082 = vmatprep.subr.bf16.mxu0 0
      %5083 = vmatpush1.bf16.msra.mxu0 %v4988
      %5084 = vmatprep.subr.bf16.mxu0 0
      %5085 = vmatpush1.bf16.msra.mxu0 %v4989
      %5086 = vmatprep.subr.bf16.mxu0 0
      %5087 = vmatpush1.bf16.msra.mxu0 %v4990
      %5088 = vmatprep.subr.bf16.mxu0 0
      %5089 = vmatpush1.bf16.msra.mxu0 %v4991
      %5090 = vmatprep.subr.bf16.mxu0 0
      %5091 = vmatpush1.bf16.msra.mxu0 %v4992
      %5092 = vmatprep.subr.bf16.mxu0 0
      %5093 = vmatpush1.bf16.msra.mxu0 %v4993
      %5094 = vmatprep.mubr.bf16.mxu0 %v4823
      %5095 = vmatmul.mubr.bf16.gmra.mrb[0].mxu0 %v4822
      %v5096 = vpop.f32.mrb[0].mxu0
      %v5097 = vadd.f32 0.0, %v5096
      %v5098 = vpop.f32.mrb[0].mxu0
      %v5099 = vpop.f32.mrb[0].mxu0
      %v5100 = vadd.f32 0.0, %v5099
      %v5101 = vpop.f32.mrb[0].mxu0
      %5102 = vmatprep.mubr.bf16.mxu0 %v4826
      %5103 = vmatmul.mubr.bf16.gmra.mrb[0].mxu0 %v4825
      %v5104 = vpop.f32.mrb[0].mxu0
      %v5105 = vadd.f32 0.0, %v5104
      %v5106 = vpop.f32.mrb[0].mxu0
      %v5107 = vpop.f32.mrb[0].mxu0
      %v5108 = vadd.f32 0.0, %v5107
      %v5109 = vpop.f32.mrb[0].mxu0
      %5110 = vmatprep.mubr.bf16.mxu0 %v4829
      %5111 = vmatmul.mubr.bf16.gmra.mrb[0].mxu0 %v4828
      %v5112 = vpop.f32.mrb[0].mxu0
      %v5113 = vadd.f32 0.0, %v5112
      %v5114 = vpop.f32.mrb[0].mxu0
      %v5115 = vpop.f32.mrb[0].mxu0
      %v5116 = vadd.f32 0.0, %v5115
      %v5117 = vpop.f32.mrb[0].mxu0
      %5118 = vmatprep.mubr.bf16.mxu0 %v4832
      %5119 = vmatmul.mubr.bf16.gmra.mrb[0].mxu0 %v4831
      %v5120 = vpop.f32.mrb[0].mxu0
      %v5121 = vadd.f32 0.0, %v5120
      %v5122 = vpop.f32.mrb[0].mxu0
      %v5123 = vpop.f32.mrb[0].mxu0
      %v5124 = vadd.f32 0.0, %v5123
      %v5125 = vpop.f32.mrb[0].mxu0
      %5126 = vmatprep.mubr.bf16.mxu0 %v4835
      %5127 = vmatmul.mubr.bf16.gmra.mrb[0].mxu0 %v4834
      %v5128 = vpop.f32.mrb[0].mxu0
      %v5129 = vadd.f32 0.0, %v5128
      %v5130 = vpop.f32.mrb[0].mxu0
      %v5131 = vpop.f32.mrb[0].mxu0
      %v5132 = vadd.f32 0.0, %v5131
      %v5133 = vpop.f32.mrb[0].mxu0
      %5134 = vmatprep.mubr.bf16.mxu0 %v4838
      %5135 = vmatmul.mubr.bf16.gmra.mrb[0].mxu0 %v4837
      %v5136 = vpop.f32.mrb[0].mxu0
      %v5137 = vadd.f32 0.0, %v5136
      %v5138 = vpop.f32.mrb[0].mxu0
      %v5139 = vpop.f32.mrb[0].mxu0
      %v5140 = vadd.f32 0.0, %v5139
      %v5141 = vpop.f32.mrb[0].mxu0
      %5142 = vmatprep.mubr.bf16.mxu0 %v4841
      %5143 = vmatmul.mubr.bf16.gmra.mrb[0].mxu0 %v4840
      %v5144 = vpop.f32.mrb[0].mxu0
      %v5145 = vadd.f32 0.0, %v5144
      %v5146 = vpop.f32.mrb[0].mxu0
      %v5147 = vpop.f32.mrb[0].mxu0
      %v5148 = vadd.f32 0.0, %v5147
      %v5149 = vpop.f32.mrb[0].mxu0
      %5150 = vmatprep.mubr.bf16.mxu0 %v4844
      %5151 = vmatmul.mubr.bf16.gmra.mrb[0].mxu0 %v4843
      %v5152 = vpop.f32.mrb[0].mxu0
      %v5153 = vadd.f32 0.0, %v5152
      %v5154 = vpop.f32.mrb[0].mxu0
      %v5155 = vpop.f32.mrb[0].mxu0
      %v5156 = vadd.f32 0.0, %v5155
      %v5157 = vpop.f32.mrb[0].mxu0
      %5158 = vmatprep.mubr.bf16.mxu0 %v4847
      %5159 = vmatmul.mubr.bf16.gmra.mrb[0].mxu0 %v4846
      %v5160 = vpop.f32.mrb[0].mxu0
      %v5161 = vadd.f32 0.0, %v5160
      %v5162 = vpop.f32.mrb[0].mxu0
      %v5163 = vpop.f32.mrb[0].mxu0
      %v5164 = vadd.f32 0.0, %v5163
      %v5165 = vpop.f32.mrb[0].mxu0
      %5166 = vmatprep.mubr.bf16.mxu0 %v4850
      %5167 = vmatmul.mubr.bf16.gmra.mrb[0].mxu0 %v4849
      %v5168 = vpop.f32.mrb[0].mxu0
      %v5169 = vadd.f32 0.0, %v5168
      %v5170 = vpop.f32.mrb[0].mxu0
      %v5171 = vpop.f32.mrb[0].mxu0
      %v5172 = vadd.f32 0.0, %v5171
      %v5173 = vpop.f32.mrb[0].mxu0
      %5174 = vmatprep.mubr.bf16.mxu0 %v4853
      %5175 = vmatmul.mubr.bf16.gmra.mrb[0].mxu0 %v4852
      %v5176 = vpop.f32.mrb[0].mxu0
      %v5177 = vadd.f32 0.0, %v5176
      %v5178 = vpop.f32.mrb[0].mxu0
      %v5179 = vpop.f32.mrb[0].mxu0
      %v5180 = vadd.f32 0.0, %v5179
      %v5181 = vpop.f32.mrb[0].mxu0
      %5182 = vmatprep.mubr.bf16.mxu0 %v4856
      %5183 = vmatmul.mubr.bf16.gmra.mrb[0].mxu0 %v4855
      %v5184 = vpop.f32.mrb[0].mxu0
      %v5185 = vadd.f32 0.0, %v5184
      %v5186 = vpop.f32.mrb[0].mxu0
      %v5187 = vpop.f32.mrb[0].mxu0
      %v5188 = vadd.f32 0.0, %v5187
      %v5189 = vpop.f32.mrb[0].mxu0
      %5190 = vmatprep.mubr.bf16.mxu0 %v4859
      %5191 = vmatmul.mubr.bf16.gmra.mrb[0].mxu0 %v4858
      %v5192 = vpop.f32.mrb[0].mxu0
      %v5193 = vadd.f32 0.0, %v5192
      %v5194 = vpop.f32.mrb[0].mxu0
      %v5195 = vpop.f32.mrb[0].mxu0
      %v5196 = vadd.f32 0.0, %v5195
      %v5197 = vpop.f32.mrb[0].mxu0
      %5198 = vmatprep.mubr.bf16.mxu0 %v4862
      %5199 = vmatmul.mubr.bf16.gmra.mrb[0].mxu0 %v4861
      %v5200 = vpop.f32.mrb[0].mxu0
      %v5201 = vadd.f32 0.0, %v5200
      %v5202 = vpop.f32.mrb[0].mxu0
      %v5203 = vpop.f32.mrb[0].mxu0
      %v5204 = vadd.f32 0.0, %v5203
      %v5205 = vpop.f32.mrb[0].mxu0
      %5206 = vmatprep.mubr.bf16.mxu0 %v4865
      %5207 = vmatmul.mubr.bf16.gmra.mrb[0].mxu0 %v4864
      %v5208 = vpop.f32.mrb[0].mxu0
      %v5209 = vadd.f32 0.0, %v5208
      %v5210 = vpop.f32.mrb[0].mxu0
      %v5211 = vpop.f32.mrb[0].mxu0
      %v5212 = vadd.f32 0.0, %v5211
      %v5213 = vpop.f32.mrb[0].mxu0
      %5214 = vmatprep.mubr.bf16.mxu0 %v4868
      %5215 = vmatmul.mubr.bf16.gmra.mrb[0].mxu0 %v4867
      %v5216 = vpop.f32.mrb[0].mxu0
      %v5217 = vadd.f32 0.0, %v5216
      %v5218 = vpop.f32.mrb[0].mxu0
      %v5219 = vpop.f32.mrb[0].mxu0
      %v5220 = vadd.f32 0.0, %v5219
      %v5221 = vpop.f32.mrb[0].mxu0
      %5222 = vdwg.mxu0
      %5223 = vmatprep.subr.bf16.mxu0 0
      %5224 = vmatpush1.bf16.msra.mxu0 %v4994
      %5225 = vmatprep.subr.bf16.mxu0 0
      %5226 = vmatpush1.bf16.msra.mxu0 %v4995
      %5227 = vmatprep.subr.bf16.mxu0 0
      %5228 = vmatpush1.bf16.msra.mxu0 0
      %5229 = vmatprep.subr.bf16.mxu0 0
      %5230 = vmatpush1.bf16.msra.mxu0 0
      %5231 = vmatprep.subr.bf16.mxu0 0
      %5232 = vmatpush1.bf16.msra.mxu0 0
      %5233 = vmatprep.subr.bf16.mxu0 0
      %5234 = vmatpush1.bf16.msra.mxu0 0
      %5235 = vmatprep.subr.bf16.mxu0 0
      %5236 = vmatpush1.bf16.msra.mxu0 0
      %5237 = vmatprep.subr.bf16.mxu0 0
      %5238 = vmatpush1.bf16.msra.mxu0 0
      %5239 = vmatprep.subr.bf16.mxu0 0
      %5240 = vmatpush1.bf16.msra.mxu0 0
      %5241 = vmatprep.subr.bf16.mxu0 0
      %5242 = vmatpush1.bf16.msra.mxu0 0
      %5243 = vmatprep.subr.bf16.mxu0 0
      %5244 = vmatpush1.bf16.msra.mxu0 0
      %5245 = vmatprep.subr.bf16.mxu0 0
      %5246 = vmatpush1.bf16.msra.mxu0 0
      %5247 = vmatprep.subr.bf16.mxu0 0
      %5248 = vmatpush1.bf16.msra.mxu0 0
      %5249 = vmatprep.subr.bf16.mxu0 0
      %5250 = vmatpush1.bf16.msra.mxu0 0
      %5251 = vmatprep.subr.bf16.mxu0 0
      %5252 = vmatpush1.bf16.msra.mxu0 0
      %5253 = vmatprep.subr.bf16.mxu0 0
      %5254 = vmatpush1.bf16.msra.mxu0 0
      %5255 = vmatprep.mubr.bf16.mxu0 0
      %5256 = vmatmul.mubr.bf16.gmra.mrb[0].mxu0 %v5015
      %v5257 = vpop.f32.mrb[0].mxu0
      %v5258 = vadd.f32 %v5097, %v5257
      %v5259 = vpop.f32.mrb[0].mxu0
      %v5260 = vpop.f32.mrb[0].mxu0
      %v5261 = vadd.f32 %v5100, %v5260
      %v5262 = vpop.f32.mrb[0].mxu0
      %5263 = vmatprep.mubr.bf16.mxu0 0
      %5264 = vmatmul.mubr.bf16.gmra.mrb[0].mxu0 %v5018
      %v5265 = vpop.f32.mrb[0].mxu0
      %v5266 = vadd.f32 %v5105, %v5265
      %v5267 = vpop.f32.mrb[0].mxu0
      %v5268 = vpop.f32.mrb[0].mxu0
      %v5269 = vadd.f32 %v5108, %v5268
      %v5270 = vpop.f32.mrb[0].mxu0
      %5271 = vmatprep.mubr.bf16.mxu0 0
      %5272 = vmatmul.mubr.bf16.gmra.mrb[0].mxu0 %v5021
      %v5273 = vpop.f32.mrb[0].mxu0
      %v5274 = vadd.f32 %v5113, %v5273
      %v5275 = vpop.f32.mrb[0].mxu0
      %v5276 = vpop.f32.mrb[0].mxu0
      %v5277 = vadd.f32 %v5116, %v5276
      %v5278 = vpop.f32.mrb[0].mxu0
      %5279 = vmatprep.mubr.bf16.mxu0 0
      %5280 = vmatmul.mubr.bf16.gmra.mrb[0].mxu0 %v5024
      %v5281 = vpop.f32.mrb[0].mxu0
      %v5282 = vadd.f32 %v5121, %v5281
      %v5283 = vpop.f32.mrb[0].mxu0
      %v5284 = vpop.f32.mrb[0].mxu0
      %v5285 = vadd.f32 %v5124, %v5284
      %v5286 = vpop.f32.mrb[0].mxu0
      %5287 = vmatprep.mubr.bf16.mxu0 0
      %5288 = vmatmul.mubr.bf16.gmra.mrb[0].mxu0 %v5027
      %v5289 = vpop.f32.mrb[0].mxu0
      %v5290 = vadd.f32 %v5129, %v5289
      %v5291 = vpop.f32.mrb[0].mxu0
      %v5292 = vpop.f32.mrb[0].mxu0
      %v5293 = vadd.f32 %v5132, %v5292
      %v5294 = vpop.f32.mrb[0].mxu0
      %5295 = vmatprep.mubr.bf16.mxu0 0
      %5296 = vmatmul.mubr.bf16.gmra.mrb[0].mxu0 %v5030
      %v5297 = vpop.f32.mrb[0].mxu0
      %v5298 = vadd.f32 %v5137, %v5297
      %v5299 = vpop.f32.mrb[0].mxu0
      %v5300 = vpop.f32.mrb[0].mxu0
      %v5301 = vadd.f32 %v5140, %v5300
      %v5302 = vpop.f32.mrb[0].mxu0
      %5303 = vmatprep.mubr.bf16.mxu0 0
      %5304 = vmatmul.mubr.bf16.gmra.mrb[0].mxu0 %v5033
      %v5305 = vpop.f32.mrb[0].mxu0
      %v5306 = vadd.f32 %v5145, %v5305
      %v5307 = vpop.f32.mrb[0].mxu0
      %v5308 = vpop.f32.mrb[0].mxu0
      %v5309 = vadd.f32 %v5148, %v5308
      %v5310 = vpop.f32.mrb[0].mxu0
      %5311 = vmatprep.mubr.bf16.mxu0 0
      %5312 = vmatmul.mubr.bf16.gmra.mrb[0].mxu0 %v5036
      %v5313 = vpop.f32.mrb[0].mxu0
      %v5314 = vadd.f32 %v5153, %v5313
      %v5315 = vpop.f32.mrb[0].mxu0
      %v5316 = vpop.f32.mrb[0].mxu0
      %v5317 = vadd.f32 %v5156, %v5316
      %v5318 = vpop.f32.mrb[0].mxu0
      %5319 = vmatprep.mubr.bf16.mxu0 0
      %5320 = vmatmul.mubr.bf16.gmra.mrb[0].mxu0 %v5039
      %v5321 = vpop.f32.mrb[0].mxu0
      %v5322 = vadd.f32 %v5161, %v5321
      %v5323 = vpop.f32.mrb[0].mxu0
      %v5324 = vpop.f32.mrb[0].mxu0
      %v5325 = vadd.f32 %v5164, %v5324
      %v5326 = vpop.f32.mrb[0].mxu0
      %5327 = vmatprep.mubr.bf16.mxu0 0
      %5328 = vmatmul.mubr.bf16.gmra.mrb[0].mxu0 %v5042
      %v5329 = vpop.f32.mrb[0].mxu0
      %v5330 = vadd.f32 %v5169, %v5329
      %v5331 = vpop.f32.mrb[0].mxu0
      %v5332 = vpop.f32.mrb[0].mxu0
      %v5333 = vadd.f32 %v5172, %v5332
      %v5334 = vpop.f32.mrb[0].mxu0
      %5335 = vmatprep.mubr.bf16.mxu0 0
      %5336 = vmatmul.mubr.bf16.gmra.mrb[0].mxu0 %v5045
      %v5337 = vpop.f32.mrb[0].mxu0
      %v5338 = vadd.f32 %v5177, %v5337
      %v5339 = vpop.f32.mrb[0].mxu0
      %v5340 = vpop.f32.mrb[0].mxu0
      %v5341 = vadd.f32 %v5180, %v5340
      %v5342 = vpop.f32.mrb[0].mxu0
      %5343 = vmatprep.mubr.bf16.mxu0 0
      %5344 = vmatmul.mubr.bf16.gmra.mrb[0].mxu0 %v5048
      %v5345 = vpop.f32.mrb[0].mxu0
      %v5346 = vadd.f32 %v5185, %v5345
      %v5347 = vpop.f32.mrb[0].mxu0
      %v5348 = vpop.f32.mrb[0].mxu0
      %v5349 = vadd.f32 %v5188, %v5348
      %v5350 = vpop.f32.mrb[0].mxu0
      %5351 = vmatprep.mubr.bf16.mxu0 0
      %5352 = vmatmul.mubr.bf16.gmra.mrb[0].mxu0 %v5051
      %v5353 = vpop.f32.mrb[0].mxu0
      %v5354 = vadd.f32 %v5193, %v5353
      %v5355 = vpop.f32.mrb[0].mxu0
      %v5356 = vpop.f32.mrb[0].mxu0
      %v5357 = vadd.f32 %v5196, %v5356
      %v5358 = vpop.f32.mrb[0].mxu0
      %5359 = vmatprep.mubr.bf16.mxu0 0
      %5360 = vmatmul.mubr.bf16.gmra.mrb[0].mxu0 %v5054
      %v5361 = vpop.f32.mrb[0].mxu0
      %v5362 = vadd.f32 %v5201, %v5361
      %v5363 = vpop.f32.mrb[0].mxu0
      %v5364 = vpop.f32.mrb[0].mxu0
      %v5365 = vadd.f32 %v5204, %v5364
      %v5366 = vpop.f32.mrb[0].mxu0
      %5367 = vmatprep.mubr.bf16.mxu0 0
      %5368 = vmatmul.mubr.bf16.gmra.mrb[0].mxu0 %v5057
      %v5369 = vpop.f32.mrb[0].mxu0
      %v5370 = vadd.f32 %v5209, %v5369
      %v5371 = vpop.f32.mrb[0].mxu0
      %v5372 = vpop.f32.mrb[0].mxu0
      %v5373 = vadd.f32 %v5212, %v5372
      %v5374 = vpop.f32.mrb[0].mxu0
      %5375 = vmatprep.mubr.bf16.mxu0 0
      %5376 = vmatmul.mubr.bf16.gmra.mrb[0].mxu0 %v5060
      %v5377 = vpop.f32.mrb[0].mxu0
      %v5378 = vadd.f32 %v5217, %v5377
      %v5379 = vpop.f32.mrb[0].mxu0
      %v5380 = vpop.f32.mrb[0].mxu0
      %v5381 = vadd.f32 %v5220, %v5380
      %v5382 = vpop.f32.mrb[0].mxu0
      %5383 = vdwg.mxu0
      %v5384 = vld [vmem:[%s5] sm:$0xff]
      %v5385 = vld [vmem:[%s5 + $0x8] sm:$0xff]
      %v5386 = vld [vmem:[%s5 + $0x10] sm:$0xff]
      %v5387 = vld [vmem:[%s5 + $0x18] sm:$0xff]
      %v5388 = vld [vmem:[%s5 + $0x20] sm:$0xff]
      %v5389 = vld [vmem:[%s5 + $0x28] sm:$0xff]
      %v5390 = vld [vmem:[%s5 + $0x30] sm:$0xff]
      %v5391 = vld [vmem:[%s5 + $0x38] sm:$0xff]
      %v5392 = vld [vmem:[%s5 + $0x40] sm:$0xff]
      %v5393 = vld [vmem:[%s5 + $0x48] sm:$0xff]
      %v5394 = vld [vmem:[%s5 + $0x50] sm:$0xff]
      %v5395 = vld [vmem:[%s5 + $0x58] sm:$0xff]
      %v5396 = vld [vmem:[%s5 + $0x60] sm:$0xff]
      %v5397 = vld [vmem:[%s5 + $0x68] sm:$0xff]
      %v5398 = vld [vmem:[%s5 + $0x70] sm:$0xff]
      %v5399 = vld [vmem:[%s5 + $0x78] sm:$0xff]
      %v5400 = vld [vmem:[%s4] sm:$0x1]
      %v5402 = vlaneseq
      %v5403 = vshrl.u32 %v5402, 7
      %v5404 = vsub.s32 0, %v5403
      %v5405 = vrot.slane %v5400, %v5404
      %5407 = vmatprep.subr.mxu0 0.0
      %5408 = vmatpush1.msra.mxu0 %v5258
      %5409 = vmatprep.subr.mxu0 0.0
      %5410 = vmatpush1.msra.mxu0 %v5261
      %5411 = vmatprep.subr.mxu0 0.0
      %5412 = vmatpush1.msra.mxu0 %v5266
      %5413 = vmatprep.subr.mxu0 0.0
      %5414 = vmatpush1.msra.mxu0 %v5269
      %5415 = vmatprep.subr.mxu0 0.0
      %5416 = vmatpush1.msra.mxu0 %v5274
      %5417 = vmatprep.subr.mxu0 0.0
      %5418 = vmatpush1.msra.mxu0 %v5277
      %5419 = vmatprep.subr.mxu0 0.0
      %5420 = vmatpush1.msra.mxu0 %v5282
      %5421 = vmatprep.subr.mxu0 0.0
      %5422 = vmatpush1.msra.mxu0 %v5285
      %5423 = vmatprep.subr.mxu0 0.0
      %5424 = vmatpush1.msra.mxu0 %v5290
      %5425 = vmatprep.subr.mxu0 0.0
      %5426 = vmatpush1.msra.mxu0 %v5293
      %5427 = vmatprep.subr.mxu0 0.0
      %5428 = vmatpush1.msra.mxu0 %v5298
      %5429 = vmatprep.subr.mxu0 0.0
      %5430 = vmatpush1.msra.mxu0 %v5301
      %5431 = vmatprep.subr.mxu0 0.0
      %5432 = vmatpush1.msra.mxu0 %v5306
      %5433 = vmatprep.subr.mxu0 0.0
      %5434 = vmatpush1.msra.mxu0 %v5309
      %5435 = vmatprep.subr.mxu0 0.0
      %5436 = vmatpush1.msra.mxu0 %v5314
      %5437 = vmatprep.subr.mxu0 0.0
      %5438 = vmatpush1.msra.mxu0 %v5317
      %5439 = vmatprep.subr.mxu0 0.0
      %5440 = vmatpush1.msra.mxu0 %v5322
      %5441 = vmatprep.subr.mxu0 0.0
      %5442 = vmatpush1.msra.mxu0 %v5325
      %5443 = vmatprep.subr.mxu0 0.0
      %5444 = vmatpush1.msra.mxu0 %v5330
      %5445 = vmatprep.subr.mxu0 0.0
      %5446 = vmatpush1.msra.mxu0 %v5333
      %5447 = vmatprep.subr.mxu0 0.0
      %5448 = vmatpush1.msra.mxu0 %v5338
      %5449 = vmatprep.subr.mxu0 0.0
      %5450 = vmatpush1.msra.mxu0 %v5341
      %5451 = vmatprep.subr.mxu0 0.0
      %5452 = vmatpush1.msra.mxu0 %v5346
      %5453 = vmatprep.subr.mxu0 0.0
      %5454 = vmatpush1.msra.mxu0 %v5349
      %5455 = vmatprep.subr.mxu0 0.0
      %5456 = vmatpush1.msra.mxu0 %v5354
      %5457 = vmatprep.subr.mxu0 0.0
      %5458 = vmatpush1.msra.mxu0 %v5357
      %5459 = vmatprep.subr.mxu0 0.0
      %5460 = vmatpush1.msra.mxu0 %v5362
      %5461 = vmatprep.subr.mxu0 0.0
      %5462 = vmatpush1.msra.mxu0 %v5365
      %5463 = vmatprep.subr.mxu0 0.0
      %5464 = vmatpush1.msra.mxu0 %v5370
      %5465 = vmatprep.subr.mxu0 0.0
      %5466 = vmatpush1.msra.mxu0 %v5373
      %5467 = vmatprep.subr.mxu0 0.0
      %5468 = vmatpush1.msra.mxu0 %v5378
      %5469 = vmatprep.subr.mxu0 0.0
      %5470 = vmatpush1.msra.mxu0 %v5381
      %5471 = vmatprep.mubr.f32.mxu0 %v5385
      %5472 = vmatmul.mubr.f32.gmra.mrb[0].mxu0 %v5384
      %v5473 = vpop.f32.mrb[0].mxu0
      %v5474 = vadd.f32 %v5405, %v5473
      %v5475 = vpop.f32.mrb[0].mxu0
      %5476 = vmatprep.mubr.f32.mxu0 %v5387
      %5477 = vmatmul.mubr.f32.gmra.mrb[0].mxu0 %v5386
      %v5478 = vpop.f32.mrb[0].mxu0
      %v5479 = vadd.f32 %v5405, %v5478
      %v5480 = vpop.f32.mrb[0].mxu0
      %5481 = vmatprep.mubr.f32.mxu0 %v5389
      %5482 = vmatmul.mubr.f32.gmra.mrb[0].mxu0 %v5388
      %v5483 = vpop.f32.mrb[0].mxu0
      %v5484 = vadd.f32 %v5405, %v5483
      %v5485 = vpop.f32.mrb[0].mxu0
      %5486 = vmatprep.mubr.f32.mxu0 %v5391
      %5487 = vmatmul.mubr.f32.gmra.mrb[0].mxu0 %v5390
      %v5488 = vpop.f32.mrb[0].mxu0
      %v5489 = vadd.f32 %v5405, %v5488
      %v5490 = vpop.f32.mrb[0].mxu0
      %5491 = vmatprep.mubr.f32.mxu0 %v5393
      %5492 = vmatmul.mubr.f32.gmra.mrb[0].mxu0 %v5392
      %v5493 = vpop.f32.mrb[0].mxu0
      %v5494 = vadd.f32 %v5405, %v5493
      %v5495 = vpop.f32.mrb[0].mxu0
      %5496 = vmatprep.mubr.f32.mxu0 %v5395
      %5497 = vmatmul.mubr.f32.gmra.mrb[0].mxu0 %v5394
      %v5498 = vpop.f32.mrb[0].mxu0
      %v5499 = vadd.f32 %v5405, %v5498
      %v5500 = vpop.f32.mrb[0].mxu0
      %5501 = vmatprep.mubr.f32.mxu0 %v5397
      %5502 = vmatmul.mubr.f32.gmra.mrb[0].mxu0 %v5396
      %v5503 = vpop.f32.mrb[0].mxu0
      %v5504 = vadd.f32 %v5405, %v5503
      %v5505 = vpop.f32.mrb[0].mxu0
      %5506 = vmatprep.mubr.f32.mxu0 %v5399
      %5507 = vmatmul.mubr.f32.gmra.mrb[0].mxu0 %v5398
      %v5508 = vpop.f32.mrb[0].mxu0
      %v5509 = vadd.f32 %v5405, %v5508
      %v5510 = vpop.f32.mrb[0].mxu0
      %5511 = vdwg.mxu0
      %v5512 = vmax.f32 %v5474, 0.0
      %v5513 = vmax.f32 %v5479, 0.0
      %v5514 = vmax.f32 %v5484, 0.0
      %v5515 = vmax.f32 %v5489, 0.0
      %v5516 = vmax.f32 %v5494, 0.0
      %v5517 = vmax.f32 %v5499, 0.0
      %v5518 = vmax.f32 %v5504, 0.0
      %v5519 = vmax.f32 %v5509, 0.0
      %v5520 = vand.u32 %v453, 7
      %v5521 = vand.u32 %v454, 7
      %v5522 = vand.u32 %v455, 7
      %v5523 = vand.u32 %v456, 7
      %v5524 = vand.u32 %v457, 7
      %v5525 = vand.u32 %v458, 7
      %v5526 = vand.u32 %v459, 7
      %v5527 = vand.u32 %v460, 7
      %v5528 = vshra.s32 %v453, 3
      %v5529 = vshra.s32 %v454, 3
      %v5530 = vshra.s32 %v455, 3
      %v5531 = vshra.s32 %v456, 3
      %v5532 = vshra.s32 %v457, 3
      %v5533 = vshra.s32 %v458, 3
      %v5534 = vshra.s32 %v459, 3
      %v5535 = vshra.s32 %v460, 3
      %v5536 = vand.u32 %v5528, 7
      %v5537 = vand.u32 %v5529, 7
      %v5538 = vand.u32 %v5530, 7
      %v5539 = vand.u32 %v5531, 7
      %v5540 = vand.u32 %v5532, 7
      %v5541 = vand.u32 %v5533, 7
      %v5542 = vand.u32 %v5534, 7
      %v5543 = vand.u32 %v5535, 7
      %v5546 = vrot.slane %v5518, 7
      %v5547 = vrot.slane %v5519, 7
      %v5548 = vsel %vm584, %v5546, %v5547
      %v5557 = vrot.slane %v5512, 7
      %v5558 = vrot.slane %v5513, 7
      %v5559 = vsel %vm584, %v5557, %v5558
      %v5560 = vrot.slane %v5514, 7
      %v5561 = vsel %vm584, %v5558, %v5560
      %v5562 = vrot.slane %v5515, 7
      %v5563 = vsel %vm584, %v5560, %v5562
      %v5564 = vrot.slane %v5516, 7
      %v5565 = vsel %vm584, %v5562, %v5564
      %v5566 = vrot.slane %v5517, 7
      %v5567 = vsel %vm584, %v5564, %v5566
      %v5568 = vsel %vm584, %v5566, %v5546
      %v5576 = vsel %vm584, %v5547, %v5557
      %vm5577 = vcmp.ge.s32.totalorder %v5536, 1
      %vm5578 = vcmp.ge.s32.totalorder %v5537, 1
      %vm5579 = vcmp.ge.s32.totalorder %v5538, 1
      %vm5580 = vcmp.ge.s32.totalorder %v5539, 1
      %vm5581 = vcmp.ge.s32.totalorder %v5540, 1
      %vm5582 = vcmp.ge.s32.totalorder %v5541, 1
      %vm5583 = vcmp.ge.s32.totalorder %v5542, 1
      %vm5584 = vcmp.ge.s32.totalorder %v5543, 1
      %vm5585 = vcmp.ge.s32.totalorder %v5520, 1
      %vm5586 = vcmp.ge.s32.totalorder %v5521, 1
      %vm5587 = vcmp.ge.s32.totalorder %v5522, 1
      %vm5588 = vcmp.ge.s32.totalorder %v5523, 1
      %vm5589 = vcmp.ge.s32.totalorder %v5524, 1
      %vm5590 = vcmp.ge.s32.totalorder %v5525, 1
      %vm5591 = vcmp.ge.s32.totalorder %v5526, 1
      %vm5592 = vcmp.ge.s32.totalorder %v5527, 1
      %vm5593 = vmand %vm5577, %vm5585
      %vm5594 = vmand %vm5578, %vm5586
      %vm5595 = vmand %vm5579, %vm5587
      %vm5596 = vmand %vm5580, %vm5588
      %vm5597 = vmand %vm5581, %vm5589
      %vm5598 = vmand %vm5582, %vm5590
      %vm5599 = vmand %vm5583, %vm5591
      %vm5600 = vmand %vm5584, %vm5592
      %v5601 = vsel %vm5593, 1, 0
      %v5602 = vsel %vm5594, 1, 0
      %v5603 = vsel %vm5595, 1, 0
      %v5604 = vsel %vm5596, 1, 0
      %v5605 = vsel %vm5597, 1, 0
      %v5606 = vsel %vm5598, 1, 0
      %v5607 = vsel %vm5599, 1, 0
      %v5608 = vsel %vm5600, 1, 0
      %vm5609 = vcmp.eq.s32.totalorder %v5601, 1
      %vm5610 = vcmp.eq.s32.totalorder %v5602, 1
      %vm5611 = vcmp.eq.s32.totalorder %v5603, 1
      %vm5612 = vcmp.eq.s32.totalorder %v5604, 1
      %vm5613 = vcmp.eq.s32.totalorder %v5605, 1
      %vm5614 = vcmp.eq.s32.totalorder %v5606, 1
      %vm5615 = vcmp.eq.s32.totalorder %v5607, 1
      %vm5616 = vcmp.eq.s32.totalorder %v5608, 1
      %v5617 = vsel %vm5609, %v5548, 0.0
      %v5618 = vsel %vm5610, %v5576, 0.0
      %v5619 = vsel %vm5611, %v5559, 0.0
      %v5620 = vsel %vm5612, %v5561, 0.0
      %v5621 = vsel %vm5613, %v5563, 0.0
      %v5622 = vsel %vm5614, %v5565, 0.0
      %v5623 = vsel %vm5615, %v5567, 0.0
      %v5624 = vsel %vm5616, %v5568, 0.0
      %v5625 = vsel %vm5577, 1, 0
      %v5626 = vsel %vm5578, 1, 0
      %v5627 = vsel %vm5579, 1, 0
      %v5628 = vsel %vm5580, 1, 0
      %v5629 = vsel %vm5581, 1, 0
      %v5630 = vsel %vm5582, 1, 0
      %v5631 = vsel %vm5583, 1, 0
      %v5632 = vsel %vm5584, 1, 0
      %vm5633 = vcmp.eq.s32.totalorder %v5625, 1
      %vm5634 = vcmp.eq.s32.totalorder %v5626, 1
      %vm5635 = vcmp.eq.s32.totalorder %v5627, 1
      %vm5636 = vcmp.eq.s32.totalorder %v5628, 1
      %vm5637 = vcmp.eq.s32.totalorder %v5629, 1
      %vm5638 = vcmp.eq.s32.totalorder %v5630, 1
      %vm5639 = vcmp.eq.s32.totalorder %v5631, 1
      %vm5640 = vcmp.eq.s32.totalorder %v5632, 1
      %v5641 = vsel %vm5633, %v5519, 0.0
      %v5642 = vsel %vm5634, %v5512, 0.0
      %v5643 = vsel %vm5635, %v5513, 0.0
      %v5644 = vsel %vm5636, %v5514, 0.0
      %v5645 = vsel %vm5637, %v5515, 0.0
      %v5646 = vsel %vm5638, %v5516, 0.0
      %v5647 = vsel %vm5639, %v5517, 0.0
      %v5648 = vsel %vm5640, %v5518, 0.0
      %v5649 = vrot.slane %v5519, 1
      %v5651 = vrot.slane %v5512, 1
      %v5652 = vrot.slane %v5513, 1
      %v5653 = vsel %vm999, %v5651, %v5652
      %v5654 = vrot.slane %v5514, 1
      %v5655 = vsel %vm999, %v5652, %v5654
      %v5656 = vrot.slane %v5515, 1
      %v5657 = vsel %vm999, %v5654, %v5656
      %v5658 = vrot.slane %v5516, 1
      %v5659 = vsel %vm999, %v5656, %v5658
      %v5660 = vrot.slane %v5517, 1
      %v5661 = vsel %vm999, %v5658, %v5660
      %v5662 = vrot.slane %v5518, 1
      %v5663 = vsel %vm999, %v5660, %v5662
      %v5664 = vsel %vm999, %v5662, %v5649
      %v5673 = vsel %vm999, %v5649, %v5651
      %vm5674 = vcmp.le.s32.totalorder %v5520, 6
      %vm5675 = vcmp.le.s32.totalorder %v5521, 6
      %vm5676 = vcmp.le.s32.totalorder %v5522, 6
      %vm5677 = vcmp.le.s32.totalorder %v5523, 6
      %vm5678 = vcmp.le.s32.totalorder %v5524, 6
      %vm5679 = vcmp.le.s32.totalorder %v5525, 6
      %vm5680 = vcmp.le.s32.totalorder %v5526, 6
      %vm5681 = vcmp.le.s32.totalorder %v5527, 6
      %vm5682 = vmand %vm5577, %vm5674
      %vm5683 = vmand %vm5578, %vm5675
      %vm5684 = vmand %vm5579, %vm5676
      %vm5685 = vmand %vm5580, %vm5677
      %vm5686 = vmand %vm5581, %vm5678
      %vm5687 = vmand %vm5582, %vm5679
      %vm5688 = vmand %vm5583, %vm5680
      %vm5689 = vmand %vm5584, %vm5681
      %v5690 = vsel %vm5682, 1, 0
      %v5691 = vsel %vm5683, 1, 0
      %v5692 = vsel %vm5684, 1, 0
      %v5693 = vsel %vm5685, 1, 0
      %v5694 = vsel %vm5686, 1, 0
      %v5695 = vsel %vm5687, 1, 0
      %v5696 = vsel %vm5688, 1, 0
      %v5697 = vsel %vm5689, 1, 0
      %vm5698 = vcmp.eq.s32.totalorder %v5690, 1
      %vm5699 = vcmp.eq.s32.totalorder %v5691, 1
      %vm5700 = vcmp.eq.s32.totalorder %v5692, 1
      %vm5701 = vcmp.eq.s32.totalorder %v5693, 1
      %vm5702 = vcmp.eq.s32.totalorder %v5694, 1
      %vm5703 = vcmp.eq.s32.totalorder %v5695, 1
      %vm5704 = vcmp.eq.s32.totalorder %v5696, 1
      %vm5705 = vcmp.eq.s32.totalorder %v5697, 1
      %v5706 = vsel %vm5698, %v5673, 0.0
      %v5707 = vsel %vm5699, %v5653, 0.0
      %v5708 = vsel %vm5700, %v5655, 0.0
      %v5709 = vsel %vm5701, %v5657, 0.0
      %v5710 = vsel %vm5702, %v5659, 0.0
      %v5711 = vsel %vm5703, %v5661, 0.0
      %v5712 = vsel %vm5704, %v5663, 0.0
      %v5713 = vsel %vm5705, %v5664, 0.0
      %v5714 = vsel %vm5585, 1, 0
      %v5715 = vsel %vm5586, 1, 0
      %v5716 = vsel %vm5587, 1, 0
      %v5717 = vsel %vm5588, 1, 0
      %v5718 = vsel %vm5589, 1, 0
      %v5719 = vsel %vm5590, 1, 0
      %v5720 = vsel %vm5591, 1, 0
      %v5721 = vsel %vm5592, 1, 0
      %vm5722 = vcmp.eq.s32.totalorder %v5714, 1
      %vm5723 = vcmp.eq.s32.totalorder %v5715, 1
      %vm5724 = vcmp.eq.s32.totalorder %v5716, 1
      %vm5725 = vcmp.eq.s32.totalorder %v5717, 1
      %vm5726 = vcmp.eq.s32.totalorder %v5718, 1
      %vm5727 = vcmp.eq.s32.totalorder %v5719, 1
      %vm5728 = vcmp.eq.s32.totalorder %v5720, 1
      %vm5729 = vcmp.eq.s32.totalorder %v5721, 1
      %v5730 = vsel %vm5722, %v5576, 0.0
      %v5731 = vsel %vm5723, %v5559, 0.0
      %v5732 = vsel %vm5724, %v5561, 0.0
      %v5733 = vsel %vm5725, %v5563, 0.0
      %v5734 = vsel %vm5726, %v5565, 0.0
      %v5735 = vsel %vm5727, %v5567, 0.0
      %v5736 = vsel %vm5728, %v5568, 0.0
      %v5737 = vsel %vm5729, %v5548, 0.0
      %v5738 = vsel %vm5674, 1, 0
      %v5739 = vsel %vm5675, 1, 0
      %v5740 = vsel %vm5676, 1, 0
      %v5741 = vsel %vm5677, 1, 0
      %v5742 = vsel %vm5678, 1, 0
      %v5743 = vsel %vm5679, 1, 0
      %v5744 = vsel %vm5680, 1, 0
      %v5745 = vsel %vm5681, 1, 0
      %vm5746 = vcmp.eq.s32.totalorder %v5738, 1
      %vm5747 = vcmp.eq.s32.totalorder %v5739, 1
      %vm5748 = vcmp.eq.s32.totalorder %v5740, 1
      %vm5749 = vcmp.eq.s32.totalorder %v5741, 1
      %vm5750 = vcmp.eq.s32.totalorder %v5742, 1
      %vm5751 = vcmp.eq.s32.totalorder %v5743, 1
      %vm5752 = vcmp.eq.s32.totalorder %v5744, 1
      %vm5753 = vcmp.eq.s32.totalorder %v5745, 1
      %v5754 = vsel %vm5746, %v5653, 0.0
      %v5755 = vsel %vm5747, %v5655, 0.0
      %v5756 = vsel %vm5748, %v5657, 0.0
      %v5757 = vsel %vm5749, %v5659, 0.0
      %v5758 = vsel %vm5750, %v5661, 0.0
      %v5759 = vsel %vm5751, %v5663, 0.0
      %v5760 = vsel %vm5752, %v5664, 0.0
      %v5761 = vsel %vm5753, %v5673, 0.0
      %vm5762 = vcmp.le.s32.totalorder %v5536, 6
      %vm5763 = vcmp.le.s32.totalorder %v5537, 6
      %vm5764 = vcmp.le.s32.totalorder %v5538, 6
      %vm5765 = vcmp.le.s32.totalorder %v5539, 6
      %vm5766 = vcmp.le.s32.totalorder %v5540, 6
      %vm5767 = vcmp.le.s32.totalorder %v5541, 6
      %vm5768 = vcmp.le.s32.totalorder %v5542, 6
      %vm5769 = vcmp.le.s32.totalorder %v5543, 6
      %vm5770 = vmand %vm5762, %vm5585
      %vm5771 = vmand %vm5763, %vm5586
      %vm5772 = vmand %vm5764, %vm5587
      %vm5773 = vmand %vm5765, %vm5588
      %vm5774 = vmand %vm5766, %vm5589
      %vm5775 = vmand %vm5767, %vm5590
      %vm5776 = vmand %vm5768, %vm5591
      %vm5777 = vmand %vm5769, %vm5592
      %v5778 = vsel %vm5770, 1, 0
      %v5779 = vsel %vm5771, 1, 0
      %v5780 = vsel %vm5772, 1, 0
      %v5781 = vsel %vm5773, 1, 0
      %v5782 = vsel %vm5774, 1, 0
      %v5783 = vsel %vm5775, 1, 0
      %v5784 = vsel %vm5776, 1, 0
      %v5785 = vsel %vm5777, 1, 0
      %vm5786 = vcmp.eq.s32.totalorder %v5778, 1
      %vm5787 = vcmp.eq.s32.totalorder %v5779, 1
      %vm5788 = vcmp.eq.s32.totalorder %v5780, 1
      %vm5789 = vcmp.eq.s32.totalorder %v5781, 1
      %vm5790 = vcmp.eq.s32.totalorder %v5782, 1
      %vm5791 = vcmp.eq.s32.totalorder %v5783, 1
      %vm5792 = vcmp.eq.s32.totalorder %v5784, 1
      %vm5793 = vcmp.eq.s32.totalorder %v5785, 1
      %v5794 = vsel %vm5786, %v5559, 0.0
      %v5795 = vsel %vm5787, %v5561, 0.0
      %v5796 = vsel %vm5788, %v5563, 0.0
      %v5797 = vsel %vm5789, %v5565, 0.0
      %v5798 = vsel %vm5790, %v5567, 0.0
      %v5799 = vsel %vm5791, %v5568, 0.0
      %v5800 = vsel %vm5792, %v5548, 0.0
      %v5801 = vsel %vm5793, %v5576, 0.0
      %v5802 = vsel %vm5762, 1, 0
      %v5803 = vsel %vm5763, 1, 0
      %v5804 = vsel %vm5764, 1, 0
      %v5805 = vsel %vm5765, 1, 0
      %v5806 = vsel %vm5766, 1, 0
      %v5807 = vsel %vm5767, 1, 0
      %v5808 = vsel %vm5768, 1, 0
      %v5809 = vsel %vm5769, 1, 0
      %vm5810 = vcmp.eq.s32.totalorder %v5802, 1
      %vm5811 = vcmp.eq.s32.totalorder %v5803, 1
      %vm5812 = vcmp.eq.s32.totalorder %v5804, 1
      %vm5813 = vcmp.eq.s32.totalorder %v5805, 1
      %vm5814 = vcmp.eq.s32.totalorder %v5806, 1
      %vm5815 = vcmp.eq.s32.totalorder %v5807, 1
      %vm5816 = vcmp.eq.s32.totalorder %v5808, 1
      %vm5817 = vcmp.eq.s32.totalorder %v5809, 1
      %v5818 = vsel %vm5810, %v5513, 0.0
      %v5819 = vsel %vm5811, %v5514, 0.0
      %v5820 = vsel %vm5812, %v5515, 0.0
      %v5821 = vsel %vm5813, %v5516, 0.0
      %v5822 = vsel %vm5814, %v5517, 0.0
      %v5823 = vsel %vm5815, %v5518, 0.0
      %v5824 = vsel %vm5816, %v5519, 0.0
      %v5825 = vsel %vm5817, %v5512, 0.0
      %vm5826 = vmand %vm5762, %vm5674
      %vm5827 = vmand %vm5763, %vm5675
      %vm5828 = vmand %vm5764, %vm5676
      %vm5829 = vmand %vm5765, %vm5677
      %vm5830 = vmand %vm5766, %vm5678
      %vm5831 = vmand %vm5767, %vm5679
      %vm5832 = vmand %vm5768, %vm5680
      %vm5833 = vmand %vm5769, %vm5681
      %v5834 = vsel %vm5826, 1, 0
      %v5835 = vsel %vm5827, 1, 0
      %v5836 = vsel %vm5828, 1, 0
      %v5837 = vsel %vm5829, 1, 0
      %v5838 = vsel %vm5830, 1, 0
      %v5839 = vsel %vm5831, 1, 0
      %v5840 = vsel %vm5832, 1, 0
      %v5841 = vsel %vm5833, 1, 0
      %vm5842 = vcmp.eq.s32.totalorder %v5834, 1
      %vm5843 = vcmp.eq.s32.totalorder %v5835, 1
      %vm5844 = vcmp.eq.s32.totalorder %v5836, 1
      %vm5845 = vcmp.eq.s32.totalorder %v5837, 1
      %vm5846 = vcmp.eq.s32.totalorder %v5838, 1
      %vm5847 = vcmp.eq.s32.totalorder %v5839, 1
      %vm5848 = vcmp.eq.s32.totalorder %v5840, 1
      %vm5849 = vcmp.eq.s32.totalorder %v5841, 1
      %v5850 = vsel %vm5842, %v5655, 0.0
      %v5851 = vsel %vm5843, %v5657, 0.0
      %v5852 = vsel %vm5844, %v5659, 0.0
      %v5853 = vsel %vm5845, %v5661, 0.0
      %v5854 = vsel %vm5846, %v5663, 0.0
      %v5855 = vsel %vm5847, %v5664, 0.0
      %v5856 = vsel %vm5848, %v5673, 0.0
      %v5857 = vsel %vm5849, %v5653, 0.0
      %5866 = vrot.lane.b32.xlu0 %v5641, 32
      %v5867 = vpop.permute.xlu0 %5866
      %5868 = vrot.lane.b32.xlu0 %v5642, 32
      %v5869 = vpop.permute.xlu0 %5868
      %5870 = vrot.lane.b32.xlu0 %v5643, 32
      %v5871 = vpop.permute.xlu0 %5870
      %5872 = vrot.lane.b32.xlu0 %v5644, 32
      %v5873 = vpop.permute.xlu0 %5872
      %5874 = vrot.lane.b32.xlu0 %v5645, 32
      %v5875 = vpop.permute.xlu0 %5874
      %5876 = vrot.lane.b32.xlu0 %v5646, 32
      %v5877 = vpop.permute.xlu0 %5876
      %5878 = vrot.lane.b32.xlu0 %v5647, 32
      %v5879 = vpop.permute.xlu0 %5878
      %5880 = vrot.lane.b32.xlu0 %v5648, 32
      %v5881 = vpop.permute.xlu0 %5880
      %5898 = vrot.lane.b32.xlu0 %v5706, 64
      %v5899 = vpop.permute.xlu0 %5898
      %5900 = vrot.lane.b32.xlu0 %v5707, 64
      %v5901 = vpop.permute.xlu0 %5900
      %5902 = vrot.lane.b32.xlu0 %v5708, 64
      %v5903 = vpop.permute.xlu0 %5902
      %5904 = vrot.lane.b32.xlu0 %v5709, 64
      %v5905 = vpop.permute.xlu0 %5904
      %5906 = vrot.lane.b32.xlu0 %v5710, 64
      %v5907 = vpop.permute.xlu0 %5906
      %5908 = vrot.lane.b32.xlu0 %v5711, 64
      %v5909 = vpop.permute.xlu0 %5908
      %5910 = vrot.lane.b32.xlu0 %v5712, 64
      %v5911 = vpop.permute.xlu0 %5910
      %5912 = vrot.lane.b32.xlu0 %v5713, 64
      %v5913 = vpop.permute.xlu0 %5912
      %5930 = vrot.lane.b32.xlu0 %v5730, 96
      %v5931 = vpop.permute.xlu0 %5930
      %5932 = vrot.lane.b32.xlu0 %v5731, 96
      %v5933 = vpop.permute.xlu0 %5932
      %5934 = vrot.lane.b32.xlu0 %v5732, 96
      %v5935 = vpop.permute.xlu0 %5934
      %5936 = vrot.lane.b32.xlu0 %v5733, 96
      %v5937 = vpop.permute.xlu0 %5936
      %5938 = vrot.lane.b32.xlu0 %v5734, 96
      %v5939 = vpop.permute.xlu0 %5938
      %5940 = vrot.lane.b32.xlu0 %v5735, 96
      %v5941 = vpop.permute.xlu0 %5940
      %5942 = vrot.lane.b32.xlu0 %v5736, 96
      %v5943 = vpop.permute.xlu0 %5942
      %5944 = vrot.lane.b32.xlu0 %v5737, 96
      %v5945 = vpop.permute.xlu0 %5944
      %5962 = vrot.lane.b32.xlu0 %v5754, 32
      %v5963 = vpop.permute.xlu0 %5962
      %5964 = vrot.lane.b32.xlu0 %v5755, 32
      %v5965 = vpop.permute.xlu0 %5964
      %5966 = vrot.lane.b32.xlu0 %v5756, 32
      %v5967 = vpop.permute.xlu0 %5966
      %5968 = vrot.lane.b32.xlu0 %v5757, 32
      %v5969 = vpop.permute.xlu0 %5968
      %5970 = vrot.lane.b32.xlu0 %v5758, 32
      %v5971 = vpop.permute.xlu0 %5970
      %5972 = vrot.lane.b32.xlu0 %v5759, 32
      %v5973 = vpop.permute.xlu0 %5972
      %5974 = vrot.lane.b32.xlu0 %v5760, 32
      %v5975 = vpop.permute.xlu0 %5974
      %5976 = vrot.lane.b32.xlu0 %v5761, 32
      %v5977 = vpop.permute.xlu0 %5976
      %5994 = vrot.lane.b32.xlu0 %v5794, 64
      %v5995 = vpop.permute.xlu0 %5994
      %5996 = vrot.lane.b32.xlu0 %v5795, 64
      %v5997 = vpop.permute.xlu0 %5996
      %5998 = vrot.lane.b32.xlu0 %v5796, 64
      %v5999 = vpop.permute.xlu0 %5998
      %6000 = vrot.lane.b32.xlu0 %v5797, 64
      %v6001 = vpop.permute.xlu0 %6000
      %6002 = vrot.lane.b32.xlu0 %v5798, 64
      %v6003 = vpop.permute.xlu0 %6002
      %6004 = vrot.lane.b32.xlu0 %v5799, 64
      %v6005 = vpop.permute.xlu0 %6004
      %6006 = vrot.lane.b32.xlu0 %v5800, 64
      %v6007 = vpop.permute.xlu0 %6006
      %6008 = vrot.lane.b32.xlu0 %v5801, 64
      %v6009 = vpop.permute.xlu0 %6008
      %6026 = vrot.lane.b32.xlu0 %v5818, 96
      %v6027 = vpop.permute.xlu0 %6026
      %6028 = vrot.lane.b32.xlu0 %v5819, 96
      %v6029 = vpop.permute.xlu0 %6028
      %6030 = vrot.lane.b32.xlu0 %v5820, 96
      %v6031 = vpop.permute.xlu0 %6030
      %6032 = vrot.lane.b32.xlu0 %v5821, 96
      %v6033 = vpop.permute.xlu0 %6032
      %6034 = vrot.lane.b32.xlu0 %v5822, 96
      %v6035 = vpop.permute.xlu0 %6034
      %6036 = vrot.lane.b32.xlu0 %v5823, 96
      %v6037 = vpop.permute.xlu0 %6036
      %6038 = vrot.lane.b32.xlu0 %v5824, 96
      %v6039 = vpop.permute.xlu0 %6038
      %6040 = vrot.lane.b32.xlu0 %v5825, 96
      %v6041 = vpop.permute.xlu0 %6040
      %v6050 = vsel %vm3056, %v5617, %v5867
      %v6051 = vsel %vm3056, %v5618, %v5869
      %v6052 = vsel %vm3056, %v5619, %v5871
      %v6053 = vsel %vm3056, %v5620, %v5873
      %v6054 = vsel %vm3056, %v5621, %v5875
      %v6055 = vsel %vm3056, %v5622, %v5877
      %v6056 = vsel %vm3056, %v5623, %v5879
      %v6057 = vsel %vm3056, %v5624, %v5881
      %v6058 = vsel %vm4660, %v6050, %v5899
      %v6059 = vsel %vm4660, %v6051, %v5901
      %v6060 = vsel %vm4660, %v6052, %v5903
      %v6061 = vsel %vm4660, %v6053, %v5905
      %v6062 = vsel %vm4660, %v6054, %v5907
      %v6063 = vsel %vm4660, %v6055, %v5909
      %v6064 = vsel %vm4660, %v6056, %v5911
      %v6065 = vsel %vm4660, %v6057, %v5913
      %v6066 = vsel %vm4693, %v6058, %v5931
      %v6067 = vsel %vm4693, %v6059, %v5933
      %v6068 = vsel %vm4693, %v6060, %v5935
      %v6069 = vsel %vm4693, %v6061, %v5937
      %v6070 = vsel %vm4693, %v6062, %v5939
      %v6071 = vsel %vm4693, %v6063, %v5941
      %v6072 = vsel %vm4693, %v6064, %v5943
      %v6073 = vsel %vm4693, %v6065, %v5945
      %v6074 = vsel %vm3056, %v5512, %v5963
      %v6075 = vsel %vm3056, %v5513, %v5965
      %v6076 = vsel %vm3056, %v5514, %v5967
      %v6077 = vsel %vm3056, %v5515, %v5969
      %v6078 = vsel %vm3056, %v5516, %v5971
      %v6079 = vsel %vm3056, %v5517, %v5973
      %v6080 = vsel %vm3056, %v5518, %v5975
      %v6081 = vsel %vm3056, %v5519, %v5977
      %v6082 = vsel %vm4660, %v6074, %v5995
      %v6083 = vsel %vm4660, %v6075, %v5997
      %v6084 = vsel %vm4660, %v6076, %v5999
      %v6085 = vsel %vm4660, %v6077, %v6001
      %v6086 = vsel %vm4660, %v6078, %v6003
      %v6087 = vsel %vm4660, %v6079, %v6005
      %v6088 = vsel %vm4660, %v6080, %v6007
      %v6089 = vsel %vm4660, %v6081, %v6009
      %v6090 = vsel %vm4693, %v6082, %v6027
      %v6091 = vsel %vm4693, %v6083, %v6029
      %v6092 = vsel %vm4693, %v6084, %v6031
      %v6093 = vsel %vm4693, %v6085, %v6033
      %v6094 = vsel %vm4693, %v6086, %v6035
      %v6095 = vsel %vm4693, %v6087, %v6037
      %v6096 = vsel %vm4693, %v6088, %v6039
      %v6097 = vsel %vm4693, %v6089, %v6041
      %v6098 = vpack.c.bf16 %v6067, %v6066
      %v6099 = vpack.c.bf16 %v6091, %v6090
      %v6100 = vpack.c.bf16 %v5851, %v5850
      %v6101 = vpack.c.bf16 %v6069, %v6068
      %v6102 = vpack.c.bf16 %v6093, %v6092
      %v6103 = vpack.c.bf16 %v5853, %v5852
      %v6104 = vpack.c.bf16 %v6071, %v6070
      %v6105 = vpack.c.bf16 %v6095, %v6094
      %v6106 = vpack.c.bf16 %v5855, %v5854
      %v6107 = vpack.c.bf16 %v6073, %v6072
      %v6108 = vpack.c.bf16 %v6097, %v6096
      %v6109 = vpack.c.bf16 %v5857, %v5856
      %v6110 = vld [vmem:[%s6] sm:$0xf]
      %v6111 = vld [vmem:[%s6 + $0x4] sm:$0xf]
      %v6112 = vld [vmem:[%s6 + $0x8] sm:$0xf]
      %v6113 = vld [vmem:[%s6 + $0xc] sm:$0xf]
      %v6114 = vld [vmem:[%s6 + $0x10] sm:$0xf]
      %v6115 = vld [vmem:[%s6 + $0x14] sm:$0xf]
      %v6116 = vld [vmem:[%s6 + $0x18] sm:$0xf]
      %v6117 = vld [vmem:[%s6 + $0x1c] sm:$0xf]
      %v6118 = vld [vmem:[%s6 + $0x20] sm:$0xf]
      %v6119 = vld [vmem:[%s6 + $0x24] sm:$0xf]
      %v6120 = vld [vmem:[%s6 + $0x28] sm:$0xf]
      %v6121 = vld [vmem:[%s6 + $0x2c] sm:$0xf]
      %v6122 = vld [vmem:[%s6 + $0x30] sm:$0xf]
      %v6123 = vld [vmem:[%s6 + $0x34] sm:$0xf]
      %v6124 = vld [vmem:[%s6 + $0x38] sm:$0xf]
      %v6125 = vld [vmem:[%s6 + $0x3c] sm:$0xf]
      %v6126 = vld [vmem:[%s6 + $0x40] sm:$0xf]
      %v6127 = vld [vmem:[%s6 + $0x44] sm:$0xf]
      %v6128 = vld [vmem:[%s6 + $0x48] sm:$0xf]
      %v6129 = vld [vmem:[%s6 + $0x4c] sm:$0xf]
      %v6130 = vld [vmem:[%s6 + $0x50] sm:$0xf]
      %v6131 = vld [vmem:[%s6 + $0x54] sm:$0xf]
      %v6132 = vld [vmem:[%s6 + $0x58] sm:$0xf]
      %v6133 = vld [vmem:[%s6 + $0x5c] sm:$0xf]
      %v6134 = vld [vmem:[%s6 + $0x60] sm:$0xf]
      %v6135 = vld [vmem:[%s6 + $0x64] sm:$0xf]
      %v6136 = vld [vmem:[%s6 + $0x68] sm:$0xf]
      %v6137 = vld [vmem:[%s6 + $0x6c] sm:$0xf]
      %v6138 = vld [vmem:[%s6 + $0x70] sm:$0xf]
      %v6139 = vld [vmem:[%s6 + $0x74] sm:$0xf]
      %v6140 = vld [vmem:[%s6 + $0x78] sm:$0xf]
      %v6141 = vld [vmem:[%s6 + $0x7c] sm:$0xf]
      %v6142 = vld [vmem:[%s6 + $0x80] sm:$0xf]
      %v6143 = vld [vmem:[%s6 + $0x84] sm:$0xf]
      %v6144 = vld [vmem:[%s6 + $0x88] sm:$0xf]
      %v6145 = vld [vmem:[%s6 + $0x8c] sm:$0xf]
      %v6182 = vunpack.c.l.b16 %v6110
      %v6183 = vunpack.c.l.b16 %v6111
      %v6184 = vunpack.c.l.b16 %v6112
      %v6185 = vunpack.c.l.b16 %v6113
      %v6186 = vunpack.c.l.b16 %v6114
      %v6187 = vunpack.c.l.b16 %v6115
      %v6188 = vunpack.c.l.b16 %v6116
      %v6189 = vunpack.c.l.b16 %v6117
      %v6190 = vunpack.c.l.b16 %v6118
      %v6191 = vunpack.c.l.b16 %v6119
      %v6192 = vunpack.c.l.b16 %v6120
      %v6193 = vunpack.c.l.b16 %v6121
      %v6194 = vunpack.c.l.b16 %v6122
      %v6195 = vunpack.c.l.b16 %v6123
      %v6196 = vunpack.c.l.b16 %v6124
      %v6197 = vunpack.c.l.b16 %v6125
      %v6198 = vunpack.c.l.b16 %v6126
      %v6199 = vunpack.c.l.b16 %v6127
      %v6200 = vunpack.c.l.b16 %v6128
      %v6201 = vunpack.c.l.b16 %v6129
      %v6202 = vunpack.c.l.b16 %v6130
      %v6203 = vunpack.c.l.b16 %v6131
      %v6204 = vunpack.c.l.b16 %v6132
      %v6205 = vunpack.c.l.b16 %v6133
      %v6206 = vunpack.c.l.b16 %v6134
      %v6207 = vunpack.c.l.b16 %v6135
      %v6208 = vunpack.c.l.b16 %v6136
      %v6209 = vunpack.c.l.b16 %v6137
      %v6210 = vunpack.c.l.b16 %v6138
      %v6211 = vunpack.c.l.b16 %v6139
      %v6212 = vunpack.c.l.b16 %v6140
      %v6213 = vunpack.c.l.b16 %v6141
      %v6214 = vunpack.c.l.b16 %v6142
      %v6215 = vunpack.c.l.b16 %v6143
      %v6216 = vunpack.c.l.b16 %v6144
      %v6217 = vunpack.c.l.b16 %v6145
      %v6218 = vpack.c.b16 %v6183, %v6182
      %v6219 = vpack.c.b16 %v6185, %v6184
      %v6220 = vpack.c.b16 %v6187, %v6186
      %v6221 = vpack.c.b16 %v6189, %v6188
      %v6222 = vpack.c.b16 %v6191, %v6190
      %v6223 = vpack.c.b16 %v6193, %v6192
      %v6224 = vpack.c.b16 %v6195, %v6194
      %v6225 = vpack.c.b16 %v6197, %v6196
      %v6226 = vpack.c.b16 %v6199, %v6198
      %v6227 = vpack.c.b16 %v6201, %v6200
      %v6228 = vpack.c.b16 %v6203, %v6202
      %v6229 = vpack.c.b16 %v6205, %v6204
      %v6230 = vpack.c.b16 %v6207, %v6206
      %v6231 = vpack.c.b16 %v6209, %v6208
      %v6232 = vpack.c.b16 %v6211, %v6210
      %v6233 = vpack.c.b16 %v6213, %v6212
      %v6234 = vpack.c.b16 %v6215, %v6214
      %v6235 = vpack.c.b16 %v6217, %v6216
      %v6255 = vsel %vm3056, %v6100, 0
      %v6258 = vsel %vm3056, %v6103, 0
      %v6261 = vsel %vm3056, %v6106, 0
      %v6264 = vsel %vm3056, %v6109, 0
      %6266 = vmatprep.subr.bf16.mxu0 0
      %6267 = vmatpush1.bf16.msra.mxu0 %v6218
      %6268 = vmatprep.subr.bf16.mxu0 0
      %6269 = vmatpush1.bf16.msra.mxu0 %v6219
      %6270 = vmatprep.subr.bf16.mxu0 0
      %6271 = vmatpush1.bf16.msra.mxu0 %v6220
      %6272 = vmatprep.subr.bf16.mxu0 0
      %6273 = vmatpush1.bf16.msra.mxu0 %v6221
      %6274 = vmatprep.subr.bf16.mxu0 0
      %6275 = vmatpush1.bf16.msra.mxu0 %v6222
      %6276 = vmatprep.subr.bf16.mxu0 0
      %6277 = vmatpush1.bf16.msra.mxu0 %v6223
      %6278 = vmatprep.subr.bf16.mxu0 0
      %6279 = vmatpush1.bf16.msra.mxu0 %v6224
      %6280 = vmatprep.subr.bf16.mxu0 0
      %6281 = vmatpush1.bf16.msra.mxu0 %v6225
      %6282 = vmatprep.subr.bf16.mxu0 0
      %6283 = vmatpush1.bf16.msra.mxu0 %v6226
      %6284 = vmatprep.subr.bf16.mxu0 0
      %6285 = vmatpush1.bf16.msra.mxu0 %v6227
      %6286 = vmatprep.subr.bf16.mxu0 0
      %6287 = vmatpush1.bf16.msra.mxu0 %v6228
      %6288 = vmatprep.subr.bf16.mxu0 0
      %6289 = vmatpush1.bf16.msra.mxu0 %v6229
      %6290 = vmatprep.subr.bf16.mxu0 0
      %6291 = vmatpush1.bf16.msra.mxu0 %v6230
      %6292 = vmatprep.subr.bf16.mxu0 0
      %6293 = vmatpush1.bf16.msra.mxu0 %v6231
      %6294 = vmatprep.subr.bf16.mxu0 0
      %6295 = vmatpush1.bf16.msra.mxu0 %v6232
      %6296 = vmatprep.subr.bf16.mxu0 0
      %6297 = vmatpush1.bf16.msra.mxu0 %v6233
      %6298 = vmatprep.mubr.bf16.mxu0 %v6099
      %6299 = vmatmul.mubr.bf16.gmra.mrb[0].mxu0 %v6098
      %v6300 = vpop.f32.mrb[0].mxu0
      %v6301 = vadd.f32 0.0, %v6300
      %v6302 = vpop.f32.mrb[0].mxu0
      %v6303 = vpop.f32.mrb[0].mxu0
      %v6304 = vadd.f32 0.0, %v6303
      %v6305 = vpop.f32.mrb[0].mxu0
      %6306 = vmatprep.mubr.bf16.mxu0 %v6102
      %6307 = vmatmul.mubr.bf16.gmra.mrb[0].mxu0 %v6101
      %v6308 = vpop.f32.mrb[0].mxu0
      %v6309 = vadd.f32 0.0, %v6308
      %v6310 = vpop.f32.mrb[0].mxu0
      %v6311 = vpop.f32.mrb[0].mxu0
      %v6312 = vadd.f32 0.0, %v6311
      %v6313 = vpop.f32.mrb[0].mxu0
      %6314 = vmatprep.mubr.bf16.mxu0 %v6105
      %6315 = vmatmul.mubr.bf16.gmra.mrb[0].mxu0 %v6104
      %v6316 = vpop.f32.mrb[0].mxu0
      %v6317 = vadd.f32 0.0, %v6316
      %v6318 = vpop.f32.mrb[0].mxu0
      %v6319 = vpop.f32.mrb[0].mxu0
      %v6320 = vadd.f32 0.0, %v6319
      %v6321 = vpop.f32.mrb[0].mxu0
      %6322 = vmatprep.mubr.bf16.mxu0 %v6108
      %6323 = vmatmul.mubr.bf16.gmra.mrb[0].mxu0 %v6107
      %v6324 = vpop.f32.mrb[0].mxu0
      %v6325 = vadd.f32 0.0, %v6324
      %v6326 = vpop.f32.mrb[0].mxu0
      %v6327 = vpop.f32.mrb[0].mxu0
      %v6328 = vadd.f32 0.0, %v6327
      %v6329 = vpop.f32.mrb[0].mxu0
      %6330 = vdwg.mxu0
      %6331 = vmatprep.subr.bf16.mxu0 0
      %6332 = vmatpush1.bf16.msra.mxu0 %v6234
      %6333 = vmatprep.subr.bf16.mxu0 0
      %6334 = vmatpush1.bf16.msra.mxu0 %v6235
      %6335 = vmatprep.subr.bf16.mxu0 0
      %6336 = vmatpush1.bf16.msra.mxu0 0
      %6337 = vmatprep.subr.bf16.mxu0 0
      %6338 = vmatpush1.bf16.msra.mxu0 0
      %6339 = vmatprep.subr.bf16.mxu0 0
      %6340 = vmatpush1.bf16.msra.mxu0 0
      %6341 = vmatprep.subr.bf16.mxu0 0
      %6342 = vmatpush1.bf16.msra.mxu0 0
      %6343 = vmatprep.subr.bf16.mxu0 0
      %6344 = vmatpush1.bf16.msra.mxu0 0
      %6345 = vmatprep.subr.bf16.mxu0 0
      %6346 = vmatpush1.bf16.msra.mxu0 0
      %6347 = vmatprep.subr.bf16.mxu0 0
      %6348 = vmatpush1.bf16.msra.mxu0 0
      %6349 = vmatprep.subr.bf16.mxu0 0
      %6350 = vmatpush1.bf16.msra.mxu0 0
      %6351 = vmatprep.subr.bf16.mxu0 0
      %6352 = vmatpush1.bf16.msra.mxu0 0
      %6353 = vmatprep.subr.bf16.mxu0 0
      %6354 = vmatpush1.bf16.msra.mxu0 0
      %6355 = vmatprep.subr.bf16.mxu0 0
      %6356 = vmatpush1.bf16.msra.mxu0 0
      %6357 = vmatprep.subr.bf16.mxu0 0
      %6358 = vmatpush1.bf16.msra.mxu0 0
      %6359 = vmatprep.subr.bf16.mxu0 0
      %6360 = vmatpush1.bf16.msra.mxu0 0
      %6361 = vmatprep.subr.bf16.mxu0 0
      %6362 = vmatpush1.bf16.msra.mxu0 0
      %6363 = vmatprep.mubr.bf16.mxu0 0
      %6364 = vmatmul.mubr.bf16.gmra.mrb[0].mxu0 %v6255
      %v6365 = vpop.f32.mrb[0].mxu0
      %v6366 = vadd.f32 %v6301, %v6365
      %v6367 = vpop.f32.mrb[0].mxu0
      %v6368 = vpop.f32.mrb[0].mxu0
      %v6369 = vadd.f32 %v6304, %v6368
      %v6370 = vpop.f32.mrb[0].mxu0
      %6371 = vmatprep.mubr.bf16.mxu0 0
      %6372 = vmatmul.mubr.bf16.gmra.mrb[0].mxu0 %v6258
      %v6373 = vpop.f32.mrb[0].mxu0
      %v6374 = vadd.f32 %v6309, %v6373
      %v6375 = vpop.f32.mrb[0].mxu0
      %v6376 = vpop.f32.mrb[0].mxu0
      %v6377 = vadd.f32 %v6312, %v6376
      %v6378 = vpop.f32.mrb[0].mxu0
      %6379 = vmatprep.mubr.bf16.mxu0 0
      %6380 = vmatmul.mubr.bf16.gmra.mrb[0].mxu0 %v6261
      %v6381 = vpop.f32.mrb[0].mxu0
      %v6382 = vadd.f32 %v6317, %v6381
      %v6383 = vpop.f32.mrb[0].mxu0
      %v6384 = vpop.f32.mrb[0].mxu0
      %v6385 = vadd.f32 %v6320, %v6384
      %v6386 = vpop.f32.mrb[0].mxu0
      %6387 = vmatprep.mubr.bf16.mxu0 0
      %6388 = vmatmul.mubr.bf16.gmra.mrb[0].mxu0 %v6264
      %v6389 = vpop.f32.mrb[0].mxu0
      %v6390 = vadd.f32 %v6325, %v6389
      %v6391 = vpop.f32.mrb[0].mxu0
      %v6392 = vpop.f32.mrb[0].mxu0
      %v6393 = vadd.f32 %v6328, %v6392
      %v6394 = vpop.f32.mrb[0].mxu0
      %6395 = vdwg.mxu0
      %v6396 = vld [vmem:[%s8] sm:$0xff]
      %v6397 = vld [vmem:[%s8 + $0x8] sm:$0xff]
      %v6398 = vld [vmem:[%s7] sm:$0x1]
      %v6400 = vlaneseq
      %v6401 = vshrl.u32 %v6400, 7
      %v6402 = vsub.s32 0, %v6401
      %v6403 = vrot.slane %v6398, %v6402
      %v6406 = vsel %vm4660, %v6396, 0
      %v6409 = vsel %vm4660, %v6397, 0
      %6411 = vmatprep.subr.mxu0 0.0
      %6412 = vmatpush1.msra.mxu0 %v6366
      %6413 = vmatprep.subr.mxu0 0.0
      %6414 = vmatpush1.msra.mxu0 %v6369
      %6415 = vmatprep.subr.mxu0 0.0
      %6416 = vmatpush1.msra.mxu0 %v6374
      %6417 = vmatprep.subr.mxu0 0.0
      %6418 = vmatpush1.msra.mxu0 %v6377
      %6419 = vmatprep.subr.mxu0 0.0
      %6420 = vmatpush1.msra.mxu0 %v6382
      %6421 = vmatprep.subr.mxu0 0.0
      %6422 = vmatpush1.msra.mxu0 %v6385
      %6423 = vmatprep.subr.mxu0 0.0
      %6424 = vmatpush1.msra.mxu0 %v6390
      %6425 = vmatprep.subr.mxu0 0.0
      %6426 = vmatpush1.msra.mxu0 %v6393
      %6427 = vmatprep.subr.mxu0 0.0
      %6428 = vmatpush1.msra.mxu0 0.0
      %6429 = vmatprep.subr.mxu0 0.0
      %6430 = vmatpush1.msra.mxu0 0.0
      %6431 = vmatprep.subr.mxu0 0.0
      %6432 = vmatpush1.msra.mxu0 0.0
      %6433 = vmatprep.subr.mxu0 0.0
      %6434 = vmatpush1.msra.mxu0 0.0
      %6435 = vmatprep.subr.mxu0 0.0
      %6436 = vmatpush1.msra.mxu0 0.0
      %6437 = vmatprep.subr.mxu0 0.0
      %6438 = vmatpush1.msra.mxu0 0.0
      %6439 = vmatprep.subr.mxu0 0.0
      %6440 = vmatpush1.msra.mxu0 0.0
      %6441 = vmatprep.subr.mxu0 0.0
      %6442 = vmatpush1.msra.mxu0 0.0
      %6443 = vmatprep.subr.mxu0 0.0
      %6444 = vmatpush1.msra.mxu0 0.0
      %6445 = vmatprep.subr.mxu0 0.0
      %6446 = vmatpush1.msra.mxu0 0.0
      %6447 = vmatprep.subr.mxu0 0.0
      %6448 = vmatpush1.msra.mxu0 0.0
      %6449 = vmatprep.subr.mxu0 0.0
      %6450 = vmatpush1.msra.mxu0 0.0
      %6451 = vmatprep.subr.mxu0 0.0
      %6452 = vmatpush1.msra.mxu0 0.0
      %6453 = vmatprep.subr.mxu0 0.0
      %6454 = vmatpush1.msra.mxu0 0.0
      %6455 = vmatprep.subr.mxu0 0.0
      %6456 = vmatpush1.msra.mxu0 0.0
      %6457 = vmatprep.subr.mxu0 0.0
      %6458 = vmatpush1.msra.mxu0 0.0
      %6459 = vmatprep.subr.mxu0 0.0
      %6460 = vmatpush1.msra.mxu0 0.0
      %6461 = vmatprep.subr.mxu0 0.0
      %6462 = vmatpush1.msra.mxu0 0.0
      %6463 = vmatprep.subr.mxu0 0.0
      %6464 = vmatpush1.msra.mxu0 0.0
      %6465 = vmatprep.subr.mxu0 0.0
      %6466 = vmatpush1.msra.mxu0 0.0
      %6467 = vmatprep.subr.mxu0 0.0
      %6468 = vmatpush1.msra.mxu0 0.0
      %6469 = vmatprep.subr.mxu0 0.0
      %6470 = vmatpush1.msra.mxu0 0.0
      %6471 = vmatprep.subr.mxu0 0.0
      %6472 = vmatpush1.msra.mxu0 0.0
      %6473 = vmatprep.subr.mxu0 0.0
      %6474 = vmatpush1.msra.mxu0 0.0
      %6475 = vmatprep.mubr.f32.mxu0 0.0
      %6476 = vmatmul.mubr.f32.gmra.mrb[0].mxu0 %v6406
      %v6477 = vpop.f32.mrb[0].mxu0
      %v6478 = vadd.f32 %v6403, %v6477
      %v6479 = vpop.f32.mrb[0].mxu0
      %6480 = vmatprep.mubr.f32.mxu0 0.0
      %6481 = vmatmul.mubr.f32.gmra.mrb[0].mxu0 %v6409
      %v6482 = vpop.f32.mrb[0].mxu0
      %v6483 = vadd.f32 %v6403, %v6482
      %v6484 = vpop.f32.mrb[0].mxu0
      %6485 = vdwg.mxu0
      %v6486 = vmax.f32 %v6478, 0.0
      %v6487 = vmax.f32 %v6483, 0.0
      %v6488 = vand.u32 %v453, 3
      %v6489 = vand.u32 %v454, 3
      %v6490 = vshra.s32 %v453, 2
      %v6491 = vshra.s32 %v454, 2
      %v6492 = vand.u32 %v6490, 3
      %v6493 = vand.u32 %v6491, 3
      %v6495 = vrot.slane %v6487, 3
      %vm6498 = vcmask 1044480
      %v6499 = vrot.slane %v6486, 3
      %v6500 = vsel %vm6498, %v6499, %v6495
      %v6503 = vsel %vm6498, %v6495, %v6499
      %vm6504 = vcmp.ge.s32.totalorder %v6492, 1
      %vm6505 = vcmp.ge.s32.totalorder %v6493, 1
      %vm6506 = vcmp.ge.s32.totalorder %v6488, 1
      %vm6507 = vcmp.ge.s32.totalorder %v6489, 1
      %vm6508 = vmand %vm6504, %vm6506
      %vm6509 = vmand %vm6505, %vm6507
      %v6510 = vsel %vm6508, 1, 0
      %v6511 = vsel %vm6509, 1, 0
      %vm6512 = vcmp.eq.s32.totalorder %v6510, 1
      %vm6513 = vcmp.eq.s32.totalorder %v6511, 1
      %v6514 = vsel %vm6512, %v6503, 0.0
      %v6515 = vsel %vm6513, %v6500, 0.0
      %v6516 = vrot.slane %v6487, 4
      %vm6518 = vcmask 1043456
      %v6519 = vrot.slane %v6486, 4
      %v6520 = vsel %vm6518, %v6519, %v6516
      %v6523 = vsel %vm6518, %v6516, %v6519
      %v6524 = vsel %vm6504, 1, 0
      %v6525 = vsel %vm6505, 1, 0
      %vm6526 = vcmp.eq.s32.totalorder %v6524, 1
      %vm6527 = vcmp.eq.s32.totalorder %v6525, 1
      %v6528 = vsel %vm6526, %v6523, 0.0
      %v6529 = vsel %vm6527, %v6520, 0.0
      %v6530 = vrot.slane %v6487, 5
      %vm6532 = vcmask 1042432
      %v6533 = vrot.slane %v6486, 5
      %v6534 = vsel %vm6532, %v6533, %v6530
      %v6537 = vsel %vm6532, %v6530, %v6533
      %vm6538 = vcmp.le.s32.totalorder %v6488, 2
      %vm6539 = vcmp.le.s32.totalorder %v6489, 2
      %vm6540 = vmand %vm6504, %vm6538
      %vm6541 = vmand %vm6505, %vm6539
      %v6542 = vsel %vm6540, 1, 0
      %v6543 = vsel %vm6541, 1, 0
      %vm6544 = vcmp.eq.s32.totalorder %v6542, 1
      %vm6545 = vcmp.eq.s32.totalorder %v6543, 1
      %v6546 = vsel %vm6544, %v6537, 0.0
      %v6547 = vsel %vm6545, %v6534, 0.0
      %v6548 = vrot.slane %v6487, 7
      %v6550 = vrot.slane %v6486, 7
      %v6551 = vsel %vm584, %v6550, %v6548
      %v6554 = vsel %vm584, %v6548, %v6550
      %v6555 = vsel %vm6506, 1, 0
      %v6556 = vsel %vm6507, 1, 0
      %vm6557 = vcmp.eq.s32.totalorder %v6555, 1
      %vm6558 = vcmp.eq.s32.totalorder %v6556, 1
      %v6559 = vsel %vm6557, %v6554, 0.0
      %v6560 = vsel %vm6558, %v6551, 0.0
      %v6561 = vrot.slane %v6486, 1
      %v6562 = vrot.slane %v6487, 1
      %v6563 = vsel %vm999, %v6561, %v6562
      %v6567 = vsel %vm999, %v6562, %v6561
      %v6568 = vsel %vm6538, 1, 0
      %v6569 = vsel %vm6539, 1, 0
      %vm6570 = vcmp.eq.s32.totalorder %v6568, 1
      %vm6571 = vcmp.eq.s32.totalorder %v6569, 1
      %v6572 = vsel %vm6570, %v6563, 0.0
      %v6573 = vsel %vm6571, %v6567, 0.0
      %vm6574 = vcmp.le.s32.totalorder %v6492, 2
      %vm6575 = vcmp.le.s32.totalorder %v6493, 2
      %vm6576 = vmand %vm6574, %vm6506
      %vm6577 = vmand %vm6575, %vm6507
      %v6578 = vsel %vm6576, 1, 0
      %v6579 = vsel %vm6577, 1, 0
      %vm6580 = vcmp.eq.s32.totalorder %v6578, 1
      %vm6581 = vcmp.eq.s32.totalorder %v6579, 1
      %v6582 = vsel %vm6580, %v6500, 0.0
      %v6583 = vsel %vm6581, %v6503, 0.0
      %v6584 = vsel %vm6574, 1, 0
      %v6585 = vsel %vm6575, 1, 0
      %vm6586 = vcmp.eq.s32.totalorder %v6584, 1
      %vm6587 = vcmp.eq.s32.totalorder %v6585, 1
      %v6588 = vsel %vm6586, %v6520, 0.0
      %v6589 = vsel %vm6587, %v6523, 0.0
      %vm6590 = vmand %vm6574, %vm6538
      %vm6591 = vmand %vm6575, %vm6539
      %v6592 = vsel %vm6590, 1, 0
      %v6593 = vsel %vm6591, 1, 0
      %vm6594 = vcmp.eq.s32.totalorder %v6592, 1
      %vm6595 = vcmp.eq.s32.totalorder %v6593, 1
      %v6596 = vsel %vm6594, %v6534, 0.0
      %v6597 = vsel %vm6595, %v6537, 0.0
      %6600 = vrot.lane.b32.xlu0 %v6528, 32
      %v6601 = vpop.permute.xlu0 %6600
      %6602 = vrot.lane.b32.xlu0 %v6529, 32
      %v6603 = vpop.permute.xlu0 %6602
      %6608 = vrot.lane.b32.xlu0 %v6546, 64
      %v6609 = vpop.permute.xlu0 %6608
      %6610 = vrot.lane.b32.xlu0 %v6547, 64
      %v6611 = vpop.permute.xlu0 %6610
      %6616 = vrot.lane.b32.xlu0 %v6559, 96
      %v6617 = vpop.permute.xlu0 %6616
      %6618 = vrot.lane.b32.xlu0 %v6560, 96
      %v6619 = vpop.permute.xlu0 %6618
      %6624 = vrot.lane.b32.xlu0 %v6572, 32
      %v6625 = vpop.permute.xlu0 %6624
      %6626 = vrot.lane.b32.xlu0 %v6573, 32
      %v6627 = vpop.permute.xlu0 %6626
      %6632 = vrot.lane.b32.xlu0 %v6582, 64
      %v6633 = vpop.permute.xlu0 %6632
      %6634 = vrot.lane.b32.xlu0 %v6583, 64
      %v6635 = vpop.permute.xlu0 %6634
      %6640 = vrot.lane.b32.xlu0 %v6588, 96
      %v6641 = vpop.permute.xlu0 %6640
      %6642 = vrot.lane.b32.xlu0 %v6589, 96
      %v6643 = vpop.permute.xlu0 %6642
      %v6646 = vsel %vm3056, %v6514, %v6601
      %v6647 = vsel %vm3056, %v6515, %v6603
      %v6648 = vsel %vm4660, %v6646, %v6609
      %v6649 = vsel %vm4660, %v6647, %v6611
      %v6650 = vsel %vm4693, %v6648, %v6617
      %v6651 = vsel %vm4693, %v6649, %v6619
      %v6652 = vsel %vm3056, %v6486, %v6625
      %v6653 = vsel %vm3056, %v6487, %v6627
      %v6654 = vsel %vm4660, %v6652, %v6633
      %v6655 = vsel %vm4660, %v6653, %v6635
      %v6656 = vsel %vm4693, %v6654, %v6641
      %v6657 = vsel %vm4693, %v6655, %v6643
      %v6658 = vpack.c.bf16 %v6651, %v6650
      %v6659 = vpack.c.bf16 %v6657, %v6656
      %v6660 = vpack.c.bf16 %v6597, %v6596
      %v6661 = vld [vmem:[%s9] sm:$0xff]
      %v6662 = vld [vmem:[%s9 + $0x8] sm:$0xff]
      %v6663 = vld [vmem:[%s9 + $0x10] sm:$0xff]
      %v6664 = vld [vmem:[%s9 + $0x18] sm:$0xff]
      %v6665 = vld [vmem:[%s9 + $0x20] sm:$0xff]
      %v6666 = vld [vmem:[%s9 + $0x28] sm:$0xff]
      %v6667 = vld [vmem:[%s9 + $0x30] sm:$0xff]
      %v6668 = vld [vmem:[%s9 + $0x38] sm:$0xff]
      %v6669 = vld [vmem:[%s9 + $0x40] sm:$0xff]
      %v6670 = vld [vmem:[%s9 + $0x48] sm:$0xff]
      %v6671 = vld [vmem:[%s9 + $0x50] sm:$0xff]
      %v6672 = vld [vmem:[%s9 + $0x58] sm:$0xff]
      %v6673 = vld [vmem:[%s9 + $0x60] sm:$0xff]
      %v6674 = vld [vmem:[%s9 + $0x68] sm:$0xff]
      %v6675 = vld [vmem:[%s9 + $0x70] sm:$0xff]
      %v6676 = vld [vmem:[%s9 + $0x78] sm:$0xff]
      %v6677 = vld [vmem:[%s9 + $0x80] sm:$0xff]
      %v6678 = vld [vmem:[%s9 + $0x88] sm:$0xff]
      %v6679 = vld [vmem:[%s9 + $0x90] sm:$0xff]
      %v6680 = vld [vmem:[%s9 + $0x98] sm:$0xff]
      %v6681 = vld [vmem:[%s9 + $0xa0] sm:$0xff]
      %v6682 = vld [vmem:[%s9 + $0xa8] sm:$0xff]
      %v6683 = vld [vmem:[%s9 + $0xb0] sm:$0xff]
      %v6684 = vld [vmem:[%s9 + $0xb8] sm:$0xff]
      %v6685 = vld [vmem:[%s9 + $0xc0] sm:$0xff]
      %v6686 = vld [vmem:[%s9 + $0xc8] sm:$0xff]
      %v6687 = vld [vmem:[%s9 + $0xd0] sm:$0xff]
      %v6688 = vld [vmem:[%s9 + $0xd8] sm:$0xff]
      %v6689 = vld [vmem:[%s9 + $0xe0] sm:$0xff]
      %v6690 = vld [vmem:[%s9 + $0xe8] sm:$0xff]
      %v6691 = vld [vmem:[%s9 + $0xf0] sm:$0xff]
      %v6692 = vld [vmem:[%s9 + $0xf8] sm:$0xff]
      %v6693 = vld [vmem:[%s9 + $0x100] sm:$0xff]
      %v6694 = vld [vmem:[%s9 + $0x108] sm:$0xff]
      %v6695 = vld [vmem:[%s9 + $0x110] sm:$0xff]
      %v6696 = vld [vmem:[%s9 + $0x118] sm:$0xff]
      %v6697 = vld [vmem:[%s10] sm:$0x3]
      %v6699 = vlaneseq
      %v6700 = vshrl.u32 %v6699, 7
      %v6701 = vsub.s32 0, %v6700
      %v6702 = vrot.slane %v6697, %v6701
      %v6703 = vlaneseq
      %v6704 = vshrl.u32 %v6703, 7
      %v6705 = vsub.s32 1, %v6704
      %v6706 = vrot.slane %v6697, %v6705
      %v6745 = vunpack.c.l.b16 %v6661
      %v6746 = vunpack.c.h.b16 %v6661
      %v6747 = vunpack.c.l.b16 %v6662
      %v6748 = vunpack.c.h.b16 %v6662
      %v6749 = vunpack.c.l.b16 %v6663
      %v6750 = vunpack.c.h.b16 %v6663
      %v6751 = vunpack.c.l.b16 %v6664
      %v6752 = vunpack.c.h.b16 %v6664
      %v6753 = vunpack.c.l.b16 %v6665
      %v6754 = vunpack.c.h.b16 %v6665
      %v6755 = vunpack.c.l.b16 %v6666
      %v6756 = vunpack.c.h.b16 %v6666
      %v6757 = vunpack.c.l.b16 %v6667
      %v6758 = vunpack.c.h.b16 %v6667
      %v6759 = vunpack.c.l.b16 %v6668
      %v6760 = vunpack.c.h.b16 %v6668
      %v6761 = vunpack.c.l.b16 %v6669
      %v6762 = vunpack.c.h.b16 %v6669
      %v6763 = vunpack.c.l.b16 %v6670
      %v6764 = vunpack.c.h.b16 %v6670
      %v6765 = vunpack.c.l.b16 %v6671
      %v6766 = vunpack.c.h.b16 %v6671
      %v6767 = vunpack.c.l.b16 %v6672
      %v6768 = vunpack.c.h.b16 %v6672
      %v6769 = vunpack.c.l.b16 %v6673
      %v6770 = vunpack.c.h.b16 %v6673
      %v6771 = vunpack.c.l.b16 %v6674
      %v6772 = vunpack.c.h.b16 %v6674
      %v6773 = vunpack.c.l.b16 %v6675
      %v6774 = vunpack.c.h.b16 %v6675
      %v6775 = vunpack.c.l.b16 %v6676
      %v6776 = vunpack.c.h.b16 %v6676
      %v6777 = vunpack.c.l.b16 %v6677
      %v6778 = vunpack.c.h.b16 %v6677
      %v6779 = vunpack.c.l.b16 %v6678
      %v6780 = vunpack.c.h.b16 %v6678
      %v6781 = vunpack.c.l.b16 %v6679
      %v6782 = vunpack.c.h.b16 %v6679
      %v6783 = vunpack.c.l.b16 %v6680
      %v6784 = vunpack.c.h.b16 %v6680
      %v6785 = vunpack.c.l.b16 %v6681
      %v6786 = vunpack.c.h.b16 %v6681
      %v6787 = vunpack.c.l.b16 %v6682
      %v6788 = vunpack.c.h.b16 %v6682
      %v6789 = vunpack.c.l.b16 %v6683
      %v6790 = vunpack.c.h.b16 %v6683
      %v6791 = vunpack.c.l.b16 %v6684
      %v6792 = vunpack.c.h.b16 %v6684
      %v6793 = vunpack.c.l.b16 %v6685
      %v6794 = vunpack.c.h.b16 %v6685
      %v6795 = vunpack.c.l.b16 %v6686
      %v6796 = vunpack.c.h.b16 %v6686
      %v6797 = vunpack.c.l.b16 %v6687
      %v6798 = vunpack.c.h.b16 %v6687
      %v6799 = vunpack.c.l.b16 %v6688
      %v6800 = vunpack.c.h.b16 %v6688
      %v6801 = vunpack.c.l.b16 %v6689
      %v6802 = vunpack.c.h.b16 %v6689
      %v6803 = vunpack.c.l.b16 %v6690
      %v6804 = vunpack.c.h.b16 %v6690
      %v6805 = vunpack.c.l.b16 %v6691
      %v6806 = vunpack.c.h.b16 %v6691
      %v6807 = vunpack.c.l.b16 %v6692
      %v6808 = vunpack.c.h.b16 %v6692
      %v6809 = vunpack.c.l.b16 %v6693
      %v6810 = vunpack.c.h.b16 %v6693
      %v6811 = vunpack.c.l.b16 %v6694
      %v6812 = vunpack.c.h.b16 %v6694
      %v6813 = vunpack.c.l.b16 %v6695
      %v6814 = vunpack.c.h.b16 %v6695
      %v6815 = vunpack.c.l.b16 %v6696
      %v6816 = vunpack.c.h.b16 %v6696
      %v6817 = vpack.c.b16 %v6747, %v6745
      %v6818 = vpack.c.b16 %v6748, %v6746
      %v6819 = vpack.c.b16 %v6751, %v6749
      %v6820 = vpack.c.b16 %v6752, %v6750
      %v6821 = vpack.c.b16 %v6755, %v6753
      %v6822 = vpack.c.b16 %v6756, %v6754
      %v6823 = vpack.c.b16 %v6759, %v6757
      %v6824 = vpack.c.b16 %v6760, %v6758
      %v6825 = vpack.c.b16 %v6763, %v6761
      %v6826 = vpack.c.b16 %v6764, %v6762
      %v6827 = vpack.c.b16 %v6767, %v6765
      %v6828 = vpack.c.b16 %v6768, %v6766
      %v6829 = vpack.c.b16 %v6771, %v6769
      %v6830 = vpack.c.b16 %v6772, %v6770
      %v6831 = vpack.c.b16 %v6775, %v6773
      %v6832 = vpack.c.b16 %v6776, %v6774
      %v6833 = vpack.c.b16 %v6779, %v6777
      %v6834 = vpack.c.b16 %v6780, %v6778
      %v6835 = vpack.c.b16 %v6783, %v6781
      %v6836 = vpack.c.b16 %v6784, %v6782
      %v6837 = vpack.c.b16 %v6787, %v6785
      %v6838 = vpack.c.b16 %v6788, %v6786
      %v6839 = vpack.c.b16 %v6791, %v6789
      %v6840 = vpack.c.b16 %v6792, %v6790
      %v6841 = vpack.c.b16 %v6795, %v6793
      %v6842 = vpack.c.b16 %v6796, %v6794
      %v6843 = vpack.c.b16 %v6799, %v6797
      %v6844 = vpack.c.b16 %v6800, %v6798
      %v6845 = vpack.c.b16 %v6803, %v6801
      %v6846 = vpack.c.b16 %v6804, %v6802
      %v6847 = vpack.c.b16 %v6807, %v6805
      %v6848 = vpack.c.b16 %v6808, %v6806
      %v6849 = vpack.c.b16 %v6811, %v6809
      %v6850 = vpack.c.b16 %v6812, %v6810
      %v6851 = vpack.c.b16 %v6815, %v6813
      %v6852 = vpack.c.b16 %v6816, %v6814
      %6889 = vmatprep.subr.bf16.mxu0 %v6818
      %6890 = vmatpush1.bf16.msra.mxu0 %v6817
      %6891 = vmatprep.subr.bf16.mxu0 %v6820
      %6892 = vmatpush1.bf16.msra.mxu0 %v6819
      %6893 = vmatprep.subr.bf16.mxu0 %v6822
      %6894 = vmatpush1.bf16.msra.mxu0 %v6821
      %6895 = vmatprep.subr.bf16.mxu0 %v6824
      %6896 = vmatpush1.bf16.msra.mxu0 %v6823
      %6897 = vmatprep.subr.bf16.mxu0 %v6826
      %6898 = vmatpush1.bf16.msra.mxu0 %v6825
      %6899 = vmatprep.subr.bf16.mxu0 %v6828
      %6900 = vmatpush1.bf16.msra.mxu0 %v6827
      %6901 = vmatprep.subr.bf16.mxu0 %v6830
      %6902 = vmatpush1.bf16.msra.mxu0 %v6829
      %6903 = vmatprep.subr.bf16.mxu0 %v6832
      %6904 = vmatpush1.bf16.msra.mxu0 %v6831
      %6905 = vmatprep.subr.bf16.mxu0 %v6834
      %6906 = vmatpush1.bf16.msra.mxu0 %v6833
      %6907 = vmatprep.subr.bf16.mxu0 %v6836
      %6908 = vmatpush1.bf16.msra.mxu0 %v6835
      %6909 = vmatprep.subr.bf16.mxu0 %v6838
      %6910 = vmatpush1.bf16.msra.mxu0 %v6837
      %6911 = vmatprep.subr.bf16.mxu0 %v6840
      %6912 = vmatpush1.bf16.msra.mxu0 %v6839
      %6913 = vmatprep.subr.bf16.mxu0 %v6842
      %6914 = vmatpush1.bf16.msra.mxu0 %v6841
      %6915 = vmatprep.subr.bf16.mxu0 %v6844
      %6916 = vmatpush1.bf16.msra.mxu0 %v6843
      %6917 = vmatprep.subr.bf16.mxu0 %v6846
      %6918 = vmatpush1.bf16.msra.mxu0 %v6845
      %6919 = vmatprep.subr.bf16.mxu0 %v6848
      %6920 = vmatpush1.bf16.msra.mxu0 %v6847
      %6921 = vmatprep.mubr.bf16.mxu0 %v6099
      %6922 = vmatmul.mubr.bf16.gmra.mrb[0].mxu0 %v6098
      %v6923 = vpop.f32.mrb[0].mxu0
      %v6924 = vadd.f32 %v6702, %v6923
      %v6925 = vpop.f32.mrb[0].mxu0
      %v6926 = vadd.f32 %v6706, %v6925
      %v6927 = vpop.f32.mrb[0].mxu0
      %v6928 = vadd.f32 %v6702, %v6927
      %v6929 = vpop.f32.mrb[0].mxu0
      %v6930 = vadd.f32 %v6706, %v6929
      %6931 = vmatprep.mubr.bf16.mxu0 %v6102
      %6932 = vmatmul.mubr.bf16.gmra.mrb[0].mxu0 %v6101
      %v6933 = vpop.f32.mrb[0].mxu0
      %v6934 = vadd.f32 %v6702, %v6933
      %v6935 = vpop.f32.mrb[0].mxu0
      %v6936 = vadd.f32 %v6706, %v6935
      %v6937 = vpop.f32.mrb[0].mxu0
      %v6938 = vadd.f32 %v6702, %v6937
      %v6939 = vpop.f32.mrb[0].mxu0
      %v6940 = vadd.f32 %v6706, %v6939
      %6941 = vmatprep.mubr.bf16.mxu0 %v6105
      %6942 = vmatmul.mubr.bf16.gmra.mrb[0].mxu0 %v6104
      %v6943 = vpop.f32.mrb[0].mxu0
      %v6944 = vadd.f32 %v6702, %v6943
      %v6945 = vpop.f32.mrb[0].mxu0
      %v6946 = vadd.f32 %v6706, %v6945
      %v6947 = vpop.f32.mrb[0].mxu0
      %v6948 = vadd.f32 %v6702, %v6947
      %v6949 = vpop.f32.mrb[0].mxu0
      %v6950 = vadd.f32 %v6706, %v6949
      %6951 = vmatprep.mubr.bf16.mxu0 %v6108
      %6952 = vmatmul.mubr.bf16.gmra.mrb[0].mxu0 %v6107
      %v6953 = vpop.f32.mrb[0].mxu0
      %v6954 = vadd.f32 %v6702, %v6953
      %v6955 = vpop.f32.mrb[0].mxu0
      %v6956 = vadd.f32 %v6706, %v6955
      %v6957 = vpop.f32.mrb[0].mxu0
      %v6958 = vadd.f32 %v6702, %v6957
      %v6959 = vpop.f32.mrb[0].mxu0
      %v6960 = vadd.f32 %v6706, %v6959
      %6961 = vdwg.mxu0
      %6962 = vmatprep.subr.bf16.mxu0 %v6850
      %6963 = vmatpush1.bf16.msra.mxu0 %v6849
      %6964 = vmatprep.subr.bf16.mxu0 %v6852
      %6965 = vmatpush1.bf16.msra.mxu0 %v6851
      %6966 = vmatprep.subr.bf16.mxu0 0
      %6967 = vmatpush1.bf16.msra.mxu0 0
      %6968 = vmatprep.subr.bf16.mxu0 0
      %6969 = vmatpush1.bf16.msra.mxu0 0
      %6970 = vmatprep.subr.bf16.mxu0 0
      %6971 = vmatpush1.bf16.msra.mxu0 0
      %6972 = vmatprep.subr.bf16.mxu0 0
      %6973 = vmatpush1.bf16.msra.mxu0 0
      %6974 = vmatprep.subr.bf16.mxu0 0
      %6975 = vmatpush1.bf16.msra.mxu0 0
      %6976 = vmatprep.subr.bf16.mxu0 0
      %6977 = vmatpush1.bf16.msra.mxu0 0
      %6978 = vmatprep.subr.bf16.mxu0 0
      %6979 = vmatpush1.bf16.msra.mxu0 0
      %6980 = vmatprep.subr.bf16.mxu0 0
      %6981 = vmatpush1.bf16.msra.mxu0 0
      %6982 = vmatprep.subr.bf16.mxu0 0
      %6983 = vmatpush1.bf16.msra.mxu0 0
      %6984 = vmatprep.subr.bf16.mxu0 0
      %6985 = vmatpush1.bf16.msra.mxu0 0
      %6986 = vmatprep.subr.bf16.mxu0 0
      %6987 = vmatpush1.bf16.msra.mxu0 0
      %6988 = vmatprep.subr.bf16.mxu0 0
      %6989 = vmatpush1.bf16.msra.mxu0 0
      %6990 = vmatprep.subr.bf16.mxu0 0
      %6991 = vmatpush1.bf16.msra.mxu0 0
      %6992 = vmatprep.subr.bf16.mxu0 0
      %6993 = vmatpush1.bf16.msra.mxu0 0
      %6994 = vmatprep.mubr.bf16.mxu0 0
      %6995 = vmatmul.mubr.bf16.gmra.mrb[0].mxu0 %v6255
      %v6996 = vpop.f32.mrb[0].mxu0
      %v6997 = vadd.f32 %v6924, %v6996
      %v6998 = vpop.f32.mrb[0].mxu0
      %v6999 = vadd.f32 %v6926, %v6998
      %v7000 = vpop.f32.mrb[0].mxu0
      %v7001 = vadd.f32 %v6928, %v7000
      %v7002 = vpop.f32.mrb[0].mxu0
      %v7003 = vadd.f32 %v6930, %v7002
      %7004 = vmatprep.mubr.bf16.mxu0 0
      %7005 = vmatmul.mubr.bf16.gmra.mrb[0].mxu0 %v6258
      %v7006 = vpop.f32.mrb[0].mxu0
      %v7007 = vadd.f32 %v6934, %v7006
      %v7008 = vpop.f32.mrb[0].mxu0
      %v7009 = vadd.f32 %v6936, %v7008
      %v7010 = vpop.f32.mrb[0].mxu0
      %v7011 = vadd.f32 %v6938, %v7010
      %v7012 = vpop.f32.mrb[0].mxu0
      %v7013 = vadd.f32 %v6940, %v7012
      %7014 = vmatprep.mubr.bf16.mxu0 0
      %7015 = vmatmul.mubr.bf16.gmra.mrb[0].mxu0 %v6261
      %v7016 = vpop.f32.mrb[0].mxu0
      %v7017 = vadd.f32 %v6944, %v7016
      %v7018 = vpop.f32.mrb[0].mxu0
      %v7019 = vadd.f32 %v6946, %v7018
      %v7020 = vpop.f32.mrb[0].mxu0
      %v7021 = vadd.f32 %v6948, %v7020
      %v7022 = vpop.f32.mrb[0].mxu0
      %v7023 = vadd.f32 %v6950, %v7022
      %7024 = vmatprep.mubr.bf16.mxu0 0
      %7025 = vmatmul.mubr.bf16.gmra.mrb[0].mxu0 %v6264
      %v7026 = vpop.f32.mrb[0].mxu0
      %v7027 = vadd.f32 %v6954, %v7026
      %v7028 = vpop.f32.mrb[0].mxu0
      %v7029 = vadd.f32 %v6956, %v7028
      %v7030 = vpop.f32.mrb[0].mxu0
      %v7031 = vadd.f32 %v6958, %v7030
      %v7032 = vpop.f32.mrb[0].mxu0
      %v7033 = vadd.f32 %v6960, %v7032
      %7034 = vdwg.mxu0
      %v7036 = vsel %vm3056, %v6660, 0
      %7038 = vmatprep.subr.bf16.mxu0 %v6818
      %7039 = vmatpush1.bf16.msra.mxu0 %v6817
      %7040 = vmatprep.subr.bf16.mxu0 %v6820
      %7041 = vmatpush1.bf16.msra.mxu0 %v6819
      %7042 = vmatprep.subr.bf16.mxu0 %v6822
      %7043 = vmatpush1.bf16.msra.mxu0 %v6821
      %7044 = vmatprep.subr.bf16.mxu0 %v6824
      %7045 = vmatpush1.bf16.msra.mxu0 %v6823
      %7046 = vmatprep.subr.bf16.mxu0 %v6826
      %7047 = vmatpush1.bf16.msra.mxu0 %v6825
      %7048 = vmatprep.subr.bf16.mxu0 %v6828
      %7049 = vmatpush1.bf16.msra.mxu0 %v6827
      %7050 = vmatprep.subr.bf16.mxu0 %v6830
      %7051 = vmatpush1.bf16.msra.mxu0 %v6829
      %7052 = vmatprep.subr.bf16.mxu0 %v6832
      %7053 = vmatpush1.bf16.msra.mxu0 %v6831
      %7054 = vmatprep.subr.bf16.mxu0 %v6834
      %7055 = vmatpush1.bf16.msra.mxu0 %v6833
      %7056 = vmatprep.subr.bf16.mxu0 %v6836
      %7057 = vmatpush1.bf16.msra.mxu0 %v6835
      %7058 = vmatprep.subr.bf16.mxu0 %v6838
      %7059 = vmatpush1.bf16.msra.mxu0 %v6837
      %7060 = vmatprep.subr.bf16.mxu0 %v6840
      %7061 = vmatpush1.bf16.msra.mxu0 %v6839
      %7062 = vmatprep.subr.bf16.mxu0 %v6842
      %7063 = vmatpush1.bf16.msra.mxu0 %v6841
      %7064 = vmatprep.subr.bf16.mxu0 %v6844
      %7065 = vmatpush1.bf16.msra.mxu0 %v6843
      %7066 = vmatprep.subr.bf16.mxu0 %v6846
      %7067 = vmatpush1.bf16.msra.mxu0 %v6845
      %7068 = vmatprep.subr.bf16.mxu0 %v6848
      %7069 = vmatpush1.bf16.msra.mxu0 %v6847
      %7070 = vmatprep.mubr.bf16.mxu0 %v6659
      %7071 = vmatmul.mubr.bf16.gmra.mrb[0].mxu0 %v6658
      %v7072 = vpop.f32.mrb[0].mxu0
      %v7073 = vadd.f32 %v6702, %v7072
      %v7074 = vpop.f32.mrb[0].mxu0
      %v7075 = vadd.f32 %v6706, %v7074
      %v7076 = vpop.f32.mrb[0].mxu0
      %v7077 = vadd.f32 %v6702, %v7076
      %v7078 = vpop.f32.mrb[0].mxu0
      %v7079 = vadd.f32 %v6706, %v7078
      %7080 = vdwg.mxu0
      %7081 = vmatprep.subr.bf16.mxu0 %v6850
      %7082 = vmatpush1.bf16.msra.mxu0 %v6849
      %7083 = vmatprep.subr.bf16.mxu0 %v6852
      %7084 = vmatpush1.bf16.msra.mxu0 %v6851
      %7085 = vmatprep.subr.bf16.mxu0 0
      %7086 = vmatpush1.bf16.msra.mxu0 0
      %7087 = vmatprep.subr.bf16.mxu0 0
      %7088 = vmatpush1.bf16.msra.mxu0 0
      %7089 = vmatprep.subr.bf16.mxu0 0
      %7090 = vmatpush1.bf16.msra.mxu0 0
      %7091 = vmatprep.subr.bf16.mxu0 0
      %7092 = vmatpush1.bf16.msra.mxu0 0
      %7093 = vmatprep.subr.bf16.mxu0 0
      %7094 = vmatpush1.bf16.msra.mxu0 0
      %7095 = vmatprep.subr.bf16.mxu0 0
      %7096 = vmatpush1.bf16.msra.mxu0 0
      %7097 = vmatprep.subr.bf16.mxu0 0
      %7098 = vmatpush1.bf16.msra.mxu0 0
      %7099 = vmatprep.subr.bf16.mxu0 0
      %7100 = vmatpush1.bf16.msra.mxu0 0
      %7101 = vmatprep.subr.bf16.mxu0 0
      %7102 = vmatpush1.bf16.msra.mxu0 0
      %7103 = vmatprep.subr.bf16.mxu0 0
      %7104 = vmatpush1.bf16.msra.mxu0 0
      %7105 = vmatprep.subr.bf16.mxu0 0
      %7106 = vmatpush1.bf16.msra.mxu0 0
      %7107 = vmatprep.subr.bf16.mxu0 0
      %7108 = vmatpush1.bf16.msra.mxu0 0
      %7109 = vmatprep.subr.bf16.mxu0 0
      %7110 = vmatpush1.bf16.msra.mxu0 0
      %7111 = vmatprep.subr.bf16.mxu0 0
      %7112 = vmatpush1.bf16.msra.mxu0 0
      %7113 = vmatprep.mubr.bf16.mxu0 0
      %7114 = vmatmul.mubr.bf16.gmra.mrb[0].mxu0 %v7036
      %v7115 = vpop.f32.mrb[0].mxu0
      %v7116 = vadd.f32 %v7073, %v7115
      %v7117 = vpop.f32.mrb[0].mxu0
      %v7118 = vadd.f32 %v7075, %v7117
      %v7119 = vpop.f32.mrb[0].mxu0
      %v7120 = vadd.f32 %v7077, %v7119
      %v7121 = vpop.f32.mrb[0].mxu0
      %v7122 = vadd.f32 %v7079, %v7121
      %7123 = vdwg.mxu0
      %v7124 = vlaneseq
      %v7125 = vand.u32 %v7124, 127
      %v7126 = vadd.s32 %v7125, 128
      %vm7127 = vcmp.ge.s32.totalorder %v7125, 24
      %vm7128 = vcmp.ge.s32.totalorder %v7126, 24
      %v7129 = vsel %vm7127, 1, 0
      %v7130 = vsel %vm7128, 1, 0
      %vm7131 = vcmp.eq.s32.totalorder %v7129, 1
      %vm7132 = vcmp.eq.s32.totalorder %v7130, 1
      %v7133 = vsel %vm7131, %v6997, -inf
      %v7134 = vsel %vm7132, %v6999, -inf
      %v7135 = vsel %vm7131, %v7001, -inf
      %v7136 = vsel %vm7132, %v7003, -inf
      %v7137 = vsel %vm7131, %v7007, -inf
      %v7138 = vsel %vm7132, %v7009, -inf
      %v7139 = vsel %vm7131, %v7011, -inf
      %v7140 = vsel %vm7132, %v7013, -inf
      %v7141 = vsel %vm7131, %v7017, -inf
      %v7142 = vsel %vm7132, %v7019, -inf
      %v7143 = vsel %vm7131, %v7021, -inf
      %v7144 = vsel %vm7132, %v7023, -inf
      %v7145 = vsel %vm7131, %v7027, -inf
      %v7146 = vsel %vm7132, %v7029, -inf
      %v7147 = vsel %vm7131, %v7031, -inf
      %v7148 = vsel %vm7132, %v7033, -inf
      %v7149 = vsel %vm7131, %v7116, -inf
      %v7150 = vsel %vm7132, %v7118, -inf
      %v7151 = vsel %vm7131, %v7120, -inf
      %v7152 = vsel %vm7132, %v7122, -inf
      %vm7153 = vcmask 179200
      %v7154 = vsel %vm7153, %v7134, -inf
      %v7155 = vmax.f32 %v7133, %v7154
      %7156 = vmax.xlane.f32.xlu0 %v7155
      %v7157 = vpop.xlane.xlu0 %7156
      %v7158 = vsel %vm7153, %v7136, -inf
      %v7159 = vmax.f32 %v7135, %v7158
      %7160 = vmax.xlane.f32.xlu0 %v7159
      %v7161 = vpop.xlane.xlu0 %7160
      %v7162 = vsel %vm7153, %v7138, -inf
      %v7163 = vmax.f32 %v7137, %v7162
      %7164 = vmax.xlane.f32.xlu0 %v7163
      %v7165 = vpop.xlane.xlu0 %7164
      %v7166 = vsel %vm7153, %v7140, -inf
      %v7167 = vmax.f32 %v7139, %v7166
      %7168 = vmax.xlane.f32.xlu0 %v7167
      %v7169 = vpop.xlane.xlu0 %7168
      %v7170 = vsel %vm7153, %v7142, -inf
      %v7171 = vmax.f32 %v7141, %v7170
      %7172 = vmax.xlane.f32.xlu0 %v7171
      %v7173 = vpop.xlane.xlu0 %7172
      %v7174 = vsel %vm7153, %v7144, -inf
      %v7175 = vmax.f32 %v7143, %v7174
      %7176 = vmax.xlane.f32.xlu0 %v7175
      %v7177 = vpop.xlane.xlu0 %7176
      %v7178 = vsel %vm7153, %v7146, -inf
      %v7179 = vmax.f32 %v7145, %v7178
      %7180 = vmax.xlane.f32.xlu0 %v7179
      %v7181 = vpop.xlane.xlu0 %7180
      %v7182 = vsel %vm7153, %v7148, -inf
      %v7183 = vmax.f32 %v7147, %v7182
      %7184 = vmax.xlane.f32.xlu0 %v7183
      %v7185 = vpop.xlane.xlu0 %7184
      %v7186 = vsel %vm7153, %v7150, -inf
      %v7187 = vmax.f32 %v7149, %v7186
      %7188 = vmax.xlane.f32.xlu0 %v7187
      %v7189 = vpop.xlane.xlu0 %7188
      %v7190 = vsel %vm7153, %v7152, -inf
      %v7191 = vmax.f32 %v7151, %v7190
      %7192 = vmax.xlane.f32.xlu0 %v7191
      %v7193 = vpop.xlane.xlu0 %7192
      %v7194 = vsub.f32 %v6997, %v7157
      %v7195 = vsub.f32 %v6999, %v7157
      %v7196 = vsub.f32 %v7001, %v7161
      %v7197 = vsub.f32 %v7003, %v7161
      %v7198 = vsub.f32 %v7007, %v7165
      %v7199 = vsub.f32 %v7009, %v7165
      %v7200 = vsub.f32 %v7011, %v7169
      %v7201 = vsub.f32 %v7013, %v7169
      %v7202 = vsub.f32 %v7017, %v7173
      %v7203 = vsub.f32 %v7019, %v7173
      %v7204 = vsub.f32 %v7021, %v7177
      %v7205 = vsub.f32 %v7023, %v7177
      %v7206 = vsub.f32 %v7027, %v7181
      %v7207 = vsub.f32 %v7029, %v7181
      %v7208 = vsub.f32 %v7031, %v7185
      %v7209 = vsub.f32 %v7033, %v7185
      %v7210 = vsub.f32 %v7116, %v7189
      %v7211 = vsub.f32 %v7118, %v7189
      %v7212 = vsub.f32 %v7120, %v7193
      %v7213 = vsub.f32 %v7122, %v7193
      %v7214 = vsel %vm7131, %v7194, 0.0
      %v7215 = vsel %vm7132, %v7195, 0.0
      %v7216 = vsel %vm7131, %v7196, 0.0
      %v7217 = vsel %vm7132, %v7197, 0.0
      %v7218 = vsel %vm7131, %v7198, 0.0
      %v7219 = vsel %vm7132, %v7199, 0.0
      %v7220 = vsel %vm7131, %v7200, 0.0
      %v7221 = vsel %vm7132, %v7201, 0.0
      %v7222 = vsel %vm7131, %v7202, 0.0
      %v7223 = vsel %vm7132, %v7203, 0.0
      %v7224 = vsel %vm7131, %v7204, 0.0
      %v7225 = vsel %vm7132, %v7205, 0.0
      %v7226 = vsel %vm7131, %v7206, 0.0
      %v7227 = vsel %vm7132, %v7207, 0.0
      %v7228 = vsel %vm7131, %v7208, 0.0
      %v7229 = vsel %vm7132, %v7209, 0.0
      %v7230 = vsel %vm7131, %v7210, 0.0
      %v7231 = vsel %vm7132, %v7211, 0.0
      %v7232 = vsel %vm7131, %v7212, 0.0
      %v7233 = vsel %vm7132, %v7213, 0.0
      %v7234 = vmul.f32 %v7214, 1.442695
      %v7235 = vpow.pop %v7234
      %v7236 = vmul.f32 %v7215, 1.442695
      %v7237 = vpow.pop %v7236
      %v7238 = vmul.f32 %v7216, 1.442695
      %v7239 = vpow.pop %v7238
      %v7240 = vmul.f32 %v7217, 1.442695
      %v7241 = vpow.pop %v7240
      %v7242 = vmul.f32 %v7218, 1.442695
      %v7243 = vpow.pop %v7242
      %v7244 = vmul.f32 %v7219, 1.442695
      %v7245 = vpow.pop %v7244
      %v7246 = vmul.f32 %v7220, 1.442695
      %v7247 = vpow.pop %v7246
      %v7248 = vmul.f32 %v7221, 1.442695
      %v7249 = vpow.pop %v7248
      %v7250 = vmul.f32 %v7222, 1.442695
      %v7251 = vpow.pop %v7250
      %v7252 = vmul.f32 %v7223, 1.442695
      %v7253 = vpow.pop %v7252
      %v7254 = vmul.f32 %v7224, 1.442695
      %v7255 = vpow.pop %v7254
      %v7256 = vmul.f32 %v7225, 1.442695
      %v7257 = vpow.pop %v7256
      %v7258 = vmul.f32 %v7226, 1.442695
      %v7259 = vpow.pop %v7258
      %v7260 = vmul.f32 %v7227, 1.442695
      %v7261 = vpow.pop %v7260
      %v7262 = vmul.f32 %v7228, 1.442695
      %v7263 = vpow.pop %v7262
      %v7264 = vmul.f32 %v7229, 1.442695
      %v7265 = vpow.pop %v7264
      %v7266 = vmul.f32 %v7230, 1.442695
      %v7267 = vpow.pop %v7266
      %v7268 = vmul.f32 %v7231, 1.442695
      %v7269 = vpow.pop %v7268
      %v7270 = vmul.f32 %v7232, 1.442695
      %v7271 = vpow.pop %v7270
      %v7272 = vmul.f32 %v7233, 1.442695
      %v7273 = vpow.pop %v7272
      %v7274 = vsel %vm7131, %v7235, 0.0
      %v7275 = vsel %vm7132, %v7237, 0.0
      %v7276 = vsel %vm7131, %v7239, 0.0
      %v7277 = vsel %vm7132, %v7241, 0.0
      %v7278 = vsel %vm7131, %v7243, 0.0
      %v7279 = vsel %vm7132, %v7245, 0.0
      %v7280 = vsel %vm7131, %v7247, 0.0
      %v7281 = vsel %vm7132, %v7249, 0.0
      %v7282 = vsel %vm7131, %v7251, 0.0
      %v7283 = vsel %vm7132, %v7253, 0.0
      %v7284 = vsel %vm7131, %v7255, 0.0
      %v7285 = vsel %vm7132, %v7257, 0.0
      %v7286 = vsel %vm7131, %v7259, 0.0
      %v7287 = vsel %vm7132, %v7261, 0.0
      %v7288 = vsel %vm7131, %v7263, 0.0
      %v7289 = vsel %vm7132, %v7265, 0.0
      %v7290 = vsel %vm7131, %v7267, 0.0
      %v7291 = vsel %vm7132, %v7269, 0.0
      %v7292 = vsel %vm7131, %v7271, 0.0
      %v7293 = vsel %vm7132, %v7273, 0.0
      %v7294 = vld [vmem:[%s11] sm:$0xff]
      %v7295 = vld [vmem:[%s11 + $0x8] sm:$0xff]
      %v7296 = vld [vmem:[%s11 + $0x10] sm:$0xff]
      %v7297 = vld [vmem:[%s11 + $0x18] sm:$0xff]
      %v7298 = vld [vmem:[%s11 + $0x20] sm:$0xff]
      %v7299 = vld [vmem:[%s11 + $0x28] sm:$0xff]
      %v7300 = vld [vmem:[%s11 + $0x30] sm:$0xff]
      %v7301 = vld [vmem:[%s11 + $0x38] sm:$0xff]
      %v7302 = vld [vmem:[%s11 + $0x40] sm:$0xff]
      %v7303 = vld [vmem:[%s11 + $0x48] sm:$0xff]
      %v7304 = vld [vmem:[%s11 + $0x50] sm:$0xff]
      %v7305 = vld [vmem:[%s11 + $0x58] sm:$0xff]
      %v7306 = vld [vmem:[%s11 + $0x60] sm:$0xff]
      %v7307 = vld [vmem:[%s11 + $0x68] sm:$0xff]
      %v7308 = vld [vmem:[%s11 + $0x70] sm:$0xff]
      %v7309 = vld [vmem:[%s11 + $0x78] sm:$0xff]
      %v7310 = vld [vmem:[%s11 + $0x80] sm:$0xff]
      %v7311 = vld [vmem:[%s11 + $0x88] sm:$0xff]
      %v7312 = vld [vmem:[%s11 + $0x90] sm:$0xff]
      %v7313 = vld [vmem:[%s11 + $0x98] sm:$0xff]
      %v7314 = vld [vmem:[%s11 + $0xa0] sm:$0xff]
      %v7315 = vld [vmem:[%s11 + $0xa8] sm:$0xff]
      %v7316 = vld [vmem:[%s11 + $0xb0] sm:$0xff]
      %v7317 = vld [vmem:[%s11 + $0xb8] sm:$0xff]
      %v7318 = vld [vmem:[%s11 + $0xc0] sm:$0xff]
      %v7319 = vld [vmem:[%s11 + $0xc8] sm:$0xff]
      %v7320 = vld [vmem:[%s11 + $0xd0] sm:$0xff]
      %v7321 = vld [vmem:[%s11 + $0xd8] sm:$0xff]
      %v7322 = vld [vmem:[%s11 + $0xe0] sm:$0xff]
      %v7323 = vld [vmem:[%s11 + $0xe8] sm:$0xff]
      %v7324 = vld [vmem:[%s11 + $0xf0] sm:$0xff]
      %v7325 = vld [vmem:[%s11 + $0xf8] sm:$0xff]
      %v7326 = vld [vmem:[%s11 + $0x100] sm:$0xff]
      %v7327 = vld [vmem:[%s11 + $0x108] sm:$0xff]
      %v7328 = vld [vmem:[%s11 + $0x110] sm:$0xff]
      %v7329 = vld [vmem:[%s11 + $0x118] sm:$0xff]
      %v7330 = vld [vmem:[%s11 + $0x120] sm:$0x3f]
      %v7331 = vld [vmem:[%s11 + $0x128] sm:$0x3f]
      %v7332 = vsel %vm7127, 0.0, 1.0
      %v7333 = vsel %vm7128, 0.0, 1.0
      %v7335 = vsel %vm7153, %v7275, 0
      %v7338 = vsel %vm7153, %v7277, 0
      %v7341 = vsel %vm7153, %v7279, 0
      %v7344 = vsel %vm7153, %v7281, 0
      %v7347 = vsel %vm7153, %v7283, 0
      %v7350 = vsel %vm7153, %v7285, 0
      %v7353 = vsel %vm7153, %v7287, 0
      %v7356 = vsel %vm7153, %v7289, 0
      %v7359 = vsel %vm7153, %v7291, 0
      %v7362 = vsel %vm7153, %v7293, 0
      %vm7364 = vcmask 1045504
      %v7366 = vsel %vm7364, %v7330, 0
      %v7369 = vsel %vm7364, %v7331, 0
      %7371 = vmatprep.subr.mxu0 %v7295
      %7372 = vmatpush1.msra.mxu0 %v7294
      %7373 = vmatprep.subr.mxu0 %v7297
      %7374 = vmatpush1.msra.mxu0 %v7296
      %7375 = vmatprep.subr.mxu0 %v7299
      %7376 = vmatpush1.msra.mxu0 %v7298
      %7377 = vmatprep.subr.mxu0 %v7301
      %7378 = vmatpush1.msra.mxu0 %v7300
      %7379 = vmatprep.subr.mxu0 %v7303
      %7380 = vmatpush1.msra.mxu0 %v7302
      %7381 = vmatprep.subr.mxu0 %v7305
      %7382 = vmatpush1.msra.mxu0 %v7304
      %7383 = vmatprep.subr.mxu0 %v7307
      %7384 = vmatpush1.msra.mxu0 %v7306
      %7385 = vmatprep.subr.mxu0 %v7309
      %7386 = vmatpush1.msra.mxu0 %v7308
      %7387 = vmatprep.subr.mxu0 %v7311
      %7388 = vmatpush1.msra.mxu0 %v7310
      %7389 = vmatprep.subr.mxu0 %v7313
      %7390 = vmatpush1.msra.mxu0 %v7312
      %7391 = vmatprep.subr.mxu0 %v7315
      %7392 = vmatpush1.msra.mxu0 %v7314
      %7393 = vmatprep.subr.mxu0 %v7317
      %7394 = vmatpush1.msra.mxu0 %v7316
      %7395 = vmatprep.subr.mxu0 %v7319
      %7396 = vmatpush1.msra.mxu0 %v7318
      %7397 = vmatprep.subr.mxu0 %v7321
      %7398 = vmatpush1.msra.mxu0 %v7320
      %7399 = vmatprep.subr.mxu0 %v7323
      %7400 = vmatpush1.msra.mxu0 %v7322
      %7401 = vmatprep.subr.mxu0 %v7325
      %7402 = vmatpush1.msra.mxu0 %v7324
      %7403 = vmatprep.subr.mxu0 %v7327
      %7404 = vmatpush1.msra.mxu0 %v7326
      %7405 = vmatprep.subr.mxu0 %v7329
      %7406 = vmatpush1.msra.mxu0 %v7328
      %7407 = vmatprep.subr.mxu0 %v7369
      %7408 = vmatpush1.msra.mxu0 %v7366
      %7409 = vmatprep.subr.mxu0 0.0
      %7410 = vmatpush1.msra.mxu0 0.0
      %7411 = vmatprep.subr.mxu0 0.0
      %7412 = vmatpush1.msra.mxu0 0.0
      %7413 = vmatprep.subr.mxu0 0.0
      %7414 = vmatpush1.msra.mxu0 0.0
      %7415 = vmatprep.subr.mxu0 0.0
      %7416 = vmatpush1.msra.mxu0 0.0
      %7417 = vmatprep.subr.mxu0 0.0
      %7418 = vmatpush1.msra.mxu0 0.0
      %7419 = vmatprep.subr.mxu0 0.0
      %7420 = vmatpush1.msra.mxu0 0.0
      %7421 = vmatprep.subr.mxu0 0.0
      %7422 = vmatpush1.msra.mxu0 0.0
      %7423 = vmatprep.subr.mxu0 0.0
      %7424 = vmatpush1.msra.mxu0 0.0
      %7425 = vmatprep.subr.mxu0 0.0
      %7426 = vmatpush1.msra.mxu0 0.0
      %7427 = vmatprep.subr.mxu0 0.0
      %7428 = vmatpush1.msra.mxu0 0.0
      %7429 = vmatprep.subr.mxu0 0.0
      %7430 = vmatpush1.msra.mxu0 0.0
      %7431 = vmatprep.subr.mxu0 0.0
      %7432 = vmatpush1.msra.mxu0 0.0
      %7433 = vmatprep.subr.mxu0 0.0
      %7434 = vmatpush1.msra.mxu0 0.0
      %7435 = vmatprep.mubr.f32.mxu0 %v7335
      %7436 = vmatmul.mubr.f32.gmra.mrb[0].mxu0 %v7274
      %v7437 = vpop.f32.mrb[0].mxu0
      %v7438 = vadd.f32 %v7332, %v7437
      %v7439 = vpop.f32.mrb[0].mxu0
      %v7440 = vadd.f32 %v7333, %v7439
      %7441 = vmatprep.mubr.f32.mxu0 %v7338
      %7442 = vmatmul.mubr.f32.gmra.mrb[0].mxu0 %v7276
      %v7443 = vpop.f32.mrb[0].mxu0
      %v7444 = vadd.f32 %v7332, %v7443
      %v7445 = vpop.f32.mrb[0].mxu0
      %v7446 = vadd.f32 %v7333, %v7445
      %7447 = vmatprep.mubr.f32.mxu0 %v7341
      %7448 = vmatmul.mubr.f32.gmra.mrb[0].mxu0 %v7278
      %v7449 = vpop.f32.mrb[0].mxu0
      %v7450 = vadd.f32 %v7332, %v7449
      %v7451 = vpop.f32.mrb[0].mxu0
      %v7452 = vadd.f32 %v7333, %v7451
      %7453 = vmatprep.mubr.f32.mxu0 %v7344
      %7454 = vmatmul.mubr.f32.gmra.mrb[0].mxu0 %v7280
      %v7455 = vpop.f32.mrb[0].mxu0
      %v7456 = vadd.f32 %v7332, %v7455
      %v7457 = vpop.f32.mrb[0].mxu0
      %v7458 = vadd.f32 %v7333, %v7457
      %7459 = vmatprep.mubr.f32.mxu0 %v7347
      %7460 = vmatmul.mubr.f32.gmra.mrb[0].mxu0 %v7282
      %v7461 = vpop.f32.mrb[0].mxu0
      %v7462 = vadd.f32 %v7332, %v7461
      %v7463 = vpop.f32.mrb[0].mxu0
      %v7464 = vadd.f32 %v7333, %v7463
      %7465 = vmatprep.mubr.f32.mxu0 %v7350
      %7466 = vmatmul.mubr.f32.gmra.mrb[0].mxu0 %v7284
      %v7467 = vpop.f32.mrb[0].mxu0
      %v7468 = vadd.f32 %v7332, %v7467
      %v7469 = vpop.f32.mrb[0].mxu0
      %v7470 = vadd.f32 %v7333, %v7469
      %7471 = vmatprep.mubr.f32.mxu0 %v7353
      %7472 = vmatmul.mubr.f32.gmra.mrb[0].mxu0 %v7286
      %v7473 = vpop.f32.mrb[0].mxu0
      %v7474 = vadd.f32 %v7332, %v7473
      %v7475 = vpop.f32.mrb[0].mxu0
      %v7476 = vadd.f32 %v7333, %v7475
      %7477 = vmatprep.mubr.f32.mxu0 %v7356
      %7478 = vmatmul.mubr.f32.gmra.mrb[0].mxu0 %v7288
      %v7479 = vpop.f32.mrb[0].mxu0
      %v7480 = vadd.f32 %v7332, %v7479
      %v7481 = vpop.f32.mrb[0].mxu0
      %v7482 = vadd.f32 %v7333, %v7481
      %7483 = vmatprep.mubr.f32.mxu0 %v7359
      %7484 = vmatmul.mubr.f32.gmra.mrb[0].mxu0 %v7290
      %v7485 = vpop.f32.mrb[0].mxu0
      %v7486 = vadd.f32 %v7332, %v7485
      %v7487 = vpop.f32.mrb[0].mxu0
      %v7488 = vadd.f32 %v7333, %v7487
      %7489 = vmatprep.mubr.f32.mxu0 %v7362
      %7490 = vmatmul.mubr.f32.gmra.mrb[0].mxu0 %v7292
      %v7491 = vpop.f32.mrb[0].mxu0
      %v7492 = vadd.f32 %v7332, %v7491
      %v7493 = vpop.f32.mrb[0].mxu0
      %v7494 = vadd.f32 %v7333, %v7493
      %7495 = vdwg.mxu0
      %v7496 = vmax.f32 %v7438, 1e-30
      %v7497 = vmax.f32 %v7440, 1e-30
      %v7498 = vmax.f32 %v7444, 1e-30
      %v7499 = vmax.f32 %v7446, 1e-30
      %v7500 = vmax.f32 %v7450, 1e-30
      %v7501 = vmax.f32 %v7452, 1e-30
      %v7502 = vmax.f32 %v7456, 1e-30
      %v7503 = vmax.f32 %v7458, 1e-30
      %v7504 = vmax.f32 %v7462, 1e-30
      %v7505 = vmax.f32 %v7464, 1e-30
      %v7506 = vmax.f32 %v7468, 1e-30
      %v7507 = vmax.f32 %v7470, 1e-30
      %v7508 = vmax.f32 %v7474, 1e-30
      %v7509 = vmax.f32 %v7476, 1e-30
      %v7510 = vmax.f32 %v7480, 1e-30
      %v7511 = vmax.f32 %v7482, 1e-30
      %v7512 = vmax.f32 %v7486, 1e-30
      %v7513 = vmax.f32 %v7488, 1e-30
      %v7514 = vmax.f32 %v7492, 1e-30
      %v7515 = vmax.f32 %v7494, 1e-30
      %v7516 = vrcp.pop %v7496
      %v7517 = vmul.f32 %v7274, %v7516
      %v7518 = vrcp.pop %v7497
      %v7519 = vmul.f32 %v7275, %v7518
      %v7520 = vrcp.pop %v7498
      %v7521 = vmul.f32 %v7276, %v7520
      %v7522 = vrcp.pop %v7499
      %v7523 = vmul.f32 %v7277, %v7522
      %v7524 = vrcp.pop %v7500
      %v7525 = vmul.f32 %v7278, %v7524
      %v7526 = vrcp.pop %v7501
      %v7527 = vmul.f32 %v7279, %v7526
      %v7528 = vrcp.pop %v7502
      %v7529 = vmul.f32 %v7280, %v7528
      %v7530 = vrcp.pop %v7503
      %v7531 = vmul.f32 %v7281, %v7530
      %v7532 = vrcp.pop %v7504
      %v7533 = vmul.f32 %v7282, %v7532
      %v7534 = vrcp.pop %v7505
      %v7535 = vmul.f32 %v7283, %v7534
      %v7536 = vrcp.pop %v7506
      %v7537 = vmul.f32 %v7284, %v7536
      %v7538 = vrcp.pop %v7507
      %v7539 = vmul.f32 %v7285, %v7538
      %v7540 = vrcp.pop %v7508
      %v7541 = vmul.f32 %v7286, %v7540
      %v7542 = vrcp.pop %v7509
      %v7543 = vmul.f32 %v7287, %v7542
      %v7544 = vrcp.pop %v7510
      %v7545 = vmul.f32 %v7288, %v7544
      %v7546 = vrcp.pop %v7511
      %v7547 = vmul.f32 %v7289, %v7546
      %v7548 = vrcp.pop %v7512
      %v7549 = vmul.f32 %v7290, %v7548
      %v7550 = vrcp.pop %v7513
      %v7551 = vmul.f32 %v7291, %v7550
      %v7552 = vrcp.pop %v7514
      %v7553 = vmul.f32 %v7292, %v7552
      %v7554 = vrcp.pop %v7515
      %v7555 = vmul.f32 %v7293, %v7554
      %v7556 = vsel %vm7131, %v7517, %v6997
      %v7557 = vsel %vm7132, %v7519, %v6999
      %v7558 = vsel %vm7131, %v7521, %v7001
      %v7559 = vsel %vm7132, %v7523, %v7003
      %v7560 = vsel %vm7131, %v7525, %v7007
      %v7561 = vsel %vm7132, %v7527, %v7009
      %v7562 = vsel %vm7131, %v7529, %v7011
      %v7563 = vsel %vm7132, %v7531, %v7013
      %v7564 = vsel %vm7131, %v7533, %v7017
      %v7565 = vsel %vm7132, %v7535, %v7019
      %v7566 = vsel %vm7131, %v7537, %v7021
      %v7567 = vsel %vm7132, %v7539, %v7023
      %v7568 = vsel %vm7131, %v7541, %v7027
      %v7569 = vsel %vm7132, %v7543, %v7029
      %v7570 = vsel %vm7131, %v7545, %v7031
      %v7571 = vsel %vm7132, %v7547, %v7033
      %v7572 = vsel %vm7131, %v7549, %v7116
      %v7573 = vsel %vm7132, %v7551, %v7118
      %v7574 = vsel %vm7131, %v7553, %v7120
      %v7575 = vsel %vm7132, %v7555, %v7122
      %7576 = vst [vmem:[%s417] sm:$0xff] %v7556
      %7577 = vst.msk [vmem:[%s417 + $0x8] sm:$0xff] %vm7153, %v7557
      %7578 = vst [vmem:[%s417 + $0x10] sm:$0xff] %v7558
      %7579 = vst.msk [vmem:[%s417 + $0x18] sm:$0xff] %vm7153, %v7559
      %7580 = vst [vmem:[%s417 + $0x20] sm:$0xff] %v7560
      %7581 = vst.msk [vmem:[%s417 + $0x28] sm:$0xff] %vm7153, %v7561
      %7582 = vst [vmem:[%s417 + $0x30] sm:$0xff] %v7562
      %7583 = vst.msk [vmem:[%s417 + $0x38] sm:$0xff] %vm7153, %v7563
      %7584 = vst [vmem:[%s417 + $0x40] sm:$0xff] %v7564
      %7585 = vst.msk [vmem:[%s417 + $0x48] sm:$0xff] %vm7153, %v7565
      %7586 = vst [vmem:[%s417 + $0x50] sm:$0xff] %v7566
      %7587 = vst.msk [vmem:[%s417 + $0x58] sm:$0xff] %vm7153, %v7567
      %7588 = vst [vmem:[%s417 + $0x60] sm:$0xff] %v7568
      %7589 = vst.msk [vmem:[%s417 + $0x68] sm:$0xff] %vm7153, %v7569
      %7590 = vst [vmem:[%s417 + $0x70] sm:$0xff] %v7570
      %7591 = vst.msk [vmem:[%s417 + $0x78] sm:$0xff] %vm7153, %v7571
      %7592 = vst [vmem:[%s417 + $0x80] sm:$0xff] %v7572
      %7593 = vst.msk [vmem:[%s417 + $0x88] sm:$0xff] %vm7153, %v7573
      %7594 = vst [vmem:[%s417 + $0x90] sm:$0xff] %v7574
      %7595 = vst.msk [vmem:[%s417 + $0x98] sm:$0xff] %vm7153, %v7575
      %s7596 = smul.u32 10, %s23
      %p7597 = scmp.lt.s32.totalorder %s7596, 19
      %s7598 = scalar_select %p7597, %s7596, 19
      %s7599 = smul.addr %s7598, 2
      %s7600 = smul.addr %s7599, 8
      %s7601 = scalar_lea.vmem %s12, %s7600
      // Predicated region
      $region69: #{fwd.1} parent=67 // pred_check
        %p7602 = pneg %p298
      $region70: #{fwd.1} parent=67 // pred_check_branch
        %7604 = sbr.rel (%p7602) target = $region72
      $region71: #{fwd.1} parent=67 // pred_region
        %s7605 = smul.u32 10, %s23
      $region72: #{fwd.1} parent=67 // pred_fallthru
        _
    $region68: #{fwd.1} parent=5 // pred_fallthru
      _
    %p7606 = scmp.le.s32.totalorder 2, %s18
    // Predicated region
    $region73: #{fwd.1} parent=5 // pred_check
      %p7607 = pneg %p7606
    $region74: #{fwd.1} parent=5 // pred_check_branch
      %7609 = sbr.rel (%p7607) target = $region76
    $region75: #{fwd.1} parent=5 // pred_region
      %s7610 = ssub.s32 %s18, 2
      // Predicated region
      $region77: #{fwd.1} parent=75 // pred_check
        %p7611 = pneg %p304
      $region78: #{fwd.1} parent=75 // pred_check_branch
        %7613 = sbr.rel (%p7611) target = $region80
      $region79: #{fwd.1} parent=75 // pred_region
        %s7614 = smul.u32 10, %s24
        %p7615 = scmp.lt.s32.totalorder %s7614, 19
        %s7616 = scalar_select %p7615, %s7614, 19
        %s7617 = smul.addr %s7616, 2
        %s7618 = smul.addr %s7617, 8
        %s7619 = scalar_lea.vmem %s12, %s7618
      $region80: #{fwd.1} parent=75 // pred_fallthru
        _
    $region76: #{fwd.1} parent=5 // pred_fallthru
      _
  $region6: #{fwd.1} parent=0 // loop_footer
    %s22 = sadd.s32 1, %s18
  $region7: #{fwd.1} parent=0 // loop_footer_branch
    %17 = sbr.rel target = $region3
  $region8: #{fwd.1} parent=0 // loop_exit
    _

</llo_original>
